<compile_context>
chip_gen: v5e
topology: v5e:2x2
jax: 0.10.0
libtpu: 0.0.40
codegen_flags: <defaults>
</compile_context>

<pallas_src>
import jax
import jax.numpy as jnp
from jax.experimental import pallas as pl
from jax.experimental.pallas import tpu as pltpu

K = 5          # conv kernel size (module hard-codes kernel_size=5)
PK = 5         # AvgPool2d kernel == stride
CP = 128       # padded channel width == lane width


# ----------------------------------------------------------------------------
# Fused kernel (one batch element per grid step)
# ----------------------------------------------------------------------------
def shallow2d_fused_kernel(
        x_ref,                                   # (1, H+4, W+4, Cin) bf16 padded NHWC
        w1_ref, b1_ref, s1_ref, t1_ref,          # (K*K*Cin, CP) bf16, (1, CP) f32 x3
        w2_ref, b2_ref, s2_ref, t2_ref,          # (K*K*CP,  CP) bf16, (1, CP) f32 x3
        fc1w_ref, fc1b_ref,                      # (npos*CP, CP) bf16, (1, CP) f32
        fc2w_ref, fc2b_ref,                      # (CP, NC) bf16, (1, NC) f32
        o_ref,                                   # (1, 1, NC) f32
        xw1_ref,                                 # (H+4, W, K*Cin) bf16 scratch (conv1 kw stage)
        xw2_ref):                                # (H,   W, K*CP)  bf16 scratch (conv2 kw stage)
    Cin = x_ref.shape[-1]
    CPk = w1_ref.shape[-1]                       # padded channel width (128)
    H, W, KCP = xw2_ref.shape                    # conv1 output spatial dims, K*CP
    KC1 = xw1_ref.shape[-1]                      # K*Cin
    Ho2 = H - (K - 1)                            # conv2 'valid' output rows
    NP = Ho2 // PK                               # pooled spatial extent per side

    # ---- conv1 kw-stage im2col: xw1[h, w, kw*Cin+c] = xpad[h, w+kw, c] -----
    # (4-lane slices, but the whole buffer is tiny: ~13 KB bf16)
    for kw in range(K):
        xw1_ref[:, :, kw * Cin:(kw + 1) * Cin] = x_ref[0, :, kw:kw + W, :]

    # ---- conv1: 5 accumulating matmuls over kh (K = K*Cin each) ------------
    acc1 = None
    for kh in range(K):
        a = xw1_ref[kh:kh + H, :, :].reshape(H * W, KC1)
        part = jnp.dot(a, w1_ref[kh * KC1:(kh + 1) * KC1, :],
                       preferred_element_type=jnp.float32)
        acc1 = part if acc1 is None else acc1 + part
    # fused epilogue: conv bias -> ReLU -> BN affine (all f32), then bf16 tile
    y1 = jnp.maximum(acc1 + b1_ref[...], 0.0) * s1_ref[...] + t1_ref[...]
    y1 = y1.astype(xw2_ref.dtype).reshape(H, W, CPk)       # pad channels are 0

    # ---- conv2 kw-stage im2col (128-lane dense writes) ----------------------
    # xw2[h, w2, kw*CP+c] = y1[h, w2+kw, c] for every pooled column (w2 < W-4);
    # the tail columns receive wrapped (deterministic, never-read) values
    # instead of an explicit zero-fill.
    for kw in range(K):
        xw2_ref[:, 0:W - kw, kw * CPk:(kw + 1) * CPk] = y1[:, kw:W, :]
        if kw:
            xw2_ref[:, W - kw:W, kw * CPk:(kw + 1) * CPk] = y1[:, 0:kw, :]

    # ---- conv2 'valid': 5 accumulating matmuls over kh (K = K*CP each) ------
    acc2 = None
    for kh in range(K):
        a = xw2_ref[kh:kh + Ho2, :, :].reshape(Ho2 * W, KCP)
        part = jnp.dot(a, w2_ref[kh * KCP:(kh + 1) * KCP, :],
                       preferred_element_type=jnp.float32)
        acc2 = part if acc2 is None else acc2 + part
    y2 = jnp.maximum(acc2 + b2_ref[...], 0.0) * s2_ref[...] + t2_ref[...]
    y2 = y2.reshape(Ho2, W, CPk)                 # columns >= W-4 are never read

    # ---- AvgPool2d(5) + NHWC flatten + fc1 (per-window rank-128 matmuls) ----
    inv = 1.0 / float(PK * PK)
    h1 = fc1b_ref[...]                           # (1, CP) f32 fc1 accumulator
    for ph in range(NP):
        for pw in range(NP):
            blk = y2[ph * PK:(ph + 1) * PK, pw * PK:(pw + 1) * PK, :]
            pooled = jnp.sum(jnp.sum(blk, axis=0), axis=0, keepdims=True) * inv
            pos = ph * NP + pw
            h1 = h1 + jnp.dot(pooled.astype(fc1w_ref.dtype),
                              fc1w_ref[pos * CPk:(pos + 1) * CPk, :],
                              preferred_element_type=jnp.float32)

    # ---- fc2 + softmax -------------------------------------------------------
    logits = jnp.dot(h1.astype(fc2w_ref.dtype), fc2w_ref[...],
                     preferred_element_type=jnp.float32) + fc2b_ref[...]
    m = jnp.max(logits, axis=-1, keepdims=True)
    e = jnp.exp(logits - m)
    denom = jnp.sum(e, axis=-1, keepdims=True)
    probs = e * pl.reciprocal(denom)             # exact: keeps sum-to-1 tight
    o_ref[...] = probs.reshape(1, 1, -1)


# ----------------------------------------------------------------------------
# Wrapper: one pallas_call, grid over batch, parallel for v7x's 2nd TensorCore
# ----------------------------------------------------------------------------
def shallow2d_forward(x_nchw, kp):
    N, Cin, H, W = x_nchw.shape
    pad = (K - 1) // 2
    Hp, Wp = H + 2 * pad, W + 2 * pad
    Ho2 = H - (K - 1)
    NP = Ho2 // PK
    npos = NP * NP
    nclasses = kp["fc2_b"].shape[-1]

    # Only XLA glue: NCHW->NHWC, 'same' zero-pad, bf16 cast of the 8 KB input.
    x = jnp.transpose(x_nchw, (0, 2, 3, 1))
    x = jnp.pad(x, ((0, 0), (pad, pad), (pad, pad), (0, 0))).astype(jnp.bfloat16)

    params = (kp["w1"], kp["b1"], kp["s1"], kp["t1"],
              kp["w2"], kp["b2"], kp["s2"], kp["t2"],
              kp["fc1_w"], kp["fc1_b"], kp["fc2_w"], kp["fc2_b"])

    def full(arr):  # whole-array block, constant across the batch grid
        return pl.BlockSpec(arr.shape, lambda b: (0,) * arr.ndim)

    flops = 2 * N * (H * W * (K * K * Cin) * CP
                     + Ho2 * W * (K * K * CP) * CP
                     + npos * CP * CP + CP * nclasses)
    bytes_accessed = (x.size * 2
                      + sum(p.size * p.dtype.itemsize for p in params)
                      + N * nclasses * 4)

    out = pl.pallas_call(
        shallow2d_fused_kernel,
        grid=(N,),
        in_specs=[pl.BlockSpec((1, Hp, Wp, Cin), lambda b: (b, 0, 0, 0))]
                 + [full(p) for p in params],
        out_specs=pl.BlockSpec((1, 1, nclasses), lambda b: (b, 0, 0)),
        out_shape=jax.ShapeDtypeStruct((N, 1, nclasses), jnp.float32),
        scratch_shapes=[
            pltpu.VMEM((Hp, W, K * Cin), jnp.bfloat16),   # conv1 kw-stage (~13 KB)
            pltpu.VMEM((H, W, K * CP), jnp.bfloat16),     # conv2 kw-stage (~320 KB)
        ],
        compiler_params=pltpu.CompilerParams(
            dimension_semantics=("parallel",)),
        cost_estimate=pl.CostEstimate(
            flops=flops, transcendentals=N * nclasses,
            bytes_accessed=bytes_accessed),
    )(x, *params)
    return out[:, 0, :]


# ----------------------------------------------------------------------------
# Parameter init (PyTorch-like layout)
# ----------------------------------------------------------------------------
def init_params(key, input_channels, input_size, nclasses):
    """Conv weights in HWIO (a torch OIHW weight maps via w.transpose(2,3,1,0));
    fc1 rows follow torch.flatten (C,H,W) order."""
    ks = jax.random.split(key, 10)
    eps = 1e-5
    run_mean = jnp.zeros((40,), jnp.float32)   # nn.BatchNorm2d defaults
    run_var = jnp.ones((40,), jnp.float32)

    bn1_g = 1.0 + 0.1 * jax.random.normal(ks[2], (40,), jnp.float32)
    bn1_b = 0.1 * jax.random.normal(ks[3], (40,), jnp.float32)
    bn2_g = 1.0 + 0.1 * jax.random.normal(ks[6], (40,), jnp.float32)
    bn2_b = 0.1 * jax.random.normal(ks[7], (40,), jnp.float32)

    def fold_bn(g, b):
        scale = g / jnp.sqrt(run_var + eps)
        return scale, b - run_mean * scale

    bn1_scale, bn1_shift = fold_bn(bn1_g, bn1_b)
    bn2_scale, bn2_shift = fold_bn(bn2_g, bn2_b)

    pooled = (input_size - 4) // 5             # conv2 'valid' then AvgPool2d(5)
    flat_features = 40 * pooled * pooled

    return {
        "conv1_w": 0.1 * jax.random.normal(ks[0], (5, 5, input_channels, 40),
                                           jnp.float32),
        "conv1_b": 0.1 * jax.random.normal(ks[1], (40,), jnp.float32),
        "bn1_scale": bn1_scale, "bn1_shift": bn1_shift,
        "conv2_w": 0.05 * jax.random.normal(ks[4], (5, 5, 40, 40), jnp.float32),
        "conv2_b": 0.1 * jax.random.normal(ks[5], (40,), jnp.float32),
        "bn2_scale": bn2_scale, "bn2_shift": bn2_shift,
        "fc1_w": 0.05 * jax.random.normal(ks[8], (flat_features, 80), jnp.float32),
        "fc1_b": jnp.zeros((80,), jnp.float32),
        "fc2_w": 0.1 * jax.random.normal(ks[9], (80, nclasses), jnp.float32),
        "fc2_b": jnp.zeros((nclasses,), jnp.float32),
    }


def prepare_params(p):
    """One-time conversion to kernel layout: channel dims zero-padded to 128
    lanes, conv weights im2col-flattened (kh,kw,c order), fc1 rows permuted
    from torch (C,H,W) flatten order to (pos, 128-channel) order; MXU-side
    tensors bf16, epilogue vectors (1,128) f32 rows (zero pad => padded
    channels stay exactly zero through the whole network)."""
    K_, _, Cin, C1 = p["conv1_w"].shape
    C2 = p["conv2_w"].shape[-1]
    FH = p["fc1_w"].shape[1]                    # fc1 hidden width (80)
    NC = p["fc2_w"].shape[1]

    def row(v, n):
        return jnp.pad(v, (0, n - v.shape[0])).reshape(1, n).astype(jnp.float32)

    w1 = p["conv1_w"].reshape(K_ * K_ * Cin, C1)
    w1 = jnp.pad(w1, ((0, 0), (0, CP - C1))).astype(jnp.bfloat16)

    w2 = jnp.pad(p["conv2_w"], ((0, 0), (0, 0), (0, CP - C1), (0, CP - C2)))
    w2 = w2.reshape(K_ * K_ * CP, CP).astype(jnp.bfloat16)

    F = p["fc1_w"].shape[0]
    npos = F // C2
    np_side = int(round(npos ** 0.5))
    fc1 = p["fc1_w"].reshape(C2, np_side, np_side, FH)   # torch (C,H,W) flatten
    fc1 = jnp.transpose(fc1, (1, 2, 0, 3))               # -> (ph, pw, c, out)
    fc1 = jnp.pad(fc1, ((0, 0), (0, 0), (0, CP - C2), (0, CP - FH)))
    fc1 = fc1.reshape(npos * CP, CP).astype(jnp.bfloat16)

    fc2 = jnp.pad(p["fc2_w"], ((0, CP - FH), (0, 0))).astype(jnp.bfloat16)

    return {
        "w1": w1, "b1": row(p["conv1_b"], CP),
        "s1": row(p["bn1_scale"], CP), "t1": row(p["bn1_shift"], CP),
        "w2": w2, "b2": row(p["conv2_b"], CP),
        "s2": row(p["bn2_scale"], CP), "t2": row(p["bn2_shift"], CP),
        "fc1_w": fc1, "fc1_b": row(p["fc1_b"], CP),
        "fc2_w": fc2, "fc2_b": p["fc2_b"].reshape(1, NC).astype(jnp.float32),
    }


if __name__ == "__main__":
    batch, channels, size = 2, 4, 16
    nclasses = 10

    key = jax.random.PRNGKey(0)
    kx, kparams = jax.random.split(key)
    x = jax.random.normal(kx, (batch, channels, size, size), jnp.float32)
    params = prepare_params(init_params(kparams, channels, size, nclasses))

    out = jax.jit(shallow2d_forward)(x, params)
    out = jax.block_until_ready(out)

    assert out.shape == (batch, nclasses)
    assert bool(jnp.all(jnp.isfinite(out)))
    assert bool(jnp.allclose(jnp.sum(out, axis=1), 1.0, atol=1e-4))
    print("KERNEL_OK")
</pallas_src>

<mosaic_0001>
module attributes {stable_mosaic.version = 11 : i64} {
  func.func @shallow2d_fused_kernel(%arg0: i32, %arg1: memref<1x20x20x4xbf16, #tpu.memory_space<vmem>>, %arg2: memref<100x128xbf16, #tpu.memory_space<vmem>>, %arg3: memref<1x128xf32, #tpu.memory_space<vmem>>, %arg4: memref<1x128xf32, #tpu.memory_space<vmem>>, %arg5: memref<1x128xf32, #tpu.memory_space<vmem>>, %arg6: memref<3200x128xbf16, #tpu.memory_space<vmem>>, %arg7: memref<1x128xf32, #tpu.memory_space<vmem>>, %arg8: memref<1x128xf32, #tpu.memory_space<vmem>>, %arg9: memref<1x128xf32, #tpu.memory_space<vmem>>, %arg10: memref<512x128xbf16, #tpu.memory_space<vmem>>, %arg11: memref<1x128xf32, #tpu.memory_space<vmem>>, %arg12: memref<128x10xbf16, #tpu.memory_space<vmem>>, %arg13: memref<1x10xf32, #tpu.memory_space<vmem>>, %arg14: memref<1x1x10xf32, #tpu.memory_space<vmem>>, %arg15: memref<20x16x20xbf16, #tpu.memory_space<vmem>>, %arg16: memref<16x16x640xbf16, #tpu.memory_space<vmem>>) attributes {dimension_semantics = [#tpu.dimension_semantics<parallel>], iteration_bounds = array<i64: 2>, scalar_prefetch = 0 : i64, scratch_operands = 2 : i64, tpu.core_type = #tpu.core_type<tc>, window_params = [{transform_indices = @transform_0, window_bounds = array<i64: 1, 20, 20, 4>}, {pipeline_mode = #tpu.pipeline_mode<synchronous>, transform_indices = @transform_1, window_bounds = array<i64: 100, 128>}, {pipeline_mode = #tpu.pipeline_mode<synchronous>, transform_indices = @transform_2, window_bounds = array<i64: 1, 128>}, {pipeline_mode = #tpu.pipeline_mode<synchronous>, transform_indices = @transform_3, window_bounds = array<i64: 1, 128>}, {pipeline_mode = #tpu.pipeline_mode<synchronous>, transform_indices = @transform_4, window_bounds = array<i64: 1, 128>}, {pipeline_mode = #tpu.pipeline_mode<synchronous>, transform_indices = @transform_5, window_bounds = array<i64: 3200, 128>}, {pipeline_mode = #tpu.pipeline_mode<synchronous>, transform_indices = @transform_6, window_bounds = array<i64: 1, 128>}, {pipeline_mode = #tpu.pipeline_mode<synchronous>, transform_indices = @transform_7, window_bounds = array<i64: 1, 128>}, {pipeline_mode = #tpu.pipeline_mode<synchronous>, transform_indices = @transform_8, window_bounds = array<i64: 1, 128>}, {pipeline_mode = #tpu.pipeline_mode<synchronous>, transform_indices = @transform_9, window_bounds = array<i64: 512, 128>}, {pipeline_mode = #tpu.pipeline_mode<synchronous>, transform_indices = @transform_10, window_bounds = array<i64: 1, 128>}, {pipeline_mode = #tpu.pipeline_mode<synchronous>, transform_indices = @transform_11, window_bounds = array<i64: 128, 10>}, {pipeline_mode = #tpu.pipeline_mode<synchronous>, transform_indices = @transform_12, window_bounds = array<i64: 1, 10>}, {transform_indices = @transform_13, window_bounds = array<i64: 1, 1, 10>}]} {
    %c0 = arith.constant 0 : index
    %c0_0 = arith.constant 0 : index
    %c0_1 = arith.constant 0 : index
    %c0_2 = arith.constant 0 : index
    %0 = vector.load %arg1[%c0, %c0_0, %c0_1, %c0_2] : memref<1x20x20x4xbf16, #tpu.memory_space<vmem>>, vector<1x20x16x4xbf16>
    %1 = vector.shape_cast %0 : vector<1x20x16x4xbf16> to vector<20x16x4xbf16>
    %c0_3 = arith.constant 0 : index
    %c0_4 = arith.constant 0 : index
    %c0_5 = arith.constant 0 : index
    %2 = vector.load %arg15[%c0_3, %c0_4, %c0_5] : memref<20x16x20xbf16, #tpu.memory_space<vmem>>, vector<20x16x4xbf16>
    tpu.vector_store %arg15[%c0_3, %c0_4, %c0_5], %1 {strides = array<i32>} : memref<20x16x20xbf16, #tpu.memory_space<vmem>>, vector<20x16x4xbf16>,
    %c0_6 = arith.constant 0 : index
    %c0_7 = arith.constant 0 : index
    %c1 = arith.constant 1 : index
    %c0_8 = arith.constant 0 : index
    %3 = vector.load %arg1[%c0_6, %c0_7, %c1, %c0_8] : memref<1x20x20x4xbf16, #tpu.memory_space<vmem>>, vector<1x20x16x4xbf16>
    %4 = vector.shape_cast %3 : vector<1x20x16x4xbf16> to vector<20x16x4xbf16>
    %c0_9 = arith.constant 0 : index
    %c0_10 = arith.constant 0 : index
    %c4 = arith.constant 4 : index
    %5 = vector.load %arg15[%c0_9, %c0_10, %c4] : memref<20x16x20xbf16, #tpu.memory_space<vmem>>, vector<20x16x4xbf16>
    tpu.vector_store %arg15[%c0_9, %c0_10, %c4], %4 {strides = array<i32>} : memref<20x16x20xbf16, #tpu.memory_space<vmem>>, vector<20x16x4xbf16>,
    %c0_11 = arith.constant 0 : index
    %c0_12 = arith.constant 0 : index
    %c2 = arith.constant 2 : index
    %c0_13 = arith.constant 0 : index
    %6 = vector.load %arg1[%c0_11, %c0_12, %c2, %c0_13] : memref<1x20x20x4xbf16, #tpu.memory_space<vmem>>, vector<1x20x16x4xbf16>
    %7 = vector.shape_cast %6 : vector<1x20x16x4xbf16> to vector<20x16x4xbf16>
    %c0_14 = arith.constant 0 : index
    %c0_15 = arith.constant 0 : index
    %c8 = arith.constant 8 : index
    %8 = vector.load %arg15[%c0_14, %c0_15, %c8] : memref<20x16x20xbf16, #tpu.memory_space<vmem>>, vector<20x16x4xbf16>
    tpu.vector_store %arg15[%c0_14, %c0_15, %c8], %7 {strides = array<i32>} : memref<20x16x20xbf16, #tpu.memory_space<vmem>>, vector<20x16x4xbf16>,
    %c0_16 = arith.constant 0 : index
    %c0_17 = arith.constant 0 : index
    %c3 = arith.constant 3 : index
    %c0_18 = arith.constant 0 : index
    %9 = vector.load %arg1[%c0_16, %c0_17, %c3, %c0_18] : memref<1x20x20x4xbf16, #tpu.memory_space<vmem>>, vector<1x20x16x4xbf16>
    %10 = vector.shape_cast %9 : vector<1x20x16x4xbf16> to vector<20x16x4xbf16>
    %c0_19 = arith.constant 0 : index
    %c0_20 = arith.constant 0 : index
    %c12 = arith.constant 12 : index
    %11 = vector.load %arg15[%c0_19, %c0_20, %c12] : memref<20x16x20xbf16, #tpu.memory_space<vmem>>, vector<20x16x4xbf16>
    tpu.vector_store %arg15[%c0_19, %c0_20, %c12], %10 {strides = array<i32>} : memref<20x16x20xbf16, #tpu.memory_space<vmem>>, vector<20x16x4xbf16>,
    %c0_21 = arith.constant 0 : index
    %c0_22 = arith.constant 0 : index
    %c4_23 = arith.constant 4 : index
    %c0_24 = arith.constant 0 : index
    %12 = vector.load %arg1[%c0_21, %c0_22, %c4_23, %c0_24] : memref<1x20x20x4xbf16, #tpu.memory_space<vmem>>, vector<1x20x16x4xbf16>
    %13 = vector.shape_cast %12 : vector<1x20x16x4xbf16> to vector<20x16x4xbf16>
    %c0_25 = arith.constant 0 : index
    %c0_26 = arith.constant 0 : index
    %c16 = arith.constant 16 : index
    %14 = vector.load %arg15[%c0_25, %c0_26, %c16] : memref<20x16x20xbf16, #tpu.memory_space<vmem>>, vector<20x16x4xbf16>
    tpu.vector_store %arg15[%c0_25, %c0_26, %c16], %13 {strides = array<i32>} : memref<20x16x20xbf16, #tpu.memory_space<vmem>>, vector<20x16x4xbf16>,
    %c0_27 = arith.constant 0 : index
    %c0_28 = arith.constant 0 : index
    %c0_29 = arith.constant 0 : index
    %15 = vector.load %arg15[%c0_27, %c0_28, %c0_29] : memref<20x16x20xbf16, #tpu.memory_space<vmem>>, vector<16x16x20xbf16>
    %16 = vector.shape_cast %15 : vector<16x16x20xbf16> to vector<256x20xbf16>
    %c0_30 = arith.constant 0 : index
    %c0_31 = arith.constant 0 : index
    %17 = vector.load %arg2[%c0_30, %c0_31] : memref<100x128xbf16, #tpu.memory_space<vmem>>, vector<20x128xbf16>
    %cst = arith.constant dense<0.000000e+00> : vector<256x128xf32>
    %18 = tpu.matmul %16, %17, %cst {dimension_numbers = #tpu.dot_dimension_numbers<[1], [0], [0], [1], [0, 0, 1, 1], [], []>} : vector<256x20xbf16>, vector<20x128xbf16>, vector<256x128xf32> -> vector<256x128xf32>
    %c1_32 = arith.constant 1 : index
    %c0_33 = arith.constant 0 : index
    %c0_34 = arith.constant 0 : index
    %19 = vector.load %arg15[%c1_32, %c0_33, %c0_34] : memref<20x16x20xbf16, #tpu.memory_space<vmem>>, vector<16x16x20xbf16>
    %20 = vector.shape_cast %19 : vector<16x16x20xbf16> to vector<256x20xbf16>
    %c20 = arith.constant 20 : index
    %c0_35 = arith.constant 0 : index
    %21 = vector.load %arg2[%c20, %c0_35] : memref<100x128xbf16, #tpu.memory_space<vmem>>, vector<20x128xbf16>
    %cst_36 = arith.constant dense<0.000000e+00> : vector<256x128xf32>
    %22 = tpu.matmul %20, %21, %cst_36 {dimension_numbers = #tpu.dot_dimension_numbers<[1], [0], [0], [1], [0, 0, 1, 1], [], []>} : vector<256x20xbf16>, vector<20x128xbf16>, vector<256x128xf32> -> vector<256x128xf32>
    %23 = arith.addf %18, %22 : vector<256x128xf32>
    %c2_37 = arith.constant 2 : index
    %c0_38 = arith.constant 0 : index
    %c0_39 = arith.constant 0 : index
    %24 = vector.load %arg15[%c2_37, %c0_38, %c0_39] : memref<20x16x20xbf16, #tpu.memory_space<vmem>>, vector<16x16x20xbf16>
    %25 = vector.shape_cast %24 : vector<16x16x20xbf16> to vector<256x20xbf16>
    %c40 = arith.constant 40 : index
    %c0_40 = arith.constant 0 : index
    %26 = vector.load %arg2[%c40, %c0_40] : memref<100x128xbf16, #tpu.memory_space<vmem>>, vector<20x128xbf16>
    %cst_41 = arith.constant dense<0.000000e+00> : vector<256x128xf32>
    %27 = tpu.matmul %25, %26, %cst_41 {dimension_numbers = #tpu.dot_dimension_numbers<[1], [0], [0], [1], [0, 0, 1, 1], [], []>} : vector<256x20xbf16>, vector<20x128xbf16>, vector<256x128xf32> -> vector<256x128xf32>
    %28 = arith.addf %23, %27 : vector<256x128xf32>
    %c3_42 = arith.constant 3 : index
    %c0_43 = arith.constant 0 : index
    %c0_44 = arith.constant 0 : index
    %29 = vector.load %arg15[%c3_42, %c0_43, %c0_44] : memref<20x16x20xbf16, #tpu.memory_space<vmem>>, vector<16x16x20xbf16>
    %30 = vector.shape_cast %29 : vector<16x16x20xbf16> to vector<256x20xbf16>
    %c60 = arith.constant 60 : index
    %c0_45 = arith.constant 0 : index
    %31 = vector.load %arg2[%c60, %c0_45] : memref<100x128xbf16, #tpu.memory_space<vmem>>, vector<20x128xbf16>
    %cst_46 = arith.constant dense<0.000000e+00> : vector<256x128xf32>
    %32 = tpu.matmul %30, %31, %cst_46 {dimension_numbers = #tpu.dot_dimension_numbers<[1], [0], [0], [1], [0, 0, 1, 1], [], []>} : vector<256x20xbf16>, vector<20x128xbf16>, vector<256x128xf32> -> vector<256x128xf32>
    %33 = arith.addf %28, %32 : vector<256x128xf32>
    %c4_47 = arith.constant 4 : index
    %c0_48 = arith.constant 0 : index
    %c0_49 = arith.constant 0 : index
    %34 = vector.load %arg15[%c4_47, %c0_48, %c0_49] : memref<20x16x20xbf16, #tpu.memory_space<vmem>>, vector<16x16x20xbf16>
    %35 = vector.shape_cast %34 : vector<16x16x20xbf16> to vector<256x20xbf16>
    %c80 = arith.constant 80 : index
    %c0_50 = arith.constant 0 : index
    %36 = vector.load %arg2[%c80, %c0_50] : memref<100x128xbf16, #tpu.memory_space<vmem>>, vector<20x128xbf16>
    %cst_51 = arith.constant dense<0.000000e+00> : vector<256x128xf32>
    %37 = tpu.matmul %35, %36, %cst_51 {dimension_numbers = #tpu.dot_dimension_numbers<[1], [0], [0], [1], [0, 0, 1, 1], [], []>} : vector<256x20xbf16>, vector<20x128xbf16>, vector<256x128xf32> -> vector<256x128xf32>
    %38 = arith.addf %33, %37 : vector<256x128xf32>
    %c0_52 = arith.constant 0 : index
    %c0_53 = arith.constant 0 : index
    %39 = vector.load %arg3[%c0_52, %c0_53] : memref<1x128xf32, #tpu.memory_space<vmem>>, vector<1x128xf32>
    %40 = vector.broadcast %39 : vector<1x128xf32> to vector<256x128xf32>
    %41 = arith.addf %38, %40 : vector<256x128xf32>
    %cst_54 = arith.constant 0.000000e+00 : f32
    %42 = vector.broadcast %cst_54 : f32 to vector<256x128xf32>
    %43 = arith.maximumf %41, %42 : vector<256x128xf32>
    %c0_55 = arith.constant 0 : index
    %c0_56 = arith.constant 0 : index
    %44 = vector.load %arg4[%c0_55, %c0_56] : memref<1x128xf32, #tpu.memory_space<vmem>>, vector<1x128xf32>
    %45 = vector.broadcast %44 : vector<1x128xf32> to vector<256x128xf32>
    %46 = arith.mulf %43, %45 : vector<256x128xf32>
    %c0_57 = arith.constant 0 : index
    %c0_58 = arith.constant 0 : index
    %47 = vector.load %arg5[%c0_57, %c0_58] : memref<1x128xf32, #tpu.memory_space<vmem>>, vector<1x128xf32>
    %48 = vector.broadcast %47 : vector<1x128xf32> to vector<256x128xf32>
    %49 = arith.addf %46, %48 : vector<256x128xf32>
    %50 = arith.truncf %49 : vector<256x128xf32> to vector<256x128xbf16>
    %51 = vector.shape_cast %50 : vector<256x128xbf16> to vector<16x16x128xbf16>
    %c0_59 = arith.constant 0 : index
    %c0_60 = arith.constant 0 : index
    %c0_61 = arith.constant 0 : index
    %52 = vector.load %arg16[%c0_59, %c0_60, %c0_61] : memref<16x16x640xbf16, #tpu.memory_space<vmem>>, vector<16x16x128xbf16>
    tpu.vector_store %arg16[%c0_59, %c0_60, %c0_61], %51 {strides = array<i32>} : memref<16x16x640xbf16, #tpu.memory_space<vmem>>, vector<16x16x128xbf16>,
    %53 = vector.extract_strided_slice %51 {offsets = [0, 1, 0], sizes = [16, 15, 128], strides = [1, 1, 1]} : vector<16x16x128xbf16> to vector<16x15x128xbf16>
    %c0_62 = arith.constant 0 : index
    %c0_63 = arith.constant 0 : index
    %c128 = arith.constant 128 : index
    %54 = vector.load %arg16[%c0_62, %c0_63, %c128] : memref<16x16x640xbf16, #tpu.memory_space<vmem>>, vector<16x15x128xbf16>
    tpu.vector_store %arg16[%c0_62, %c0_63, %c128], %53 {strides = array<i32>} : memref<16x16x640xbf16, #tpu.memory_space<vmem>>, vector<16x15x128xbf16>,
    %55 = vector.extract_strided_slice %51 {offsets = [0, 0, 0], sizes = [16, 1, 128], strides = [1, 1, 1]} : vector<16x16x128xbf16> to vector<16x1x128xbf16>
    %c0_64 = arith.constant 0 : index
    %c15 = arith.constant 15 : index
    %c128_65 = arith.constant 128 : index
    %56 = vector.load %arg16[%c0_64, %c15, %c128_65] : memref<16x16x640xbf16, #tpu.memory_space<vmem>>, vector<16x1x128xbf16>
    tpu.vector_store %arg16[%c0_64, %c15, %c128_65], %55 {strides = array<i32>} : memref<16x16x640xbf16, #tpu.memory_space<vmem>>, vector<16x1x128xbf16>,
    %57 = vector.extract_strided_slice %51 {offsets = [0, 2, 0], sizes = [16, 14, 128], strides = [1, 1, 1]} : vector<16x16x128xbf16> to vector<16x14x128xbf16>
    %c0_66 = arith.constant 0 : index
    %c0_67 = arith.constant 0 : index
    %c256 = arith.constant 256 : index
    %58 = vector.load %arg16[%c0_66, %c0_67, %c256] : memref<16x16x640xbf16, #tpu.memory_space<vmem>>, vector<16x14x128xbf16>
    tpu.vector_store %arg16[%c0_66, %c0_67, %c256], %57 {strides = array<i32>} : memref<16x16x640xbf16, #tpu.memory_space<vmem>>, vector<16x14x128xbf16>,
    %59 = vector.extract_strided_slice %51 {offsets = [0, 0, 0], sizes = [16, 2, 128], strides = [1, 1, 1]} : vector<16x16x128xbf16> to vector<16x2x128xbf16>
    %c0_68 = arith.constant 0 : index
    %c14 = arith.constant 14 : index
    %c256_69 = arith.constant 256 : index
    %60 = vector.load %arg16[%c0_68, %c14, %c256_69] : memref<16x16x640xbf16, #tpu.memory_space<vmem>>, vector<16x2x128xbf16>
    tpu.vector_store %arg16[%c0_68, %c14, %c256_69], %59 {strides = array<i32>} : memref<16x16x640xbf16, #tpu.memory_space<vmem>>, vector<16x2x128xbf16>,
    %61 = vector.extract_strided_slice %51 {offsets = [0, 3, 0], sizes = [16, 13, 128], strides = [1, 1, 1]} : vector<16x16x128xbf16> to vector<16x13x128xbf16>
    %c0_70 = arith.constant 0 : index
    %c0_71 = arith.constant 0 : index
    %c384 = arith.constant 384 : index
    %62 = vector.load %arg16[%c0_70, %c0_71, %c384] : memref<16x16x640xbf16, #tpu.memory_space<vmem>>, vector<16x13x128xbf16>
    tpu.vector_store %arg16[%c0_70, %c0_71, %c384], %61 {strides = array<i32>} : memref<16x16x640xbf16, #tpu.memory_space<vmem>>, vector<16x13x128xbf16>,
    %63 = vector.extract_strided_slice %51 {offsets = [0, 0, 0], sizes = [16, 3, 128], strides = [1, 1, 1]} : vector<16x16x128xbf16> to vector<16x3x128xbf16>
    %c0_72 = arith.constant 0 : index
    %c13 = arith.constant 13 : index
    %c384_73 = arith.constant 384 : index
    %64 = vector.load %arg16[%c0_72, %c13, %c384_73] : memref<16x16x640xbf16, #tpu.memory_space<vmem>>, vector<16x3x128xbf16>
    tpu.vector_store %arg16[%c0_72, %c13, %c384_73], %63 {strides = array<i32>} : memref<16x16x640xbf16, #tpu.memory_space<vmem>>, vector<16x3x128xbf16>,
    %65 = vector.extract_strided_slice %51 {offsets = [0, 4, 0], sizes = [16, 12, 128], strides = [1, 1, 1]} : vector<16x16x128xbf16> to vector<16x12x128xbf16>
    %c0_74 = arith.constant 0 : index
    %c0_75 = arith.constant 0 : index
    %c512 = arith.constant 512 : index
    %66 = vector.load %arg16[%c0_74, %c0_75, %c512] : memref<16x16x640xbf16, #tpu.memory_space<vmem>>, vector<16x12x128xbf16>
    tpu.vector_store %arg16[%c0_74, %c0_75, %c512], %65 {strides = array<i32>} : memref<16x16x640xbf16, #tpu.memory_space<vmem>>, vector<16x12x128xbf16>,
    %67 = vector.extract_strided_slice %51 {offsets = [0, 0, 0], sizes = [16, 4, 128], strides = [1, 1, 1]} : vector<16x16x128xbf16> to vector<16x4x128xbf16>
    %c0_76 = arith.constant 0 : index
    %c12_77 = arith.constant 12 : index
    %c512_78 = arith.constant 512 : index
    %68 = vector.load %arg16[%c0_76, %c12_77, %c512_78] : memref<16x16x640xbf16, #tpu.memory_space<vmem>>, vector<16x4x128xbf16>
    tpu.vector_store %arg16[%c0_76, %c12_77, %c512_78], %67 {strides = array<i32>} : memref<16x16x640xbf16, #tpu.memory_space<vmem>>, vector<16x4x128xbf16>,
    %c0_79 = arith.constant 0 : index
    %c0_80 = arith.constant 0 : index
    %c0_81 = arith.constant 0 : index
    %69 = vector.load %arg16[%c0_79, %c0_80, %c0_81] : memref<16x16x640xbf16, #tpu.memory_space<vmem>>, vector<12x16x640xbf16>
    %70 = vector.shape_cast %69 : vector<12x16x640xbf16> to vector<192x640xbf16>
    %c0_82 = arith.constant 0 : index
    %c0_83 = arith.constant 0 : index
    %71 = vector.load %arg6[%c0_82, %c0_83] : memref<3200x128xbf16, #tpu.memory_space<vmem>>, vector<640x128xbf16>
    %cst_84 = arith.constant dense<0.000000e+00> : vector<192x128xf32>
    %72 = tpu.matmul %70, %71, %cst_84 {dimension_numbers = #tpu.dot_dimension_numbers<[1], [0], [0], [1], [0, 0, 1, 1], [], []>} : vector<192x640xbf16>, vector<640x128xbf16>, vector<192x128xf32> -> vector<192x128xf32>
    %c1_85 = arith.constant 1 : index
    %c0_86 = arith.constant 0 : index
    %c0_87 = arith.constant 0 : index
    %73 = vector.load %arg16[%c1_85, %c0_86, %c0_87] : memref<16x16x640xbf16, #tpu.memory_space<vmem>>, vector<12x16x640xbf16>
    %74 = vector.shape_cast %73 : vector<12x16x640xbf16> to vector<192x640xbf16>
    %c640 = arith.constant 640 : index
    %c0_88 = arith.constant 0 : index
    %75 = vector.load %arg6[%c640, %c0_88] : memref<3200x128xbf16, #tpu.memory_space<vmem>>, vector<640x128xbf16>
    %cst_89 = arith.constant dense<0.000000e+00> : vector<192x128xf32>
    %76 = tpu.matmul %74, %75, %cst_89 {dimension_numbers = #tpu.dot_dimension_numbers<[1], [0], [0], [1], [0, 0, 1, 1], [], []>} : vector<192x640xbf16>, vector<640x128xbf16>, vector<192x128xf32> -> vector<192x128xf32>
    %77 = arith.addf %72, %76 : vector<192x128xf32>
    %c2_90 = arith.constant 2 : index
    %c0_91 = arith.constant 0 : index
    %c0_92 = arith.constant 0 : index
    %78 = vector.load %arg16[%c2_90, %c0_91, %c0_92] : memref<16x16x640xbf16, #tpu.memory_space<vmem>>, vector<12x16x640xbf16>
    %79 = vector.shape_cast %78 : vector<12x16x640xbf16> to vector<192x640xbf16>
    %c1280 = arith.constant 1280 : index
    %c0_93 = arith.constant 0 : index
    %80 = vector.load %arg6[%c1280, %c0_93] : memref<3200x128xbf16, #tpu.memory_space<vmem>>, vector<640x128xbf16>
    %cst_94 = arith.constant dense<0.000000e+00> : vector<192x128xf32>
    %81 = tpu.matmul %79, %80, %cst_94 {dimension_numbers = #tpu.dot_dimension_numbers<[1], [0], [0], [1], [0, 0, 1, 1], [], []>} : vector<192x640xbf16>, vector<640x128xbf16>, vector<192x128xf32> -> vector<192x128xf32>
    %82 = arith.addf %77, %81 : vector<192x128xf32>
    %c3_95 = arith.constant 3 : index
    %c0_96 = arith.constant 0 : index
    %c0_97 = arith.constant 0 : index
    %83 = vector.load %arg16[%c3_95, %c0_96, %c0_97] : memref<16x16x640xbf16, #tpu.memory_space<vmem>>, vector<12x16x640xbf16>
    %84 = vector.shape_cast %83 : vector<12x16x640xbf16> to vector<192x640xbf16>
    %c1920 = arith.constant 1920 : index
    %c0_98 = arith.constant 0 : index
    %85 = vector.load %arg6[%c1920, %c0_98] : memref<3200x128xbf16, #tpu.memory_space<vmem>>, vector<640x128xbf16>
    %cst_99 = arith.constant dense<0.000000e+00> : vector<192x128xf32>
    %86 = tpu.matmul %84, %85, %cst_99 {dimension_numbers = #tpu.dot_dimension_numbers<[1], [0], [0], [1], [0, 0, 1, 1], [], []>} : vector<192x640xbf16>, vector<640x128xbf16>, vector<192x128xf32> -> vector<192x128xf32>
    %87 = arith.addf %82, %86 : vector<192x128xf32>
    %c4_100 = arith.constant 4 : index
    %c0_101 = arith.constant 0 : index
    %c0_102 = arith.constant 0 : index
    %88 = vector.load %arg16[%c4_100, %c0_101, %c0_102] : memref<16x16x640xbf16, #tpu.memory_space<vmem>>, vector<12x16x640xbf16>
    %89 = vector.shape_cast %88 : vector<12x16x640xbf16> to vector<192x640xbf16>
    %c2560 = arith.constant 2560 : index
    %c0_103 = arith.constant 0 : index
    %90 = vector.load %arg6[%c2560, %c0_103] : memref<3200x128xbf16, #tpu.memory_space<vmem>>, vector<640x128xbf16>
    %cst_104 = arith.constant dense<0.000000e+00> : vector<192x128xf32>
    %91 = tpu.matmul %89, %90, %cst_104 {dimension_numbers = #tpu.dot_dimension_numbers<[1], [0], [0], [1], [0, 0, 1, 1], [], []>} : vector<192x640xbf16>, vector<640x128xbf16>, vector<192x128xf32> -> vector<192x128xf32>
    %92 = arith.addf %87, %91 : vector<192x128xf32>
    %c0_105 = arith.constant 0 : index
    %c0_106 = arith.constant 0 : index
    %93 = vector.load %arg7[%c0_105, %c0_106] : memref<1x128xf32, #tpu.memory_space<vmem>>, vector<1x128xf32>
    %94 = vector.broadcast %93 : vector<1x128xf32> to vector<192x128xf32>
    %95 = arith.addf %92, %94 : vector<192x128xf32>
    %cst_107 = arith.constant 0.000000e+00 : f32
    %96 = vector.broadcast %cst_107 : f32 to vector<192x128xf32>
    %97 = arith.maximumf %95, %96 : vector<192x128xf32>
    %c0_108 = arith.constant 0 : index
    %c0_109 = arith.constant 0 : index
    %98 = vector.load %arg8[%c0_108, %c0_109] : memref<1x128xf32, #tpu.memory_space<vmem>>, vector<1x128xf32>
    %99 = vector.broadcast %98 : vector<1x128xf32> to vector<192x128xf32>
    %100 = arith.mulf %97, %99 : vector<192x128xf32>
    %c0_110 = arith.constant 0 : index
    %c0_111 = arith.constant 0 : index
    %101 = vector.load %arg9[%c0_110, %c0_111] : memref<1x128xf32, #tpu.memory_space<vmem>>, vector<1x128xf32>
    %102 = vector.broadcast %101 : vector<1x128xf32> to vector<192x128xf32>
    %103 = arith.addf %100, %102 : vector<192x128xf32>
    %104 = vector.shape_cast %103 : vector<192x128xf32> to vector<12x16x128xf32>
    %c0_112 = arith.constant 0 : index
    %c0_113 = arith.constant 0 : index
    %105 = vector.load %arg11[%c0_112, %c0_113] : memref<1x128xf32, #tpu.memory_space<vmem>>, vector<1x128xf32>
    %106 = vector.extract_strided_slice %104 {offsets = [0, 0, 0], sizes = [5, 5, 128], strides = [1, 1, 1]} : vector<12x16x128xf32> to vector<5x5x128xf32>
    %cst_114 = arith.constant dense<0.000000e+00> : vector<5x128xf32>
    %107 = vector.multi_reduction <add>, %106, %cst_114 [0] : vector<5x5x128xf32> to vector<5x128xf32>
    %cst_115 = arith.constant dense<0.000000e+00> : vector<128xf32>
    %108 = vector.multi_reduction <add>, %107, %cst_115 [0] : vector<5x128xf32> to vector<128xf32>
    %109 = vector.shape_cast %108 : vector<128xf32> to vector<1x128xf32>
    %cst_116 = arith.constant 4.000000e-02 : f32
    %110 = vector.broadcast %cst_116 : f32 to vector<1x128xf32>
    %111 = arith.mulf %109, %110 : vector<1x128xf32>
    %112 = arith.truncf %111 : vector<1x128xf32> to vector<1x128xbf16>
    %c0_117 = arith.constant 0 : index
    %c0_118 = arith.constant 0 : index
    %113 = vector.load %arg10[%c0_117, %c0_118] : memref<512x128xbf16, #tpu.memory_space<vmem>>, vector<128x128xbf16>
    %cst_119 = arith.constant dense<0.000000e+00> : vector<1x128xf32>
    %114 = tpu.matmul %112, %113, %cst_119 {dimension_numbers = #tpu.dot_dimension_numbers<[1], [0], [0], [1], [0, 0, 1, 1], [], []>} : vector<1x128xbf16>, vector<128x128xbf16>, vector<1x128xf32> -> vector<1x128xf32>
    %115 = arith.addf %105, %114 : vector<1x128xf32>
    %116 = vector.extract_strided_slice %104 {offsets = [0, 5, 0], sizes = [5, 5, 128], strides = [1, 1, 1]} : vector<12x16x128xf32> to vector<5x5x128xf32>
    %cst_120 = arith.constant dense<0.000000e+00> : vector<5x128xf32>
    %117 = vector.multi_reduction <add>, %116, %cst_120 [0] : vector<5x5x128xf32> to vector<5x128xf32>
    %cst_121 = arith.constant dense<0.000000e+00> : vector<128xf32>
    %118 = vector.multi_reduction <add>, %117, %cst_121 [0] : vector<5x128xf32> to vector<128xf32>
    %119 = vector.shape_cast %118 : vector<128xf32> to vector<1x128xf32>
    %cst_122 = arith.constant 4.000000e-02 : f32
    %120 = vector.broadcast %cst_122 : f32 to vector<1x128xf32>
    %121 = arith.mulf %119, %120 : vector<1x128xf32>
    %122 = arith.truncf %121 : vector<1x128xf32> to vector<1x128xbf16>
    %c128_123 = arith.constant 128 : index
    %c0_124 = arith.constant 0 : index
    %123 = vector.load %arg10[%c128_123, %c0_124] : memref<512x128xbf16, #tpu.memory_space<vmem>>, vector<128x128xbf16>
    %cst_125 = arith.constant dense<0.000000e+00> : vector<1x128xf32>
    %124 = tpu.matmul %122, %123, %cst_125 {dimension_numbers = #tpu.dot_dimension_numbers<[1], [0], [0], [1], [0, 0, 1, 1], [], []>} : vector<1x128xbf16>, vector<128x128xbf16>, vector<1x128xf32> -> vector<1x128xf32>
    %125 = arith.addf %115, %124 : vector<1x128xf32>
    %126 = vector.extract_strided_slice %104 {offsets = [5, 0, 0], sizes = [5, 5, 128], strides = [1, 1, 1]} : vector<12x16x128xf32> to vector<5x5x128xf32>
    %cst_126 = arith.constant dense<0.000000e+00> : vector<5x128xf32>
    %127 = vector.multi_reduction <add>, %126, %cst_126 [0] : vector<5x5x128xf32> to vector<5x128xf32>
    %cst_127 = arith.constant dense<0.000000e+00> : vector<128xf32>
    %128 = vector.multi_reduction <add>, %127, %cst_127 [0] : vector<5x128xf32> to vector<128xf32>
    %129 = vector.shape_cast %128 : vector<128xf32> to vector<1x128xf32>
    %cst_128 = arith.constant 4.000000e-02 : f32
    %130 = vector.broadcast %cst_128 : f32 to vector<1x128xf32>
    %131 = arith.mulf %129, %130 : vector<1x128xf32>
    %132 = arith.truncf %131 : vector<1x128xf32> to vector<1x128xbf16>
    %c256_129 = arith.constant 256 : index
    %c0_130 = arith.constant 0 : index
    %133 = vector.load %arg10[%c256_129, %c0_130] : memref<512x128xbf16, #tpu.memory_space<vmem>>, vector<128x128xbf16>
    %cst_131 = arith.constant dense<0.000000e+00> : vector<1x128xf32>
    %134 = tpu.matmul %132, %133, %cst_131 {dimension_numbers = #tpu.dot_dimension_numbers<[1], [0], [0], [1], [0, 0, 1, 1], [], []>} : vector<1x128xbf16>, vector<128x128xbf16>, vector<1x128xf32> -> vector<1x128xf32>
    %135 = arith.addf %125, %134 : vector<1x128xf32>
    %136 = vector.extract_strided_slice %104 {offsets = [5, 5, 0], sizes = [5, 5, 128], strides = [1, 1, 1]} : vector<12x16x128xf32> to vector<5x5x128xf32>
    %cst_132 = arith.constant dense<0.000000e+00> : vector<5x128xf32>
    %137 = vector.multi_reduction <add>, %136, %cst_132 [0] : vector<5x5x128xf32> to vector<5x128xf32>
    %cst_133 = arith.constant dense<0.000000e+00> : vector<128xf32>
    %138 = vector.multi_reduction <add>, %137, %cst_133 [0] : vector<5x128xf32> to vector<128xf32>
    %139 = vector.shape_cast %138 : vector<128xf32> to vector<1x128xf32>
    %cst_134 = arith.constant 4.000000e-02 : f32
    %140 = vector.broadcast %cst_134 : f32 to vector<1x128xf32>
    %141 = arith.mulf %139, %140 : vector<1x128xf32>
    %142 = arith.truncf %141 : vector<1x128xf32> to vector<1x128xbf16>
    %c384_135 = arith.constant 384 : index
    %c0_136 = arith.constant 0 : index
    %143 = vector.load %arg10[%c384_135, %c0_136] : memref<512x128xbf16, #tpu.memory_space<vmem>>, vector<128x128xbf16>
    %cst_137 = arith.constant dense<0.000000e+00> : vector<1x128xf32>
    %144 = tpu.matmul %142, %143, %cst_137 {dimension_numbers = #tpu.dot_dimension_numbers<[1], [0], [0], [1], [0, 0, 1, 1], [], []>} : vector<1x128xbf16>, vector<128x128xbf16>, vector<1x128xf32> -> vector<1x128xf32>
    %145 = arith.addf %135, %144 : vector<1x128xf32>
    %146 = arith.truncf %145 : vector<1x128xf32> to vector<1x128xbf16>
    %c0_138 = arith.constant 0 : index
    %c0_139 = arith.constant 0 : index
    %147 = vector.load %arg12[%c0_138, %c0_139] : memref<128x10xbf16, #tpu.memory_space<vmem>>, vector<128x10xbf16>
    %cst_140 = arith.constant dense<0.000000e+00> : vector<1x10xf32>
    %148 = tpu.matmul %146, %147, %cst_140 {dimension_numbers = #tpu.dot_dimension_numbers<[1], [0], [0], [1], [0, 0, 1, 1], [], []>} : vector<1x128xbf16>, vector<128x10xbf16>, vector<1x10xf32> -> vector<1x10xf32>
    %c0_141 = arith.constant 0 : index
    %c0_142 = arith.constant 0 : index
    %149 = vector.load %arg13[%c0_141, %c0_142] : memref<1x10xf32, #tpu.memory_space<vmem>>, vector<1x10xf32>
    %150 = arith.addf %148, %149 : vector<1x10xf32>
    %cst_143 = arith.constant dense<0xFF800000> : vector<1xf32>
    %151 = vector.multi_reduction <maximumf>, %150, %cst_143 [1] : vector<1x10xf32> to vector<1xf32>
    %152 = vector.shape_cast %151 : vector<1xf32> to vector<1x1xf32>
    %153 = vector.broadcast %152 : vector<1x1xf32> to vector<1x10xf32>
    %154 = arith.subf %150, %153 : vector<1x10xf32>
    %155 = math.exp %154 : vector<1x10xf32>
    %cst_144 = arith.constant dense<0.000000e+00> : vector<1xf32>
    %156 = vector.multi_reduction <add>, %155, %cst_144 [1] : vector<1x10xf32> to vector<1xf32>
    %157 = vector.shape_cast %156 : vector<1xf32> to vector<1x1xf32>
    %158 = tpu.reciprocal %157 : vector<1x1xf32> -> vector<1x1xf32>
    %159 = vector.broadcast %158 : vector<1x1xf32> to vector<1x10xf32>
    %160 = arith.mulf %155, %159 : vector<1x10xf32>
    %161 = vector.shape_cast %160 : vector<1x10xf32> to vector<1x1x10xf32>
    %c0_145 = arith.constant 0 : index
    %c0_146 = arith.constant 0 : index
    %c0_147 = arith.constant 0 : index
    %162 = vector.load %arg14[%c0_145, %c0_146, %c0_147] : memref<1x1x10xf32, #tpu.memory_space<vmem>>, vector<1x1x10xf32>
    tpu.vector_store %arg14[%c0_145, %c0_146, %c0_147], %161 {strides = array<i32>} : memref<1x1x10xf32, #tpu.memory_space<vmem>>, vector<1x1x10xf32>,
    return
  }
  func.func @transform_0(%arg0: i32) -> (i32, i32, i32, i32) {
    %c0_i32 = arith.constant 0 : i32
    %c0_i32_0 = arith.constant 0 : i32
    %c0_i32_1 = arith.constant 0 : i32
    %c0_i32_2 = arith.constant 0 : i32
    return %arg0, %c0_i32, %c0_i32_0, %c0_i32_1 : i32, i32, i32, i32
  }
  func.func @transform_1(%arg0: i32) -> (i32, i32) {
    %c0_i32 = arith.constant 0 : i32
    %c0_i32_0 = arith.constant 0 : i32
    %c0_i32_1 = arith.constant 0 : i32
    return %c0_i32, %c0_i32_0 : i32, i32
  }
  func.func @transform_2(%arg0: i32) -> (i32, i32) {
    %c0_i32 = arith.constant 0 : i32
    %c0_i32_0 = arith.constant 0 : i32
    %c0_i32_1 = arith.constant 0 : i32
    return %c0_i32, %c0_i32_0 : i32, i32
  }
  func.func @transform_3(%arg0: i32) -> (i32, i32) {
    %c0_i32 = arith.constant 0 : i32
    %c0_i32_0 = arith.constant 0 : i32
    %c0_i32_1 = arith.constant 0 : i32
    return %c0_i32, %c0_i32_0 : i32, i32
  }
  func.func @transform_4(%arg0: i32) -> (i32, i32) {
    %c0_i32 = arith.constant 0 : i32
    %c0_i32_0 = arith.constant 0 : i32
    %c0_i32_1 = arith.constant 0 : i32
    return %c0_i32, %c0_i32_0 : i32, i32
  }
  func.func @transform_5(%arg0: i32) -> (i32, i32) {
    %c0_i32 = arith.constant 0 : i32
    %c0_i32_0 = arith.constant 0 : i32
    %c0_i32_1 = arith.constant 0 : i32
    return %c0_i32, %c0_i32_0 : i32, i32
  }
  func.func @transform_6(%arg0: i32) -> (i32, i32) {
    %c0_i32 = arith.constant 0 : i32
    %c0_i32_0 = arith.constant 0 : i32
    %c0_i32_1 = arith.constant 0 : i32
    return %c0_i32, %c0_i32_0 : i32, i32
  }
  func.func @transform_7(%arg0: i32) -> (i32, i32) {
    %c0_i32 = arith.constant 0 : i32
    %c0_i32_0 = arith.constant 0 : i32
    %c0_i32_1 = arith.constant 0 : i32
    return %c0_i32, %c0_i32_0 : i32, i32
  }
  func.func @transform_8(%arg0: i32) -> (i32, i32) {
    %c0_i32 = arith.constant 0 : i32
    %c0_i32_0 = arith.constant 0 : i32
    %c0_i32_1 = arith.constant 0 : i32
    return %c0_i32, %c0_i32_0 : i32, i32
  }
  func.func @transform_9(%arg0: i32) -> (i32, i32) {
    %c0_i32 = arith.constant 0 : i32
    %c0_i32_0 = arith.constant 0 : i32
    %c0_i32_1 = arith.constant 0 : i32
    return %c0_i32, %c0_i32_0 : i32, i32
  }
  func.func @transform_10(%arg0: i32) -> (i32, i32) {
    %c0_i32 = arith.constant 0 : i32
    %c0_i32_0 = arith.constant 0 : i32
    %c0_i32_1 = arith.constant 0 : i32
    return %c0_i32, %c0_i32_0 : i32, i32
  }
  func.func @transform_11(%arg0: i32) -> (i32, i32) {
    %c0_i32 = arith.constant 0 : i32
    %c0_i32_0 = arith.constant 0 : i32
    %c0_i32_1 = arith.constant 0 : i32
    return %c0_i32, %c0_i32_0 : i32, i32
  }
  func.func @transform_12(%arg0: i32) -> (i32, i32) {
    %c0_i32 = arith.constant 0 : i32
    %c0_i32_0 = arith.constant 0 : i32
    %c0_i32_1 = arith.constant 0 : i32
    return %c0_i32, %c0_i32_0 : i32, i32
  }
  func.func @transform_13(%arg0: i32) -> (i32, i32, i32) {
    %c0_i32 = arith.constant 0 : i32
    %c0_i32_0 = arith.constant 0 : i32
    %c0_i32_1 = arith.constant 0 : i32
    return %arg0, %c0_i32, %c0_i32_0 : i32, i32, i32
  }
}

</mosaic_0001>

<llo_original>
// kernel: shallow2d_forward.1
$region0: #{shallow2d_forward.1}
  #allocation0 [shape = 'u32[]', space=smem, size = 0x4, offset = 0x4, fixed_abs, tag = 'smem constant byte address 0x4 - core index']
  #allocation1 [shape = 'u32[72,128]{1,0:T(1,128)}', space=vmem, size = 0x9000, scoped, tag = 'internal scratch']
  #allocation2 [shape = 'bf16[20,16,20]{2,1,0:T(8,128)(2,1)}', space=vmem, size = 0x14000, scoped, tag = 'scratch operand']
  #allocation3 [shape = 'bf16[16,16,640]{2,1,0:T(8,128)(2,1)}', space=vmem, size = 0x50000, scoped, tag = 'scratch operand']
  %s0 = inlined_call_operand.vmem [shape: bf16[2,20,20,4], index: 0, kind: input, shape index: {}]
  %s1 = inlined_call_operand.vmem [shape: bf16[100,128], index: 1, kind: input, shape index: {}]
  %s2 = inlined_call_operand.vmem [shape: f32[1,128], index: 2, kind: input, shape index: {}]
  %s3 = inlined_call_operand.vmem [shape: f32[1,128], index: 3, kind: input, shape index: {}]
  %s4 = inlined_call_operand.vmem [shape: f32[1,128], index: 4, kind: input, shape index: {}]
  %s5 = inlined_call_operand.hbm [shape: bf16[3200,128], index: 5, kind: input, shape index: {}]
  %s6 = inlined_call_operand.vmem [shape: f32[1,128], index: 6, kind: input, shape index: {}]
  %s7 = inlined_call_operand.vmem [shape: f32[1,128], index: 7, kind: input, shape index: {}]
  %s8 = inlined_call_operand.vmem [shape: f32[1,128], index: 8, kind: input, shape index: {}]
  %s9 = inlined_call_operand.vmem [shape: bf16[512,128], index: 9, kind: input, shape index: {}]
  %s10 = inlined_call_operand.vmem [shape: f32[1,128], index: 10, kind: input, shape index: {}]
  %s11 = inlined_call_operand.vmem [shape: bf16[128,10], index: 11, kind: input, shape index: {}]
  %s12 = inlined_call_operand.vmem [shape: f32[1,10], index: 12, kind: input, shape index: {}]
  %s13 = inlined_call_operand.hbm [shape: f32[2,1,10], index: 13, kind: output, shape index: {}]
  %s14 = sld [smem:[#allocation0]]
  $region89: #{shallow2d_forward.1} parent=0
    _
  %s16 = ssub.s32 1, %s14
  %s17 = scalar_select 0, %s16, %s14
  $region1: #{shallow2d_forward.1} parent=0
    #allocation4 [shape = 'u8[819200]{0}', space=vmem, size = 0xc8000, scoped, tag = 'input window, operand 5, single buffered']
    #allocation5 [shape = 's32[2]{0}', space=sflag, size = 0x8, scoped, tag = 'scoped memory for shallow2d_forward.1']
    #allocation6 [shape = 's32[2]{0}', space=sflag, size = 0x8, scoped, tag = 'scoped memory for shallow2d_forward.1']
    #allocation7 [shape = 'u8[1024]{0}', space=vmem, size = 0x400, scoped, tag = 'output window, operand 0']
    %18 = vsyncpa [#allocation5], 0
    %19 = vsyncpa [#allocation6], 0
    %s20 = scalar_lea.sflag [#allocation6], 1
    %21 = vsyncpa %s20, 0
    loop: start=0, step=1, limit=4
    $region2: #{shallow2d_forward.1} parent=1 // loop_pre_header
      _
    $region3: #{shallow2d_forward.1} parent=1 // loop_header
      %s23 = sphi 0, %s27
      %p24 = scmp.ge.s32.totalorder %s23, 4
      %s33 = sphi 0, %s35
      %s36 = sphi 0, %s33
      %s37 = sphi 0, %s36
      %s53 = sphi 0, %s37
      %s57 = sphi 0, %s57
      %s59 = sphi 0, %s57
      %s60 = sphi 0, %s59
      %s74 = sphi 0, %s60
      %s78 = sphi 0, %s78
      %s80 = sphi 0, %s78
      %s81 = sphi 0, %s80
      %s95 = sphi 0, %s81
      %s99 = sphi 0, %s99
      %s101 = sphi 0, %s99
      %s102 = sphi 0, %s101
      %s116 = sphi 0, %s102
      %s120 = sphi 0, %s120
      %s122 = sphi 0, %s120
      %s123 = sphi 0, %s122
      %s137 = sphi 0, %s123
      %s141 = sphi 0, %s141
      %s143 = sphi 0, %s141
      %s144 = sphi 0, %s143
      %s158 = sphi 0, %s144
      %s162 = sphi 0, %s162
      %s164 = sphi 0, %s162
      %s165 = sphi 0, %s164
      %s179 = sphi 0, %s165
      %s183 = sphi 0, %s183
      %s185 = sphi 0, %s183
      %s186 = sphi 0, %s185
      %s200 = sphi 0, %s186
      %s204 = sphi 0, %s204
      %s206 = sphi 0, %s204
      %s207 = sphi 0, %s206
      %s221 = sphi 0, %s207
      %s225 = sphi 0, %s225
      %s227 = sphi 0, %s225
      %s228 = sphi 0, %s227
      %s242 = sphi 0, %s228
      %s246 = sphi 0, %s246
      %s248 = sphi 0, %s246
      %s249 = sphi 0, %s248
      %s263 = sphi 0, %s249
      %s267 = sphi 0, %s267
      %s269 = sphi 0, %s267
      %s270 = sphi 0, %s269
      %s284 = sphi 0, %s270
      %s288 = sphi 0, %s288
      %s290 = sphi 0, %s288
      %s291 = sphi 0, %s290
      %s305 = sphi 0, %s291
      %s311 = sphi 0, %s313
      %s314 = sphi 0, %s311
      %s315 = sphi 0, %s314
      %s331 = sphi 0, %s315
    $region4: #{shallow2d_forward.1} parent=1 // loop_header_branch
      %26 = sbr.rel (%p24) target = $region8
    $region5: #{shallow2d_forward.1} parent=1 // loop_body
      %s28 = ssub.s32 %s23, 1
      %s29 = ssub.s32 %s23, 2
      %s30 = sadd.s32 %s23, 1
      %s31 = ssub.s32 %s23, %s30
      %p32 = scmp.eq.s32.totalorder %s31, 0
      %s34 = sadd.s32 %s33, 1
      %s35 = scalar_select %p32, %s33, %s34
      %p38 = pneg %p32
      %p39 = scmp.eq.s32.totalorder %s23, 1
      %p40 = por %p38, %p39
      %p41 = scmp.ne.s32.totalorder %s33, %s36
      %p42 = scmp.eq.s32.totalorder %s23, 0
      %p43 = por %p41, %p42
      %p44 = scmp.ne.s32.totalorder %s33, %s36
      %p45 = scmp.eq.s32.totalorder %s28, 1
      %p46 = por %p44, %p45
      %p47 = scmp.ne.s32.totalorder %s36, %s37
      %p48 = scmp.eq.s32.totalorder %s28, 0
      %p49 = por %p47, %p48
      %p50 = scmp.ne.s32.totalorder %s36, %s37
      %p51 = scmp.eq.s32.totalorder %s29, 1
      %p52 = por %p50, %p51
      %p54 = scmp.ne.s32.totalorder %s37, %s53
      %p55 = scmp.eq.s32.totalorder %s29, 0
      %p56 = por %p54, %p55
      %s58 = sadd.s32 %s57, 1
      %p61 = scmp.eq.s32.totalorder %s23, 1
      %p62 = scmp.ne.s32.totalorder %s57, %s59
      %p63 = scmp.eq.s32.totalorder %s23, 0
      %p64 = por %p62, %p63
      %p65 = scmp.ne.s32.totalorder %s57, %s59
      %p66 = scmp.eq.s32.totalorder %s28, 1
      %p67 = por %p65, %p66
      %p68 = scmp.ne.s32.totalorder %s59, %s60
      %p69 = scmp.eq.s32.totalorder %s28, 0
      %p70 = por %p68, %p69
      %p71 = scmp.ne.s32.totalorder %s59, %s60
      %p72 = scmp.eq.s32.totalorder %s29, 1
      %p73 = por %p71, %p72
      %p75 = scmp.ne.s32.totalorder %s60, %s74
      %p76 = scmp.eq.s32.totalorder %s29, 0
      %p77 = por %p75, %p76
      %s79 = sadd.s32 %s78, 1
      %p82 = scmp.eq.s32.totalorder %s23, 1
      %p83 = scmp.ne.s32.totalorder %s78, %s80
      %p84 = scmp.eq.s32.totalorder %s23, 0
      %p85 = por %p83, %p84
      %p86 = scmp.ne.s32.totalorder %s78, %s80
      %p87 = scmp.eq.s32.totalorder %s28, 1
      %p88 = por %p86, %p87
      %p89 = scmp.ne.s32.totalorder %s80, %s81
      %p90 = scmp.eq.s32.totalorder %s28, 0
      %p91 = por %p89, %p90
      %p92 = scmp.ne.s32.totalorder %s80, %s81
      %p93 = scmp.eq.s32.totalorder %s29, 1
      %p94 = por %p92, %p93
      %p96 = scmp.ne.s32.totalorder %s81, %s95
      %p97 = scmp.eq.s32.totalorder %s29, 0
      %p98 = por %p96, %p97
      %s100 = sadd.s32 %s99, 1
      %p103 = scmp.eq.s32.totalorder %s23, 1
      %p104 = scmp.ne.s32.totalorder %s99, %s101
      %p105 = scmp.eq.s32.totalorder %s23, 0
      %p106 = por %p104, %p105
      %p107 = scmp.ne.s32.totalorder %s99, %s101
      %p108 = scmp.eq.s32.totalorder %s28, 1
      %p109 = por %p107, %p108
      %p110 = scmp.ne.s32.totalorder %s101, %s102
      %p111 = scmp.eq.s32.totalorder %s28, 0
      %p112 = por %p110, %p111
      %p113 = scmp.ne.s32.totalorder %s101, %s102
      %p114 = scmp.eq.s32.totalorder %s29, 1
      %p115 = por %p113, %p114
      %p117 = scmp.ne.s32.totalorder %s102, %s116
      %p118 = scmp.eq.s32.totalorder %s29, 0
      %p119 = por %p117, %p118
      %s121 = sadd.s32 %s120, 1
      %p124 = scmp.eq.s32.totalorder %s23, 1
      %p125 = scmp.ne.s32.totalorder %s120, %s122
      %p126 = scmp.eq.s32.totalorder %s23, 0
      %p127 = por %p125, %p126
      %p128 = scmp.ne.s32.totalorder %s120, %s122
      %p129 = scmp.eq.s32.totalorder %s28, 1
      %p130 = por %p128, %p129
      %p131 = scmp.ne.s32.totalorder %s122, %s123
      %p132 = scmp.eq.s32.totalorder %s28, 0
      %p133 = por %p131, %p132
      %p134 = scmp.ne.s32.totalorder %s122, %s123
      %p135 = scmp.eq.s32.totalorder %s29, 1
      %p136 = por %p134, %p135
      %p138 = scmp.ne.s32.totalorder %s123, %s137
      %p139 = scmp.eq.s32.totalorder %s29, 0
      %p140 = por %p138, %p139
      %s142 = sadd.s32 %s141, 1
      %p145 = scmp.eq.s32.totalorder %s23, 1
      %p146 = scmp.ne.s32.totalorder %s141, %s143
      %p147 = scmp.eq.s32.totalorder %s23, 0
      %p148 = por %p146, %p147
      %p149 = scmp.ne.s32.totalorder %s141, %s143
      %p150 = scmp.eq.s32.totalorder %s28, 1
      %p151 = por %p149, %p150
      %p152 = scmp.ne.s32.totalorder %s143, %s144
      %p153 = scmp.eq.s32.totalorder %s28, 0
      %p154 = por %p152, %p153
      %p155 = scmp.ne.s32.totalorder %s143, %s144
      %p156 = scmp.eq.s32.totalorder %s29, 1
      %p157 = por %p155, %p156
      %p159 = scmp.ne.s32.totalorder %s144, %s158
      %p160 = scmp.eq.s32.totalorder %s29, 0
      %p161 = por %p159, %p160
      %s163 = sadd.s32 %s162, 1
      %p166 = scmp.eq.s32.totalorder %s23, 1
      %p167 = scmp.ne.s32.totalorder %s162, %s164
      %p168 = scmp.eq.s32.totalorder %s23, 0
      %p169 = por %p167, %p168
      %p170 = scmp.ne.s32.totalorder %s162, %s164
      %p171 = scmp.eq.s32.totalorder %s28, 1
      %p172 = por %p170, %p171
      %p173 = scmp.ne.s32.totalorder %s164, %s165
      %p174 = scmp.eq.s32.totalorder %s28, 0
      %p175 = por %p173, %p174
      %p176 = scmp.ne.s32.totalorder %s164, %s165
      %p177 = scmp.eq.s32.totalorder %s29, 1
      %p178 = por %p176, %p177
      %p180 = scmp.ne.s32.totalorder %s165, %s179
      %p181 = scmp.eq.s32.totalorder %s29, 0
      %p182 = por %p180, %p181
      %s184 = sadd.s32 %s183, 1
      %p187 = scmp.eq.s32.totalorder %s23, 1
      %p188 = scmp.ne.s32.totalorder %s183, %s185
      %p189 = scmp.eq.s32.totalorder %s23, 0
      %p190 = por %p188, %p189
      %p191 = scmp.ne.s32.totalorder %s183, %s185
      %p192 = scmp.eq.s32.totalorder %s28, 1
      %p193 = por %p191, %p192
      %p194 = scmp.ne.s32.totalorder %s185, %s186
      %p195 = scmp.eq.s32.totalorder %s28, 0
      %p196 = por %p194, %p195
      %p197 = scmp.ne.s32.totalorder %s185, %s186
      %p198 = scmp.eq.s32.totalorder %s29, 1
      %p199 = por %p197, %p198
      %p201 = scmp.ne.s32.totalorder %s186, %s200
      %p202 = scmp.eq.s32.totalorder %s29, 0
      %p203 = por %p201, %p202
      %s205 = sadd.s32 %s204, 1
      %p208 = scmp.eq.s32.totalorder %s23, 1
      %p209 = scmp.ne.s32.totalorder %s204, %s206
      %p210 = scmp.eq.s32.totalorder %s23, 0
      %p211 = por %p209, %p210
      %p212 = scmp.ne.s32.totalorder %s204, %s206
      %p213 = scmp.eq.s32.totalorder %s28, 1
      %p214 = por %p212, %p213
      %p215 = scmp.ne.s32.totalorder %s206, %s207
      %p216 = scmp.eq.s32.totalorder %s28, 0
      %p217 = por %p215, %p216
      %p218 = scmp.ne.s32.totalorder %s206, %s207
      %p219 = scmp.eq.s32.totalorder %s29, 1
      %p220 = por %p218, %p219
      %p222 = scmp.ne.s32.totalorder %s207, %s221
      %p223 = scmp.eq.s32.totalorder %s29, 0
      %p224 = por %p222, %p223
      %s226 = sadd.s32 %s225, 1
      %p229 = scmp.eq.s32.totalorder %s23, 1
      %p230 = scmp.ne.s32.totalorder %s225, %s227
      %p231 = scmp.eq.s32.totalorder %s23, 0
      %p232 = por %p230, %p231
      %p233 = scmp.ne.s32.totalorder %s225, %s227
      %p234 = scmp.eq.s32.totalorder %s28, 1
      %p235 = por %p233, %p234
      %p236 = scmp.ne.s32.totalorder %s227, %s228
      %p237 = scmp.eq.s32.totalorder %s28, 0
      %p238 = por %p236, %p237
      %p239 = scmp.ne.s32.totalorder %s227, %s228
      %p240 = scmp.eq.s32.totalorder %s29, 1
      %p241 = por %p239, %p240
      %p243 = scmp.ne.s32.totalorder %s228, %s242
      %p244 = scmp.eq.s32.totalorder %s29, 0
      %p245 = por %p243, %p244
      %s247 = sadd.s32 %s246, 1
      %p250 = scmp.eq.s32.totalorder %s23, 1
      %p251 = scmp.ne.s32.totalorder %s246, %s248
      %p252 = scmp.eq.s32.totalorder %s23, 0
      %p253 = por %p251, %p252
      %p254 = scmp.ne.s32.totalorder %s246, %s248
      %p255 = scmp.eq.s32.totalorder %s28, 1
      %p256 = por %p254, %p255
      %p257 = scmp.ne.s32.totalorder %s248, %s249
      %p258 = scmp.eq.s32.totalorder %s28, 0
      %p259 = por %p257, %p258
      %p260 = scmp.ne.s32.totalorder %s248, %s249
      %p261 = scmp.eq.s32.totalorder %s29, 1
      %p262 = por %p260, %p261
      %p264 = scmp.ne.s32.totalorder %s249, %s263
      %p265 = scmp.eq.s32.totalorder %s29, 0
      %p266 = por %p264, %p265
      %s268 = sadd.s32 %s267, 1
      %p271 = scmp.eq.s32.totalorder %s23, 1
      %p272 = scmp.ne.s32.totalorder %s267, %s269
      %p273 = scmp.eq.s32.totalorder %s23, 0
      %p274 = por %p272, %p273
      %p275 = scmp.ne.s32.totalorder %s267, %s269
      %p276 = scmp.eq.s32.totalorder %s28, 1
      %p277 = por %p275, %p276
      %p278 = scmp.ne.s32.totalorder %s269, %s270
      %p279 = scmp.eq.s32.totalorder %s28, 0
      %p280 = por %p278, %p279
      %p281 = scmp.ne.s32.totalorder %s269, %s270
      %p282 = scmp.eq.s32.totalorder %s29, 1
      %p283 = por %p281, %p282
      %p285 = scmp.ne.s32.totalorder %s270, %s284
      %p286 = scmp.eq.s32.totalorder %s29, 0
      %p287 = por %p285, %p286
      %s289 = sadd.s32 %s288, 1
      %p292 = scmp.eq.s32.totalorder %s23, 1
      %p293 = scmp.ne.s32.totalorder %s288, %s290
      %p294 = scmp.eq.s32.totalorder %s23, 0
      %p295 = por %p293, %p294
      %p296 = scmp.ne.s32.totalorder %s288, %s290
      %p297 = scmp.eq.s32.totalorder %s28, 1
      %p298 = por %p296, %p297
      %p299 = scmp.ne.s32.totalorder %s290, %s291
      %p300 = scmp.eq.s32.totalorder %s28, 0
      %p301 = por %p299, %p300
      %p302 = scmp.ne.s32.totalorder %s290, %s291
      %p303 = scmp.eq.s32.totalorder %s29, 1
      %p304 = por %p302, %p303
      %p306 = scmp.ne.s32.totalorder %s291, %s305
      %p307 = scmp.eq.s32.totalorder %s29, 0
      %p308 = por %p306, %p307
      %s309 = ssub.s32 %s23, %s30
      %p310 = scmp.eq.s32.totalorder %s309, 0
      %s312 = sadd.s32 %s311, 1
      %s313 = scalar_select %p310, %s311, %s312
      %p316 = pneg %p310
      %p317 = scmp.eq.s32.totalorder %s23, 1
      %p318 = por %p316, %p317
      %p319 = scmp.ne.s32.totalorder %s311, %s314
      %p320 = scmp.eq.s32.totalorder %s23, 0
      %p321 = por %p319, %p320
      %p322 = scmp.ne.s32.totalorder %s311, %s314
      %p323 = scmp.eq.s32.totalorder %s28, 1
      %p324 = por %p322, %p323
      %p325 = scmp.ne.s32.totalorder %s314, %s315
      %p326 = scmp.eq.s32.totalorder %s28, 0
      %p327 = por %p325, %p326
      %p328 = scmp.ne.s32.totalorder %s314, %s315
      %p329 = scmp.eq.s32.totalorder %s29, 1
      %p330 = por %p328, %p329
      %p332 = scmp.ne.s32.totalorder %s315, %s331
      %p333 = scmp.eq.s32.totalorder %s29, 0
      %p334 = por %p332, %p333
      %p335 = scmp.le.s32.totalorder 1, %s23
      %p336 = scmp.lt.s32.totalorder %s23, 3
      %p337 = pnand %p335, %p336
      %p338 = pneg %p337
      // Predicated region
      $region9: #{shallow2d_forward.1} parent=5 // pred_check
        _
      $region10: #{shallow2d_forward.1} parent=5 // pred_check_branch
        %340 = sbr.rel (%p337) target = $region12
      $region11: #{shallow2d_forward.1} parent=5 // pred_region
        %s341 = ssub.s32 %s23, 1
        // Predicated region
        $region13: #{shallow2d_forward.1} parent=11 // pred_check
          %p342 = pneg %p70
        $region14: #{shallow2d_forward.1} parent=11 // pred_check_branch
          %344 = sbr.rel (%p342) target = $region16
        $region15: #{shallow2d_forward.1} parent=11 // pred_region
          _
        $region16: #{shallow2d_forward.1} parent=11 // pred_fallthru
          _
        // Predicated region
        $region17: #{shallow2d_forward.1} parent=11 // pred_check
          %p345 = pneg %p91
        $region18: #{shallow2d_forward.1} parent=11 // pred_check_branch
          %347 = sbr.rel (%p345) target = $region20
        $region19: #{shallow2d_forward.1} parent=11 // pred_region
          _
        $region20: #{shallow2d_forward.1} parent=11 // pred_fallthru
          _
        // Predicated region
        $region21: #{shallow2d_forward.1} parent=11 // pred_check
          %p348 = pneg %p112
        $region22: #{shallow2d_forward.1} parent=11 // pred_check_branch
          %350 = sbr.rel (%p348) target = $region24
        $region23: #{shallow2d_forward.1} parent=11 // pred_region
          _
        $region24: #{shallow2d_forward.1} parent=11 // pred_fallthru
          _
        // Predicated region
        $region25: #{shallow2d_forward.1} parent=11 // pred_check
          %p351 = pneg %p133
        $region26: #{shallow2d_forward.1} parent=11 // pred_check_branch
          %353 = sbr.rel (%p351) target = $region28
        $region27: #{shallow2d_forward.1} parent=11 // pred_region
          _
        $region28: #{shallow2d_forward.1} parent=11 // pred_fallthru
          _
        // Predicated region
        $region29: #{shallow2d_forward.1} parent=11 // pred_check
          %p354 = pneg %p154
        $region30: #{shallow2d_forward.1} parent=11 // pred_check_branch
          %356 = sbr.rel (%p354) target = $region32
        $region31: #{shallow2d_forward.1} parent=11 // pred_region
          %358 = vsyncadd [#allocation5], 0
          %s359 = sshll.u32 %s5, 4
          %s360 = int_to_ptr.hbm [resolvable:$true] %s359
          %s361 = sshll.u32 [#allocation4], 4
          %s362 = int_to_ptr.vmem [resolvable:$true] %s361
          %367 = dma.hbm_to_vmem [thread:$0]  %s360, 25600, %s362, [#allocation5], 64, 64, 4
        $region32: #{shallow2d_forward.1} parent=11 // pred_fallthru
          _
        // Predicated region
        $region33: #{shallow2d_forward.1} parent=11 // pred_check
          %p368 = pneg %p175
        $region34: #{shallow2d_forward.1} parent=11 // pred_check_branch
          %370 = sbr.rel (%p368) target = $region36
        $region35: #{shallow2d_forward.1} parent=11 // pred_region
          _
        $region36: #{shallow2d_forward.1} parent=11 // pred_fallthru
          _
        // Predicated region
        $region37: #{shallow2d_forward.1} parent=11 // pred_check
          %p371 = pneg %p196
        $region38: #{shallow2d_forward.1} parent=11 // pred_check_branch
          %373 = sbr.rel (%p371) target = $region40
        $region39: #{shallow2d_forward.1} parent=11 // pred_region
          _
        $region40: #{shallow2d_forward.1} parent=11 // pred_fallthru
          _
        // Predicated region
        $region41: #{shallow2d_forward.1} parent=11 // pred_check
          %p374 = pneg %p217
        $region42: #{shallow2d_forward.1} parent=11 // pred_check_branch
          %376 = sbr.rel (%p374) target = $region44
        $region43: #{shallow2d_forward.1} parent=11 // pred_region
          _
        $region44: #{shallow2d_forward.1} parent=11 // pred_fallthru
          _
        // Predicated region
        $region45: #{shallow2d_forward.1} parent=11 // pred_check
          %p377 = pneg %p238
        $region46: #{shallow2d_forward.1} parent=11 // pred_check_branch
          %379 = sbr.rel (%p377) target = $region48
        $region47: #{shallow2d_forward.1} parent=11 // pred_region
          _
        $region48: #{shallow2d_forward.1} parent=11 // pred_fallthru
          _
        // Predicated region
        $region49: #{shallow2d_forward.1} parent=11 // pred_check
          %p380 = pneg %p259
        $region50: #{shallow2d_forward.1} parent=11 // pred_check_branch
          %382 = sbr.rel (%p380) target = $region52
        $region51: #{shallow2d_forward.1} parent=11 // pred_region
          _
        $region52: #{shallow2d_forward.1} parent=11 // pred_fallthru
          _
        // Predicated region
        $region53: #{shallow2d_forward.1} parent=11 // pred_check
          %p383 = pneg %p280
        $region54: #{shallow2d_forward.1} parent=11 // pred_check_branch
          %385 = sbr.rel (%p383) target = $region56
        $region55: #{shallow2d_forward.1} parent=11 // pred_region
          _
        $region56: #{shallow2d_forward.1} parent=11 // pred_fallthru
          _
        // Predicated region
        $region57: #{shallow2d_forward.1} parent=11 // pred_check
          %p386 = pneg %p301
        $region58: #{shallow2d_forward.1} parent=11 // pred_check_branch
          %388 = sbr.rel (%p386) target = $region60
        $region59: #{shallow2d_forward.1} parent=11 // pred_region
          _
        $region60: #{shallow2d_forward.1} parent=11 // pred_fallthru
          _
      $region12: #{shallow2d_forward.1} parent=5 // pred_fallthru
        _
      %p389 = scmp.lt.s32.totalorder %s23, 2
      // Predicated region
      $region61: #{shallow2d_forward.1} parent=5 // pred_check
        %p390 = pneg %p389
      $region62: #{shallow2d_forward.1} parent=5 // pred_check_branch
        %392 = sbr.rel (%p390) target = $region64
      $region63: #{shallow2d_forward.1} parent=5 // pred_region
        // Predicated region
        $region65: #{shallow2d_forward.1} parent=63 // pred_check
          %p393 = pneg %p43
        $region66: #{shallow2d_forward.1} parent=63 // pred_check_branch
          %395 = sbr.rel (%p393) target = $region68
        $region67: #{shallow2d_forward.1} parent=63 // pred_region
          %p396 = scmp.lt.s32.totalorder %s23, 1
          %s397 = scalar_select %p396, %s23, 1
          %s398 = smul.addr %s397, 60
          %s399 = smul.addr %s398, 4
          %s400 = scalar_lea.vmem %s0, %s399
        $region68: #{shallow2d_forward.1} parent=63 // pred_fallthru
          _
      $region64: #{shallow2d_forward.1} parent=5 // pred_fallthru
        _
      %p401 = scmp.le.s32.totalorder 1, %s23
      %p402 = scmp.lt.s32.totalorder %s23, 3
      %p403 = pnand %p401, %p402
      %p404 = pneg %p403
      // Predicated region
      $region69: #{shallow2d_forward.1} parent=5 // pred_check
        _
      $region70: #{shallow2d_forward.1} parent=5 // pred_check_branch
        %406 = sbr.rel (%p403) target = $region72
      $region71: #{shallow2d_forward.1} parent=5 // pred_region
        %s407 = ssub.s32 %s23, 1
        // Predicated region
        $region73: #{shallow2d_forward.1} parent=71 // pred_check
          %p408 = pneg %p154
        $region74: #{shallow2d_forward.1} parent=71 // pred_check_branch
          %410 = sbr.rel (%p408) target = $region76
        $region75: #{shallow2d_forward.1} parent=71 // pred_region
          %412 = dma.done [#allocation5], 25600
        $region76: #{shallow2d_forward.1} parent=71 // pred_fallthru
          _
        %p413 = scmp.lt.s32.totalorder %s28, 1
        %s414 = scalar_select %p413, %s28, 1
        %s415 = smul.addr %s414, 60
        %s416 = smul.addr %s415, 4
        %s417 = scalar_lea.vmem %s0, %s416
        %p418 = pneg %p49
        %p419 = pneg %p46
        %p420 = pneg %p70
        %p421 = pneg %p67
        %p422 = pneg %p91
        %p423 = pneg %p88
        %p424 = pneg %p112
        %p425 = pneg %p109
        %p426 = pneg %p133
        %p427 = pneg %p130
        %p428 = pneg %p154
        %p429 = pneg %p151
        %p430 = pneg %p175
        %p431 = pneg %p172
        %p432 = pneg %p196
        %p433 = pneg %p193
        %p434 = pneg %p217
        %p435 = pneg %p214
        %p436 = pneg %p238
        %p437 = pneg %p235
        %p438 = pneg %p259
        %p439 = pneg %p256
        %p440 = pneg %p280
        %p441 = pneg %p277
        %p442 = pneg %p301
        %p443 = pneg %p298
        %p444 = pneg %p327
        %p445 = pneg %p324
        %s446 = sand.u32 %s314, 1
        %s447 = scalar_lea.sflag [#allocation6], %s446
        %s448 = sand.u32 %s314, 1
        %s449 = scalar_lea.vmem [#allocation7], %s448
        %p450 = scmp.lt.s32.totalorder %s28, 1
        %s451 = scalar_select %p450, %s28, 1
        %s452 = smul.addr %s451, 60
        %s453 = smul.addr %s452, 4
        %s454 = scalar_lea.vmem %s0, %s453
        %v456 = vld [vmem:[%s454] sm:$0xf]
        %v457 = vld [vmem:[%s454 + $0x4] sm:$0xf]
        %v458 = vld [vmem:[%s454 + $0xc] sm:$0xf]
        %v459 = vld [vmem:[%s454 + $0x10] sm:$0xf]
        %v460 = vld [vmem:[%s454 + $0x18] sm:$0xf]
        %v461 = vld [vmem:[%s454 + $0x1c] sm:$0xf]
        %v462 = vld [vmem:[%s454 + $0x24] sm:$0xf]
        %v463 = vld [vmem:[%s454 + $0x28] sm:$0xf]
        %v464 = vld [vmem:[%s454 + $0x30] sm:$0xf]
        %v465 = vld [vmem:[%s454 + $0x34] sm:$0xf]
        %v466 = vld [vmem:[%s454 + $0x3c] sm:$0xf]
        %v467 = vld [vmem:[%s454 + $0x40] sm:$0xf]
        %v468 = vld [vmem:[%s454 + $0x48] sm:$0xf]
        %v469 = vld [vmem:[%s454 + $0x4c] sm:$0xf]
        %v470 = vld [vmem:[%s454 + $0x54] sm:$0xf]
        %v471 = vld [vmem:[%s454 + $0x58] sm:$0xf]
        %v472 = vld [vmem:[%s454 + $0x60] sm:$0xf]
        %v473 = vld [vmem:[%s454 + $0x64] sm:$0xf]
        %v474 = vld [vmem:[%s454 + $0x6c] sm:$0xf]
        %v475 = vld [vmem:[%s454 + $0x70] sm:$0xf]
        %v476 = vld [vmem:[%s454 + $0x78] sm:$0xf]
        %v477 = vld [vmem:[%s454 + $0x7c] sm:$0xf]
        %v478 = vld [vmem:[%s454 + $0x84] sm:$0xf]
        %v479 = vld [vmem:[%s454 + $0x88] sm:$0xf]
        %v480 = vld [vmem:[%s454 + $0x90] sm:$0xf]
        %v481 = vld [vmem:[%s454 + $0x94] sm:$0xf]
        %v482 = vld [vmem:[%s454 + $0x9c] sm:$0xf]
        %v483 = vld [vmem:[%s454 + $0xa0] sm:$0xf]
        %v484 = vld [vmem:[%s454 + $0xa8] sm:$0xf]
        %v485 = vld [vmem:[%s454 + $0xac] sm:$0xf]
        %v486 = vld [vmem:[%s454 + $0xb4] sm:$0xf]
        %v487 = vld [vmem:[%s454 + $0xb8] sm:$0xf]
        %v488 = vld [vmem:[%s454 + $0xc0] sm:$0xf]
        %v489 = vld [vmem:[%s454 + $0xc4] sm:$0xf]
        %v490 = vld [vmem:[%s454 + $0xcc] sm:$0xf]
        %v491 = vld [vmem:[%s454 + $0xd0] sm:$0xf]
        %v492 = vld [vmem:[%s454 + $0xd8] sm:$0xf]
        %v493 = vld [vmem:[%s454 + $0xdc] sm:$0xf]
        %v494 = vld [vmem:[%s454 + $0xe4] sm:$0xf]
        %v495 = vld [vmem:[%s454 + $0xe8] sm:$0xf]
        %vm496 = vcmask 27648
        %497 = vst.msk [vmem:[#allocation2] sm:$0xf] %vm496, %v456
        %498 = vst.msk [vmem:[#allocation2 + $0x4] sm:$0xf] %vm496, %v457
        %499 = vst.msk [vmem:[#allocation2 + $0x8] sm:$0xf] %vm496, %v458
        %500 = vst.msk [vmem:[#allocation2 + $0xc] sm:$0xf] %vm496, %v459
        %501 = vst.msk [vmem:[#allocation2 + $0x10] sm:$0xf] %vm496, %v460
        %502 = vst.msk [vmem:[#allocation2 + $0x14] sm:$0xf] %vm496, %v461
        %503 = vst.msk [vmem:[#allocation2 + $0x18] sm:$0xf] %vm496, %v462
        %504 = vst.msk [vmem:[#allocation2 + $0x1c] sm:$0xf] %vm496, %v463
        %505 = vst.msk [vmem:[#allocation2 + $0x20] sm:$0xf] %vm496, %v464
        %506 = vst.msk [vmem:[#allocation2 + $0x24] sm:$0xf] %vm496, %v465
        %507 = vst.msk [vmem:[#allocation2 + $0x28] sm:$0xf] %vm496, %v466
        %508 = vst.msk [vmem:[#allocation2 + $0x2c] sm:$0xf] %vm496, %v467
        %509 = vst.msk [vmem:[#allocation2 + $0x30] sm:$0xf] %vm496, %v468
        %510 = vst.msk [vmem:[#allocation2 + $0x34] sm:$0xf] %vm496, %v469
        %511 = vst.msk [vmem:[#allocation2 + $0x38] sm:$0xf] %vm496, %v470
        %512 = vst.msk [vmem:[#allocation2 + $0x3c] sm:$0xf] %vm496, %v471
        %513 = vst.msk [vmem:[#allocation2 + $0x40] sm:$0xf] %vm496, %v472
        %514 = vst.msk [vmem:[#allocation2 + $0x44] sm:$0xf] %vm496, %v473
        %515 = vst.msk [vmem:[#allocation2 + $0x48] sm:$0xf] %vm496, %v474
        %516 = vst.msk [vmem:[#allocation2 + $0x4c] sm:$0xf] %vm496, %v475
        %517 = vst.msk [vmem:[#allocation2 + $0x50] sm:$0xf] %vm496, %v476
        %518 = vst.msk [vmem:[#allocation2 + $0x54] sm:$0xf] %vm496, %v477
        %519 = vst.msk [vmem:[#allocation2 + $0x58] sm:$0xf] %vm496, %v478
        %520 = vst.msk [vmem:[#allocation2 + $0x5c] sm:$0xf] %vm496, %v479
        %521 = vst.msk [vmem:[#allocation2 + $0x60] sm:$0xf] %vm496, %v480
        %522 = vst.msk [vmem:[#allocation2 + $0x64] sm:$0xf] %vm496, %v481
        %523 = vst.msk [vmem:[#allocation2 + $0x68] sm:$0xf] %vm496, %v482
        %524 = vst.msk [vmem:[#allocation2 + $0x6c] sm:$0xf] %vm496, %v483
        %525 = vst.msk [vmem:[#allocation2 + $0x70] sm:$0xf] %vm496, %v484
        %526 = vst.msk [vmem:[#allocation2 + $0x74] sm:$0xf] %vm496, %v485
        %527 = vst.msk [vmem:[#allocation2 + $0x78] sm:$0xf] %vm496, %v486
        %528 = vst.msk [vmem:[#allocation2 + $0x7c] sm:$0xf] %vm496, %v487
        %529 = vst.msk [vmem:[#allocation2 + $0x80] sm:$0xf] %vm496, %v488
        %530 = vst.msk [vmem:[#allocation2 + $0x84] sm:$0xf] %vm496, %v489
        %531 = vst.msk [vmem:[#allocation2 + $0x88] sm:$0xf] %vm496, %v490
        %532 = vst.msk [vmem:[#allocation2 + $0x8c] sm:$0xf] %vm496, %v491
        %533 = vst.msk [vmem:[#allocation2 + $0x90] sm:$0xf] %vm496, %v492
        %534 = vst.msk [vmem:[#allocation2 + $0x94] sm:$0xf] %vm496, %v493
        %535 = vst.msk [vmem:[#allocation2 + $0x98] sm:$0xf] %vm496, %v494
        %536 = vst.msk [vmem:[#allocation2 + $0x9c] sm:$0xf] %vm496, %v495
        %v537 = vld [vmem:[%s454] sm:$0xf]
        %v538 = vld [vmem:[%s454 + $0x4] sm:$0xf]
        %v539 = vld [vmem:[%s454 + $0x8] sm:$0x1]
        %v540 = vld [vmem:[%s454 + $0xc] sm:$0xf]
        %v541 = vld [vmem:[%s454 + $0x10] sm:$0xf]
        %v542 = vld [vmem:[%s454 + $0x14] sm:$0x1]
        %v543 = vld [vmem:[%s454 + $0x18] sm:$0xf]
        %v544 = vld [vmem:[%s454 + $0x1c] sm:$0xf]
        %v545 = vld [vmem:[%s454 + $0x20] sm:$0x1]
        %v546 = vld [vmem:[%s454 + $0x24] sm:$0xf]
        %v547 = vld [vmem:[%s454 + $0x28] sm:$0xf]
        %v548 = vld [vmem:[%s454 + $0x2c] sm:$0x1]
        %v549 = vld [vmem:[%s454 + $0x30] sm:$0xf]
        %v550 = vld [vmem:[%s454 + $0x34] sm:$0xf]
        %v551 = vld [vmem:[%s454 + $0x38] sm:$0x1]
        %v552 = vld [vmem:[%s454 + $0x3c] sm:$0xf]
        %v553 = vld [vmem:[%s454 + $0x40] sm:$0xf]
        %v554 = vld [vmem:[%s454 + $0x44] sm:$0x1]
        %v555 = vld [vmem:[%s454 + $0x48] sm:$0xf]
        %v556 = vld [vmem:[%s454 + $0x4c] sm:$0xf]
        %v557 = vld [vmem:[%s454 + $0x50] sm:$0x1]
        %v558 = vld [vmem:[%s454 + $0x54] sm:$0xf]
        %v559 = vld [vmem:[%s454 + $0x58] sm:$0xf]
        %v560 = vld [vmem:[%s454 + $0x5c] sm:$0x1]
        %v561 = vld [vmem:[%s454 + $0x60] sm:$0xf]
        %v562 = vld [vmem:[%s454 + $0x64] sm:$0xf]
        %v563 = vld [vmem:[%s454 + $0x68] sm:$0x1]
        %v564 = vld [vmem:[%s454 + $0x6c] sm:$0xf]
        %v565 = vld [vmem:[%s454 + $0x70] sm:$0xf]
        %v566 = vld [vmem:[%s454 + $0x74] sm:$0x1]
        %v567 = vld [vmem:[%s454 + $0x78] sm:$0xf]
        %v568 = vld [vmem:[%s454 + $0x7c] sm:$0xf]
        %v569 = vld [vmem:[%s454 + $0x80] sm:$0x1]
        %v570 = vld [vmem:[%s454 + $0x84] sm:$0xf]
        %v571 = vld [vmem:[%s454 + $0x88] sm:$0xf]
        %v572 = vld [vmem:[%s454 + $0x8c] sm:$0x1]
        %v573 = vld [vmem:[%s454 + $0x90] sm:$0xf]
        %v574 = vld [vmem:[%s454 + $0x94] sm:$0xf]
        %v575 = vld [vmem:[%s454 + $0x98] sm:$0x1]
        %v576 = vld [vmem:[%s454 + $0x9c] sm:$0xf]
        %v577 = vld [vmem:[%s454 + $0xa0] sm:$0xf]
        %v578 = vld [vmem:[%s454 + $0xa4] sm:$0x1]
        %v579 = vld [vmem:[%s454 + $0xa8] sm:$0xf]
        %v580 = vld [vmem:[%s454 + $0xac] sm:$0xf]
        %v581 = vld [vmem:[%s454 + $0xb0] sm:$0x1]
        %v582 = vld [vmem:[%s454 + $0xb4] sm:$0xf]
        %v583 = vld [vmem:[%s454 + $0xb8] sm:$0xf]
        %v584 = vld [vmem:[%s454 + $0xbc] sm:$0x1]
        %v585 = vld [vmem:[%s454 + $0xc0] sm:$0xf]
        %v586 = vld [vmem:[%s454 + $0xc4] sm:$0xf]
        %v587 = vld [vmem:[%s454 + $0xc8] sm:$0x1]
        %v588 = vld [vmem:[%s454 + $0xcc] sm:$0xf]
        %v589 = vld [vmem:[%s454 + $0xd0] sm:$0xf]
        %v590 = vld [vmem:[%s454 + $0xd4] sm:$0x1]
        %v591 = vld [vmem:[%s454 + $0xd8] sm:$0xf]
        %v592 = vld [vmem:[%s454 + $0xdc] sm:$0xf]
        %v593 = vld [vmem:[%s454 + $0xe0] sm:$0x1]
        %v594 = vld [vmem:[%s454 + $0xe4] sm:$0xf]
        %v595 = vld [vmem:[%s454 + $0xe8] sm:$0xf]
        %v596 = vld [vmem:[%s454 + $0xec] sm:$0x1]
        %vm597 = vsmask.f32 3328
        %vm598 = vsmask.f32 7440
        %vm599 = vmor %vm597, %vm598
        %v601 = vshrl.u32 %v537, 16
        %v603 = vrot.slane %v601, 4
        %v604 = vshll.u32 %v537, 16
        %v606 = vrot.slane %v604, 5
        %v607 = vor.u32 %v603, %v606
        %v608 = vrot.slane %v607, 4
        %v610 = vshll.u32 %v538, 16
        %v612 = vrot.slane %v610, 5
        %v613 = vsel %vm599, %v608, %v612
        %v614 = vshrl.u32 %v538, 16
        %v616 = vrot.slane %v614, 4
        %v617 = vor.u32 %v616, %v612
        %v618 = vrot.slane %v617, 4
        %v620 = vshll.u32 %v539, 16
        %v622 = vrot.slane %v620, 5
        %v623 = vsel %vm599, %v618, %v622
        %v625 = vshrl.u32 %v540, 16
        %v627 = vrot.slane %v625, 4
        %v628 = vshll.u32 %v540, 16
        %v630 = vrot.slane %v628, 5
        %v631 = vor.u32 %v627, %v630
        %v632 = vrot.slane %v631, 4
        %v634 = vshll.u32 %v541, 16
        %v636 = vrot.slane %v634, 5
        %v637 = vsel %vm599, %v632, %v636
        %v638 = vshrl.u32 %v541, 16
        %v640 = vrot.slane %v638, 4
        %v641 = vor.u32 %v640, %v636
        %v642 = vrot.slane %v641, 4
        %v644 = vshll.u32 %v542, 16
        %v646 = vrot.slane %v644, 5
        %v647 = vsel %vm599, %v642, %v646
        %v649 = vshrl.u32 %v543, 16
        %v651 = vrot.slane %v649, 4
        %v652 = vshll.u32 %v543, 16
        %v654 = vrot.slane %v652, 5
        %v655 = vor.u32 %v651, %v654
        %v656 = vrot.slane %v655, 4
        %v658 = vshll.u32 %v544, 16
        %v660 = vrot.slane %v658, 5
        %v661 = vsel %vm599, %v656, %v660
        %v662 = vshrl.u32 %v544, 16
        %v664 = vrot.slane %v662, 4
        %v665 = vor.u32 %v664, %v660
        %v666 = vrot.slane %v665, 4
        %v668 = vshll.u32 %v545, 16
        %v670 = vrot.slane %v668, 5
        %v671 = vsel %vm599, %v666, %v670
        %v673 = vshrl.u32 %v546, 16
        %v675 = vrot.slane %v673, 4
        %v676 = vshll.u32 %v546, 16
        %v678 = vrot.slane %v676, 5
        %v679 = vor.u32 %v675, %v678
        %v680 = vrot.slane %v679, 4
        %v682 = vshll.u32 %v547, 16
        %v684 = vrot.slane %v682, 5
        %v685 = vsel %vm599, %v680, %v684
        %v686 = vshrl.u32 %v547, 16
        %v688 = vrot.slane %v686, 4
        %v689 = vor.u32 %v688, %v684
        %v690 = vrot.slane %v689, 4
        %v692 = vshll.u32 %v548, 16
        %v694 = vrot.slane %v692, 5
        %v695 = vsel %vm599, %v690, %v694
        %v697 = vshrl.u32 %v549, 16
        %v699 = vrot.slane %v697, 4
        %v700 = vshll.u32 %v549, 16
        %v702 = vrot.slane %v700, 5
        %v703 = vor.u32 %v699, %v702
        %v704 = vrot.slane %v703, 4
        %v706 = vshll.u32 %v550, 16
        %v708 = vrot.slane %v706, 5
        %v709 = vsel %vm599, %v704, %v708
        %v710 = vshrl.u32 %v550, 16
        %v712 = vrot.slane %v710, 4
        %v713 = vor.u32 %v712, %v708
        %v714 = vrot.slane %v713, 4
        %v716 = vshll.u32 %v551, 16
        %v718 = vrot.slane %v716, 5
        %v719 = vsel %vm599, %v714, %v718
        %v721 = vshrl.u32 %v552, 16
        %v723 = vrot.slane %v721, 4
        %v724 = vshll.u32 %v552, 16
        %v726 = vrot.slane %v724, 5
        %v727 = vor.u32 %v723, %v726
        %v728 = vrot.slane %v727, 4
        %v730 = vshll.u32 %v553, 16
        %v732 = vrot.slane %v730, 5
        %v733 = vsel %vm599, %v728, %v732
        %v734 = vshrl.u32 %v553, 16
        %v736 = vrot.slane %v734, 4
        %v737 = vor.u32 %v736, %v732
        %v738 = vrot.slane %v737, 4
        %v740 = vshll.u32 %v554, 16
        %v742 = vrot.slane %v740, 5
        %v743 = vsel %vm599, %v738, %v742
        %v745 = vshrl.u32 %v555, 16
        %v747 = vrot.slane %v745, 4
        %v748 = vshll.u32 %v555, 16
        %v750 = vrot.slane %v748, 5
        %v751 = vor.u32 %v747, %v750
        %v752 = vrot.slane %v751, 4
        %v754 = vshll.u32 %v556, 16
        %v756 = vrot.slane %v754, 5
        %v757 = vsel %vm599, %v752, %v756
        %v758 = vshrl.u32 %v556, 16
        %v760 = vrot.slane %v758, 4
        %v761 = vor.u32 %v760, %v756
        %v762 = vrot.slane %v761, 4
        %v764 = vshll.u32 %v557, 16
        %v766 = vrot.slane %v764, 5
        %v767 = vsel %vm599, %v762, %v766
        %v769 = vshrl.u32 %v558, 16
        %v771 = vrot.slane %v769, 4
        %v772 = vshll.u32 %v558, 16
        %v774 = vrot.slane %v772, 5
        %v775 = vor.u32 %v771, %v774
        %v776 = vrot.slane %v775, 4
        %v778 = vshll.u32 %v559, 16
        %v780 = vrot.slane %v778, 5
        %v781 = vsel %vm599, %v776, %v780
        %v782 = vshrl.u32 %v559, 16
        %v784 = vrot.slane %v782, 4
        %v785 = vor.u32 %v784, %v780
        %v786 = vrot.slane %v785, 4
        %v788 = vshll.u32 %v560, 16
        %v790 = vrot.slane %v788, 5
        %v791 = vsel %vm599, %v786, %v790
        %v793 = vshrl.u32 %v561, 16
        %v795 = vrot.slane %v793, 4
        %v796 = vshll.u32 %v561, 16
        %v798 = vrot.slane %v796, 5
        %v799 = vor.u32 %v795, %v798
        %v800 = vrot.slane %v799, 4
        %v802 = vshll.u32 %v562, 16
        %v804 = vrot.slane %v802, 5
        %v805 = vsel %vm599, %v800, %v804
        %v806 = vshrl.u32 %v562, 16
        %v808 = vrot.slane %v806, 4
        %v809 = vor.u32 %v808, %v804
        %v810 = vrot.slane %v809, 4
        %v812 = vshll.u32 %v563, 16
        %v814 = vrot.slane %v812, 5
        %v815 = vsel %vm599, %v810, %v814
        %v817 = vshrl.u32 %v564, 16
        %v819 = vrot.slane %v817, 4
        %v820 = vshll.u32 %v564, 16
        %v822 = vrot.slane %v820, 5
        %v823 = vor.u32 %v819, %v822
        %v824 = vrot.slane %v823, 4
        %v826 = vshll.u32 %v565, 16
        %v828 = vrot.slane %v826, 5
        %v829 = vsel %vm599, %v824, %v828
        %v830 = vshrl.u32 %v565, 16
        %v832 = vrot.slane %v830, 4
        %v833 = vor.u32 %v832, %v828
        %v834 = vrot.slane %v833, 4
        %v836 = vshll.u32 %v566, 16
        %v838 = vrot.slane %v836, 5
        %v839 = vsel %vm599, %v834, %v838
        %v841 = vshrl.u32 %v567, 16
        %v843 = vrot.slane %v841, 4
        %v844 = vshll.u32 %v567, 16
        %v846 = vrot.slane %v844, 5
        %v847 = vor.u32 %v843, %v846
        %v848 = vrot.slane %v847, 4
        %v850 = vshll.u32 %v568, 16
        %v852 = vrot.slane %v850, 5
        %v853 = vsel %vm599, %v848, %v852
        %v854 = vshrl.u32 %v568, 16
        %v856 = vrot.slane %v854, 4
        %v857 = vor.u32 %v856, %v852
        %v858 = vrot.slane %v857, 4
        %v860 = vshll.u32 %v569, 16
        %v862 = vrot.slane %v860, 5
        %v863 = vsel %vm599, %v858, %v862
        %v865 = vshrl.u32 %v570, 16
        %v867 = vrot.slane %v865, 4
        %v868 = vshll.u32 %v570, 16
        %v870 = vrot.slane %v868, 5
        %v871 = vor.u32 %v867, %v870
        %v872 = vrot.slane %v871, 4
        %v874 = vshll.u32 %v571, 16
        %v876 = vrot.slane %v874, 5
        %v877 = vsel %vm599, %v872, %v876
        %v878 = vshrl.u32 %v571, 16
        %v880 = vrot.slane %v878, 4
        %v881 = vor.u32 %v880, %v876
        %v882 = vrot.slane %v881, 4
        %v884 = vshll.u32 %v572, 16
        %v886 = vrot.slane %v884, 5
        %v887 = vsel %vm599, %v882, %v886
        %v889 = vshrl.u32 %v573, 16
        %v891 = vrot.slane %v889, 4
        %v892 = vshll.u32 %v573, 16
        %v894 = vrot.slane %v892, 5
        %v895 = vor.u32 %v891, %v894
        %v896 = vrot.slane %v895, 4
        %v898 = vshll.u32 %v574, 16
        %v900 = vrot.slane %v898, 5
        %v901 = vsel %vm599, %v896, %v900
        %v902 = vshrl.u32 %v574, 16
        %v904 = vrot.slane %v902, 4
        %v905 = vor.u32 %v904, %v900
        %v906 = vrot.slane %v905, 4
        %v908 = vshll.u32 %v575, 16
        %v910 = vrot.slane %v908, 5
        %v911 = vsel %vm599, %v906, %v910
        %v913 = vshrl.u32 %v576, 16
        %v915 = vrot.slane %v913, 4
        %v916 = vshll.u32 %v576, 16
        %v918 = vrot.slane %v916, 5
        %v919 = vor.u32 %v915, %v918
        %v920 = vrot.slane %v919, 4
        %v922 = vshll.u32 %v577, 16
        %v924 = vrot.slane %v922, 5
        %v925 = vsel %vm599, %v920, %v924
        %v926 = vshrl.u32 %v577, 16
        %v928 = vrot.slane %v926, 4
        %v929 = vor.u32 %v928, %v924
        %v930 = vrot.slane %v929, 4
        %v932 = vshll.u32 %v578, 16
        %v934 = vrot.slane %v932, 5
        %v935 = vsel %vm599, %v930, %v934
        %v937 = vshrl.u32 %v579, 16
        %v939 = vrot.slane %v937, 4
        %v940 = vshll.u32 %v579, 16
        %v942 = vrot.slane %v940, 5
        %v943 = vor.u32 %v939, %v942
        %v944 = vrot.slane %v943, 4
        %v946 = vshll.u32 %v580, 16
        %v948 = vrot.slane %v946, 5
        %v949 = vsel %vm599, %v944, %v948
        %v950 = vshrl.u32 %v580, 16
        %v952 = vrot.slane %v950, 4
        %v953 = vor.u32 %v952, %v948
        %v954 = vrot.slane %v953, 4
        %v956 = vshll.u32 %v581, 16
        %v958 = vrot.slane %v956, 5
        %v959 = vsel %vm599, %v954, %v958
        %v961 = vshrl.u32 %v582, 16
        %v963 = vrot.slane %v961, 4
        %v964 = vshll.u32 %v582, 16
        %v966 = vrot.slane %v964, 5
        %v967 = vor.u32 %v963, %v966
        %v968 = vrot.slane %v967, 4
        %v970 = vshll.u32 %v583, 16
        %v972 = vrot.slane %v970, 5
        %v973 = vsel %vm599, %v968, %v972
        %v974 = vshrl.u32 %v583, 16
        %v976 = vrot.slane %v974, 4
        %v977 = vor.u32 %v976, %v972
        %v978 = vrot.slane %v977, 4
        %v980 = vshll.u32 %v584, 16
        %v982 = vrot.slane %v980, 5
        %v983 = vsel %vm599, %v978, %v982
        %v985 = vshrl.u32 %v585, 16
        %v987 = vrot.slane %v985, 4
        %v988 = vshll.u32 %v585, 16
        %v990 = vrot.slane %v988, 5
        %v991 = vor.u32 %v987, %v990
        %v992 = vrot.slane %v991, 4
        %v994 = vshll.u32 %v586, 16
        %v996 = vrot.slane %v994, 5
        %v997 = vsel %vm599, %v992, %v996
        %v998 = vshrl.u32 %v586, 16
        %v1000 = vrot.slane %v998, 4
        %v1001 = vor.u32 %v1000, %v996
        %v1002 = vrot.slane %v1001, 4
        %v1004 = vshll.u32 %v587, 16
        %v1006 = vrot.slane %v1004, 5
        %v1007 = vsel %vm599, %v1002, %v1006
        %v1009 = vshrl.u32 %v588, 16
        %v1011 = vrot.slane %v1009, 4
        %v1012 = vshll.u32 %v588, 16
        %v1014 = vrot.slane %v1012, 5
        %v1015 = vor.u32 %v1011, %v1014
        %v1016 = vrot.slane %v1015, 4
        %v1018 = vshll.u32 %v589, 16
        %v1020 = vrot.slane %v1018, 5
        %v1021 = vsel %vm599, %v1016, %v1020
        %v1022 = vshrl.u32 %v589, 16
        %v1024 = vrot.slane %v1022, 4
        %v1025 = vor.u32 %v1024, %v1020
        %v1026 = vrot.slane %v1025, 4
        %v1028 = vshll.u32 %v590, 16
        %v1030 = vrot.slane %v1028, 5
        %v1031 = vsel %vm599, %v1026, %v1030
        %v1033 = vshrl.u32 %v591, 16
        %v1035 = vrot.slane %v1033, 4
        %v1036 = vshll.u32 %v591, 16
        %v1038 = vrot.slane %v1036, 5
        %v1039 = vor.u32 %v1035, %v1038
        %v1040 = vrot.slane %v1039, 4
        %v1042 = vshll.u32 %v592, 16
        %v1044 = vrot.slane %v1042, 5
        %v1045 = vsel %vm599, %v1040, %v1044
        %v1046 = vshrl.u32 %v592, 16
        %v1048 = vrot.slane %v1046, 4
        %v1049 = vor.u32 %v1048, %v1044
        %v1050 = vrot.slane %v1049, 4
        %v1052 = vshll.u32 %v593, 16
        %v1054 = vrot.slane %v1052, 5
        %v1055 = vsel %vm599, %v1050, %v1054
        %v1057 = vshrl.u32 %v594, 16
        %v1059 = vrot.slane %v1057, 4
        %v1060 = vshll.u32 %v594, 16
        %v1062 = vrot.slane %v1060, 5
        %v1063 = vor.u32 %v1059, %v1062
        %v1064 = vrot.slane %v1063, 4
        %v1066 = vshll.u32 %v595, 16
        %v1068 = vrot.slane %v1066, 5
        %v1069 = vsel %vm599, %v1064, %v1068
        %v1070 = vshrl.u32 %v595, 16
        %v1072 = vrot.slane %v1070, 4
        %v1073 = vor.u32 %v1072, %v1068
        %v1074 = vrot.slane %v1073, 4
        %v1076 = vshll.u32 %v596, 16
        %v1078 = vrot.slane %v1076, 5
        %v1079 = vsel %vm599, %v1074, %v1078
        %1080 = vrot.lane.b32.xlu0 %v613, 4
        %v1081 = vpop.permute.xlu0 %1080
        %1082 = vrot.lane.b32.xlu0 %v623, 4
        %v1083 = vpop.permute.xlu0 %1082
        %1084 = vrot.lane.b32.xlu0 %v637, 4
        %v1085 = vpop.permute.xlu0 %1084
        %1086 = vrot.lane.b32.xlu0 %v647, 4
        %v1087 = vpop.permute.xlu0 %1086
        %1088 = vrot.lane.b32.xlu0 %v661, 4
        %v1089 = vpop.permute.xlu0 %1088
        %1090 = vrot.lane.b32.xlu0 %v671, 4
        %v1091 = vpop.permute.xlu0 %1090
        %1092 = vrot.lane.b32.xlu0 %v685, 4
        %v1093 = vpop.permute.xlu0 %1092
        %1094 = vrot.lane.b32.xlu0 %v695, 4
        %v1095 = vpop.permute.xlu0 %1094
        %1096 = vrot.lane.b32.xlu0 %v709, 4
        %v1097 = vpop.permute.xlu0 %1096
        %1098 = vrot.lane.b32.xlu0 %v719, 4
        %v1099 = vpop.permute.xlu0 %1098
        %1100 = vrot.lane.b32.xlu0 %v733, 4
        %v1101 = vpop.permute.xlu0 %1100
        %1102 = vrot.lane.b32.xlu0 %v743, 4
        %v1103 = vpop.permute.xlu0 %1102
        %1104 = vrot.lane.b32.xlu0 %v757, 4
        %v1105 = vpop.permute.xlu0 %1104
        %1106 = vrot.lane.b32.xlu0 %v767, 4
        %v1107 = vpop.permute.xlu0 %1106
        %1108 = vrot.lane.b32.xlu0 %v781, 4
        %v1109 = vpop.permute.xlu0 %1108
        %1110 = vrot.lane.b32.xlu0 %v791, 4
        %v1111 = vpop.permute.xlu0 %1110
        %1112 = vrot.lane.b32.xlu0 %v805, 4
        %v1113 = vpop.permute.xlu0 %1112
        %1114 = vrot.lane.b32.xlu0 %v815, 4
        %v1115 = vpop.permute.xlu0 %1114
        %1116 = vrot.lane.b32.xlu0 %v829, 4
        %v1117 = vpop.permute.xlu0 %1116
        %1118 = vrot.lane.b32.xlu0 %v839, 4
        %v1119 = vpop.permute.xlu0 %1118
        %1120 = vrot.lane.b32.xlu0 %v853, 4
        %v1121 = vpop.permute.xlu0 %1120
        %1122 = vrot.lane.b32.xlu0 %v863, 4
        %v1123 = vpop.permute.xlu0 %1122
        %1124 = vrot.lane.b32.xlu0 %v877, 4
        %v1125 = vpop.permute.xlu0 %1124
        %1126 = vrot.lane.b32.xlu0 %v887, 4
        %v1127 = vpop.permute.xlu0 %1126
        %1128 = vrot.lane.b32.xlu0 %v901, 4
        %v1129 = vpop.permute.xlu0 %1128
        %1130 = vrot.lane.b32.xlu0 %v911, 4
        %v1131 = vpop.permute.xlu0 %1130
        %1132 = vrot.lane.b32.xlu0 %v925, 4
        %v1133 = vpop.permute.xlu0 %1132
        %1134 = vrot.lane.b32.xlu0 %v935, 4
        %v1135 = vpop.permute.xlu0 %1134
        %1136 = vrot.lane.b32.xlu0 %v949, 4
        %v1137 = vpop.permute.xlu0 %1136
        %1138 = vrot.lane.b32.xlu0 %v959, 4
        %v1139 = vpop.permute.xlu0 %1138
        %1140 = vrot.lane.b32.xlu0 %v973, 4
        %v1141 = vpop.permute.xlu0 %1140
        %1142 = vrot.lane.b32.xlu0 %v983, 4
        %v1143 = vpop.permute.xlu0 %1142
        %1144 = vrot.lane.b32.xlu0 %v997, 4
        %v1145 = vpop.permute.xlu0 %1144
        %1146 = vrot.lane.b32.xlu0 %v1007, 4
        %v1147 = vpop.permute.xlu0 %1146
        %1148 = vrot.lane.b32.xlu0 %v1021, 4
        %v1149 = vpop.permute.xlu0 %1148
        %1150 = vrot.lane.b32.xlu0 %v1031, 4
        %v1151 = vpop.permute.xlu0 %1150
        %1152 = vrot.lane.b32.xlu0 %v1045, 4
        %v1153 = vpop.permute.xlu0 %1152
        %1154 = vrot.lane.b32.xlu0 %v1055, 4
        %v1155 = vpop.permute.xlu0 %1154
        %1156 = vrot.lane.b32.xlu0 %v1069, 4
        %v1157 = vpop.permute.xlu0 %1156
        %1158 = vrot.lane.b32.xlu0 %v1079, 4
        %v1159 = vpop.permute.xlu0 %1158
        %vm1200 = vcmask 60448
        %1201 = vst.msk [vmem:[#allocation2] sm:$0xf] %vm1200, %v1081
        %1202 = vst.msk [vmem:[#allocation2 + $0x4] sm:$0xf] %vm1200, %v1083
        %1203 = vst.msk [vmem:[#allocation2 + $0x8] sm:$0xf] %vm1200, %v1085
        %1204 = vst.msk [vmem:[#allocation2 + $0xc] sm:$0xf] %vm1200, %v1087
        %1205 = vst.msk [vmem:[#allocation2 + $0x10] sm:$0xf] %vm1200, %v1089
        %1206 = vst.msk [vmem:[#allocation2 + $0x14] sm:$0xf] %vm1200, %v1091
        %1207 = vst.msk [vmem:[#allocation2 + $0x18] sm:$0xf] %vm1200, %v1093
        %1208 = vst.msk [vmem:[#allocation2 + $0x1c] sm:$0xf] %vm1200, %v1095
        %1209 = vst.msk [vmem:[#allocation2 + $0x20] sm:$0xf] %vm1200, %v1097
        %1210 = vst.msk [vmem:[#allocation2 + $0x24] sm:$0xf] %vm1200, %v1099
        %1211 = vst.msk [vmem:[#allocation2 + $0x28] sm:$0xf] %vm1200, %v1101
        %1212 = vst.msk [vmem:[#allocation2 + $0x2c] sm:$0xf] %vm1200, %v1103
        %1213 = vst.msk [vmem:[#allocation2 + $0x30] sm:$0xf] %vm1200, %v1105
        %1214 = vst.msk [vmem:[#allocation2 + $0x34] sm:$0xf] %vm1200, %v1107
        %1215 = vst.msk [vmem:[#allocation2 + $0x38] sm:$0xf] %vm1200, %v1109
        %1216 = vst.msk [vmem:[#allocation2 + $0x3c] sm:$0xf] %vm1200, %v1111
        %1217 = vst.msk [vmem:[#allocation2 + $0x40] sm:$0xf] %vm1200, %v1113
        %1218 = vst.msk [vmem:[#allocation2 + $0x44] sm:$0xf] %vm1200, %v1115
        %1219 = vst.msk [vmem:[#allocation2 + $0x48] sm:$0xf] %vm1200, %v1117
        %1220 = vst.msk [vmem:[#allocation2 + $0x4c] sm:$0xf] %vm1200, %v1119
        %1221 = vst.msk [vmem:[#allocation2 + $0x50] sm:$0xf] %vm1200, %v1121
        %1222 = vst.msk [vmem:[#allocation2 + $0x54] sm:$0xf] %vm1200, %v1123
        %1223 = vst.msk [vmem:[#allocation2 + $0x58] sm:$0xf] %vm1200, %v1125
        %1224 = vst.msk [vmem:[#allocation2 + $0x5c] sm:$0xf] %vm1200, %v1127
        %1225 = vst.msk [vmem:[#allocation2 + $0x60] sm:$0xf] %vm1200, %v1129
        %1226 = vst.msk [vmem:[#allocation2 + $0x64] sm:$0xf] %vm1200, %v1131
        %1227 = vst.msk [vmem:[#allocation2 + $0x68] sm:$0xf] %vm1200, %v1133
        %1228 = vst.msk [vmem:[#allocation2 + $0x6c] sm:$0xf] %vm1200, %v1135
        %1229 = vst.msk [vmem:[#allocation2 + $0x70] sm:$0xf] %vm1200, %v1137
        %1230 = vst.msk [vmem:[#allocation2 + $0x74] sm:$0xf] %vm1200, %v1139
        %1231 = vst.msk [vmem:[#allocation2 + $0x78] sm:$0xf] %vm1200, %v1141
        %1232 = vst.msk [vmem:[#allocation2 + $0x7c] sm:$0xf] %vm1200, %v1143
        %1233 = vst.msk [vmem:[#allocation2 + $0x80] sm:$0xf] %vm1200, %v1145
        %1234 = vst.msk [vmem:[#allocation2 + $0x84] sm:$0xf] %vm1200, %v1147
        %1235 = vst.msk [vmem:[#allocation2 + $0x88] sm:$0xf] %vm1200, %v1149
        %1236 = vst.msk [vmem:[#allocation2 + $0x8c] sm:$0xf] %vm1200, %v1151
        %1237 = vst.msk [vmem:[#allocation2 + $0x90] sm:$0xf] %vm1200, %v1153
        %1238 = vst.msk [vmem:[#allocation2 + $0x94] sm:$0xf] %vm1200, %v1155
        %1239 = vst.msk [vmem:[#allocation2 + $0x98] sm:$0xf] %vm1200, %v1157
        %1240 = vst.msk [vmem:[#allocation2 + $0x9c] sm:$0xf] %vm1200, %v1159
        %v1241 = vld [vmem:[%s454] sm:$0xe]
        %v1242 = vld [vmem:[%s454 + $0x4] sm:$0xf]
        %v1243 = vld [vmem:[%s454 + $0x8] sm:$0x1]
        %v1244 = vld [vmem:[%s454 + $0xc] sm:$0xe]
        %v1245 = vld [vmem:[%s454 + $0x10] sm:$0xf]
        %v1246 = vld [vmem:[%s454 + $0x14] sm:$0x1]
        %v1247 = vld [vmem:[%s454 + $0x18] sm:$0xe]
        %v1248 = vld [vmem:[%s454 + $0x1c] sm:$0xf]
        %v1249 = vld [vmem:[%s454 + $0x20] sm:$0x1]
        %v1250 = vld [vmem:[%s454 + $0x24] sm:$0xe]
        %v1251 = vld [vmem:[%s454 + $0x28] sm:$0xf]
        %v1252 = vld [vmem:[%s454 + $0x2c] sm:$0x1]
        %v1253 = vld [vmem:[%s454 + $0x30] sm:$0xe]
        %v1254 = vld [vmem:[%s454 + $0x34] sm:$0xf]
        %v1255 = vld [vmem:[%s454 + $0x38] sm:$0x1]
        %v1256 = vld [vmem:[%s454 + $0x3c] sm:$0xe]
        %v1257 = vld [vmem:[%s454 + $0x40] sm:$0xf]
        %v1258 = vld [vmem:[%s454 + $0x44] sm:$0x1]
        %v1259 = vld [vmem:[%s454 + $0x48] sm:$0xe]
        %v1260 = vld [vmem:[%s454 + $0x4c] sm:$0xf]
        %v1261 = vld [vmem:[%s454 + $0x50] sm:$0x1]
        %v1262 = vld [vmem:[%s454 + $0x54] sm:$0xe]
        %v1263 = vld [vmem:[%s454 + $0x58] sm:$0xf]
        %v1264 = vld [vmem:[%s454 + $0x5c] sm:$0x1]
        %v1265 = vld [vmem:[%s454 + $0x60] sm:$0xe]
        %v1266 = vld [vmem:[%s454 + $0x64] sm:$0xf]
        %v1267 = vld [vmem:[%s454 + $0x68] sm:$0x1]
        %v1268 = vld [vmem:[%s454 + $0x6c] sm:$0xe]
        %v1269 = vld [vmem:[%s454 + $0x70] sm:$0xf]
        %v1270 = vld [vmem:[%s454 + $0x74] sm:$0x1]
        %v1271 = vld [vmem:[%s454 + $0x78] sm:$0xe]
        %v1272 = vld [vmem:[%s454 + $0x7c] sm:$0xf]
        %v1273 = vld [vmem:[%s454 + $0x80] sm:$0x1]
        %v1274 = vld [vmem:[%s454 + $0x84] sm:$0xe]
        %v1275 = vld [vmem:[%s454 + $0x88] sm:$0xf]
        %v1276 = vld [vmem:[%s454 + $0x8c] sm:$0x1]
        %v1277 = vld [vmem:[%s454 + $0x90] sm:$0xe]
        %v1278 = vld [vmem:[%s454 + $0x94] sm:$0xf]
        %v1279 = vld [vmem:[%s454 + $0x98] sm:$0x1]
        %v1280 = vld [vmem:[%s454 + $0x9c] sm:$0xe]
        %v1281 = vld [vmem:[%s454 + $0xa0] sm:$0xf]
        %v1282 = vld [vmem:[%s454 + $0xa4] sm:$0x1]
        %v1283 = vld [vmem:[%s454 + $0xa8] sm:$0xe]
        %v1284 = vld [vmem:[%s454 + $0xac] sm:$0xf]
        %v1285 = vld [vmem:[%s454 + $0xb0] sm:$0x1]
        %v1286 = vld [vmem:[%s454 + $0xb4] sm:$0xe]
        %v1287 = vld [vmem:[%s454 + $0xb8] sm:$0xf]
        %v1288 = vld [vmem:[%s454 + $0xbc] sm:$0x1]
        %v1289 = vld [vmem:[%s454 + $0xc0] sm:$0xe]
        %v1290 = vld [vmem:[%s454 + $0xc4] sm:$0xf]
        %v1291 = vld [vmem:[%s454 + $0xc8] sm:$0x1]
        %v1292 = vld [vmem:[%s454 + $0xcc] sm:$0xe]
        %v1293 = vld [vmem:[%s454 + $0xd0] sm:$0xf]
        %v1294 = vld [vmem:[%s454 + $0xd4] sm:$0x1]
        %v1295 = vld [vmem:[%s454 + $0xd8] sm:$0xe]
        %v1296 = vld [vmem:[%s454 + $0xdc] sm:$0xf]
        %v1297 = vld [vmem:[%s454 + $0xe0] sm:$0x1]
        %v1298 = vld [vmem:[%s454 + $0xe4] sm:$0xe]
        %v1299 = vld [vmem:[%s454 + $0xe8] sm:$0xf]
        %v1300 = vld [vmem:[%s454 + $0xec] sm:$0x1]
        %vm1361 = vcmask 1042432
        %vm1362 = vcmask 1046532
        %vm1363 = vmor %vm1361, %vm1362
        %v1364 = vrot.slane %v1241, 5
        %v1365 = vrot.slane %v1364, 4
        %v1366 = vrot.slane %v1242, 5
        %v1367 = vsel %vm1363, %v1365, %v1366
        %v1368 = vrot.slane %v1366, 4
        %v1369 = vrot.slane %v1243, 5
        %v1370 = vsel %vm1363, %v1368, %v1369
        %v1371 = vrot.slane %v1244, 5
        %v1372 = vrot.slane %v1371, 4
        %v1373 = vrot.slane %v1245, 5
        %v1374 = vsel %vm1363, %v1372, %v1373
        %v1375 = vrot.slane %v1373, 4
        %v1376 = vrot.slane %v1246, 5
        %v1377 = vsel %vm1363, %v1375, %v1376
        %v1378 = vrot.slane %v1247, 5
        %v1379 = vrot.slane %v1378, 4
        %v1380 = vrot.slane %v1248, 5
        %v1381 = vsel %vm1363, %v1379, %v1380
        %v1382 = vrot.slane %v1380, 4
        %v1383 = vrot.slane %v1249, 5
        %v1384 = vsel %vm1363, %v1382, %v1383
        %v1385 = vrot.slane %v1250, 5
        %v1386 = vrot.slane %v1385, 4
        %v1387 = vrot.slane %v1251, 5
        %v1388 = vsel %vm1363, %v1386, %v1387
        %v1389 = vrot.slane %v1387, 4
        %v1390 = vrot.slane %v1252, 5
        %v1391 = vsel %vm1363, %v1389, %v1390
        %v1392 = vrot.slane %v1253, 5
        %v1393 = vrot.slane %v1392, 4
        %v1394 = vrot.slane %v1254, 5
        %v1395 = vsel %vm1363, %v1393, %v1394
        %v1396 = vrot.slane %v1394, 4
        %v1397 = vrot.slane %v1255, 5
        %v1398 = vsel %vm1363, %v1396, %v1397
        %v1399 = vrot.slane %v1256, 5
        %v1400 = vrot.slane %v1399, 4
        %v1401 = vrot.slane %v1257, 5
        %v1402 = vsel %vm1363, %v1400, %v1401
        %v1403 = vrot.slane %v1401, 4
        %v1404 = vrot.slane %v1258, 5
        %v1405 = vsel %vm1363, %v1403, %v1404
        %v1406 = vrot.slane %v1259, 5
        %v1407 = vrot.slane %v1406, 4
        %v1408 = vrot.slane %v1260, 5
        %v1409 = vsel %vm1363, %v1407, %v1408
        %v1410 = vrot.slane %v1408, 4
        %v1411 = vrot.slane %v1261, 5
        %v1412 = vsel %vm1363, %v1410, %v1411
        %v1413 = vrot.slane %v1262, 5
        %v1414 = vrot.slane %v1413, 4
        %v1415 = vrot.slane %v1263, 5
        %v1416 = vsel %vm1363, %v1414, %v1415
        %v1417 = vrot.slane %v1415, 4
        %v1418 = vrot.slane %v1264, 5
        %v1419 = vsel %vm1363, %v1417, %v1418
        %v1420 = vrot.slane %v1265, 5
        %v1421 = vrot.slane %v1420, 4
        %v1422 = vrot.slane %v1266, 5
        %v1423 = vsel %vm1363, %v1421, %v1422
        %v1424 = vrot.slane %v1422, 4
        %v1425 = vrot.slane %v1267, 5
        %v1426 = vsel %vm1363, %v1424, %v1425
        %v1427 = vrot.slane %v1268, 5
        %v1428 = vrot.slane %v1427, 4
        %v1429 = vrot.slane %v1269, 5
        %v1430 = vsel %vm1363, %v1428, %v1429
        %v1431 = vrot.slane %v1429, 4
        %v1432 = vrot.slane %v1270, 5
        %v1433 = vsel %vm1363, %v1431, %v1432
        %v1434 = vrot.slane %v1271, 5
        %v1435 = vrot.slane %v1434, 4
        %v1436 = vrot.slane %v1272, 5
        %v1437 = vsel %vm1363, %v1435, %v1436
        %v1438 = vrot.slane %v1436, 4
        %v1439 = vrot.slane %v1273, 5
        %v1440 = vsel %vm1363, %v1438, %v1439
        %v1441 = vrot.slane %v1274, 5
        %v1442 = vrot.slane %v1441, 4
        %v1443 = vrot.slane %v1275, 5
        %v1444 = vsel %vm1363, %v1442, %v1443
        %v1445 = vrot.slane %v1443, 4
        %v1446 = vrot.slane %v1276, 5
        %v1447 = vsel %vm1363, %v1445, %v1446
        %v1448 = vrot.slane %v1277, 5
        %v1449 = vrot.slane %v1448, 4
        %v1450 = vrot.slane %v1278, 5
        %v1451 = vsel %vm1363, %v1449, %v1450
        %v1452 = vrot.slane %v1450, 4
        %v1453 = vrot.slane %v1279, 5
        %v1454 = vsel %vm1363, %v1452, %v1453
        %v1455 = vrot.slane %v1280, 5
        %v1456 = vrot.slane %v1455, 4
        %v1457 = vrot.slane %v1281, 5
        %v1458 = vsel %vm1363, %v1456, %v1457
        %v1459 = vrot.slane %v1457, 4
        %v1460 = vrot.slane %v1282, 5
        %v1461 = vsel %vm1363, %v1459, %v1460
        %v1462 = vrot.slane %v1283, 5
        %v1463 = vrot.slane %v1462, 4
        %v1464 = vrot.slane %v1284, 5
        %v1465 = vsel %vm1363, %v1463, %v1464
        %v1466 = vrot.slane %v1464, 4
        %v1467 = vrot.slane %v1285, 5
        %v1468 = vsel %vm1363, %v1466, %v1467
        %v1469 = vrot.slane %v1286, 5
        %v1470 = vrot.slane %v1469, 4
        %v1471 = vrot.slane %v1287, 5
        %v1472 = vsel %vm1363, %v1470, %v1471
        %v1473 = vrot.slane %v1471, 4
        %v1474 = vrot.slane %v1288, 5
        %v1475 = vsel %vm1363, %v1473, %v1474
        %v1476 = vrot.slane %v1289, 5
        %v1477 = vrot.slane %v1476, 4
        %v1478 = vrot.slane %v1290, 5
        %v1479 = vsel %vm1363, %v1477, %v1478
        %v1480 = vrot.slane %v1478, 4
        %v1481 = vrot.slane %v1291, 5
        %v1482 = vsel %vm1363, %v1480, %v1481
        %v1483 = vrot.slane %v1292, 5
        %v1484 = vrot.slane %v1483, 4
        %v1485 = vrot.slane %v1293, 5
        %v1486 = vsel %vm1363, %v1484, %v1485
        %v1487 = vrot.slane %v1485, 4
        %v1488 = vrot.slane %v1294, 5
        %v1489 = vsel %vm1363, %v1487, %v1488
        %v1490 = vrot.slane %v1295, 5
        %v1491 = vrot.slane %v1490, 4
        %v1492 = vrot.slane %v1296, 5
        %v1493 = vsel %vm1363, %v1491, %v1492
        %v1494 = vrot.slane %v1492, 4
        %v1495 = vrot.slane %v1297, 5
        %v1496 = vsel %vm1363, %v1494, %v1495
        %v1497 = vrot.slane %v1298, 5
        %v1498 = vrot.slane %v1497, 4
        %v1499 = vrot.slane %v1299, 5
        %v1500 = vsel %vm1363, %v1498, %v1499
        %v1501 = vrot.slane %v1499, 4
        %v1502 = vrot.slane %v1300, 5
        %v1503 = vsel %vm1363, %v1501, %v1502
        %1504 = vrot.lane.b32.xlu0 %v1367, 8
        %v1505 = vpop.permute.xlu0 %1504
        %1506 = vrot.lane.b32.xlu0 %v1370, 8
        %v1507 = vpop.permute.xlu0 %1506
        %1508 = vrot.lane.b32.xlu0 %v1374, 8
        %v1509 = vpop.permute.xlu0 %1508
        %1510 = vrot.lane.b32.xlu0 %v1377, 8
        %v1511 = vpop.permute.xlu0 %1510
        %1512 = vrot.lane.b32.xlu0 %v1381, 8
        %v1513 = vpop.permute.xlu0 %1512
        %1514 = vrot.lane.b32.xlu0 %v1384, 8
        %v1515 = vpop.permute.xlu0 %1514
        %1516 = vrot.lane.b32.xlu0 %v1388, 8
        %v1517 = vpop.permute.xlu0 %1516
        %1518 = vrot.lane.b32.xlu0 %v1391, 8
        %v1519 = vpop.permute.xlu0 %1518
        %1520 = vrot.lane.b32.xlu0 %v1395, 8
        %v1521 = vpop.permute.xlu0 %1520
        %1522 = vrot.lane.b32.xlu0 %v1398, 8
        %v1523 = vpop.permute.xlu0 %1522
        %1524 = vrot.lane.b32.xlu0 %v1402, 8
        %v1525 = vpop.permute.xlu0 %1524
        %1526 = vrot.lane.b32.xlu0 %v1405, 8
        %v1527 = vpop.permute.xlu0 %1526
        %1528 = vrot.lane.b32.xlu0 %v1409, 8
        %v1529 = vpop.permute.xlu0 %1528
        %1530 = vrot.lane.b32.xlu0 %v1412, 8
        %v1531 = vpop.permute.xlu0 %1530
        %1532 = vrot.lane.b32.xlu0 %v1416, 8
        %v1533 = vpop.permute.xlu0 %1532
        %1534 = vrot.lane.b32.xlu0 %v1419, 8
        %v1535 = vpop.permute.xlu0 %1534
        %1536 = vrot.lane.b32.xlu0 %v1423, 8
        %v1537 = vpop.permute.xlu0 %1536
        %1538 = vrot.lane.b32.xlu0 %v1426, 8
        %v1539 = vpop.permute.xlu0 %1538
        %1540 = vrot.lane.b32.xlu0 %v1430, 8
        %v1541 = vpop.permute.xlu0 %1540
        %1542 = vrot.lane.b32.xlu0 %v1433, 8
        %v1543 = vpop.permute.xlu0 %1542
        %1544 = vrot.lane.b32.xlu0 %v1437, 8
        %v1545 = vpop.permute.xlu0 %1544
        %1546 = vrot.lane.b32.xlu0 %v1440, 8
        %v1547 = vpop.permute.xlu0 %1546
        %1548 = vrot.lane.b32.xlu0 %v1444, 8
        %v1549 = vpop.permute.xlu0 %1548
        %1550 = vrot.lane.b32.xlu0 %v1447, 8
        %v1551 = vpop.permute.xlu0 %1550
        %1552 = vrot.lane.b32.xlu0 %v1451, 8
        %v1553 = vpop.permute.xlu0 %1552
        %1554 = vrot.lane.b32.xlu0 %v1454, 8
        %v1555 = vpop.permute.xlu0 %1554
        %1556 = vrot.lane.b32.xlu0 %v1458, 8
        %v1557 = vpop.permute.xlu0 %1556
        %1558 = vrot.lane.b32.xlu0 %v1461, 8
        %v1559 = vpop.permute.xlu0 %1558
        %1560 = vrot.lane.b32.xlu0 %v1465, 8
        %v1561 = vpop.permute.xlu0 %1560
        %1562 = vrot.lane.b32.xlu0 %v1468, 8
        %v1563 = vpop.permute.xlu0 %1562
        %1564 = vrot.lane.b32.xlu0 %v1472, 8
        %v1565 = vpop.permute.xlu0 %1564
        %1566 = vrot.lane.b32.xlu0 %v1475, 8
        %v1567 = vpop.permute.xlu0 %1566
        %1568 = vrot.lane.b32.xlu0 %v1479, 8
        %v1569 = vpop.permute.xlu0 %1568
        %1570 = vrot.lane.b32.xlu0 %v1482, 8
        %v1571 = vpop.permute.xlu0 %1570
        %1572 = vrot.lane.b32.xlu0 %v1486, 8
        %v1573 = vpop.permute.xlu0 %1572
        %1574 = vrot.lane.b32.xlu0 %v1489, 8
        %v1575 = vpop.permute.xlu0 %1574
        %1576 = vrot.lane.b32.xlu0 %v1493, 8
        %v1577 = vpop.permute.xlu0 %1576
        %1578 = vrot.lane.b32.xlu0 %v1496, 8
        %v1579 = vpop.permute.xlu0 %1578
        %1580 = vrot.lane.b32.xlu0 %v1500, 8
        %v1581 = vpop.permute.xlu0 %1580
        %1582 = vrot.lane.b32.xlu0 %v1503, 8
        %v1583 = vpop.permute.xlu0 %1582
        %vm1624 = vcmask 93248
        %1625 = vst.msk [vmem:[#allocation2] sm:$0xf] %vm1624, %v1505
        %1626 = vst.msk [vmem:[#allocation2 + $0x4] sm:$0xf] %vm1624, %v1507
        %1627 = vst.msk [vmem:[#allocation2 + $0x8] sm:$0xf] %vm1624, %v1509
        %1628 = vst.msk [vmem:[#allocation2 + $0xc] sm:$0xf] %vm1624, %v1511
        %1629 = vst.msk [vmem:[#allocation2 + $0x10] sm:$0xf] %vm1624, %v1513
        %1630 = vst.msk [vmem:[#allocation2 + $0x14] sm:$0xf] %vm1624, %v1515
        %1631 = vst.msk [vmem:[#allocation2 + $0x18] sm:$0xf] %vm1624, %v1517
        %1632 = vst.msk [vmem:[#allocation2 + $0x1c] sm:$0xf] %vm1624, %v1519
        %1633 = vst.msk [vmem:[#allocation2 + $0x20] sm:$0xf] %vm1624, %v1521
        %1634 = vst.msk [vmem:[#allocation2 + $0x24] sm:$0xf] %vm1624, %v1523
        %1635 = vst.msk [vmem:[#allocation2 + $0x28] sm:$0xf] %vm1624, %v1525
        %1636 = vst.msk [vmem:[#allocation2 + $0x2c] sm:$0xf] %vm1624, %v1527
        %1637 = vst.msk [vmem:[#allocation2 + $0x30] sm:$0xf] %vm1624, %v1529
        %1638 = vst.msk [vmem:[#allocation2 + $0x34] sm:$0xf] %vm1624, %v1531
        %1639 = vst.msk [vmem:[#allocation2 + $0x38] sm:$0xf] %vm1624, %v1533
        %1640 = vst.msk [vmem:[#allocation2 + $0x3c] sm:$0xf] %vm1624, %v1535
        %1641 = vst.msk [vmem:[#allocation2 + $0x40] sm:$0xf] %vm1624, %v1537
        %1642 = vst.msk [vmem:[#allocation2 + $0x44] sm:$0xf] %vm1624, %v1539
        %1643 = vst.msk [vmem:[#allocation2 + $0x48] sm:$0xf] %vm1624, %v1541
        %1644 = vst.msk [vmem:[#allocation2 + $0x4c] sm:$0xf] %vm1624, %v1543
        %1645 = vst.msk [vmem:[#allocation2 + $0x50] sm:$0xf] %vm1624, %v1545
        %1646 = vst.msk [vmem:[#allocation2 + $0x54] sm:$0xf] %vm1624, %v1547
        %1647 = vst.msk [vmem:[#allocation2 + $0x58] sm:$0xf] %vm1624, %v1549
        %1648 = vst.msk [vmem:[#allocation2 + $0x5c] sm:$0xf] %vm1624, %v1551
        %1649 = vst.msk [vmem:[#allocation2 + $0x60] sm:$0xf] %vm1624, %v1553
        %1650 = vst.msk [vmem:[#allocation2 + $0x64] sm:$0xf] %vm1624, %v1555
        %1651 = vst.msk [vmem:[#allocation2 + $0x68] sm:$0xf] %vm1624, %v1557
        %1652 = vst.msk [vmem:[#allocation2 + $0x6c] sm:$0xf] %vm1624, %v1559
        %1653 = vst.msk [vmem:[#allocation2 + $0x70] sm:$0xf] %vm1624, %v1561
        %1654 = vst.msk [vmem:[#allocation2 + $0x74] sm:$0xf] %vm1624, %v1563
        %1655 = vst.msk [vmem:[#allocation2 + $0x78] sm:$0xf] %vm1624, %v1565
        %1656 = vst.msk [vmem:[#allocation2 + $0x7c] sm:$0xf] %vm1624, %v1567
        %1657 = vst.msk [vmem:[#allocation2 + $0x80] sm:$0xf] %vm1624, %v1569
        %1658 = vst.msk [vmem:[#allocation2 + $0x84] sm:$0xf] %vm1624, %v1571
        %1659 = vst.msk [vmem:[#allocation2 + $0x88] sm:$0xf] %vm1624, %v1573
        %1660 = vst.msk [vmem:[#allocation2 + $0x8c] sm:$0xf] %vm1624, %v1575
        %1661 = vst.msk [vmem:[#allocation2 + $0x90] sm:$0xf] %vm1624, %v1577
        %1662 = vst.msk [vmem:[#allocation2 + $0x94] sm:$0xf] %vm1624, %v1579
        %1663 = vst.msk [vmem:[#allocation2 + $0x98] sm:$0xf] %vm1624, %v1581
        %1664 = vst.msk [vmem:[#allocation2 + $0x9c] sm:$0xf] %vm1624, %v1583
        %v1665 = vld [vmem:[%s454] sm:$0xe]
        %v1666 = vld [vmem:[%s454 + $0x4] sm:$0xf]
        %v1667 = vld [vmem:[%s454 + $0x8] sm:$0x3]
        %v1668 = vld [vmem:[%s454 + $0xc] sm:$0xe]
        %v1669 = vld [vmem:[%s454 + $0x10] sm:$0xf]
        %v1670 = vld [vmem:[%s454 + $0x14] sm:$0x3]
        %v1671 = vld [vmem:[%s454 + $0x18] sm:$0xe]
        %v1672 = vld [vmem:[%s454 + $0x1c] sm:$0xf]
        %v1673 = vld [vmem:[%s454 + $0x20] sm:$0x3]
        %v1674 = vld [vmem:[%s454 + $0x24] sm:$0xe]
        %v1675 = vld [vmem:[%s454 + $0x28] sm:$0xf]
        %v1676 = vld [vmem:[%s454 + $0x2c] sm:$0x3]
        %v1677 = vld [vmem:[%s454 + $0x30] sm:$0xe]
        %v1678 = vld [vmem:[%s454 + $0x34] sm:$0xf]
        %v1679 = vld [vmem:[%s454 + $0x38] sm:$0x3]
        %v1680 = vld [vmem:[%s454 + $0x3c] sm:$0xe]
        %v1681 = vld [vmem:[%s454 + $0x40] sm:$0xf]
        %v1682 = vld [vmem:[%s454 + $0x44] sm:$0x3]
        %v1683 = vld [vmem:[%s454 + $0x48] sm:$0xe]
        %v1684 = vld [vmem:[%s454 + $0x4c] sm:$0xf]
        %v1685 = vld [vmem:[%s454 + $0x50] sm:$0x3]
        %v1686 = vld [vmem:[%s454 + $0x54] sm:$0xe]
        %v1687 = vld [vmem:[%s454 + $0x58] sm:$0xf]
        %v1688 = vld [vmem:[%s454 + $0x5c] sm:$0x3]
        %v1689 = vld [vmem:[%s454 + $0x60] sm:$0xe]
        %v1690 = vld [vmem:[%s454 + $0x64] sm:$0xf]
        %v1691 = vld [vmem:[%s454 + $0x68] sm:$0x3]
        %v1692 = vld [vmem:[%s454 + $0x6c] sm:$0xe]
        %v1693 = vld [vmem:[%s454 + $0x70] sm:$0xf]
        %v1694 = vld [vmem:[%s454 + $0x74] sm:$0x3]
        %v1695 = vld [vmem:[%s454 + $0x78] sm:$0xe]
        %v1696 = vld [vmem:[%s454 + $0x7c] sm:$0xf]
        %v1697 = vld [vmem:[%s454 + $0x80] sm:$0x3]
        %v1698 = vld [vmem:[%s454 + $0x84] sm:$0xe]
        %v1699 = vld [vmem:[%s454 + $0x88] sm:$0xf]
        %v1700 = vld [vmem:[%s454 + $0x8c] sm:$0x3]
        %v1701 = vld [vmem:[%s454 + $0x90] sm:$0xe]
        %v1702 = vld [vmem:[%s454 + $0x94] sm:$0xf]
        %v1703 = vld [vmem:[%s454 + $0x98] sm:$0x3]
        %v1704 = vld [vmem:[%s454 + $0x9c] sm:$0xe]
        %v1705 = vld [vmem:[%s454 + $0xa0] sm:$0xf]
        %v1706 = vld [vmem:[%s454 + $0xa4] sm:$0x3]
        %v1707 = vld [vmem:[%s454 + $0xa8] sm:$0xe]
        %v1708 = vld [vmem:[%s454 + $0xac] sm:$0xf]
        %v1709 = vld [vmem:[%s454 + $0xb0] sm:$0x3]
        %v1710 = vld [vmem:[%s454 + $0xb4] sm:$0xe]
        %v1711 = vld [vmem:[%s454 + $0xb8] sm:$0xf]
        %v1712 = vld [vmem:[%s454 + $0xbc] sm:$0x3]
        %v1713 = vld [vmem:[%s454 + $0xc0] sm:$0xe]
        %v1714 = vld [vmem:[%s454 + $0xc4] sm:$0xf]
        %v1715 = vld [vmem:[%s454 + $0xc8] sm:$0x3]
        %v1716 = vld [vmem:[%s454 + $0xcc] sm:$0xe]
        %v1717 = vld [vmem:[%s454 + $0xd0] sm:$0xf]
        %v1718 = vld [vmem:[%s454 + $0xd4] sm:$0x3]
        %v1719 = vld [vmem:[%s454 + $0xd8] sm:$0xe]
        %v1720 = vld [vmem:[%s454 + $0xdc] sm:$0xf]
        %v1721 = vld [vmem:[%s454 + $0xe0] sm:$0x3]
        %v1722 = vld [vmem:[%s454 + $0xe4] sm:$0xe]
        %v1723 = vld [vmem:[%s454 + $0xe8] sm:$0xf]
        %v1724 = vld [vmem:[%s454 + $0xec] sm:$0x3]
        %vm1725 = vsmask.f32 2304
        %vm1726 = vsmask.f32 6416
        %vm1727 = vmor %vm1725, %vm1726
        %v1729 = vshrl.u32 %v1665, 16
        %v1731 = vrot.slane %v1729, 5
        %v1732 = vshll.u32 %v1665, 16
        %v1734 = vrot.slane %v1732, 6
        %v1735 = vor.u32 %v1731, %v1734
        %v1736 = vrot.slane %v1735, 4
        %v1738 = vshrl.u32 %v1666, 16
        %v1740 = vrot.slane %v1738, 5
        %v1741 = vshll.u32 %v1666, 16
        %v1743 = vrot.slane %v1741, 6
        %v1744 = vor.u32 %v1740, %v1743
        %v1745 = vsel %vm1727, %v1736, %v1744
        %v1746 = vrot.slane %v1744, 4
        %v1748 = vshrl.u32 %v1667, 16
        %v1750 = vrot.slane %v1748, 5
        %v1751 = vshll.u32 %v1667, 16
        %v1753 = vrot.slane %v1751, 6
        %v1754 = vor.u32 %v1750, %v1753
        %v1755 = vsel %vm1727, %v1746, %v1754
        %v1757 = vshrl.u32 %v1668, 16
        %v1759 = vrot.slane %v1757, 5
        %v1760 = vshll.u32 %v1668, 16
        %v1762 = vrot.slane %v1760, 6
        %v1763 = vor.u32 %v1759, %v1762
        %v1764 = vrot.slane %v1763, 4
        %v1766 = vshrl.u32 %v1669, 16
        %v1768 = vrot.slane %v1766, 5
        %v1769 = vshll.u32 %v1669, 16
        %v1771 = vrot.slane %v1769, 6
        %v1772 = vor.u32 %v1768, %v1771
        %v1773 = vsel %vm1727, %v1764, %v1772
        %v1774 = vrot.slane %v1772, 4
        %v1776 = vshrl.u32 %v1670, 16
        %v1778 = vrot.slane %v1776, 5
        %v1779 = vshll.u32 %v1670, 16
        %v1781 = vrot.slane %v1779, 6
        %v1782 = vor.u32 %v1778, %v1781
        %v1783 = vsel %vm1727, %v1774, %v1782
        %v1785 = vshrl.u32 %v1671, 16
        %v1787 = vrot.slane %v1785, 5
        %v1788 = vshll.u32 %v1671, 16
        %v1790 = vrot.slane %v1788, 6
        %v1791 = vor.u32 %v1787, %v1790
        %v1792 = vrot.slane %v1791, 4
        %v1794 = vshrl.u32 %v1672, 16
        %v1796 = vrot.slane %v1794, 5
        %v1797 = vshll.u32 %v1672, 16
        %v1799 = vrot.slane %v1797, 6
        %v1800 = vor.u32 %v1796, %v1799
        %v1801 = vsel %vm1727, %v1792, %v1800
        %v1802 = vrot.slane %v1800, 4
        %v1804 = vshrl.u32 %v1673, 16
        %v1806 = vrot.slane %v1804, 5
        %v1807 = vshll.u32 %v1673, 16
        %v1809 = vrot.slane %v1807, 6
        %v1810 = vor.u32 %v1806, %v1809
        %v1811 = vsel %vm1727, %v1802, %v1810
        %v1813 = vshrl.u32 %v1674, 16
        %v1815 = vrot.slane %v1813, 5
        %v1816 = vshll.u32 %v1674, 16
        %v1818 = vrot.slane %v1816, 6
        %v1819 = vor.u32 %v1815, %v1818
        %v1820 = vrot.slane %v1819, 4
        %v1822 = vshrl.u32 %v1675, 16
        %v1824 = vrot.slane %v1822, 5
        %v1825 = vshll.u32 %v1675, 16
        %v1827 = vrot.slane %v1825, 6
        %v1828 = vor.u32 %v1824, %v1827
        %v1829 = vsel %vm1727, %v1820, %v1828
        %v1830 = vrot.slane %v1828, 4
        %v1832 = vshrl.u32 %v1676, 16
        %v1834 = vrot.slane %v1832, 5
        %v1835 = vshll.u32 %v1676, 16
        %v1837 = vrot.slane %v1835, 6
        %v1838 = vor.u32 %v1834, %v1837
        %v1839 = vsel %vm1727, %v1830, %v1838
        %v1841 = vshrl.u32 %v1677, 16
        %v1843 = vrot.slane %v1841, 5
        %v1844 = vshll.u32 %v1677, 16
        %v1846 = vrot.slane %v1844, 6
        %v1847 = vor.u32 %v1843, %v1846
        %v1848 = vrot.slane %v1847, 4
        %v1850 = vshrl.u32 %v1678, 16
        %v1852 = vrot.slane %v1850, 5
        %v1853 = vshll.u32 %v1678, 16
        %v1855 = vrot.slane %v1853, 6
        %v1856 = vor.u32 %v1852, %v1855
        %v1857 = vsel %vm1727, %v1848, %v1856
        %v1858 = vrot.slane %v1856, 4
        %v1860 = vshrl.u32 %v1679, 16
        %v1862 = vrot.slane %v1860, 5
        %v1863 = vshll.u32 %v1679, 16
        %v1865 = vrot.slane %v1863, 6
        %v1866 = vor.u32 %v1862, %v1865
        %v1867 = vsel %vm1727, %v1858, %v1866
        %v1869 = vshrl.u32 %v1680, 16
        %v1871 = vrot.slane %v1869, 5
        %v1872 = vshll.u32 %v1680, 16
        %v1874 = vrot.slane %v1872, 6
        %v1875 = vor.u32 %v1871, %v1874
        %v1876 = vrot.slane %v1875, 4
        %v1878 = vshrl.u32 %v1681, 16
        %v1880 = vrot.slane %v1878, 5
        %v1881 = vshll.u32 %v1681, 16
        %v1883 = vrot.slane %v1881, 6
        %v1884 = vor.u32 %v1880, %v1883
        %v1885 = vsel %vm1727, %v1876, %v1884
        %v1886 = vrot.slane %v1884, 4
        %v1888 = vshrl.u32 %v1682, 16
        %v1890 = vrot.slane %v1888, 5
        %v1891 = vshll.u32 %v1682, 16
        %v1893 = vrot.slane %v1891, 6
        %v1894 = vor.u32 %v1890, %v1893
        %v1895 = vsel %vm1727, %v1886, %v1894
        %v1897 = vshrl.u32 %v1683, 16
        %v1899 = vrot.slane %v1897, 5
        %v1900 = vshll.u32 %v1683, 16
        %v1902 = vrot.slane %v1900, 6
        %v1903 = vor.u32 %v1899, %v1902
        %v1904 = vrot.slane %v1903, 4
        %v1906 = vshrl.u32 %v1684, 16
        %v1908 = vrot.slane %v1906, 5
        %v1909 = vshll.u32 %v1684, 16
        %v1911 = vrot.slane %v1909, 6
        %v1912 = vor.u32 %v1908, %v1911
        %v1913 = vsel %vm1727, %v1904, %v1912
        %v1914 = vrot.slane %v1912, 4
        %v1916 = vshrl.u32 %v1685, 16
        %v1918 = vrot.slane %v1916, 5
        %v1919 = vshll.u32 %v1685, 16
        %v1921 = vrot.slane %v1919, 6
        %v1922 = vor.u32 %v1918, %v1921
        %v1923 = vsel %vm1727, %v1914, %v1922
        %v1925 = vshrl.u32 %v1686, 16
        %v1927 = vrot.slane %v1925, 5
        %v1928 = vshll.u32 %v1686, 16
        %v1930 = vrot.slane %v1928, 6
        %v1931 = vor.u32 %v1927, %v1930
        %v1932 = vrot.slane %v1931, 4
        %v1934 = vshrl.u32 %v1687, 16
        %v1936 = vrot.slane %v1934, 5
        %v1937 = vshll.u32 %v1687, 16
        %v1939 = vrot.slane %v1937, 6
        %v1940 = vor.u32 %v1936, %v1939
        %v1941 = vsel %vm1727, %v1932, %v1940
        %v1942 = vrot.slane %v1940, 4
        %v1944 = vshrl.u32 %v1688, 16
        %v1946 = vrot.slane %v1944, 5
        %v1947 = vshll.u32 %v1688, 16
        %v1949 = vrot.slane %v1947, 6
        %v1950 = vor.u32 %v1946, %v1949
        %v1951 = vsel %vm1727, %v1942, %v1950
        %v1953 = vshrl.u32 %v1689, 16
        %v1955 = vrot.slane %v1953, 5
        %v1956 = vshll.u32 %v1689, 16
        %v1958 = vrot.slane %v1956, 6
        %v1959 = vor.u32 %v1955, %v1958
        %v1960 = vrot.slane %v1959, 4
        %v1962 = vshrl.u32 %v1690, 16
        %v1964 = vrot.slane %v1962, 5
        %v1965 = vshll.u32 %v1690, 16
        %v1967 = vrot.slane %v1965, 6
        %v1968 = vor.u32 %v1964, %v1967
        %v1969 = vsel %vm1727, %v1960, %v1968
        %v1970 = vrot.slane %v1968, 4
        %v1972 = vshrl.u32 %v1691, 16
        %v1974 = vrot.slane %v1972, 5
        %v1975 = vshll.u32 %v1691, 16
        %v1977 = vrot.slane %v1975, 6
        %v1978 = vor.u32 %v1974, %v1977
        %v1979 = vsel %vm1727, %v1970, %v1978
        %v1981 = vshrl.u32 %v1692, 16
        %v1983 = vrot.slane %v1981, 5
        %v1984 = vshll.u32 %v1692, 16
        %v1986 = vrot.slane %v1984, 6
        %v1987 = vor.u32 %v1983, %v1986
        %v1988 = vrot.slane %v1987, 4
        %v1990 = vshrl.u32 %v1693, 16
        %v1992 = vrot.slane %v1990, 5
        %v1993 = vshll.u32 %v1693, 16
        %v1995 = vrot.slane %v1993, 6
        %v1996 = vor.u32 %v1992, %v1995
        %v1997 = vsel %vm1727, %v1988, %v1996
        %v1998 = vrot.slane %v1996, 4
        %v2000 = vshrl.u32 %v1694, 16
        %v2002 = vrot.slane %v2000, 5
        %v2003 = vshll.u32 %v1694, 16
        %v2005 = vrot.slane %v2003, 6
        %v2006 = vor.u32 %v2002, %v2005
        %v2007 = vsel %vm1727, %v1998, %v2006
        %v2009 = vshrl.u32 %v1695, 16
        %v2011 = vrot.slane %v2009, 5
        %v2012 = vshll.u32 %v1695, 16
        %v2014 = vrot.slane %v2012, 6
        %v2015 = vor.u32 %v2011, %v2014
        %v2016 = vrot.slane %v2015, 4
        %v2018 = vshrl.u32 %v1696, 16
        %v2020 = vrot.slane %v2018, 5
        %v2021 = vshll.u32 %v1696, 16
        %v2023 = vrot.slane %v2021, 6
        %v2024 = vor.u32 %v2020, %v2023
        %v2025 = vsel %vm1727, %v2016, %v2024
        %v2026 = vrot.slane %v2024, 4
        %v2028 = vshrl.u32 %v1697, 16
        %v2030 = vrot.slane %v2028, 5
        %v2031 = vshll.u32 %v1697, 16
        %v2033 = vrot.slane %v2031, 6
        %v2034 = vor.u32 %v2030, %v2033
        %v2035 = vsel %vm1727, %v2026, %v2034
        %v2037 = vshrl.u32 %v1698, 16
        %v2039 = vrot.slane %v2037, 5
        %v2040 = vshll.u32 %v1698, 16
        %v2042 = vrot.slane %v2040, 6
        %v2043 = vor.u32 %v2039, %v2042
        %v2044 = vrot.slane %v2043, 4
        %v2046 = vshrl.u32 %v1699, 16
        %v2048 = vrot.slane %v2046, 5
        %v2049 = vshll.u32 %v1699, 16
        %v2051 = vrot.slane %v2049, 6
        %v2052 = vor.u32 %v2048, %v2051
        %v2053 = vsel %vm1727, %v2044, %v2052
        %v2054 = vrot.slane %v2052, 4
        %v2056 = vshrl.u32 %v1700, 16
        %v2058 = vrot.slane %v2056, 5
        %v2059 = vshll.u32 %v1700, 16
        %v2061 = vrot.slane %v2059, 6
        %v2062 = vor.u32 %v2058, %v2061
        %v2063 = vsel %vm1727, %v2054, %v2062
        %v2065 = vshrl.u32 %v1701, 16
        %v2067 = vrot.slane %v2065, 5
        %v2068 = vshll.u32 %v1701, 16
        %v2070 = vrot.slane %v2068, 6
        %v2071 = vor.u32 %v2067, %v2070
        %v2072 = vrot.slane %v2071, 4
        %v2074 = vshrl.u32 %v1702, 16
        %v2076 = vrot.slane %v2074, 5
        %v2077 = vshll.u32 %v1702, 16
        %v2079 = vrot.slane %v2077, 6
        %v2080 = vor.u32 %v2076, %v2079
        %v2081 = vsel %vm1727, %v2072, %v2080
        %v2082 = vrot.slane %v2080, 4
        %v2084 = vshrl.u32 %v1703, 16
        %v2086 = vrot.slane %v2084, 5
        %v2087 = vshll.u32 %v1703, 16
        %v2089 = vrot.slane %v2087, 6
        %v2090 = vor.u32 %v2086, %v2089
        %v2091 = vsel %vm1727, %v2082, %v2090
        %v2093 = vshrl.u32 %v1704, 16
        %v2095 = vrot.slane %v2093, 5
        %v2096 = vshll.u32 %v1704, 16
        %v2098 = vrot.slane %v2096, 6
        %v2099 = vor.u32 %v2095, %v2098
        %v2100 = vrot.slane %v2099, 4
        %v2102 = vshrl.u32 %v1705, 16
        %v2104 = vrot.slane %v2102, 5
        %v2105 = vshll.u32 %v1705, 16
        %v2107 = vrot.slane %v2105, 6
        %v2108 = vor.u32 %v2104, %v2107
        %v2109 = vsel %vm1727, %v2100, %v2108
        %v2110 = vrot.slane %v2108, 4
        %v2112 = vshrl.u32 %v1706, 16
        %v2114 = vrot.slane %v2112, 5
        %v2115 = vshll.u32 %v1706, 16
        %v2117 = vrot.slane %v2115, 6
        %v2118 = vor.u32 %v2114, %v2117
        %v2119 = vsel %vm1727, %v2110, %v2118
        %v2121 = vshrl.u32 %v1707, 16
        %v2123 = vrot.slane %v2121, 5
        %v2124 = vshll.u32 %v1707, 16
        %v2126 = vrot.slane %v2124, 6
        %v2127 = vor.u32 %v2123, %v2126
        %v2128 = vrot.slane %v2127, 4
        %v2130 = vshrl.u32 %v1708, 16
        %v2132 = vrot.slane %v2130, 5
        %v2133 = vshll.u32 %v1708, 16
        %v2135 = vrot.slane %v2133, 6
        %v2136 = vor.u32 %v2132, %v2135
        %v2137 = vsel %vm1727, %v2128, %v2136
        %v2138 = vrot.slane %v2136, 4
        %v2140 = vshrl.u32 %v1709, 16
        %v2142 = vrot.slane %v2140, 5
        %v2143 = vshll.u32 %v1709, 16
        %v2145 = vrot.slane %v2143, 6
        %v2146 = vor.u32 %v2142, %v2145
        %v2147 = vsel %vm1727, %v2138, %v2146
        %v2149 = vshrl.u32 %v1710, 16
        %v2151 = vrot.slane %v2149, 5
        %v2152 = vshll.u32 %v1710, 16
        %v2154 = vrot.slane %v2152, 6
        %v2155 = vor.u32 %v2151, %v2154
        %v2156 = vrot.slane %v2155, 4
        %v2158 = vshrl.u32 %v1711, 16
        %v2160 = vrot.slane %v2158, 5
        %v2161 = vshll.u32 %v1711, 16
        %v2163 = vrot.slane %v2161, 6
        %v2164 = vor.u32 %v2160, %v2163
        %v2165 = vsel %vm1727, %v2156, %v2164
        %v2166 = vrot.slane %v2164, 4
        %v2168 = vshrl.u32 %v1712, 16
        %v2170 = vrot.slane %v2168, 5
        %v2171 = vshll.u32 %v1712, 16
        %v2173 = vrot.slane %v2171, 6
        %v2174 = vor.u32 %v2170, %v2173
        %v2175 = vsel %vm1727, %v2166, %v2174
        %v2177 = vshrl.u32 %v1713, 16
        %v2179 = vrot.slane %v2177, 5
        %v2180 = vshll.u32 %v1713, 16
        %v2182 = vrot.slane %v2180, 6
        %v2183 = vor.u32 %v2179, %v2182
        %v2184 = vrot.slane %v2183, 4
        %v2186 = vshrl.u32 %v1714, 16
        %v2188 = vrot.slane %v2186, 5
        %v2189 = vshll.u32 %v1714, 16
        %v2191 = vrot.slane %v2189, 6
        %v2192 = vor.u32 %v2188, %v2191
        %v2193 = vsel %vm1727, %v2184, %v2192
        %v2194 = vrot.slane %v2192, 4
        %v2196 = vshrl.u32 %v1715, 16
        %v2198 = vrot.slane %v2196, 5
        %v2199 = vshll.u32 %v1715, 16
        %v2201 = vrot.slane %v2199, 6
        %v2202 = vor.u32 %v2198, %v2201
        %v2203 = vsel %vm1727, %v2194, %v2202
        %v2205 = vshrl.u32 %v1716, 16
        %v2207 = vrot.slane %v2205, 5
        %v2208 = vshll.u32 %v1716, 16
        %v2210 = vrot.slane %v2208, 6
        %v2211 = vor.u32 %v2207, %v2210
        %v2212 = vrot.slane %v2211, 4
        %v2214 = vshrl.u32 %v1717, 16
        %v2216 = vrot.slane %v2214, 5
        %v2217 = vshll.u32 %v1717, 16
        %v2219 = vrot.slane %v2217, 6
        %v2220 = vor.u32 %v2216, %v2219
        %v2221 = vsel %vm1727, %v2212, %v2220
        %v2222 = vrot.slane %v2220, 4
        %v2224 = vshrl.u32 %v1718, 16
        %v2226 = vrot.slane %v2224, 5
        %v2227 = vshll.u32 %v1718, 16
        %v2229 = vrot.slane %v2227, 6
        %v2230 = vor.u32 %v2226, %v2229
        %v2231 = vsel %vm1727, %v2222, %v2230
        %v2233 = vshrl.u32 %v1719, 16
        %v2235 = vrot.slane %v2233, 5
        %v2236 = vshll.u32 %v1719, 16
        %v2238 = vrot.slane %v2236, 6
        %v2239 = vor.u32 %v2235, %v2238
        %v2240 = vrot.slane %v2239, 4
        %v2242 = vshrl.u32 %v1720, 16
        %v2244 = vrot.slane %v2242, 5
        %v2245 = vshll.u32 %v1720, 16
        %v2247 = vrot.slane %v2245, 6
        %v2248 = vor.u32 %v2244, %v2247
        %v2249 = vsel %vm1727, %v2240, %v2248
        %v2250 = vrot.slane %v2248, 4
        %v2252 = vshrl.u32 %v1721, 16
        %v2254 = vrot.slane %v2252, 5
        %v2255 = vshll.u32 %v1721, 16
        %v2257 = vrot.slane %v2255, 6
        %v2258 = vor.u32 %v2254, %v2257
        %v2259 = vsel %vm1727, %v2250, %v2258
        %v2261 = vshrl.u32 %v1722, 16
        %v2263 = vrot.slane %v2261, 5
        %v2264 = vshll.u32 %v1722, 16
        %v2266 = vrot.slane %v2264, 6
        %v2267 = vor.u32 %v2263, %v2266
        %v2268 = vrot.slane %v2267, 4
        %v2270 = vshrl.u32 %v1723, 16
        %v2272 = vrot.slane %v2270, 5
        %v2273 = vshll.u32 %v1723, 16
        %v2275 = vrot.slane %v2273, 6
        %v2276 = vor.u32 %v2272, %v2275
        %v2277 = vsel %vm1727, %v2268, %v2276
        %v2278 = vrot.slane %v2276, 4
        %v2280 = vshrl.u32 %v1724, 16
        %v2282 = vrot.slane %v2280, 5
        %v2283 = vshll.u32 %v1724, 16
        %v2285 = vrot.slane %v2283, 6
        %v2286 = vor.u32 %v2282, %v2285
        %v2287 = vsel %vm1727, %v2278, %v2286
        %2288 = vrot.lane.b32.xlu0 %v1745, 12
        %v2289 = vpop.permute.xlu0 %2288
        %2290 = vrot.lane.b32.xlu0 %v1755, 12
        %v2291 = vpop.permute.xlu0 %2290
        %2292 = vrot.lane.b32.xlu0 %v1773, 12
        %v2293 = vpop.permute.xlu0 %2292
        %2294 = vrot.lane.b32.xlu0 %v1783, 12
        %v2295 = vpop.permute.xlu0 %2294
        %2296 = vrot.lane.b32.xlu0 %v1801, 12
        %v2297 = vpop.permute.xlu0 %2296
        %2298 = vrot.lane.b32.xlu0 %v1811, 12
        %v2299 = vpop.permute.xlu0 %2298
        %2300 = vrot.lane.b32.xlu0 %v1829, 12
        %v2301 = vpop.permute.xlu0 %2300
        %2302 = vrot.lane.b32.xlu0 %v1839, 12
        %v2303 = vpop.permute.xlu0 %2302
        %2304 = vrot.lane.b32.xlu0 %v1857, 12
        %v2305 = vpop.permute.xlu0 %2304
        %2306 = vrot.lane.b32.xlu0 %v1867, 12
        %v2307 = vpop.permute.xlu0 %2306
        %2308 = vrot.lane.b32.xlu0 %v1885, 12
        %v2309 = vpop.permute.xlu0 %2308
        %2310 = vrot.lane.b32.xlu0 %v1895, 12
        %v2311 = vpop.permute.xlu0 %2310
        %2312 = vrot.lane.b32.xlu0 %v1913, 12
        %v2313 = vpop.permute.xlu0 %2312
        %2314 = vrot.lane.b32.xlu0 %v1923, 12
        %v2315 = vpop.permute.xlu0 %2314
        %2316 = vrot.lane.b32.xlu0 %v1941, 12
        %v2317 = vpop.permute.xlu0 %2316
        %2318 = vrot.lane.b32.xlu0 %v1951, 12
        %v2319 = vpop.permute.xlu0 %2318
        %2320 = vrot.lane.b32.xlu0 %v1969, 12
        %v2321 = vpop.permute.xlu0 %2320
        %2322 = vrot.lane.b32.xlu0 %v1979, 12
        %v2323 = vpop.permute.xlu0 %2322
        %2324 = vrot.lane.b32.xlu0 %v1997, 12
        %v2325 = vpop.permute.xlu0 %2324
        %2326 = vrot.lane.b32.xlu0 %v2007, 12
        %v2327 = vpop.permute.xlu0 %2326
        %2328 = vrot.lane.b32.xlu0 %v2025, 12
        %v2329 = vpop.permute.xlu0 %2328
        %2330 = vrot.lane.b32.xlu0 %v2035, 12
        %v2331 = vpop.permute.xlu0 %2330
        %2332 = vrot.lane.b32.xlu0 %v2053, 12
        %v2333 = vpop.permute.xlu0 %2332
        %2334 = vrot.lane.b32.xlu0 %v2063, 12
        %v2335 = vpop.permute.xlu0 %2334
        %2336 = vrot.lane.b32.xlu0 %v2081, 12
        %v2337 = vpop.permute.xlu0 %2336
        %2338 = vrot.lane.b32.xlu0 %v2091, 12
        %v2339 = vpop.permute.xlu0 %2338
        %2340 = vrot.lane.b32.xlu0 %v2109, 12
        %v2341 = vpop.permute.xlu0 %2340
        %2342 = vrot.lane.b32.xlu0 %v2119, 12
        %v2343 = vpop.permute.xlu0 %2342
        %2344 = vrot.lane.b32.xlu0 %v2137, 12
        %v2345 = vpop.permute.xlu0 %2344
        %2346 = vrot.lane.b32.xlu0 %v2147, 12
        %v2347 = vpop.permute.xlu0 %2346
        %2348 = vrot.lane.b32.xlu0 %v2165, 12
        %v2349 = vpop.permute.xlu0 %2348
        %2350 = vrot.lane.b32.xlu0 %v2175, 12
        %v2351 = vpop.permute.xlu0 %2350
        %2352 = vrot.lane.b32.xlu0 %v2193, 12
        %v2353 = vpop.permute.xlu0 %2352
        %2354 = vrot.lane.b32.xlu0 %v2203, 12
        %v2355 = vpop.permute.xlu0 %2354
        %2356 = vrot.lane.b32.xlu0 %v2221, 12
        %v2357 = vpop.permute.xlu0 %2356
        %2358 = vrot.lane.b32.xlu0 %v2231, 12
        %v2359 = vpop.permute.xlu0 %2358
        %2360 = vrot.lane.b32.xlu0 %v2249, 12
        %v2361 = vpop.permute.xlu0 %2360
        %2362 = vrot.lane.b32.xlu0 %v2259, 12
        %v2363 = vpop.permute.xlu0 %2362
        %2364 = vrot.lane.b32.xlu0 %v2277, 12
        %v2365 = vpop.permute.xlu0 %2364
        %2366 = vrot.lane.b32.xlu0 %v2287, 12
        %v2367 = vpop.permute.xlu0 %2366
        %vm2408 = vcmask 126048
        %2409 = vst.msk [vmem:[#allocation2] sm:$0xf] %vm2408, %v2289
        %2410 = vst.msk [vmem:[#allocation2 + $0x4] sm:$0xf] %vm2408, %v2291
        %2411 = vst.msk [vmem:[#allocation2 + $0x8] sm:$0xf] %vm2408, %v2293
        %2412 = vst.msk [vmem:[#allocation2 + $0xc] sm:$0xf] %vm2408, %v2295
        %2413 = vst.msk [vmem:[#allocation2 + $0x10] sm:$0xf] %vm2408, %v2297
        %2414 = vst.msk [vmem:[#allocation2 + $0x14] sm:$0xf] %vm2408, %v2299
        %2415 = vst.msk [vmem:[#allocation2 + $0x18] sm:$0xf] %vm2408, %v2301
        %2416 = vst.msk [vmem:[#allocation2 + $0x1c] sm:$0xf] %vm2408, %v2303
        %2417 = vst.msk [vmem:[#allocation2 + $0x20] sm:$0xf] %vm2408, %v2305
        %2418 = vst.msk [vmem:[#allocation2 + $0x24] sm:$0xf] %vm2408, %v2307
        %2419 = vst.msk [vmem:[#allocation2 + $0x28] sm:$0xf] %vm2408, %v2309
        %2420 = vst.msk [vmem:[#allocation2 + $0x2c] sm:$0xf] %vm2408, %v2311
        %2421 = vst.msk [vmem:[#allocation2 + $0x30] sm:$0xf] %vm2408, %v2313
        %2422 = vst.msk [vmem:[#allocation2 + $0x34] sm:$0xf] %vm2408, %v2315
        %2423 = vst.msk [vmem:[#allocation2 + $0x38] sm:$0xf] %vm2408, %v2317
        %2424 = vst.msk [vmem:[#allocation2 + $0x3c] sm:$0xf] %vm2408, %v2319
        %2425 = vst.msk [vmem:[#allocation2 + $0x40] sm:$0xf] %vm2408, %v2321
        %2426 = vst.msk [vmem:[#allocation2 + $0x44] sm:$0xf] %vm2408, %v2323
        %2427 = vst.msk [vmem:[#allocation2 + $0x48] sm:$0xf] %vm2408, %v2325
        %2428 = vst.msk [vmem:[#allocation2 + $0x4c] sm:$0xf] %vm2408, %v2327
        %2429 = vst.msk [vmem:[#allocation2 + $0x50] sm:$0xf] %vm2408, %v2329
        %2430 = vst.msk [vmem:[#allocation2 + $0x54] sm:$0xf] %vm2408, %v2331
        %2431 = vst.msk [vmem:[#allocation2 + $0x58] sm:$0xf] %vm2408, %v2333
        %2432 = vst.msk [vmem:[#allocation2 + $0x5c] sm:$0xf] %vm2408, %v2335
        %2433 = vst.msk [vmem:[#allocation2 + $0x60] sm:$0xf] %vm2408, %v2337
        %2434 = vst.msk [vmem:[#allocation2 + $0x64] sm:$0xf] %vm2408, %v2339
        %2435 = vst.msk [vmem:[#allocation2 + $0x68] sm:$0xf] %vm2408, %v2341
        %2436 = vst.msk [vmem:[#allocation2 + $0x6c] sm:$0xf] %vm2408, %v2343
        %2437 = vst.msk [vmem:[#allocation2 + $0x70] sm:$0xf] %vm2408, %v2345
        %2438 = vst.msk [vmem:[#allocation2 + $0x74] sm:$0xf] %vm2408, %v2347
        %2439 = vst.msk [vmem:[#allocation2 + $0x78] sm:$0xf] %vm2408, %v2349
        %2440 = vst.msk [vmem:[#allocation2 + $0x7c] sm:$0xf] %vm2408, %v2351
        %2441 = vst.msk [vmem:[#allocation2 + $0x80] sm:$0xf] %vm2408, %v2353
        %2442 = vst.msk [vmem:[#allocation2 + $0x84] sm:$0xf] %vm2408, %v2355
        %2443 = vst.msk [vmem:[#allocation2 + $0x88] sm:$0xf] %vm2408, %v2357
        %2444 = vst.msk [vmem:[#allocation2 + $0x8c] sm:$0xf] %vm2408, %v2359
        %2445 = vst.msk [vmem:[#allocation2 + $0x90] sm:$0xf] %vm2408, %v2361
        %2446 = vst.msk [vmem:[#allocation2 + $0x94] sm:$0xf] %vm2408, %v2363
        %2447 = vst.msk [vmem:[#allocation2 + $0x98] sm:$0xf] %vm2408, %v2365
        %2448 = vst.msk [vmem:[#allocation2 + $0x9c] sm:$0xf] %vm2408, %v2367
        %v2449 = vld [vmem:[%s454] sm:$0xc]
        %v2450 = vld [vmem:[%s454 + $0x4] sm:$0xf]
        %v2451 = vld [vmem:[%s454 + $0x8] sm:$0x3]
        %v2452 = vld [vmem:[%s454 + $0xc] sm:$0xc]
        %v2453 = vld [vmem:[%s454 + $0x10] sm:$0xf]
        %v2454 = vld [vmem:[%s454 + $0x14] sm:$0x3]
        %v2455 = vld [vmem:[%s454 + $0x18] sm:$0xc]
        %v2456 = vld [vmem:[%s454 + $0x1c] sm:$0xf]
        %v2457 = vld [vmem:[%s454 + $0x20] sm:$0x3]
        %v2458 = vld [vmem:[%s454 + $0x24] sm:$0xc]
        %v2459 = vld [vmem:[%s454 + $0x28] sm:$0xf]
        %v2460 = vld [vmem:[%s454 + $0x2c] sm:$0x3]
        %v2461 = vld [vmem:[%s454 + $0x30] sm:$0xc]
        %v2462 = vld [vmem:[%s454 + $0x34] sm:$0xf]
        %v2463 = vld [vmem:[%s454 + $0x38] sm:$0x3]
        %v2464 = vld [vmem:[%s454 + $0x3c] sm:$0xc]
        %v2465 = vld [vmem:[%s454 + $0x40] sm:$0xf]
        %v2466 = vld [vmem:[%s454 + $0x44] sm:$0x3]
        %v2467 = vld [vmem:[%s454 + $0x48] sm:$0xc]
        %v2468 = vld [vmem:[%s454 + $0x4c] sm:$0xf]
        %v2469 = vld [vmem:[%s454 + $0x50] sm:$0x3]
        %v2470 = vld [vmem:[%s454 + $0x54] sm:$0xc]
        %v2471 = vld [vmem:[%s454 + $0x58] sm:$0xf]
        %v2472 = vld [vmem:[%s454 + $0x5c] sm:$0x3]
        %v2473 = vld [vmem:[%s454 + $0x60] sm:$0xc]
        %v2474 = vld [vmem:[%s454 + $0x64] sm:$0xf]
        %v2475 = vld [vmem:[%s454 + $0x68] sm:$0x3]
        %v2476 = vld [vmem:[%s454 + $0x6c] sm:$0xc]
        %v2477 = vld [vmem:[%s454 + $0x70] sm:$0xf]
        %v2478 = vld [vmem:[%s454 + $0x74] sm:$0x3]
        %v2479 = vld [vmem:[%s454 + $0x78] sm:$0xc]
        %v2480 = vld [vmem:[%s454 + $0x7c] sm:$0xf]
        %v2481 = vld [vmem:[%s454 + $0x80] sm:$0x3]
        %v2482 = vld [vmem:[%s454 + $0x84] sm:$0xc]
        %v2483 = vld [vmem:[%s454 + $0x88] sm:$0xf]
        %v2484 = vld [vmem:[%s454 + $0x8c] sm:$0x3]
        %v2485 = vld [vmem:[%s454 + $0x90] sm:$0xc]
        %v2486 = vld [vmem:[%s454 + $0x94] sm:$0xf]
        %v2487 = vld [vmem:[%s454 + $0x98] sm:$0x3]
        %v2488 = vld [vmem:[%s454 + $0x9c] sm:$0xc]
        %v2489 = vld [vmem:[%s454 + $0xa0] sm:$0xf]
        %v2490 = vld [vmem:[%s454 + $0xa4] sm:$0x3]
        %v2491 = vld [vmem:[%s454 + $0xa8] sm:$0xc]
        %v2492 = vld [vmem:[%s454 + $0xac] sm:$0xf]
        %v2493 = vld [vmem:[%s454 + $0xb0] sm:$0x3]
        %v2494 = vld [vmem:[%s454 + $0xb4] sm:$0xc]
        %v2495 = vld [vmem:[%s454 + $0xb8] sm:$0xf]
        %v2496 = vld [vmem:[%s454 + $0xbc] sm:$0x3]
        %v2497 = vld [vmem:[%s454 + $0xc0] sm:$0xc]
        %v2498 = vld [vmem:[%s454 + $0xc4] sm:$0xf]
        %v2499 = vld [vmem:[%s454 + $0xc8] sm:$0x3]
        %v2500 = vld [vmem:[%s454 + $0xcc] sm:$0xc]
        %v2501 = vld [vmem:[%s454 + $0xd0] sm:$0xf]
        %v2502 = vld [vmem:[%s454 + $0xd4] sm:$0x3]
        %v2503 = vld [vmem:[%s454 + $0xd8] sm:$0xc]
        %v2504 = vld [vmem:[%s454 + $0xdc] sm:$0xf]
        %v2505 = vld [vmem:[%s454 + $0xe0] sm:$0x3]
        %v2506 = vld [vmem:[%s454 + $0xe4] sm:$0xc]
        %v2507 = vld [vmem:[%s454 + $0xe8] sm:$0xf]
        %v2508 = vld [vmem:[%s454 + $0xec] sm:$0x3]
        %vm2569 = vcmask 1041408
        %vm2570 = vcmask 1045508
        %vm2571 = vmor %vm2569, %vm2570
        %v2572 = vrot.slane %v2449, 6
        %v2573 = vrot.slane %v2572, 4
        %v2574 = vrot.slane %v2450, 6
        %v2575 = vsel %vm2571, %v2573, %v2574
        %v2576 = vrot.slane %v2574, 4
        %v2577 = vrot.slane %v2451, 6
        %v2578 = vsel %vm2571, %v2576, %v2577
        %v2579 = vrot.slane %v2452, 6
        %v2580 = vrot.slane %v2579, 4
        %v2581 = vrot.slane %v2453, 6
        %v2582 = vsel %vm2571, %v2580, %v2581
        %v2583 = vrot.slane %v2581, 4
        %v2584 = vrot.slane %v2454, 6
        %v2585 = vsel %vm2571, %v2583, %v2584
        %v2586 = vrot.slane %v2455, 6
        %v2587 = vrot.slane %v2586, 4
        %v2588 = vrot.slane %v2456, 6
        %v2589 = vsel %vm2571, %v2587, %v2588
        %v2590 = vrot.slane %v2588, 4
        %v2591 = vrot.slane %v2457, 6
        %v2592 = vsel %vm2571, %v2590, %v2591
        %v2593 = vrot.slane %v2458, 6
        %v2594 = vrot.slane %v2593, 4
        %v2595 = vrot.slane %v2459, 6
        %v2596 = vsel %vm2571, %v2594, %v2595
        %v2597 = vrot.slane %v2595, 4
        %v2598 = vrot.slane %v2460, 6
        %v2599 = vsel %vm2571, %v2597, %v2598
        %v2600 = vrot.slane %v2461, 6
        %v2601 = vrot.slane %v2600, 4
        %v2602 = vrot.slane %v2462, 6
        %v2603 = vsel %vm2571, %v2601, %v2602
        %v2604 = vrot.slane %v2602, 4
        %v2605 = vrot.slane %v2463, 6
        %v2606 = vsel %vm2571, %v2604, %v2605
        %v2607 = vrot.slane %v2464, 6
        %v2608 = vrot.slane %v2607, 4
        %v2609 = vrot.slane %v2465, 6
        %v2610 = vsel %vm2571, %v2608, %v2609
        %v2611 = vrot.slane %v2609, 4
        %v2612 = vrot.slane %v2466, 6
        %v2613 = vsel %vm2571, %v2611, %v2612
        %v2614 = vrot.slane %v2467, 6
        %v2615 = vrot.slane %v2614, 4
        %v2616 = vrot.slane %v2468, 6
        %v2617 = vsel %vm2571, %v2615, %v2616
        %v2618 = vrot.slane %v2616, 4
        %v2619 = vrot.slane %v2469, 6
        %v2620 = vsel %vm2571, %v2618, %v2619
        %v2621 = vrot.slane %v2470, 6
        %v2622 = vrot.slane %v2621, 4
        %v2623 = vrot.slane %v2471, 6
        %v2624 = vsel %vm2571, %v2622, %v2623
        %v2625 = vrot.slane %v2623, 4
        %v2626 = vrot.slane %v2472, 6
        %v2627 = vsel %vm2571, %v2625, %v2626
        %v2628 = vrot.slane %v2473, 6
        %v2629 = vrot.slane %v2628, 4
        %v2630 = vrot.slane %v2474, 6
        %v2631 = vsel %vm2571, %v2629, %v2630
        %v2632 = vrot.slane %v2630, 4
        %v2633 = vrot.slane %v2475, 6
        %v2634 = vsel %vm2571, %v2632, %v2633
        %v2635 = vrot.slane %v2476, 6
        %v2636 = vrot.slane %v2635, 4
        %v2637 = vrot.slane %v2477, 6
        %v2638 = vsel %vm2571, %v2636, %v2637
        %v2639 = vrot.slane %v2637, 4
        %v2640 = vrot.slane %v2478, 6
        %v2641 = vsel %vm2571, %v2639, %v2640
        %v2642 = vrot.slane %v2479, 6
        %v2643 = vrot.slane %v2642, 4
        %v2644 = vrot.slane %v2480, 6
        %v2645 = vsel %vm2571, %v2643, %v2644
        %v2646 = vrot.slane %v2644, 4
        %v2647 = vrot.slane %v2481, 6
        %v2648 = vsel %vm2571, %v2646, %v2647
        %v2649 = vrot.slane %v2482, 6
        %v2650 = vrot.slane %v2649, 4
        %v2651 = vrot.slane %v2483, 6
        %v2652 = vsel %vm2571, %v2650, %v2651
        %v2653 = vrot.slane %v2651, 4
        %v2654 = vrot.slane %v2484, 6
        %v2655 = vsel %vm2571, %v2653, %v2654
        %v2656 = vrot.slane %v2485, 6
        %v2657 = vrot.slane %v2656, 4
        %v2658 = vrot.slane %v2486, 6
        %v2659 = vsel %vm2571, %v2657, %v2658
        %v2660 = vrot.slane %v2658, 4
        %v2661 = vrot.slane %v2487, 6
        %v2662 = vsel %vm2571, %v2660, %v2661
        %v2663 = vrot.slane %v2488, 6
        %v2664 = vrot.slane %v2663, 4
        %v2665 = vrot.slane %v2489, 6
        %v2666 = vsel %vm2571, %v2664, %v2665
        %v2667 = vrot.slane %v2665, 4
        %v2668 = vrot.slane %v2490, 6
        %v2669 = vsel %vm2571, %v2667, %v2668
        %v2670 = vrot.slane %v2491, 6
        %v2671 = vrot.slane %v2670, 4
        %v2672 = vrot.slane %v2492, 6
        %v2673 = vsel %vm2571, %v2671, %v2672
        %v2674 = vrot.slane %v2672, 4
        %v2675 = vrot.slane %v2493, 6
        %v2676 = vsel %vm2571, %v2674, %v2675
        %v2677 = vrot.slane %v2494, 6
        %v2678 = vrot.slane %v2677, 4
        %v2679 = vrot.slane %v2495, 6
        %v2680 = vsel %vm2571, %v2678, %v2679
        %v2681 = vrot.slane %v2679, 4
        %v2682 = vrot.slane %v2496, 6
        %v2683 = vsel %vm2571, %v2681, %v2682
        %v2684 = vrot.slane %v2497, 6
        %v2685 = vrot.slane %v2684, 4
        %v2686 = vrot.slane %v2498, 6
        %v2687 = vsel %vm2571, %v2685, %v2686
        %v2688 = vrot.slane %v2686, 4
        %v2689 = vrot.slane %v2499, 6
        %v2690 = vsel %vm2571, %v2688, %v2689
        %v2691 = vrot.slane %v2500, 6
        %v2692 = vrot.slane %v2691, 4
        %v2693 = vrot.slane %v2501, 6
        %v2694 = vsel %vm2571, %v2692, %v2693
        %v2695 = vrot.slane %v2693, 4
        %v2696 = vrot.slane %v2502, 6
        %v2697 = vsel %vm2571, %v2695, %v2696
        %v2698 = vrot.slane %v2503, 6
        %v2699 = vrot.slane %v2698, 4
        %v2700 = vrot.slane %v2504, 6
        %v2701 = vsel %vm2571, %v2699, %v2700
        %v2702 = vrot.slane %v2700, 4
        %v2703 = vrot.slane %v2505, 6
        %v2704 = vsel %vm2571, %v2702, %v2703
        %v2705 = vrot.slane %v2506, 6
        %v2706 = vrot.slane %v2705, 4
        %v2707 = vrot.slane %v2507, 6
        %v2708 = vsel %vm2571, %v2706, %v2707
        %v2709 = vrot.slane %v2707, 4
        %v2710 = vrot.slane %v2508, 6
        %v2711 = vsel %vm2571, %v2709, %v2710
        %2712 = vrot.lane.b32.xlu0 %v2575, 16
        %v2713 = vpop.permute.xlu0 %2712
        %2714 = vrot.lane.b32.xlu0 %v2578, 16
        %v2715 = vpop.permute.xlu0 %2714
        %2716 = vrot.lane.b32.xlu0 %v2582, 16
        %v2717 = vpop.permute.xlu0 %2716
        %2718 = vrot.lane.b32.xlu0 %v2585, 16
        %v2719 = vpop.permute.xlu0 %2718
        %2720 = vrot.lane.b32.xlu0 %v2589, 16
        %v2721 = vpop.permute.xlu0 %2720
        %2722 = vrot.lane.b32.xlu0 %v2592, 16
        %v2723 = vpop.permute.xlu0 %2722
        %2724 = vrot.lane.b32.xlu0 %v2596, 16
        %v2725 = vpop.permute.xlu0 %2724
        %2726 = vrot.lane.b32.xlu0 %v2599, 16
        %v2727 = vpop.permute.xlu0 %2726
        %2728 = vrot.lane.b32.xlu0 %v2603, 16
        %v2729 = vpop.permute.xlu0 %2728
        %2730 = vrot.lane.b32.xlu0 %v2606, 16
        %v2731 = vpop.permute.xlu0 %2730
        %2732 = vrot.lane.b32.xlu0 %v2610, 16
        %v2733 = vpop.permute.xlu0 %2732
        %2734 = vrot.lane.b32.xlu0 %v2613, 16
        %v2735 = vpop.permute.xlu0 %2734
        %2736 = vrot.lane.b32.xlu0 %v2617, 16
        %v2737 = vpop.permute.xlu0 %2736
        %2738 = vrot.lane.b32.xlu0 %v2620, 16
        %v2739 = vpop.permute.xlu0 %2738
        %2740 = vrot.lane.b32.xlu0 %v2624, 16
        %v2741 = vpop.permute.xlu0 %2740
        %2742 = vrot.lane.b32.xlu0 %v2627, 16
        %v2743 = vpop.permute.xlu0 %2742
        %2744 = vrot.lane.b32.xlu0 %v2631, 16
        %v2745 = vpop.permute.xlu0 %2744
        %2746 = vrot.lane.b32.xlu0 %v2634, 16
        %v2747 = vpop.permute.xlu0 %2746
        %2748 = vrot.lane.b32.xlu0 %v2638, 16
        %v2749 = vpop.permute.xlu0 %2748
        %2750 = vrot.lane.b32.xlu0 %v2641, 16
        %v2751 = vpop.permute.xlu0 %2750
        %2752 = vrot.lane.b32.xlu0 %v2645, 16
        %v2753 = vpop.permute.xlu0 %2752
        %2754 = vrot.lane.b32.xlu0 %v2648, 16
        %v2755 = vpop.permute.xlu0 %2754
        %2756 = vrot.lane.b32.xlu0 %v2652, 16
        %v2757 = vpop.permute.xlu0 %2756
        %2758 = vrot.lane.b32.xlu0 %v2655, 16
        %v2759 = vpop.permute.xlu0 %2758
        %2760 = vrot.lane.b32.xlu0 %v2659, 16
        %v2761 = vpop.permute.xlu0 %2760
        %2762 = vrot.lane.b32.xlu0 %v2662, 16
        %v2763 = vpop.permute.xlu0 %2762
        %2764 = vrot.lane.b32.xlu0 %v2666, 16
        %v2765 = vpop.permute.xlu0 %2764
        %2766 = vrot.lane.b32.xlu0 %v2669, 16
        %v2767 = vpop.permute.xlu0 %2766
        %2768 = vrot.lane.b32.xlu0 %v2673, 16
        %v2769 = vpop.permute.xlu0 %2768
        %2770 = vrot.lane.b32.xlu0 %v2676, 16
        %v2771 = vpop.permute.xlu0 %2770
        %2772 = vrot.lane.b32.xlu0 %v2680, 16
        %v2773 = vpop.permute.xlu0 %2772
        %2774 = vrot.lane.b32.xlu0 %v2683, 16
        %v2775 = vpop.permute.xlu0 %2774
        %2776 = vrot.lane.b32.xlu0 %v2687, 16
        %v2777 = vpop.permute.xlu0 %2776
        %2778 = vrot.lane.b32.xlu0 %v2690, 16
        %v2779 = vpop.permute.xlu0 %2778
        %2780 = vrot.lane.b32.xlu0 %v2694, 16
        %v2781 = vpop.permute.xlu0 %2780
        %2782 = vrot.lane.b32.xlu0 %v2697, 16
        %v2783 = vpop.permute.xlu0 %2782
        %2784 = vrot.lane.b32.xlu0 %v2701, 16
        %v2785 = vpop.permute.xlu0 %2784
        %2786 = vrot.lane.b32.xlu0 %v2704, 16
        %v2787 = vpop.permute.xlu0 %2786
        %2788 = vrot.lane.b32.xlu0 %v2708, 16
        %v2789 = vpop.permute.xlu0 %2788
        %2790 = vrot.lane.b32.xlu0 %v2711, 16
        %v2791 = vpop.permute.xlu0 %2790
        %vm2832 = vcmask 158848
        %2833 = vst.msk [vmem:[#allocation2] sm:$0xf] %vm2832, %v2713
        %2834 = vst.msk [vmem:[#allocation2 + $0x4] sm:$0xf] %vm2832, %v2715
        %2835 = vst.msk [vmem:[#allocation2 + $0x8] sm:$0xf] %vm2832, %v2717
        %2836 = vst.msk [vmem:[#allocation2 + $0xc] sm:$0xf] %vm2832, %v2719
        %2837 = vst.msk [vmem:[#allocation2 + $0x10] sm:$0xf] %vm2832, %v2721
        %2838 = vst.msk [vmem:[#allocation2 + $0x14] sm:$0xf] %vm2832, %v2723
        %2839 = vst.msk [vmem:[#allocation2 + $0x18] sm:$0xf] %vm2832, %v2725
        %2840 = vst.msk [vmem:[#allocation2 + $0x1c] sm:$0xf] %vm2832, %v2727
        %2841 = vst.msk [vmem:[#allocation2 + $0x20] sm:$0xf] %vm2832, %v2729
        %2842 = vst.msk [vmem:[#allocation2 + $0x24] sm:$0xf] %vm2832, %v2731
        %2843 = vst.msk [vmem:[#allocation2 + $0x28] sm:$0xf] %vm2832, %v2733
        %2844 = vst.msk [vmem:[#allocation2 + $0x2c] sm:$0xf] %vm2832, %v2735
        %2845 = vst.msk [vmem:[#allocation2 + $0x30] sm:$0xf] %vm2832, %v2737
        %2846 = vst.msk [vmem:[#allocation2 + $0x34] sm:$0xf] %vm2832, %v2739
        %2847 = vst.msk [vmem:[#allocation2 + $0x38] sm:$0xf] %vm2832, %v2741
        %2848 = vst.msk [vmem:[#allocation2 + $0x3c] sm:$0xf] %vm2832, %v2743
        %2849 = vst.msk [vmem:[#allocation2 + $0x40] sm:$0xf] %vm2832, %v2745
        %2850 = vst.msk [vmem:[#allocation2 + $0x44] sm:$0xf] %vm2832, %v2747
        %2851 = vst.msk [vmem:[#allocation2 + $0x48] sm:$0xf] %vm2832, %v2749
        %2852 = vst.msk [vmem:[#allocation2 + $0x4c] sm:$0xf] %vm2832, %v2751
        %2853 = vst.msk [vmem:[#allocation2 + $0x50] sm:$0xf] %vm2832, %v2753
        %2854 = vst.msk [vmem:[#allocation2 + $0x54] sm:$0xf] %vm2832, %v2755
        %2855 = vst.msk [vmem:[#allocation2 + $0x58] sm:$0xf] %vm2832, %v2757
        %2856 = vst.msk [vmem:[#allocation2 + $0x5c] sm:$0xf] %vm2832, %v2759
        %2857 = vst.msk [vmem:[#allocation2 + $0x60] sm:$0xf] %vm2832, %v2761
        %2858 = vst.msk [vmem:[#allocation2 + $0x64] sm:$0xf] %vm2832, %v2763
        %2859 = vst.msk [vmem:[#allocation2 + $0x68] sm:$0xf] %vm2832, %v2765
        %2860 = vst.msk [vmem:[#allocation2 + $0x6c] sm:$0xf] %vm2832, %v2767
        %2861 = vst.msk [vmem:[#allocation2 + $0x70] sm:$0xf] %vm2832, %v2769
        %2862 = vst.msk [vmem:[#allocation2 + $0x74] sm:$0xf] %vm2832, %v2771
        %2863 = vst.msk [vmem:[#allocation2 + $0x78] sm:$0xf] %vm2832, %v2773
        %2864 = vst.msk [vmem:[#allocation2 + $0x7c] sm:$0xf] %vm2832, %v2775
        %2865 = vst.msk [vmem:[#allocation2 + $0x80] sm:$0xf] %vm2832, %v2777
        %2866 = vst.msk [vmem:[#allocation2 + $0x84] sm:$0xf] %vm2832, %v2779
        %2867 = vst.msk [vmem:[#allocation2 + $0x88] sm:$0xf] %vm2832, %v2781
        %2868 = vst.msk [vmem:[#allocation2 + $0x8c] sm:$0xf] %vm2832, %v2783
        %2869 = vst.msk [vmem:[#allocation2 + $0x90] sm:$0xf] %vm2832, %v2785
        %2870 = vst.msk [vmem:[#allocation2 + $0x94] sm:$0xf] %vm2832, %v2787
        %2871 = vst.msk [vmem:[#allocation2 + $0x98] sm:$0xf] %vm2832, %v2789
        %2872 = vst.msk [vmem:[#allocation2 + $0x9c] sm:$0xf] %vm2832, %v2791
        %v2873 = vld [vmem:[#allocation2] sm:$0xf]
        %v2874 = vld [vmem:[#allocation2 + $0x4] sm:$0xf]
        %v2875 = vld [vmem:[#allocation2 + $0x8] sm:$0xf]
        %v2876 = vld [vmem:[#allocation2 + $0xc] sm:$0xf]
        %v2877 = vld [vmem:[#allocation2 + $0x10] sm:$0xf]
        %v2878 = vld [vmem:[#allocation2 + $0x14] sm:$0xf]
        %v2879 = vld [vmem:[#allocation2 + $0x18] sm:$0xf]
        %v2880 = vld [vmem:[#allocation2 + $0x1c] sm:$0xf]
        %v2881 = vld [vmem:[#allocation2 + $0x20] sm:$0xf]
        %v2882 = vld [vmem:[#allocation2 + $0x24] sm:$0xf]
        %v2883 = vld [vmem:[#allocation2 + $0x28] sm:$0xf]
        %v2884 = vld [vmem:[#allocation2 + $0x2c] sm:$0xf]
        %v2885 = vld [vmem:[#allocation2 + $0x30] sm:$0xf]
        %v2886 = vld [vmem:[#allocation2 + $0x34] sm:$0xf]
        %v2887 = vld [vmem:[#allocation2 + $0x38] sm:$0xf]
        %v2888 = vld [vmem:[#allocation2 + $0x3c] sm:$0xf]
        %v2889 = vld [vmem:[#allocation2 + $0x40] sm:$0xf]
        %v2890 = vld [vmem:[#allocation2 + $0x44] sm:$0xf]
        %v2891 = vld [vmem:[#allocation2 + $0x48] sm:$0xf]
        %v2892 = vld [vmem:[#allocation2 + $0x4c] sm:$0xf]
        %v2893 = vld [vmem:[#allocation2 + $0x50] sm:$0xf]
        %v2894 = vld [vmem:[#allocation2 + $0x54] sm:$0xf]
        %v2895 = vld [vmem:[#allocation2 + $0x58] sm:$0xf]
        %v2896 = vld [vmem:[#allocation2 + $0x5c] sm:$0xf]
        %v2897 = vld [vmem:[#allocation2 + $0x60] sm:$0xf]
        %v2898 = vld [vmem:[#allocation2 + $0x64] sm:$0xf]
        %v2899 = vld [vmem:[#allocation2 + $0x68] sm:$0xf]
        %v2900 = vld [vmem:[#allocation2 + $0x6c] sm:$0xf]
        %v2901 = vld [vmem:[#allocation2 + $0x70] sm:$0xf]
        %v2902 = vld [vmem:[#allocation2 + $0x74] sm:$0xf]
        %v2903 = vld [vmem:[#allocation2 + $0x78] sm:$0xf]
        %v2904 = vld [vmem:[#allocation2 + $0x7c] sm:$0xf]
        %v2905 = vld [vmem:[%s1] sm:$0xf]
        %v2906 = vld [vmem:[%s1 + $0x4] sm:$0xf]
        %v2907 = vld [vmem:[%s1 + $0x8] sm:$0x3]
        %s2908 = scalar_lea.vmem [#allocation2], 8
        %v2909 = vld [vmem:[%s2908] sm:$0xf]
        %v2910 = vld [vmem:[%s2908 + $0x4] sm:$0xf]
        %v2911 = vld [vmem:[%s2908 + $0x8] sm:$0xf]
        %v2912 = vld [vmem:[%s2908 + $0xc] sm:$0xf]
        %v2913 = vld [vmem:[%s2908 + $0x10] sm:$0xf]
        %v2914 = vld [vmem:[%s2908 + $0x14] sm:$0xf]
        %v2915 = vld [vmem:[%s2908 + $0x18] sm:$0xf]
        %v2916 = vld [vmem:[%s2908 + $0x1c] sm:$0xf]
        %v2917 = vld [vmem:[%s2908 + $0x20] sm:$0xf]
        %v2918 = vld [vmem:[%s2908 + $0x24] sm:$0xf]
        %v2919 = vld [vmem:[%s2908 + $0x28] sm:$0xf]
        %v2920 = vld [vmem:[%s2908 + $0x2c] sm:$0xf]
        %v2921 = vld [vmem:[%s2908 + $0x30] sm:$0xf]
        %v2922 = vld [vmem:[%s2908 + $0x34] sm:$0xf]
        %v2923 = vld [vmem:[%s2908 + $0x38] sm:$0xf]
        %v2924 = vld [vmem:[%s2908 + $0x3c] sm:$0xf]
        %v2925 = vld [vmem:[%s2908 + $0x40] sm:$0xf]
        %v2926 = vld [vmem:[%s2908 + $0x44] sm:$0xf]
        %v2927 = vld [vmem:[%s2908 + $0x48] sm:$0xf]
        %v2928 = vld [vmem:[%s2908 + $0x4c] sm:$0xf]
        %v2929 = vld [vmem:[%s2908 + $0x50] sm:$0xf]
        %v2930 = vld [vmem:[%s2908 + $0x54] sm:$0xf]
        %v2931 = vld [vmem:[%s2908 + $0x58] sm:$0xf]
        %v2932 = vld [vmem:[%s2908 + $0x5c] sm:$0xf]
        %v2933 = vld [vmem:[%s2908 + $0x60] sm:$0xf]
        %v2934 = vld [vmem:[%s2908 + $0x64] sm:$0xf]
        %v2935 = vld [vmem:[%s2908 + $0x68] sm:$0xf]
        %v2936 = vld [vmem:[%s2908 + $0x6c] sm:$0xf]
        %v2937 = vld [vmem:[%s2908 + $0x70] sm:$0xf]
        %v2938 = vld [vmem:[%s2908 + $0x74] sm:$0xf]
        %v2939 = vld [vmem:[%s2908 + $0x78] sm:$0xf]
        %v2940 = vld [vmem:[%s2908 + $0x7c] sm:$0xf]
        %v2941 = vld [vmem:[%s1 + $0x8] sm:$0xc]
        %v2942 = vld [vmem:[%s1 + $0xc] sm:$0xf]
        %v2943 = vld [vmem:[%s1 + $0x10] sm:$0xf]
        %v2976 = vunpack.c.l.b16 %v2909
        %v2977 = vunpack.c.l.b16 %v2910
        %v2978 = vunpack.c.l.b16 %v2911
        %v2979 = vunpack.c.l.b16 %v2912
        %v2980 = vunpack.c.l.b16 %v2913
        %v2981 = vunpack.c.l.b16 %v2914
        %v2982 = vunpack.c.l.b16 %v2915
        %v2983 = vunpack.c.l.b16 %v2916
        %v2984 = vunpack.c.l.b16 %v2917
        %v2985 = vunpack.c.l.b16 %v2918
        %v2986 = vunpack.c.l.b16 %v2919
        %v2987 = vunpack.c.l.b16 %v2920
        %v2988 = vunpack.c.l.b16 %v2921
        %v2989 = vunpack.c.l.b16 %v2922
        %v2990 = vunpack.c.l.b16 %v2923
        %v2991 = vunpack.c.l.b16 %v2924
        %v2992 = vunpack.c.l.b16 %v2925
        %v2993 = vunpack.c.l.b16 %v2926
        %v2994 = vunpack.c.l.b16 %v2927
        %v2995 = vunpack.c.l.b16 %v2928
        %v2996 = vunpack.c.l.b16 %v2929
        %v2997 = vunpack.c.l.b16 %v2930
        %v2998 = vunpack.c.l.b16 %v2931
        %v2999 = vunpack.c.l.b16 %v2932
        %v3000 = vunpack.c.l.b16 %v2933
        %v3001 = vunpack.c.l.b16 %v2934
        %v3002 = vunpack.c.l.b16 %v2935
        %v3003 = vunpack.c.l.b16 %v2936
        %v3004 = vunpack.c.l.b16 %v2937
        %v3005 = vunpack.c.l.b16 %v2938
        %v3006 = vunpack.c.l.b16 %v2939
        %v3007 = vunpack.c.l.b16 %v2940
        %v3008 = vpack.c.b16 %v2977, %v2976
        %v3009 = vpack.c.b16 %v2979, %v2978
        %v3010 = vpack.c.b16 %v2981, %v2980
        %v3011 = vpack.c.b16 %v2983, %v2982
        %v3012 = vpack.c.b16 %v2985, %v2984
        %v3013 = vpack.c.b16 %v2987, %v2986
        %v3014 = vpack.c.b16 %v2989, %v2988
        %v3015 = vpack.c.b16 %v2991, %v2990
        %v3016 = vpack.c.b16 %v2993, %v2992
        %v3017 = vpack.c.b16 %v2995, %v2994
        %v3018 = vpack.c.b16 %v2997, %v2996
        %v3019 = vpack.c.b16 %v2999, %v2998
        %v3020 = vpack.c.b16 %v3001, %v3000
        %v3021 = vpack.c.b16 %v3003, %v3002
        %v3022 = vpack.c.b16 %v3005, %v3004
        %v3023 = vpack.c.b16 %v3007, %v3006
        %v3027 = vunpack.c.l.b16 %v2941
        %v3028 = vunpack.c.l.b16 %v2942
        %v3029 = vunpack.c.l.b16 %v2943
        %v3030 = vpack.c.b16 %v3028, %v3027
        %v3031 = vpack.c.b16 %v3029, %v3029
        %vm3032 = vcmask 1045504
        %v3033 = vrot.slane %v3030, 2
        %v3034 = vrot.slane %v3031, 2
        %v3035 = vsel %vm3032, %v3033, %v3034
        %vm3037 = vcmask 162816
        %v3039 = vsel %vm3037, %v3008, 0
        %v3042 = vsel %vm3037, %v3009, 0
        %v3045 = vsel %vm3037, %v3010, 0
        %v3048 = vsel %vm3037, %v3011, 0
        %v3051 = vsel %vm3037, %v3012, 0
        %v3054 = vsel %vm3037, %v3013, 0
        %v3057 = vsel %vm3037, %v3014, 0
        %v3060 = vsel %vm3037, %v3015, 0
        %v3063 = vsel %vm3037, %v3016, 0
        %v3066 = vsel %vm3037, %v3017, 0
        %v3069 = vsel %vm3037, %v3018, 0
        %v3072 = vsel %vm3037, %v3019, 0
        %v3075 = vsel %vm3037, %v3020, 0
        %v3078 = vsel %vm3037, %v3021, 0
        %v3081 = vsel %vm3037, %v3022, 0
        %v3084 = vsel %vm3037, %v3023, 0
        %vm3086 = vcmask 1041408
        %v3088 = vsel %vm3086, %v3034, 0
        %3090 = vmatpush.bf16.msra.mxu0 0
        %3091 = vmatpush.bf16.msra.mxu0 0
        %3092 = vmatpush.bf16.msra.mxu0 0
        %3093 = vmatpush.bf16.msra.mxu0 0
        %3094 = vmatpush.bf16.msra.mxu0 0
        %3095 = vmatpush.bf16.msra.mxu0 0
        %3096 = vmatpush.bf16.msra.mxu0 %v3088
        %3097 = vmatpush.bf16.msra.mxu0 %v3035
        %3098 = vmatmul.bf16.gmra.mxu0 %v3039
        %v3099 = vpop.f32.mrf.mxu0
        %v3100 = vadd.f32 0.0, %v3099
        %v3101 = vpop.f32.mrf.mxu0
        %v3102 = vadd.f32 0.0, %v3101
        %3103 = vmatmul.bf16.gmra.mxu0 %v3042
        %v3104 = vpop.f32.mrf.mxu0
        %v3105 = vadd.f32 0.0, %v3104
        %v3106 = vpop.f32.mrf.mxu0
        %v3107 = vadd.f32 0.0, %v3106
        %3108 = vmatmul.bf16.gmra.mxu0 %v3045
        %v3109 = vpop.f32.mrf.mxu0
        %v3110 = vadd.f32 0.0, %v3109
        %v3111 = vpop.f32.mrf.mxu0
        %v3112 = vadd.f32 0.0, %v3111
        %3113 = vmatmul.bf16.gmra.mxu0 %v3048
        %v3114 = vpop.f32.mrf.mxu0
        %v3115 = vadd.f32 0.0, %v3114
        %v3116 = vpop.f32.mrf.mxu0
        %v3117 = vadd.f32 0.0, %v3116
        %3118 = vmatmul.bf16.gmra.mxu0 %v3051
        %v3119 = vpop.f32.mrf.mxu0
        %v3120 = vadd.f32 0.0, %v3119
        %v3121 = vpop.f32.mrf.mxu0
        %v3122 = vadd.f32 0.0, %v3121
        %3123 = vmatmul.bf16.gmra.mxu0 %v3054
        %v3124 = vpop.f32.mrf.mxu0
        %v3125 = vadd.f32 0.0, %v3124
        %v3126 = vpop.f32.mrf.mxu0
        %v3127 = vadd.f32 0.0, %v3126
        %3128 = vmatmul.bf16.gmra.mxu0 %v3057
        %v3129 = vpop.f32.mrf.mxu0
        %v3130 = vadd.f32 0.0, %v3129
        %v3131 = vpop.f32.mrf.mxu0
        %v3132 = vadd.f32 0.0, %v3131
        %3133 = vmatmul.bf16.gmra.mxu0 %v3060
        %v3134 = vpop.f32.mrf.mxu0
        %v3135 = vadd.f32 0.0, %v3134
        %v3136 = vpop.f32.mrf.mxu0
        %v3137 = vadd.f32 0.0, %v3136
        %3138 = vmatmul.bf16.gmra.mxu0 %v3063
        %v3139 = vpop.f32.mrf.mxu0
        %v3140 = vadd.f32 0.0, %v3139
        %v3141 = vpop.f32.mrf.mxu0
        %v3142 = vadd.f32 0.0, %v3141
        %3143 = vmatmul.bf16.gmra.mxu0 %v3066
        %v3144 = vpop.f32.mrf.mxu0
        %v3145 = vadd.f32 0.0, %v3144
        %v3146 = vpop.f32.mrf.mxu0
        %v3147 = vadd.f32 0.0, %v3146
        %3148 = vmatmul.bf16.gmra.mxu0 %v3069
        %v3149 = vpop.f32.mrf.mxu0
        %v3150 = vadd.f32 0.0, %v3149
        %v3151 = vpop.f32.mrf.mxu0
        %v3152 = vadd.f32 0.0, %v3151
        %3153 = vmatmul.bf16.gmra.mxu0 %v3072
        %v3154 = vpop.f32.mrf.mxu0
        %v3155 = vadd.f32 0.0, %v3154
        %v3156 = vpop.f32.mrf.mxu0
        %v3157 = vadd.f32 0.0, %v3156
        %3158 = vmatmul.bf16.gmra.mxu0 %v3075
        %v3159 = vpop.f32.mrf.mxu0
        %v3160 = vadd.f32 0.0, %v3159
        %v3161 = vpop.f32.mrf.mxu0
        %v3162 = vadd.f32 0.0, %v3161
        %3163 = vmatmul.bf16.gmra.mxu0 %v3078
        %v3164 = vpop.f32.mrf.mxu0
        %v3165 = vadd.f32 0.0, %v3164
        %v3166 = vpop.f32.mrf.mxu0
        %v3167 = vadd.f32 0.0, %v3166
        %3168 = vmatmul.bf16.gmra.mxu0 %v3081
        %v3169 = vpop.f32.mrf.mxu0
        %v3170 = vadd.f32 0.0, %v3169
        %v3171 = vpop.f32.mrf.mxu0
        %v3172 = vadd.f32 0.0, %v3171
        %3173 = vmatmul.bf16.gmra.mxu0 %v3084
        %v3174 = vpop.f32.mrf.mxu0
        %v3175 = vadd.f32 0.0, %v3174
        %v3176 = vpop.f32.mrf.mxu0
        %v3177 = vadd.f32 0.0, %v3176
        %3178 = vdwg.mxu0
        %v3211 = vunpack.c.l.b16 %v2873
        %v3212 = vunpack.c.l.b16 %v2874
        %v3213 = vunpack.c.l.b16 %v2875
        %v3214 = vunpack.c.l.b16 %v2876
        %v3215 = vunpack.c.l.b16 %v2877
        %v3216 = vunpack.c.l.b16 %v2878
        %v3217 = vunpack.c.l.b16 %v2879
        %v3218 = vunpack.c.l.b16 %v2880
        %v3219 = vunpack.c.l.b16 %v2881
        %v3220 = vunpack.c.l.b16 %v2882
        %v3221 = vunpack.c.l.b16 %v2883
        %v3222 = vunpack.c.l.b16 %v2884
        %v3223 = vunpack.c.l.b16 %v2885
        %v3224 = vunpack.c.l.b16 %v2886
        %v3225 = vunpack.c.l.b16 %v2887
        %v3226 = vunpack.c.l.b16 %v2888
        %v3227 = vunpack.c.l.b16 %v2889
        %v3228 = vunpack.c.l.b16 %v2890
        %v3229 = vunpack.c.l.b16 %v2891
        %v3230 = vunpack.c.l.b16 %v2892
        %v3231 = vunpack.c.l.b16 %v2893
        %v3232 = vunpack.c.l.b16 %v2894
        %v3233 = vunpack.c.l.b16 %v2895
        %v3234 = vunpack.c.l.b16 %v2896
        %v3235 = vunpack.c.l.b16 %v2897
        %v3236 = vunpack.c.l.b16 %v2898
        %v3237 = vunpack.c.l.b16 %v2899
        %v3238 = vunpack.c.l.b16 %v2900
        %v3239 = vunpack.c.l.b16 %v2901
        %v3240 = vunpack.c.l.b16 %v2902
        %v3241 = vunpack.c.l.b16 %v2903
        %v3242 = vunpack.c.l.b16 %v2904
        %v3243 = vpack.c.b16 %v3212, %v3211
        %v3244 = vpack.c.b16 %v3214, %v3213
        %v3245 = vpack.c.b16 %v3216, %v3215
        %v3246 = vpack.c.b16 %v3218, %v3217
        %v3247 = vpack.c.b16 %v3220, %v3219
        %v3248 = vpack.c.b16 %v3222, %v3221
        %v3249 = vpack.c.b16 %v3224, %v3223
        %v3250 = vpack.c.b16 %v3226, %v3225
        %v3251 = vpack.c.b16 %v3228, %v3227
        %v3252 = vpack.c.b16 %v3230, %v3229
        %v3253 = vpack.c.b16 %v3232, %v3231
        %v3254 = vpack.c.b16 %v3234, %v3233
        %v3255 = vpack.c.b16 %v3236, %v3235
        %v3256 = vpack.c.b16 %v3238, %v3237
        %v3257 = vpack.c.b16 %v3240, %v3239
        %v3258 = vpack.c.b16 %v3242, %v3241
        %v3262 = vunpack.c.l.b16 %v2905
        %v3263 = vunpack.c.l.b16 %v2906
        %v3264 = vunpack.c.l.b16 %v2907
        %v3265 = vpack.c.b16 %v3263, %v3262
        %v3266 = vpack.c.b16 %v3264, %v3264
        %v3269 = vsel %vm3037, %v3243, 0
        %v3272 = vsel %vm3037, %v3244, 0
        %v3275 = vsel %vm3037, %v3245, 0
        %v3278 = vsel %vm3037, %v3246, 0
        %v3281 = vsel %vm3037, %v3247, 0
        %v3284 = vsel %vm3037, %v3248, 0
        %v3287 = vsel %vm3037, %v3249, 0
        %v3290 = vsel %vm3037, %v3250, 0
        %v3293 = vsel %vm3037, %v3251, 0
        %v3296 = vsel %vm3037, %v3252, 0
        %v3299 = vsel %vm3037, %v3253, 0
        %v3302 = vsel %vm3037, %v3254, 0
        %v3305 = vsel %vm3037, %v3255, 0
        %v3308 = vsel %vm3037, %v3256, 0
        %v3311 = vsel %vm3037, %v3257, 0
        %v3314 = vsel %vm3037, %v3258, 0
        %v3317 = vsel %vm3086, %v3266, 0
        %3319 = vmatpush.bf16.msra.mxu0 0
        %3320 = vmatpush.bf16.msra.mxu0 0
        %3321 = vmatpush.bf16.msra.mxu0 0
        %3322 = vmatpush.bf16.msra.mxu0 0
        %3323 = vmatpush.bf16.msra.mxu0 0
        %3324 = vmatpush.bf16.msra.mxu0 0
        %3325 = vmatpush.bf16.msra.mxu0 %v3317
        %3326 = vmatpush.bf16.msra.mxu0 %v3265
        %3327 = vmatmul.bf16.gmra.mxu0 %v3269
        %v3328 = vpop.f32.mrf.mxu0
        %v3329 = vadd.f32 %v3100, %v3328
        %v3330 = vpop.f32.mrf.mxu0
        %v3331 = vadd.f32 %v3102, %v3330
        %3332 = vmatmul.bf16.gmra.mxu0 %v3272
        %v3333 = vpop.f32.mrf.mxu0
        %v3334 = vadd.f32 %v3105, %v3333
        %v3335 = vpop.f32.mrf.mxu0
        %v3336 = vadd.f32 %v3107, %v3335
        %3337 = vmatmul.bf16.gmra.mxu0 %v3275
        %v3338 = vpop.f32.mrf.mxu0
        %v3339 = vadd.f32 %v3110, %v3338
        %v3340 = vpop.f32.mrf.mxu0
        %v3341 = vadd.f32 %v3112, %v3340
        %3342 = vmatmul.bf16.gmra.mxu0 %v3278
        %v3343 = vpop.f32.mrf.mxu0
        %v3344 = vadd.f32 %v3115, %v3343
        %v3345 = vpop.f32.mrf.mxu0
        %v3346 = vadd.f32 %v3117, %v3345
        %3347 = vmatmul.bf16.gmra.mxu0 %v3281
        %v3348 = vpop.f32.mrf.mxu0
        %v3349 = vadd.f32 %v3120, %v3348
        %v3350 = vpop.f32.mrf.mxu0
        %v3351 = vadd.f32 %v3122, %v3350
        %3352 = vmatmul.bf16.gmra.mxu0 %v3284
        %v3353 = vpop.f32.mrf.mxu0
        %v3354 = vadd.f32 %v3125, %v3353
        %v3355 = vpop.f32.mrf.mxu0
        %v3356 = vadd.f32 %v3127, %v3355
        %3357 = vmatmul.bf16.gmra.mxu0 %v3287
        %v3358 = vpop.f32.mrf.mxu0
        %v3359 = vadd.f32 %v3130, %v3358
        %v3360 = vpop.f32.mrf.mxu0
        %v3361 = vadd.f32 %v3132, %v3360
        %3362 = vmatmul.bf16.gmra.mxu0 %v3290
        %v3363 = vpop.f32.mrf.mxu0
        %v3364 = vadd.f32 %v3135, %v3363
        %v3365 = vpop.f32.mrf.mxu0
        %v3366 = vadd.f32 %v3137, %v3365
        %3367 = vmatmul.bf16.gmra.mxu0 %v3293
        %v3368 = vpop.f32.mrf.mxu0
        %v3369 = vadd.f32 %v3140, %v3368
        %v3370 = vpop.f32.mrf.mxu0
        %v3371 = vadd.f32 %v3142, %v3370
        %3372 = vmatmul.bf16.gmra.mxu0 %v3296
        %v3373 = vpop.f32.mrf.mxu0
        %v3374 = vadd.f32 %v3145, %v3373
        %v3375 = vpop.f32.mrf.mxu0
        %v3376 = vadd.f32 %v3147, %v3375
        %3377 = vmatmul.bf16.gmra.mxu0 %v3299
        %v3378 = vpop.f32.mrf.mxu0
        %v3379 = vadd.f32 %v3150, %v3378
        %v3380 = vpop.f32.mrf.mxu0
        %v3381 = vadd.f32 %v3152, %v3380
        %3382 = vmatmul.bf16.gmra.mxu0 %v3302
        %v3383 = vpop.f32.mrf.mxu0
        %v3384 = vadd.f32 %v3155, %v3383
        %v3385 = vpop.f32.mrf.mxu0
        %v3386 = vadd.f32 %v3157, %v3385
        %3387 = vmatmul.bf16.gmra.mxu0 %v3305
        %v3388 = vpop.f32.mrf.mxu0
        %v3389 = vadd.f32 %v3160, %v3388
        %v3390 = vpop.f32.mrf.mxu0
        %v3391 = vadd.f32 %v3162, %v3390
        %3392 = vmatmul.bf16.gmra.mxu0 %v3308
        %v3393 = vpop.f32.mrf.mxu0
        %v3394 = vadd.f32 %v3165, %v3393
        %v3395 = vpop.f32.mrf.mxu0
        %v3396 = vadd.f32 %v3167, %v3395
        %3397 = vmatmul.bf16.gmra.mxu0 %v3311
        %v3398 = vpop.f32.mrf.mxu0
        %v3399 = vadd.f32 %v3170, %v3398
        %v3400 = vpop.f32.mrf.mxu0
        %v3401 = vadd.f32 %v3172, %v3400
        %3402 = vmatmul.bf16.gmra.mxu0 %v3314
        %v3403 = vpop.f32.mrf.mxu0
        %v3404 = vadd.f32 %v3175, %v3403
        %v3405 = vpop.f32.mrf.mxu0
        %v3406 = vadd.f32 %v3177, %v3405
        %3407 = vdwg.mxu0
        %s3408 = scalar_lea.vmem [#allocation2], 16
        %v3409 = vld [vmem:[%s3408] sm:$0xf]
        %v3410 = vld [vmem:[%s3408 + $0x4] sm:$0xf]
        %v3411 = vld [vmem:[%s3408 + $0x8] sm:$0xf]
        %v3412 = vld [vmem:[%s3408 + $0xc] sm:$0xf]
        %v3413 = vld [vmem:[%s3408 + $0x10] sm:$0xf]
        %v3414 = vld [vmem:[%s3408 + $0x14] sm:$0xf]
        %v3415 = vld [vmem:[%s3408 + $0x18] sm:$0xf]
        %v3416 = vld [vmem:[%s3408 + $0x1c] sm:$0xf]
        %v3417 = vld [vmem:[%s3408 + $0x20] sm:$0xf]
        %v3418 = vld [vmem:[%s3408 + $0x24] sm:$0xf]
        %v3419 = vld [vmem:[%s3408 + $0x28] sm:$0xf]
        %v3420 = vld [vmem:[%s3408 + $0x2c] sm:$0xf]
        %v3421 = vld [vmem:[%s3408 + $0x30] sm:$0xf]
        %v3422 = vld [vmem:[%s3408 + $0x34] sm:$0xf]
        %v3423 = vld [vmem:[%s3408 + $0x38] sm:$0xf]
        %v3424 = vld [vmem:[%s3408 + $0x3c] sm:$0xf]
        %v3425 = vld [vmem:[%s3408 + $0x40] sm:$0xf]
        %v3426 = vld [vmem:[%s3408 + $0x44] sm:$0xf]
        %v3427 = vld [vmem:[%s3408 + $0x48] sm:$0xf]
        %v3428 = vld [vmem:[%s3408 + $0x4c] sm:$0xf]
        %v3429 = vld [vmem:[%s3408 + $0x50] sm:$0xf]
        %v3430 = vld [vmem:[%s3408 + $0x54] sm:$0xf]
        %v3431 = vld [vmem:[%s3408 + $0x58] sm:$0xf]
        %v3432 = vld [vmem:[%s3408 + $0x5c] sm:$0xf]
        %v3433 = vld [vmem:[%s3408 + $0x60] sm:$0xf]
        %v3434 = vld [vmem:[%s3408 + $0x64] sm:$0xf]
        %v3435 = vld [vmem:[%s3408 + $0x68] sm:$0xf]
        %v3436 = vld [vmem:[%s3408 + $0x6c] sm:$0xf]
        %v3437 = vld [vmem:[%s3408 + $0x70] sm:$0xf]
        %v3438 = vld [vmem:[%s3408 + $0x74] sm:$0xf]
        %v3439 = vld [vmem:[%s3408 + $0x78] sm:$0xf]
        %v3440 = vld [vmem:[%s3408 + $0x7c] sm:$0xf]
        %v3441 = vld [vmem:[%s1 + $0x14] sm:$0xf]
        %v3442 = vld [vmem:[%s1 + $0x18] sm:$0xf]
        %v3443 = vld [vmem:[%s1 + $0x1c] sm:$0x3]
        %v3476 = vunpack.c.l.b16 %v3409
        %v3477 = vunpack.c.l.b16 %v3410
        %v3478 = vunpack.c.l.b16 %v3411
        %v3479 = vunpack.c.l.b16 %v3412
        %v3480 = vunpack.c.l.b16 %v3413
        %v3481 = vunpack.c.l.b16 %v3414
        %v3482 = vunpack.c.l.b16 %v3415
        %v3483 = vunpack.c.l.b16 %v3416
        %v3484 = vunpack.c.l.b16 %v3417
        %v3485 = vunpack.c.l.b16 %v3418
        %v3486 = vunpack.c.l.b16 %v3419
        %v3487 = vunpack.c.l.b16 %v3420
        %v3488 = vunpack.c.l.b16 %v3421
        %v3489 = vunpack.c.l.b16 %v3422
        %v3490 = vunpack.c.l.b16 %v3423
        %v3491 = vunpack.c.l.b16 %v3424
        %v3492 = vunpack.c.l.b16 %v3425
        %v3493 = vunpack.c.l.b16 %v3426
        %v3494 = vunpack.c.l.b16 %v3427
        %v3495 = vunpack.c.l.b16 %v3428
        %v3496 = vunpack.c.l.b16 %v3429
        %v3497 = vunpack.c.l.b16 %v3430
        %v3498 = vunpack.c.l.b16 %v3431
        %v3499 = vunpack.c.l.b16 %v3432
        %v3500 = vunpack.c.l.b16 %v3433
        %v3501 = vunpack.c.l.b16 %v3434
        %v3502 = vunpack.c.l.b16 %v3435
        %v3503 = vunpack.c.l.b16 %v3436
        %v3504 = vunpack.c.l.b16 %v3437
        %v3505 = vunpack.c.l.b16 %v3438
        %v3506 = vunpack.c.l.b16 %v3439
        %v3507 = vunpack.c.l.b16 %v3440
        %v3508 = vpack.c.b16 %v3477, %v3476
        %v3509 = vpack.c.b16 %v3479, %v3478
        %v3510 = vpack.c.b16 %v3481, %v3480
        %v3511 = vpack.c.b16 %v3483, %v3482
        %v3512 = vpack.c.b16 %v3485, %v3484
        %v3513 = vpack.c.b16 %v3487, %v3486
        %v3514 = vpack.c.b16 %v3489, %v3488
        %v3515 = vpack.c.b16 %v3491, %v3490
        %v3516 = vpack.c.b16 %v3493, %v3492
        %v3517 = vpack.c.b16 %v3495, %v3494
        %v3518 = vpack.c.b16 %v3497, %v3496
        %v3519 = vpack.c.b16 %v3499, %v3498
        %v3520 = vpack.c.b16 %v3501, %v3500
        %v3521 = vpack.c.b16 %v3503, %v3502
        %v3522 = vpack.c.b16 %v3505, %v3504
        %v3523 = vpack.c.b16 %v3507, %v3506
        %v3527 = vunpack.c.l.b16 %v3441
        %v3528 = vunpack.c.l.b16 %v3442
        %v3529 = vunpack.c.l.b16 %v3443
        %v3530 = vpack.c.b16 %v3528, %v3527
        %v3531 = vpack.c.b16 %v3529, %v3529
        %v3534 = vsel %vm3037, %v3508, 0
        %v3537 = vsel %vm3037, %v3509, 0
        %v3540 = vsel %vm3037, %v3510, 0
        %v3543 = vsel %vm3037, %v3511, 0
        %v3546 = vsel %vm3037, %v3512, 0
        %v3549 = vsel %vm3037, %v3513, 0
        %v3552 = vsel %vm3037, %v3514, 0
        %v3555 = vsel %vm3037, %v3515, 0
        %v3558 = vsel %vm3037, %v3516, 0
        %v3561 = vsel %vm3037, %v3517, 0
        %v3564 = vsel %vm3037, %v3518, 0
        %v3567 = vsel %vm3037, %v3519, 0
        %v3570 = vsel %vm3037, %v3520, 0
        %v3573 = vsel %vm3037, %v3521, 0
        %v3576 = vsel %vm3037, %v3522, 0
        %v3579 = vsel %vm3037, %v3523, 0
        %v3582 = vsel %vm3086, %v3531, 0
        %3584 = vmatpush.bf16.msra.mxu0 0
        %3585 = vmatpush.bf16.msra.mxu0 0
        %3586 = vmatpush.bf16.msra.mxu0 0
        %3587 = vmatpush.bf16.msra.mxu0 0
        %3588 = vmatpush.bf16.msra.mxu0 0
        %3589 = vmatpush.bf16.msra.mxu0 0
        %3590 = vmatpush.bf16.msra.mxu0 %v3582
        %3591 = vmatpush.bf16.msra.mxu0 %v3530
        %3592 = vmatmul.bf16.gmra.mxu0 %v3534
        %v3593 = vpop.f32.mrf.mxu0
        %v3594 = vadd.f32 0.0, %v3593
        %v3595 = vpop.f32.mrf.mxu0
        %v3596 = vadd.f32 0.0, %v3595
        %3597 = vmatmul.bf16.gmra.mxu0 %v3537
        %v3598 = vpop.f32.mrf.mxu0
        %v3599 = vadd.f32 0.0, %v3598
        %v3600 = vpop.f32.mrf.mxu0
        %v3601 = vadd.f32 0.0, %v3600
        %3602 = vmatmul.bf16.gmra.mxu0 %v3540
        %v3603 = vpop.f32.mrf.mxu0
        %v3604 = vadd.f32 0.0, %v3603
        %v3605 = vpop.f32.mrf.mxu0
        %v3606 = vadd.f32 0.0, %v3605
        %3607 = vmatmul.bf16.gmra.mxu0 %v3543
        %v3608 = vpop.f32.mrf.mxu0
        %v3609 = vadd.f32 0.0, %v3608
        %v3610 = vpop.f32.mrf.mxu0
        %v3611 = vadd.f32 0.0, %v3610
        %3612 = vmatmul.bf16.gmra.mxu0 %v3546
        %v3613 = vpop.f32.mrf.mxu0
        %v3614 = vadd.f32 0.0, %v3613
        %v3615 = vpop.f32.mrf.mxu0
        %v3616 = vadd.f32 0.0, %v3615
        %3617 = vmatmul.bf16.gmra.mxu0 %v3549
        %v3618 = vpop.f32.mrf.mxu0
        %v3619 = vadd.f32 0.0, %v3618
        %v3620 = vpop.f32.mrf.mxu0
        %v3621 = vadd.f32 0.0, %v3620
        %3622 = vmatmul.bf16.gmra.mxu0 %v3552
        %v3623 = vpop.f32.mrf.mxu0
        %v3624 = vadd.f32 0.0, %v3623
        %v3625 = vpop.f32.mrf.mxu0
        %v3626 = vadd.f32 0.0, %v3625
        %3627 = vmatmul.bf16.gmra.mxu0 %v3555
        %v3628 = vpop.f32.mrf.mxu0
        %v3629 = vadd.f32 0.0, %v3628
        %v3630 = vpop.f32.mrf.mxu0
        %v3631 = vadd.f32 0.0, %v3630
        %3632 = vmatmul.bf16.gmra.mxu0 %v3558
        %v3633 = vpop.f32.mrf.mxu0
        %v3634 = vadd.f32 0.0, %v3633
        %v3635 = vpop.f32.mrf.mxu0
        %v3636 = vadd.f32 0.0, %v3635
        %3637 = vmatmul.bf16.gmra.mxu0 %v3561
        %v3638 = vpop.f32.mrf.mxu0
        %v3639 = vadd.f32 0.0, %v3638
        %v3640 = vpop.f32.mrf.mxu0
        %v3641 = vadd.f32 0.0, %v3640
        %3642 = vmatmul.bf16.gmra.mxu0 %v3564
        %v3643 = vpop.f32.mrf.mxu0
        %v3644 = vadd.f32 0.0, %v3643
        %v3645 = vpop.f32.mrf.mxu0
        %v3646 = vadd.f32 0.0, %v3645
        %3647 = vmatmul.bf16.gmra.mxu0 %v3567
        %v3648 = vpop.f32.mrf.mxu0
        %v3649 = vadd.f32 0.0, %v3648
        %v3650 = vpop.f32.mrf.mxu0
        %v3651 = vadd.f32 0.0, %v3650
        %3652 = vmatmul.bf16.gmra.mxu0 %v3570
        %v3653 = vpop.f32.mrf.mxu0
        %v3654 = vadd.f32 0.0, %v3653
        %v3655 = vpop.f32.mrf.mxu0
        %v3656 = vadd.f32 0.0, %v3655
        %3657 = vmatmul.bf16.gmra.mxu0 %v3573
        %v3658 = vpop.f32.mrf.mxu0
        %v3659 = vadd.f32 0.0, %v3658
        %v3660 = vpop.f32.mrf.mxu0
        %v3661 = vadd.f32 0.0, %v3660
        %3662 = vmatmul.bf16.gmra.mxu0 %v3576
        %v3663 = vpop.f32.mrf.mxu0
        %v3664 = vadd.f32 0.0, %v3663
        %v3665 = vpop.f32.mrf.mxu0
        %v3666 = vadd.f32 0.0, %v3665
        %3667 = vmatmul.bf16.gmra.mxu0 %v3579
        %v3668 = vpop.f32.mrf.mxu0
        %v3669 = vadd.f32 0.0, %v3668
        %v3670 = vpop.f32.mrf.mxu0
        %v3671 = vadd.f32 0.0, %v3670
        %3672 = vdwg.mxu0
        %v3673 = vadd.f32 %v3329, %v3594
        %v3674 = vadd.f32 %v3331, %v3596
        %v3675 = vadd.f32 %v3334, %v3599
        %v3676 = vadd.f32 %v3336, %v3601
        %v3677 = vadd.f32 %v3339, %v3604
        %v3678 = vadd.f32 %v3341, %v3606
        %v3679 = vadd.f32 %v3344, %v3609
        %v3680 = vadd.f32 %v3346, %v3611
        %v3681 = vadd.f32 %v3349, %v3614
        %v3682 = vadd.f32 %v3351, %v3616
        %v3683 = vadd.f32 %v3354, %v3619
        %v3684 = vadd.f32 %v3356, %v3621
        %v3685 = vadd.f32 %v3359, %v3624
        %v3686 = vadd.f32 %v3361, %v3626
        %v3687 = vadd.f32 %v3364, %v3629
        %v3688 = vadd.f32 %v3366, %v3631
        %v3689 = vadd.f32 %v3369, %v3634
        %v3690 = vadd.f32 %v3371, %v3636
        %v3691 = vadd.f32 %v3374, %v3639
        %v3692 = vadd.f32 %v3376, %v3641
        %v3693 = vadd.f32 %v3379, %v3644
        %v3694 = vadd.f32 %v3381, %v3646
        %v3695 = vadd.f32 %v3384, %v3649
        %v3696 = vadd.f32 %v3386, %v3651
        %v3697 = vadd.f32 %v3389, %v3654
        %v3698 = vadd.f32 %v3391, %v3656
        %v3699 = vadd.f32 %v3394, %v3659
        %v3700 = vadd.f32 %v3396, %v3661
        %v3701 = vadd.f32 %v3399, %v3664
        %v3702 = vadd.f32 %v3401, %v3666
        %v3703 = vadd.f32 %v3404, %v3669
        %v3704 = vadd.f32 %v3406, %v3671
        %s3705 = scalar_lea.vmem [#allocation2], 24
        %v3706 = vld [vmem:[%s3705] sm:$0xf]
        %v3707 = vld [vmem:[%s3705 + $0x4] sm:$0xf]
        %v3708 = vld [vmem:[%s3705 + $0x8] sm:$0xf]
        %v3709 = vld [vmem:[%s3705 + $0xc] sm:$0xf]
        %v3710 = vld [vmem:[%s3705 + $0x10] sm:$0xf]
        %v3711 = vld [vmem:[%s3705 + $0x14] sm:$0xf]
        %v3712 = vld [vmem:[%s3705 + $0x18] sm:$0xf]
        %v3713 = vld [vmem:[%s3705 + $0x1c] sm:$0xf]
        %v3714 = vld [vmem:[%s3705 + $0x20] sm:$0xf]
        %v3715 = vld [vmem:[%s3705 + $0x24] sm:$0xf]
        %v3716 = vld [vmem:[%s3705 + $0x28] sm:$0xf]
        %v3717 = vld [vmem:[%s3705 + $0x2c] sm:$0xf]
        %v3718 = vld [vmem:[%s3705 + $0x30] sm:$0xf]
        %v3719 = vld [vmem:[%s3705 + $0x34] sm:$0xf]
        %v3720 = vld [vmem:[%s3705 + $0x38] sm:$0xf]
        %v3721 = vld [vmem:[%s3705 + $0x3c] sm:$0xf]
        %v3722 = vld [vmem:[%s3705 + $0x40] sm:$0xf]
        %v3723 = vld [vmem:[%s3705 + $0x44] sm:$0xf]
        %v3724 = vld [vmem:[%s3705 + $0x48] sm:$0xf]
        %v3725 = vld [vmem:[%s3705 + $0x4c] sm:$0xf]
        %v3726 = vld [vmem:[%s3705 + $0x50] sm:$0xf]
        %v3727 = vld [vmem:[%s3705 + $0x54] sm:$0xf]
        %v3728 = vld [vmem:[%s3705 + $0x58] sm:$0xf]
        %v3729 = vld [vmem:[%s3705 + $0x5c] sm:$0xf]
        %v3730 = vld [vmem:[%s3705 + $0x60] sm:$0xf]
        %v3731 = vld [vmem:[%s3705 + $0x64] sm:$0xf]
        %v3732 = vld [vmem:[%s3705 + $0x68] sm:$0xf]
        %v3733 = vld [vmem:[%s3705 + $0x6c] sm:$0xf]
        %v3734 = vld [vmem:[%s3705 + $0x70] sm:$0xf]
        %v3735 = vld [vmem:[%s3705 + $0x74] sm:$0xf]
        %v3736 = vld [vmem:[%s3705 + $0x78] sm:$0xf]
        %v3737 = vld [vmem:[%s3705 + $0x7c] sm:$0xf]
        %v3738 = vld [vmem:[%s1 + $0x1c] sm:$0xc]
        %v3739 = vld [vmem:[%s1 + $0x20] sm:$0xf]
        %v3740 = vld [vmem:[%s1 + $0x24] sm:$0xf]
        %v3773 = vunpack.c.l.b16 %v3706
        %v3774 = vunpack.c.l.b16 %v3707
        %v3775 = vunpack.c.l.b16 %v3708
        %v3776 = vunpack.c.l.b16 %v3709
        %v3777 = vunpack.c.l.b16 %v3710
        %v3778 = vunpack.c.l.b16 %v3711
        %v3779 = vunpack.c.l.b16 %v3712
        %v3780 = vunpack.c.l.b16 %v3713
        %v3781 = vunpack.c.l.b16 %v3714
        %v3782 = vunpack.c.l.b16 %v3715
        %v3783 = vunpack.c.l.b16 %v3716
        %v3784 = vunpack.c.l.b16 %v3717
        %v3785 = vunpack.c.l.b16 %v3718
        %v3786 = vunpack.c.l.b16 %v3719
        %v3787 = vunpack.c.l.b16 %v3720
        %v3788 = vunpack.c.l.b16 %v3721
        %v3789 = vunpack.c.l.b16 %v3722
        %v3790 = vunpack.c.l.b16 %v3723
        %v3791 = vunpack.c.l.b16 %v3724
        %v3792 = vunpack.c.l.b16 %v3725
        %v3793 = vunpack.c.l.b16 %v3726
        %v3794 = vunpack.c.l.b16 %v3727
        %v3795 = vunpack.c.l.b16 %v3728
        %v3796 = vunpack.c.l.b16 %v3729
        %v3797 = vunpack.c.l.b16 %v3730
        %v3798 = vunpack.c.l.b16 %v3731
        %v3799 = vunpack.c.l.b16 %v3732
        %v3800 = vunpack.c.l.b16 %v3733
        %v3801 = vunpack.c.l.b16 %v3734
        %v3802 = vunpack.c.l.b16 %v3735
        %v3803 = vunpack.c.l.b16 %v3736
        %v3804 = vunpack.c.l.b16 %v3737
        %v3805 = vpack.c.b16 %v3774, %v3773
        %v3806 = vpack.c.b16 %v3776, %v3775
        %v3807 = vpack.c.b16 %v3778, %v3777
        %v3808 = vpack.c.b16 %v3780, %v3779
        %v3809 = vpack.c.b16 %v3782, %v3781
        %v3810 = vpack.c.b16 %v3784, %v3783
        %v3811 = vpack.c.b16 %v3786, %v3785
        %v3812 = vpack.c.b16 %v3788, %v3787
        %v3813 = vpack.c.b16 %v3790, %v3789
        %v3814 = vpack.c.b16 %v3792, %v3791
        %v3815 = vpack.c.b16 %v3794, %v3793
        %v3816 = vpack.c.b16 %v3796, %v3795
        %v3817 = vpack.c.b16 %v3798, %v3797
        %v3818 = vpack.c.b16 %v3800, %v3799
        %v3819 = vpack.c.b16 %v3802, %v3801
        %v3820 = vpack.c.b16 %v3804, %v3803
        %v3824 = vunpack.c.l.b16 %v3738
        %v3825 = vunpack.c.l.b16 %v3739
        %v3826 = vunpack.c.l.b16 %v3740
        %v3827 = vpack.c.b16 %v3825, %v3824
        %v3828 = vpack.c.b16 %v3826, %v3826
        %v3829 = vrot.slane %v3827, 2
        %v3830 = vrot.slane %v3828, 2
        %v3831 = vsel %vm3032, %v3829, %v3830
        %v3834 = vsel %vm3037, %v3805, 0
        %v3837 = vsel %vm3037, %v3806, 0
        %v3840 = vsel %vm3037, %v3807, 0
        %v3843 = vsel %vm3037, %v3808, 0
        %v3846 = vsel %vm3037, %v3809, 0
        %v3849 = vsel %vm3037, %v3810, 0
        %v3852 = vsel %vm3037, %v3811, 0
        %v3855 = vsel %vm3037, %v3812, 0
        %v3858 = vsel %vm3037, %v3813, 0
        %v3861 = vsel %vm3037, %v3814, 0
        %v3864 = vsel %vm3037, %v3815, 0
        %v3867 = vsel %vm3037, %v3816, 0
        %v3870 = vsel %vm3037, %v3817, 0
        %v3873 = vsel %vm3037, %v3818, 0
        %v3876 = vsel %vm3037, %v3819, 0
        %v3879 = vsel %vm3037, %v3820, 0
        %v3882 = vsel %vm3086, %v3830, 0
        %3884 = vmatpush.bf16.msra.mxu0 0
        %3885 = vmatpush.bf16.msra.mxu0 0
        %3886 = vmatpush.bf16.msra.mxu0 0
        %3887 = vmatpush.bf16.msra.mxu0 0
        %3888 = vmatpush.bf16.msra.mxu0 0
        %3889 = vmatpush.bf16.msra.mxu0 0
        %3890 = vmatpush.bf16.msra.mxu0 %v3882
        %3891 = vmatpush.bf16.msra.mxu0 %v3831
        %3892 = vmatmul.bf16.gmra.mxu0 %v3834
        %v3893 = vpop.f32.mrf.mxu0
        %v3894 = vadd.f32 0.0, %v3893
        %v3895 = vpop.f32.mrf.mxu0
        %v3896 = vadd.f32 0.0, %v3895
        %3897 = vmatmul.bf16.gmra.mxu0 %v3837
        %v3898 = vpop.f32.mrf.mxu0
        %v3899 = vadd.f32 0.0, %v3898
        %v3900 = vpop.f32.mrf.mxu0
        %v3901 = vadd.f32 0.0, %v3900
        %3902 = vmatmul.bf16.gmra.mxu0 %v3840
        %v3903 = vpop.f32.mrf.mxu0
        %v3904 = vadd.f32 0.0, %v3903
        %v3905 = vpop.f32.mrf.mxu0
        %v3906 = vadd.f32 0.0, %v3905
        %3907 = vmatmul.bf16.gmra.mxu0 %v3843
        %v3908 = vpop.f32.mrf.mxu0
        %v3909 = vadd.f32 0.0, %v3908
        %v3910 = vpop.f32.mrf.mxu0
        %v3911 = vadd.f32 0.0, %v3910
        %3912 = vmatmul.bf16.gmra.mxu0 %v3846
        %v3913 = vpop.f32.mrf.mxu0
        %v3914 = vadd.f32 0.0, %v3913
        %v3915 = vpop.f32.mrf.mxu0
        %v3916 = vadd.f32 0.0, %v3915
        %3917 = vmatmul.bf16.gmra.mxu0 %v3849
        %v3918 = vpop.f32.mrf.mxu0
        %v3919 = vadd.f32 0.0, %v3918
        %v3920 = vpop.f32.mrf.mxu0
        %v3921 = vadd.f32 0.0, %v3920
        %3922 = vmatmul.bf16.gmra.mxu0 %v3852
        %v3923 = vpop.f32.mrf.mxu0
        %v3924 = vadd.f32 0.0, %v3923
        %v3925 = vpop.f32.mrf.mxu0
        %v3926 = vadd.f32 0.0, %v3925
        %3927 = vmatmul.bf16.gmra.mxu0 %v3855
        %v3928 = vpop.f32.mrf.mxu0
        %v3929 = vadd.f32 0.0, %v3928
        %v3930 = vpop.f32.mrf.mxu0
        %v3931 = vadd.f32 0.0, %v3930
        %3932 = vmatmul.bf16.gmra.mxu0 %v3858
        %v3933 = vpop.f32.mrf.mxu0
        %v3934 = vadd.f32 0.0, %v3933
        %v3935 = vpop.f32.mrf.mxu0
        %v3936 = vadd.f32 0.0, %v3935
        %3937 = vmatmul.bf16.gmra.mxu0 %v3861
        %v3938 = vpop.f32.mrf.mxu0
        %v3939 = vadd.f32 0.0, %v3938
        %v3940 = vpop.f32.mrf.mxu0
        %v3941 = vadd.f32 0.0, %v3940
        %3942 = vmatmul.bf16.gmra.mxu0 %v3864
        %v3943 = vpop.f32.mrf.mxu0
        %v3944 = vadd.f32 0.0, %v3943
        %v3945 = vpop.f32.mrf.mxu0
        %v3946 = vadd.f32 0.0, %v3945
        %3947 = vmatmul.bf16.gmra.mxu0 %v3867
        %v3948 = vpop.f32.mrf.mxu0
        %v3949 = vadd.f32 0.0, %v3948
        %v3950 = vpop.f32.mrf.mxu0
        %v3951 = vadd.f32 0.0, %v3950
        %3952 = vmatmul.bf16.gmra.mxu0 %v3870
        %v3953 = vpop.f32.mrf.mxu0
        %v3954 = vadd.f32 0.0, %v3953
        %v3955 = vpop.f32.mrf.mxu0
        %v3956 = vadd.f32 0.0, %v3955
        %3957 = vmatmul.bf16.gmra.mxu0 %v3873
        %v3958 = vpop.f32.mrf.mxu0
        %v3959 = vadd.f32 0.0, %v3958
        %v3960 = vpop.f32.mrf.mxu0
        %v3961 = vadd.f32 0.0, %v3960
        %3962 = vmatmul.bf16.gmra.mxu0 %v3876
        %v3963 = vpop.f32.mrf.mxu0
        %v3964 = vadd.f32 0.0, %v3963
        %v3965 = vpop.f32.mrf.mxu0
        %v3966 = vadd.f32 0.0, %v3965
        %3967 = vmatmul.bf16.gmra.mxu0 %v3879
        %v3968 = vpop.f32.mrf.mxu0
        %v3969 = vadd.f32 0.0, %v3968
        %v3970 = vpop.f32.mrf.mxu0
        %v3971 = vadd.f32 0.0, %v3970
        %3972 = vdwg.mxu0
        %v3973 = vadd.f32 %v3673, %v3894
        %v3974 = vadd.f32 %v3674, %v3896
        %v3975 = vadd.f32 %v3675, %v3899
        %v3976 = vadd.f32 %v3676, %v3901
        %v3977 = vadd.f32 %v3677, %v3904
        %v3978 = vadd.f32 %v3678, %v3906
        %v3979 = vadd.f32 %v3679, %v3909
        %v3980 = vadd.f32 %v3680, %v3911
        %v3981 = vadd.f32 %v3681, %v3914
        %v3982 = vadd.f32 %v3682, %v3916
        %v3983 = vadd.f32 %v3683, %v3919
        %v3984 = vadd.f32 %v3684, %v3921
        %v3985 = vadd.f32 %v3685, %v3924
        %v3986 = vadd.f32 %v3686, %v3926
        %v3987 = vadd.f32 %v3687, %v3929
        %v3988 = vadd.f32 %v3688, %v3931
        %v3989 = vadd.f32 %v3689, %v3934
        %v3990 = vadd.f32 %v3690, %v3936
        %v3991 = vadd.f32 %v3691, %v3939
        %v3992 = vadd.f32 %v3692, %v3941
        %v3993 = vadd.f32 %v3693, %v3944
        %v3994 = vadd.f32 %v3694, %v3946
        %v3995 = vadd.f32 %v3695, %v3949
        %v3996 = vadd.f32 %v3696, %v3951
        %v3997 = vadd.f32 %v3697, %v3954
        %v3998 = vadd.f32 %v3698, %v3956
        %v3999 = vadd.f32 %v3699, %v3959
        %v4000 = vadd.f32 %v3700, %v3961
        %v4001 = vadd.f32 %v3701, %v3964
        %v4002 = vadd.f32 %v3702, %v3966
        %v4003 = vadd.f32 %v3703, %v3969
        %v4004 = vadd.f32 %v3704, %v3971
        %s4005 = scalar_lea.vmem [#allocation2], 32
        %v4006 = vld [vmem:[%s4005] sm:$0xf]
        %v4007 = vld [vmem:[%s4005 + $0x4] sm:$0xf]
        %v4008 = vld [vmem:[%s4005 + $0x8] sm:$0xf]
        %v4009 = vld [vmem:[%s4005 + $0xc] sm:$0xf]
        %v4010 = vld [vmem:[%s4005 + $0x10] sm:$0xf]
        %v4011 = vld [vmem:[%s4005 + $0x14] sm:$0xf]
        %v4012 = vld [vmem:[%s4005 + $0x18] sm:$0xf]
        %v4013 = vld [vmem:[%s4005 + $0x1c] sm:$0xf]
        %v4014 = vld [vmem:[%s4005 + $0x20] sm:$0xf]
        %v4015 = vld [vmem:[%s4005 + $0x24] sm:$0xf]
        %v4016 = vld [vmem:[%s4005 + $0x28] sm:$0xf]
        %v4017 = vld [vmem:[%s4005 + $0x2c] sm:$0xf]
        %v4018 = vld [vmem:[%s4005 + $0x30] sm:$0xf]
        %v4019 = vld [vmem:[%s4005 + $0x34] sm:$0xf]
        %v4020 = vld [vmem:[%s4005 + $0x38] sm:$0xf]
        %v4021 = vld [vmem:[%s4005 + $0x3c] sm:$0xf]
        %v4022 = vld [vmem:[%s4005 + $0x40] sm:$0xf]
        %v4023 = vld [vmem:[%s4005 + $0x44] sm:$0xf]
        %v4024 = vld [vmem:[%s4005 + $0x48] sm:$0xf]
        %v4025 = vld [vmem:[%s4005 + $0x4c] sm:$0xf]
        %v4026 = vld [vmem:[%s4005 + $0x50] sm:$0xf]
        %v4027 = vld [vmem:[%s4005 + $0x54] sm:$0xf]
        %v4028 = vld [vmem:[%s4005 + $0x58] sm:$0xf]
        %v4029 = vld [vmem:[%s4005 + $0x5c] sm:$0xf]
        %v4030 = vld [vmem:[%s4005 + $0x60] sm:$0xf]
        %v4031 = vld [vmem:[%s4005 + $0x64] sm:$0xf]
        %v4032 = vld [vmem:[%s4005 + $0x68] sm:$0xf]
        %v4033 = vld [vmem:[%s4005 + $0x6c] sm:$0xf]
        %v4034 = vld [vmem:[%s4005 + $0x70] sm:$0xf]
        %v4035 = vld [vmem:[%s4005 + $0x74] sm:$0xf]
        %v4036 = vld [vmem:[%s4005 + $0x78] sm:$0xf]
        %v4037 = vld [vmem:[%s4005 + $0x7c] sm:$0xf]
        %v4038 = vld [vmem:[%s1 + $0x28] sm:$0xf]
        %v4039 = vld [vmem:[%s1 + $0x2c] sm:$0xf]
        %v4040 = vld [vmem:[%s1 + $0x30] sm:$0x3]
        %v4073 = vunpack.c.l.b16 %v4006
        %v4074 = vunpack.c.l.b16 %v4007
        %v4075 = vunpack.c.l.b16 %v4008
        %v4076 = vunpack.c.l.b16 %v4009
        %v4077 = vunpack.c.l.b16 %v4010
        %v4078 = vunpack.c.l.b16 %v4011
        %v4079 = vunpack.c.l.b16 %v4012
        %v4080 = vunpack.c.l.b16 %v4013
        %v4081 = vunpack.c.l.b16 %v4014
        %v4082 = vunpack.c.l.b16 %v4015
        %v4083 = vunpack.c.l.b16 %v4016
        %v4084 = vunpack.c.l.b16 %v4017
        %v4085 = vunpack.c.l.b16 %v4018
        %v4086 = vunpack.c.l.b16 %v4019
        %v4087 = vunpack.c.l.b16 %v4020
        %v4088 = vunpack.c.l.b16 %v4021
        %v4089 = vunpack.c.l.b16 %v4022
        %v4090 = vunpack.c.l.b16 %v4023
        %v4091 = vunpack.c.l.b16 %v4024
        %v4092 = vunpack.c.l.b16 %v4025
        %v4093 = vunpack.c.l.b16 %v4026
        %v4094 = vunpack.c.l.b16 %v4027
        %v4095 = vunpack.c.l.b16 %v4028
        %v4096 = vunpack.c.l.b16 %v4029
        %v4097 = vunpack.c.l.b16 %v4030
        %v4098 = vunpack.c.l.b16 %v4031
        %v4099 = vunpack.c.l.b16 %v4032
        %v4100 = vunpack.c.l.b16 %v4033
        %v4101 = vunpack.c.l.b16 %v4034
        %v4102 = vunpack.c.l.b16 %v4035
        %v4103 = vunpack.c.l.b16 %v4036
        %v4104 = vunpack.c.l.b16 %v4037
        %v4105 = vpack.c.b16 %v4074, %v4073
        %v4106 = vpack.c.b16 %v4076, %v4075
        %v4107 = vpack.c.b16 %v4078, %v4077
        %v4108 = vpack.c.b16 %v4080, %v4079
        %v4109 = vpack.c.b16 %v4082, %v4081
        %v4110 = vpack.c.b16 %v4084, %v4083
        %v4111 = vpack.c.b16 %v4086, %v4085
        %v4112 = vpack.c.b16 %v4088, %v4087
        %v4113 = vpack.c.b16 %v4090, %v4089
        %v4114 = vpack.c.b16 %v4092, %v4091
        %v4115 = vpack.c.b16 %v4094, %v4093
        %v4116 = vpack.c.b16 %v4096, %v4095
        %v4117 = vpack.c.b16 %v4098, %v4097
        %v4118 = vpack.c.b16 %v4100, %v4099
        %v4119 = vpack.c.b16 %v4102, %v4101
        %v4120 = vpack.c.b16 %v4104, %v4103
        %v4124 = vunpack.c.l.b16 %v4038
        %v4125 = vunpack.c.l.b16 %v4039
        %v4126 = vunpack.c.l.b16 %v4040
        %v4127 = vpack.c.b16 %v4125, %v4124
        %v4128 = vpack.c.b16 %v4126, %v4126
        %v4131 = vsel %vm3037, %v4105, 0
        %v4134 = vsel %vm3037, %v4106, 0
        %v4137 = vsel %vm3037, %v4107, 0
        %v4140 = vsel %vm3037, %v4108, 0
        %v4143 = vsel %vm3037, %v4109, 0
        %v4146 = vsel %vm3037, %v4110, 0
        %v4149 = vsel %vm3037, %v4111, 0
        %v4152 = vsel %vm3037, %v4112, 0
        %v4155 = vsel %vm3037, %v4113, 0
        %v4158 = vsel %vm3037, %v4114, 0
        %v4161 = vsel %vm3037, %v4115, 0
        %v4164 = vsel %vm3037, %v4116, 0
        %v4167 = vsel %vm3037, %v4117, 0
        %v4170 = vsel %vm3037, %v4118, 0
        %v4173 = vsel %vm3037, %v4119, 0
        %v4176 = vsel %vm3037, %v4120, 0
        %v4179 = vsel %vm3086, %v4128, 0
        %4181 = vmatpush.bf16.msra.mxu0 0
        %4182 = vmatpush.bf16.msra.mxu0 0
        %4183 = vmatpush.bf16.msra.mxu0 0
        %4184 = vmatpush.bf16.msra.mxu0 0
        %4185 = vmatpush.bf16.msra.mxu0 0
        %4186 = vmatpush.bf16.msra.mxu0 0
        %4187 = vmatpush.bf16.msra.mxu0 %v4179
        %4188 = vmatpush.bf16.msra.mxu0 %v4127
        %4189 = vmatmul.bf16.gmra.mxu0 %v4131
        %v4190 = vpop.f32.mrf.mxu0
        %v4191 = vadd.f32 0.0, %v4190
        %v4192 = vpop.f32.mrf.mxu0
        %v4193 = vadd.f32 0.0, %v4192
        %4194 = vmatmul.bf16.gmra.mxu0 %v4134
        %v4195 = vpop.f32.mrf.mxu0
        %v4196 = vadd.f32 0.0, %v4195
        %v4197 = vpop.f32.mrf.mxu0
        %v4198 = vadd.f32 0.0, %v4197
        %4199 = vmatmul.bf16.gmra.mxu0 %v4137
        %v4200 = vpop.f32.mrf.mxu0
        %v4201 = vadd.f32 0.0, %v4200
        %v4202 = vpop.f32.mrf.mxu0
        %v4203 = vadd.f32 0.0, %v4202
        %4204 = vmatmul.bf16.gmra.mxu0 %v4140
        %v4205 = vpop.f32.mrf.mxu0
        %v4206 = vadd.f32 0.0, %v4205
        %v4207 = vpop.f32.mrf.mxu0
        %v4208 = vadd.f32 0.0, %v4207
        %4209 = vmatmul.bf16.gmra.mxu0 %v4143
        %v4210 = vpop.f32.mrf.mxu0
        %v4211 = vadd.f32 0.0, %v4210
        %v4212 = vpop.f32.mrf.mxu0
        %v4213 = vadd.f32 0.0, %v4212
        %4214 = vmatmul.bf16.gmra.mxu0 %v4146
        %v4215 = vpop.f32.mrf.mxu0
        %v4216 = vadd.f32 0.0, %v4215
        %v4217 = vpop.f32.mrf.mxu0
        %v4218 = vadd.f32 0.0, %v4217
        %4219 = vmatmul.bf16.gmra.mxu0 %v4149
        %v4220 = vpop.f32.mrf.mxu0
        %v4221 = vadd.f32 0.0, %v4220
        %v4222 = vpop.f32.mrf.mxu0
        %v4223 = vadd.f32 0.0, %v4222
        %4224 = vmatmul.bf16.gmra.mxu0 %v4152
        %v4225 = vpop.f32.mrf.mxu0
        %v4226 = vadd.f32 0.0, %v4225
        %v4227 = vpop.f32.mrf.mxu0
        %v4228 = vadd.f32 0.0, %v4227
        %4229 = vmatmul.bf16.gmra.mxu0 %v4155
        %v4230 = vpop.f32.mrf.mxu0
        %v4231 = vadd.f32 0.0, %v4230
        %v4232 = vpop.f32.mrf.mxu0
        %v4233 = vadd.f32 0.0, %v4232
        %4234 = vmatmul.bf16.gmra.mxu0 %v4158
        %v4235 = vpop.f32.mrf.mxu0
        %v4236 = vadd.f32 0.0, %v4235
        %v4237 = vpop.f32.mrf.mxu0
        %v4238 = vadd.f32 0.0, %v4237
        %4239 = vmatmul.bf16.gmra.mxu0 %v4161
        %v4240 = vpop.f32.mrf.mxu0
        %v4241 = vadd.f32 0.0, %v4240
        %v4242 = vpop.f32.mrf.mxu0
        %v4243 = vadd.f32 0.0, %v4242
        %4244 = vmatmul.bf16.gmra.mxu0 %v4164
        %v4245 = vpop.f32.mrf.mxu0
        %v4246 = vadd.f32 0.0, %v4245
        %v4247 = vpop.f32.mrf.mxu0
        %v4248 = vadd.f32 0.0, %v4247
        %4249 = vmatmul.bf16.gmra.mxu0 %v4167
        %v4250 = vpop.f32.mrf.mxu0
        %v4251 = vadd.f32 0.0, %v4250
        %v4252 = vpop.f32.mrf.mxu0
        %v4253 = vadd.f32 0.0, %v4252
        %4254 = vmatmul.bf16.gmra.mxu0 %v4170
        %v4255 = vpop.f32.mrf.mxu0
        %v4256 = vadd.f32 0.0, %v4255
        %v4257 = vpop.f32.mrf.mxu0
        %v4258 = vadd.f32 0.0, %v4257
        %4259 = vmatmul.bf16.gmra.mxu0 %v4173
        %v4260 = vpop.f32.mrf.mxu0
        %v4261 = vadd.f32 0.0, %v4260
        %v4262 = vpop.f32.mrf.mxu0
        %v4263 = vadd.f32 0.0, %v4262
        %4264 = vmatmul.bf16.gmra.mxu0 %v4176
        %v4265 = vpop.f32.mrf.mxu0
        %v4266 = vadd.f32 0.0, %v4265
        %v4267 = vpop.f32.mrf.mxu0
        %v4268 = vadd.f32 0.0, %v4267
        %4269 = vdwg.mxu0
        %v4270 = vadd.f32 %v3973, %v4191
        %v4271 = vadd.f32 %v3974, %v4193
        %v4272 = vadd.f32 %v3975, %v4196
        %v4273 = vadd.f32 %v3976, %v4198
        %v4274 = vadd.f32 %v3977, %v4201
        %v4275 = vadd.f32 %v3978, %v4203
        %v4276 = vadd.f32 %v3979, %v4206
        %v4277 = vadd.f32 %v3980, %v4208
        %v4278 = vadd.f32 %v3981, %v4211
        %v4279 = vadd.f32 %v3982, %v4213
        %v4280 = vadd.f32 %v3983, %v4216
        %v4281 = vadd.f32 %v3984, %v4218
        %v4282 = vadd.f32 %v3985, %v4221
        %v4283 = vadd.f32 %v3986, %v4223
        %v4284 = vadd.f32 %v3987, %v4226
        %v4285 = vadd.f32 %v3988, %v4228
        %v4286 = vadd.f32 %v3989, %v4231
        %v4287 = vadd.f32 %v3990, %v4233
        %v4288 = vadd.f32 %v3991, %v4236
        %v4289 = vadd.f32 %v3992, %v4238
        %v4290 = vadd.f32 %v3993, %v4241
        %v4291 = vadd.f32 %v3994, %v4243
        %v4292 = vadd.f32 %v3995, %v4246
        %v4293 = vadd.f32 %v3996, %v4248
        %v4294 = vadd.f32 %v3997, %v4251
        %v4295 = vadd.f32 %v3998, %v4253
        %v4296 = vadd.f32 %v3999, %v4256
        %v4297 = vadd.f32 %v4000, %v4258
        %v4298 = vadd.f32 %v4001, %v4261
        %v4299 = vadd.f32 %v4002, %v4263
        %v4300 = vadd.f32 %v4003, %v4266
        %v4301 = vadd.f32 %v4004, %v4268
        %v4302 = vld [vmem:[%s2] sm:$0x1]
        %v4304 = vperm.slane %v4302, 0
        %v4306 = vadd.f32 %v4270, %v4304
        %v4307 = vadd.f32 %v4271, %v4304
        %v4308 = vadd.f32 %v4272, %v4304
        %v4309 = vadd.f32 %v4273, %v4304
        %v4310 = vadd.f32 %v4274, %v4304
        %v4311 = vadd.f32 %v4275, %v4304
        %v4312 = vadd.f32 %v4276, %v4304
        %v4313 = vadd.f32 %v4277, %v4304
        %v4314 = vadd.f32 %v4278, %v4304
        %v4315 = vadd.f32 %v4279, %v4304
        %v4316 = vadd.f32 %v4280, %v4304
        %v4317 = vadd.f32 %v4281, %v4304
        %v4318 = vadd.f32 %v4282, %v4304
        %v4319 = vadd.f32 %v4283, %v4304
        %v4320 = vadd.f32 %v4284, %v4304
        %v4321 = vadd.f32 %v4285, %v4304
        %v4322 = vadd.f32 %v4286, %v4304
        %v4323 = vadd.f32 %v4287, %v4304
        %v4324 = vadd.f32 %v4288, %v4304
        %v4325 = vadd.f32 %v4289, %v4304
        %v4326 = vadd.f32 %v4290, %v4304
        %v4327 = vadd.f32 %v4291, %v4304
        %v4328 = vadd.f32 %v4292, %v4304
        %v4329 = vadd.f32 %v4293, %v4304
        %v4330 = vadd.f32 %v4294, %v4304
        %v4331 = vadd.f32 %v4295, %v4304
        %v4332 = vadd.f32 %v4296, %v4304
        %v4333 = vadd.f32 %v4297, %v4304
        %v4334 = vadd.f32 %v4298, %v4304
        %v4335 = vadd.f32 %v4299, %v4304
        %v4336 = vadd.f32 %v4300, %v4304
        %v4337 = vadd.f32 %v4301, %v4304
        %v4338 = vmax.f32 %v4306, 0.0
        %v4339 = vmax.f32 %v4307, 0.0
        %v4340 = vmax.f32 %v4308, 0.0
        %v4341 = vmax.f32 %v4309, 0.0
        %v4342 = vmax.f32 %v4310, 0.0
        %v4343 = vmax.f32 %v4311, 0.0
        %v4344 = vmax.f32 %v4312, 0.0
        %v4345 = vmax.f32 %v4313, 0.0
        %v4346 = vmax.f32 %v4314, 0.0
        %v4347 = vmax.f32 %v4315, 0.0
        %v4348 = vmax.f32 %v4316, 0.0
        %v4349 = vmax.f32 %v4317, 0.0
        %v4350 = vmax.f32 %v4318, 0.0
        %v4351 = vmax.f32 %v4319, 0.0
        %v4352 = vmax.f32 %v4320, 0.0
        %v4353 = vmax.f32 %v4321, 0.0
        %v4354 = vmax.f32 %v4322, 0.0
        %v4355 = vmax.f32 %v4323, 0.0
        %v4356 = vmax.f32 %v4324, 0.0
        %v4357 = vmax.f32 %v4325, 0.0
        %v4358 = vmax.f32 %v4326, 0.0
        %v4359 = vmax.f32 %v4327, 0.0
        %v4360 = vmax.f32 %v4328, 0.0
        %v4361 = vmax.f32 %v4329, 0.0
        %v4362 = vmax.f32 %v4330, 0.0
        %v4363 = vmax.f32 %v4331, 0.0
        %v4364 = vmax.f32 %v4332, 0.0
        %v4365 = vmax.f32 %v4333, 0.0
        %v4366 = vmax.f32 %v4334, 0.0
        %v4367 = vmax.f32 %v4335, 0.0
        %v4368 = vmax.f32 %v4336, 0.0
        %v4369 = vmax.f32 %v4337, 0.0
        %v4370 = vld [vmem:[%s3] sm:$0x1]
        %v4372 = vperm.slane %v4370, 0
        %v4374 = vmul.f32 %v4338, %v4372
        %v4375 = vmul.f32 %v4339, %v4372
        %v4376 = vmul.f32 %v4340, %v4372
        %v4377 = vmul.f32 %v4341, %v4372
        %v4378 = vmul.f32 %v4342, %v4372
        %v4379 = vmul.f32 %v4343, %v4372
        %v4380 = vmul.f32 %v4344, %v4372
        %v4381 = vmul.f32 %v4345, %v4372
        %v4382 = vmul.f32 %v4346, %v4372
        %v4383 = vmul.f32 %v4347, %v4372
        %v4384 = vmul.f32 %v4348, %v4372
        %v4385 = vmul.f32 %v4349, %v4372
        %v4386 = vmul.f32 %v4350, %v4372
        %v4387 = vmul.f32 %v4351, %v4372
        %v4388 = vmul.f32 %v4352, %v4372
        %v4389 = vmul.f32 %v4353, %v4372
        %v4390 = vmul.f32 %v4354, %v4372
        %v4391 = vmul.f32 %v4355, %v4372
        %v4392 = vmul.f32 %v4356, %v4372
        %v4393 = vmul.f32 %v4357, %v4372
        %v4394 = vmul.f32 %v4358, %v4372
        %v4395 = vmul.f32 %v4359, %v4372
        %v4396 = vmul.f32 %v4360, %v4372
        %v4397 = vmul.f32 %v4361, %v4372
        %v4398 = vmul.f32 %v4362, %v4372
        %v4399 = vmul.f32 %v4363, %v4372
        %v4400 = vmul.f32 %v4364, %v4372
        %v4401 = vmul.f32 %v4365, %v4372
        %v4402 = vmul.f32 %v4366, %v4372
        %v4403 = vmul.f32 %v4367, %v4372
        %v4404 = vmul.f32 %v4368, %v4372
        %v4405 = vmul.f32 %v4369, %v4372
        %v4406 = vld [vmem:[%s4] sm:$0x1]
        %v4408 = vperm.slane %v4406, 0
        %v4410 = vadd.f32 %v4374, %v4408
        %v4411 = vadd.f32 %v4375, %v4408
        %v4412 = vadd.f32 %v4376, %v4408
        %v4413 = vadd.f32 %v4377, %v4408
        %v4414 = vadd.f32 %v4378, %v4408
        %v4415 = vadd.f32 %v4379, %v4408
        %v4416 = vadd.f32 %v4380, %v4408
        %v4417 = vadd.f32 %v4381, %v4408
        %v4418 = vadd.f32 %v4382, %v4408
        %v4419 = vadd.f32 %v4383, %v4408
        %v4420 = vadd.f32 %v4384, %v4408
        %v4421 = vadd.f32 %v4385, %v4408
        %v4422 = vadd.f32 %v4386, %v4408
        %v4423 = vadd.f32 %v4387, %v4408
        %v4424 = vadd.f32 %v4388, %v4408
        %v4425 = vadd.f32 %v4389, %v4408
        %v4426 = vadd.f32 %v4390, %v4408
        %v4427 = vadd.f32 %v4391, %v4408
        %v4428 = vadd.f32 %v4392, %v4408
        %v4429 = vadd.f32 %v4393, %v4408
        %v4430 = vadd.f32 %v4394, %v4408
        %v4431 = vadd.f32 %v4395, %v4408
        %v4432 = vadd.f32 %v4396, %v4408
        %v4433 = vadd.f32 %v4397, %v4408
        %v4434 = vadd.f32 %v4398, %v4408
        %v4435 = vadd.f32 %v4399, %v4408
        %v4436 = vadd.f32 %v4400, %v4408
        %v4437 = vadd.f32 %v4401, %v4408
        %v4438 = vadd.f32 %v4402, %v4408
        %v4439 = vadd.f32 %v4403, %v4408
        %v4440 = vadd.f32 %v4404, %v4408
        %v4441 = vadd.f32 %v4405, %v4408
        %v4442 = vpack.c.bf16 %v4410, %v4410
        %v4443 = vpack.c.bf16 %v4411, %v4411
        %v4444 = vpack.c.bf16 %v4412, %v4412
        %v4445 = vpack.c.bf16 %v4413, %v4413
        %v4446 = vpack.c.bf16 %v4414, %v4414
        %v4447 = vpack.c.bf16 %v4415, %v4415
        %v4448 = vpack.c.bf16 %v4416, %v4416
        %v4449 = vpack.c.bf16 %v4417, %v4417
        %v4450 = vpack.c.bf16 %v4418, %v4418
        %v4451 = vpack.c.bf16 %v4419, %v4419
        %v4452 = vpack.c.bf16 %v4420, %v4420
        %v4453 = vpack.c.bf16 %v4421, %v4421
        %v4454 = vpack.c.bf16 %v4422, %v4422
        %v4455 = vpack.c.bf16 %v4423, %v4423
        %v4456 = vpack.c.bf16 %v4424, %v4424
        %v4457 = vpack.c.bf16 %v4425, %v4425
        %v4458 = vpack.c.bf16 %v4426, %v4426
        %v4459 = vpack.c.bf16 %v4427, %v4427
        %v4460 = vpack.c.bf16 %v4428, %v4428
        %v4461 = vpack.c.bf16 %v4429, %v4429
        %v4462 = vpack.c.bf16 %v4430, %v4430
        %v4463 = vpack.c.bf16 %v4431, %v4431
        %v4464 = vpack.c.bf16 %v4432, %v4432
        %v4465 = vpack.c.bf16 %v4433, %v4433
        %v4466 = vpack.c.bf16 %v4434, %v4434
        %v4467 = vpack.c.bf16 %v4435, %v4435
        %v4468 = vpack.c.bf16 %v4436, %v4436
        %v4469 = vpack.c.bf16 %v4437, %v4437
        %v4470 = vpack.c.bf16 %v4438, %v4438
        %v4471 = vpack.c.bf16 %v4439, %v4439
        %v4472 = vpack.c.bf16 %v4440, %v4440
        %v4473 = vpack.c.bf16 %v4441, %v4441
        %4474 = vst [vmem:[#allocation3] sm:$0xf] %v4442
        %4475 = vst [vmem:[#allocation3 + $0x14] sm:$0xf] %v4443
        %4476 = vst [vmem:[#allocation3 + $0x28] sm:$0xf] %v4444
        %4477 = vst [vmem:[#allocation3 + $0x3c] sm:$0xf] %v4445
        %4478 = vst [vmem:[#allocation3 + $0x50] sm:$0xf] %v4446
        %4479 = vst [vmem:[#allocation3 + $0x64] sm:$0xf] %v4447
        %4480 = vst [vmem:[#allocation3 + $0x78] sm:$0xf] %v4448
        %4481 = vst [vmem:[#allocation3 + $0x8c] sm:$0xf] %v4449
        %4482 = vst [vmem:[#allocation3 + $0xa0] sm:$0xf] %v4450
        %4483 = vst [vmem:[#allocation3 + $0xb4] sm:$0xf] %v4451
        %4484 = vst [vmem:[#allocation3 + $0xc8] sm:$0xf] %v4452
        %4485 = vst [vmem:[#allocation3 + $0xdc] sm:$0xf] %v4453
        %4486 = vst [vmem:[#allocation3 + $0xf0] sm:$0xf] %v4454
        %4487 = vst [vmem:[#allocation3 + $0x104] sm:$0xf] %v4455
        %4488 = vst [vmem:[#allocation3 + $0x118] sm:$0xf] %v4456
        %4489 = vst [vmem:[#allocation3 + $0x12c] sm:$0xf] %v4457
        %4490 = vst [vmem:[#allocation3 + $0x140] sm:$0xf] %v4458
        %4491 = vst [vmem:[#allocation3 + $0x154] sm:$0xf] %v4459
        %4492 = vst [vmem:[#allocation3 + $0x168] sm:$0xf] %v4460
        %4493 = vst [vmem:[#allocation3 + $0x17c] sm:$0xf] %v4461
        %4494 = vst [vmem:[#allocation3 + $0x190] sm:$0xf] %v4462
        %4495 = vst [vmem:[#allocation3 + $0x1a4] sm:$0xf] %v4463
        %4496 = vst [vmem:[#allocation3 + $0x1b8] sm:$0xf] %v4464
        %4497 = vst [vmem:[#allocation3 + $0x1cc] sm:$0xf] %v4465
        %4498 = vst [vmem:[#allocation3 + $0x1e0] sm:$0xf] %v4466
        %4499 = vst [vmem:[#allocation3 + $0x1f4] sm:$0xf] %v4467
        %4500 = vst [vmem:[#allocation3 + $0x208] sm:$0xf] %v4468
        %4501 = vst [vmem:[#allocation3 + $0x21c] sm:$0xf] %v4469
        %4502 = vst [vmem:[#allocation3 + $0x230] sm:$0xf] %v4470
        %4503 = vst [vmem:[#allocation3 + $0x244] sm:$0xf] %v4471
        %4504 = vst [vmem:[#allocation3 + $0x258] sm:$0xf] %v4472
        %4505 = vst [vmem:[#allocation3 + $0x26c] sm:$0xf] %v4473
        %v4507 = vshrl.u32 %v4442, 16
        %v4509 = vrot.slane %v4507, 4
        %v4510 = vshll.u32 %v4442, 16
        %v4512 = vrot.slane %v4510, 5
        %v4513 = vor.u32 %v4509, %v4512
        %v4514 = vrot.slane %v4513, 4
        %v4516 = vshll.u32 %v4443, 16
        %v4518 = vrot.slane %v4516, 5
        %v4519 = vsel %vm599, %v4514, %v4518
        %v4520 = vshrl.u32 %v4443, 16
        %v4522 = vrot.slane %v4520, 4
        %v4523 = vor.u32 %v4522, %v4518
        %v4524 = vrot.slane %v4523, 4
        %v4526 = vshrl.u32 %v4444, 16
        %v4528 = vrot.slane %v4526, 4
        %v4529 = vshll.u32 %v4444, 16
        %v4531 = vrot.slane %v4529, 5
        %v4532 = vor.u32 %v4528, %v4531
        %v4533 = vrot.slane %v4532, 4
        %v4535 = vshll.u32 %v4445, 16
        %v4537 = vrot.slane %v4535, 5
        %v4538 = vsel %vm599, %v4533, %v4537
        %v4539 = vshrl.u32 %v4445, 16
        %v4541 = vrot.slane %v4539, 4
        %v4542 = vor.u32 %v4541, %v4537
        %v4543 = vrot.slane %v4542, 4
        %v4545 = vshrl.u32 %v4446, 16
        %v4547 = vrot.slane %v4545, 4
        %v4548 = vshll.u32 %v4446, 16
        %v4550 = vrot.slane %v4548, 5
        %v4551 = vor.u32 %v4547, %v4550
        %v4552 = vrot.slane %v4551, 4
        %v4554 = vshll.u32 %v4447, 16
        %v4556 = vrot.slane %v4554, 5
        %v4557 = vsel %vm599, %v4552, %v4556
        %v4558 = vshrl.u32 %v4447, 16
        %v4560 = vrot.slane %v4558, 4
        %v4561 = vor.u32 %v4560, %v4556
        %v4562 = vrot.slane %v4561, 4
        %v4564 = vshrl.u32 %v4448, 16
        %v4566 = vrot.slane %v4564, 4
        %v4567 = vshll.u32 %v4448, 16
        %v4569 = vrot.slane %v4567, 5
        %v4570 = vor.u32 %v4566, %v4569
        %v4571 = vrot.slane %v4570, 4
        %v4573 = vshll.u32 %v4449, 16
        %v4575 = vrot.slane %v4573, 5
        %v4576 = vsel %vm599, %v4571, %v4575
        %v4577 = vshrl.u32 %v4449, 16
        %v4579 = vrot.slane %v4577, 4
        %v4580 = vor.u32 %v4579, %v4575
        %v4581 = vrot.slane %v4580, 4
        %v4583 = vshrl.u32 %v4450, 16
        %v4585 = vrot.slane %v4583, 4
        %v4586 = vshll.u32 %v4450, 16
        %v4588 = vrot.slane %v4586, 5
        %v4589 = vor.u32 %v4585, %v4588
        %v4590 = vrot.slane %v4589, 4
        %v4592 = vshll.u32 %v4451, 16
        %v4594 = vrot.slane %v4592, 5
        %v4595 = vsel %vm599, %v4590, %v4594
        %v4596 = vshrl.u32 %v4451, 16
        %v4598 = vrot.slane %v4596, 4
        %v4599 = vor.u32 %v4598, %v4594
        %v4600 = vrot.slane %v4599, 4
        %v4602 = vshrl.u32 %v4452, 16
        %v4604 = vrot.slane %v4602, 4
        %v4605 = vshll.u32 %v4452, 16
        %v4607 = vrot.slane %v4605, 5
        %v4608 = vor.u32 %v4604, %v4607
        %v4609 = vrot.slane %v4608, 4
        %v4611 = vshll.u32 %v4453, 16
        %v4613 = vrot.slane %v4611, 5
        %v4614 = vsel %vm599, %v4609, %v4613
        %v4615 = vshrl.u32 %v4453, 16
        %v4617 = vrot.slane %v4615, 4
        %v4618 = vor.u32 %v4617, %v4613
        %v4619 = vrot.slane %v4618, 4
        %v4621 = vshrl.u32 %v4454, 16
        %v4623 = vrot.slane %v4621, 4
        %v4624 = vshll.u32 %v4454, 16
        %v4626 = vrot.slane %v4624, 5
        %v4627 = vor.u32 %v4623, %v4626
        %v4628 = vrot.slane %v4627, 4
        %v4630 = vshll.u32 %v4455, 16
        %v4632 = vrot.slane %v4630, 5
        %v4633 = vsel %vm599, %v4628, %v4632
        %v4634 = vshrl.u32 %v4455, 16
        %v4636 = vrot.slane %v4634, 4
        %v4637 = vor.u32 %v4636, %v4632
        %v4638 = vrot.slane %v4637, 4
        %v4640 = vshrl.u32 %v4456, 16
        %v4642 = vrot.slane %v4640, 4
        %v4643 = vshll.u32 %v4456, 16
        %v4645 = vrot.slane %v4643, 5
        %v4646 = vor.u32 %v4642, %v4645
        %v4647 = vrot.slane %v4646, 4
        %v4649 = vshll.u32 %v4457, 16
        %v4651 = vrot.slane %v4649, 5
        %v4652 = vsel %vm599, %v4647, %v4651
        %v4653 = vshrl.u32 %v4457, 16
        %v4655 = vrot.slane %v4653, 4
        %v4656 = vor.u32 %v4655, %v4651
        %v4657 = vrot.slane %v4656, 4
        %v4659 = vshrl.u32 %v4458, 16
        %v4661 = vrot.slane %v4659, 4
        %v4662 = vshll.u32 %v4458, 16
        %v4664 = vrot.slane %v4662, 5
        %v4665 = vor.u32 %v4661, %v4664
        %v4666 = vrot.slane %v4665, 4
        %v4668 = vshll.u32 %v4459, 16
        %v4670 = vrot.slane %v4668, 5
        %v4671 = vsel %vm599, %v4666, %v4670
        %v4672 = vshrl.u32 %v4459, 16
        %v4674 = vrot.slane %v4672, 4
        %v4675 = vor.u32 %v4674, %v4670
        %v4676 = vrot.slane %v4675, 4
        %v4678 = vshrl.u32 %v4460, 16
        %v4680 = vrot.slane %v4678, 4
        %v4681 = vshll.u32 %v4460, 16
        %v4683 = vrot.slane %v4681, 5
        %v4684 = vor.u32 %v4680, %v4683
        %v4685 = vrot.slane %v4684, 4
        %v4687 = vshll.u32 %v4461, 16
        %v4689 = vrot.slane %v4687, 5
        %v4690 = vsel %vm599, %v4685, %v4689
        %v4691 = vshrl.u32 %v4461, 16
        %v4693 = vrot.slane %v4691, 4
        %v4694 = vor.u32 %v4693, %v4689
        %v4695 = vrot.slane %v4694, 4
        %v4697 = vshrl.u32 %v4462, 16
        %v4699 = vrot.slane %v4697, 4
        %v4700 = vshll.u32 %v4462, 16
        %v4702 = vrot.slane %v4700, 5
        %v4703 = vor.u32 %v4699, %v4702
        %v4704 = vrot.slane %v4703, 4
        %v4706 = vshll.u32 %v4463, 16
        %v4708 = vrot.slane %v4706, 5
        %v4709 = vsel %vm599, %v4704, %v4708
        %v4710 = vshrl.u32 %v4463, 16
        %v4712 = vrot.slane %v4710, 4
        %v4713 = vor.u32 %v4712, %v4708
        %v4714 = vrot.slane %v4713, 4
        %v4716 = vshrl.u32 %v4464, 16
        %v4718 = vrot.slane %v4716, 4
        %v4719 = vshll.u32 %v4464, 16
        %v4721 = vrot.slane %v4719, 5
        %v4722 = vor.u32 %v4718, %v4721
        %v4723 = vrot.slane %v4722, 4
        %v4725 = vshll.u32 %v4465, 16
        %v4727 = vrot.slane %v4725, 5
        %v4728 = vsel %vm599, %v4723, %v4727
        %v4729 = vshrl.u32 %v4465, 16
        %v4731 = vrot.slane %v4729, 4
        %v4732 = vor.u32 %v4731, %v4727
        %v4733 = vrot.slane %v4732, 4
        %v4735 = vshrl.u32 %v4466, 16
        %v4737 = vrot.slane %v4735, 4
        %v4738 = vshll.u32 %v4466, 16
        %v4740 = vrot.slane %v4738, 5
        %v4741 = vor.u32 %v4737, %v4740
        %v4742 = vrot.slane %v4741, 4
        %v4744 = vshll.u32 %v4467, 16
        %v4746 = vrot.slane %v4744, 5
        %v4747 = vsel %vm599, %v4742, %v4746
        %v4748 = vshrl.u32 %v4467, 16
        %v4750 = vrot.slane %v4748, 4
        %v4751 = vor.u32 %v4750, %v4746
        %v4752 = vrot.slane %v4751, 4
        %v4754 = vshrl.u32 %v4468, 16
        %v4756 = vrot.slane %v4754, 4
        %v4757 = vshll.u32 %v4468, 16
        %v4759 = vrot.slane %v4757, 5
        %v4760 = vor.u32 %v4756, %v4759
        %v4761 = vrot.slane %v4760, 4
        %v4763 = vshll.u32 %v4469, 16
        %v4765 = vrot.slane %v4763, 5
        %v4766 = vsel %vm599, %v4761, %v4765
        %v4767 = vshrl.u32 %v4469, 16
        %v4769 = vrot.slane %v4767, 4
        %v4770 = vor.u32 %v4769, %v4765
        %v4771 = vrot.slane %v4770, 4
        %v4773 = vshrl.u32 %v4470, 16
        %v4775 = vrot.slane %v4773, 4
        %v4776 = vshll.u32 %v4470, 16
        %v4778 = vrot.slane %v4776, 5
        %v4779 = vor.u32 %v4775, %v4778
        %v4780 = vrot.slane %v4779, 4
        %v4782 = vshll.u32 %v4471, 16
        %v4784 = vrot.slane %v4782, 5
        %v4785 = vsel %vm599, %v4780, %v4784
        %v4786 = vshrl.u32 %v4471, 16
        %v4788 = vrot.slane %v4786, 4
        %v4789 = vor.u32 %v4788, %v4784
        %v4790 = vrot.slane %v4789, 4
        %v4792 = vshrl.u32 %v4472, 16
        %v4794 = vrot.slane %v4792, 4
        %v4795 = vshll.u32 %v4472, 16
        %v4797 = vrot.slane %v4795, 5
        %v4798 = vor.u32 %v4794, %v4797
        %v4799 = vrot.slane %v4798, 4
        %v4801 = vshll.u32 %v4473, 16
        %v4803 = vrot.slane %v4801, 5
        %v4804 = vsel %vm599, %v4799, %v4803
        %v4805 = vshrl.u32 %v4473, 16
        %v4807 = vrot.slane %v4805, 4
        %v4808 = vor.u32 %v4807, %v4803
        %v4809 = vrot.slane %v4808, 4
        %4842 = vst [vmem:[#allocation3 + $0x4] sm:$0xf] %v4519
        %vm4843 = vcmask 1043456
        %vm4844 = vmand %vm4843, %vm597
        %v4845 = vld [vmem:[#allocation3 + $0x18] sm:$0xf]
        %v4846 = vsel %vm4844, %v4524, %v4845
        %4847 = vst [vmem:[#allocation3 + $0x18] sm:$0xf] %v4846
        %4848 = vst [vmem:[#allocation3 + $0x2c] sm:$0xf] %v4538
        %v4849 = vld [vmem:[#allocation3 + $0x40] sm:$0xf]
        %v4850 = vsel %vm4844, %v4543, %v4849
        %4851 = vst [vmem:[#allocation3 + $0x40] sm:$0xf] %v4850
        %4852 = vst [vmem:[#allocation3 + $0x54] sm:$0xf] %v4557
        %v4853 = vld [vmem:[#allocation3 + $0x68] sm:$0xf]
        %v4854 = vsel %vm4844, %v4562, %v4853
        %4855 = vst [vmem:[#allocation3 + $0x68] sm:$0xf] %v4854
        %4856 = vst [vmem:[#allocation3 + $0x7c] sm:$0xf] %v4576
        %v4857 = vld [vmem:[#allocation3 + $0x90] sm:$0xf]
        %v4858 = vsel %vm4844, %v4581, %v4857
        %4859 = vst [vmem:[#allocation3 + $0x90] sm:$0xf] %v4858
        %4860 = vst [vmem:[#allocation3 + $0xa4] sm:$0xf] %v4595
        %v4861 = vld [vmem:[#allocation3 + $0xb8] sm:$0xf]
        %v4862 = vsel %vm4844, %v4600, %v4861
        %4863 = vst [vmem:[#allocation3 + $0xb8] sm:$0xf] %v4862
        %4864 = vst [vmem:[#allocation3 + $0xcc] sm:$0xf] %v4614
        %v4865 = vld [vmem:[#allocation3 + $0xe0] sm:$0xf]
        %v4866 = vsel %vm4844, %v4619, %v4865
        %4867 = vst [vmem:[#allocation3 + $0xe0] sm:$0xf] %v4866
        %4868 = vst [vmem:[#allocation3 + $0xf4] sm:$0xf] %v4633
        %v4869 = vld [vmem:[#allocation3 + $0x108] sm:$0xf]
        %v4870 = vsel %vm4844, %v4638, %v4869
        %4871 = vst [vmem:[#allocation3 + $0x108] sm:$0xf] %v4870
        %4872 = vst [vmem:[#allocation3 + $0x11c] sm:$0xf] %v4652
        %v4873 = vld [vmem:[#allocation3 + $0x130] sm:$0xf]
        %v4874 = vsel %vm4844, %v4657, %v4873
        %4875 = vst [vmem:[#allocation3 + $0x130] sm:$0xf] %v4874
        %4876 = vst [vmem:[#allocation3 + $0x144] sm:$0xf] %v4671
        %v4877 = vld [vmem:[#allocation3 + $0x158] sm:$0xf]
        %v4878 = vsel %vm4844, %v4676, %v4877
        %4879 = vst [vmem:[#allocation3 + $0x158] sm:$0xf] %v4878
        %4880 = vst [vmem:[#allocation3 + $0x16c] sm:$0xf] %v4690
        %v4881 = vld [vmem:[#allocation3 + $0x180] sm:$0xf]
        %v4882 = vsel %vm4844, %v4695, %v4881
        %4883 = vst [vmem:[#allocation3 + $0x180] sm:$0xf] %v4882
        %4884 = vst [vmem:[#allocation3 + $0x194] sm:$0xf] %v4709
        %v4885 = vld [vmem:[#allocation3 + $0x1a8] sm:$0xf]
        %v4886 = vsel %vm4844, %v4714, %v4885
        %4887 = vst [vmem:[#allocation3 + $0x1a8] sm:$0xf] %v4886
        %4888 = vst [vmem:[#allocation3 + $0x1bc] sm:$0xf] %v4728
        %v4889 = vld [vmem:[#allocation3 + $0x1d0] sm:$0xf]
        %v4890 = vsel %vm4844, %v4733, %v4889
        %4891 = vst [vmem:[#allocation3 + $0x1d0] sm:$0xf] %v4890
        %4892 = vst [vmem:[#allocation3 + $0x1e4] sm:$0xf] %v4747
        %v4893 = vld [vmem:[#allocation3 + $0x1f8] sm:$0xf]
        %v4894 = vsel %vm4844, %v4752, %v4893
        %4895 = vst [vmem:[#allocation3 + $0x1f8] sm:$0xf] %v4894
        %4896 = vst [vmem:[#allocation3 + $0x20c] sm:$0xf] %v4766
        %v4897 = vld [vmem:[#allocation3 + $0x220] sm:$0xf]
        %v4898 = vsel %vm4844, %v4771, %v4897
        %4899 = vst [vmem:[#allocation3 + $0x220] sm:$0xf] %v4898
        %4900 = vst [vmem:[#allocation3 + $0x234] sm:$0xf] %v4785
        %v4901 = vld [vmem:[#allocation3 + $0x248] sm:$0xf]
        %v4902 = vsel %vm4844, %v4790, %v4901
        %4903 = vst [vmem:[#allocation3 + $0x248] sm:$0xf] %v4902
        %4904 = vst [vmem:[#allocation3 + $0x25c] sm:$0xf] %v4804
        %v4905 = vld [vmem:[#allocation3 + $0x270] sm:$0xf]
        %v4906 = vsel %vm4844, %v4809, %v4905
        %4907 = vst [vmem:[#allocation3 + $0x270] sm:$0xf] %v4906
        %vm4924 = vcmask 1043459
        %vm4925 = vsmask.f32 7950
        %vm4926 = vmand %vm4924, %vm4925
        %v4927 = vld [vmem:[#allocation3 + $0x18] sm:$0x8]
        %v4928 = vsel %vm4926, %v4512, %v4927
        %4929 = vst [vmem:[#allocation3 + $0x18] sm:$0x8] %v4928
        %v4930 = vld [vmem:[#allocation3 + $0x40] sm:$0x8]
        %v4931 = vsel %vm4926, %v4531, %v4930
        %4932 = vst [vmem:[#allocation3 + $0x40] sm:$0x8] %v4931
        %v4933 = vld [vmem:[#allocation3 + $0x68] sm:$0x8]
        %v4934 = vsel %vm4926, %v4550, %v4933
        %4935 = vst [vmem:[#allocation3 + $0x68] sm:$0x8] %v4934
        %v4936 = vld [vmem:[#allocation3 + $0x90] sm:$0x8]
        %v4937 = vsel %vm4926, %v4569, %v4936
        %4938 = vst [vmem:[#allocation3 + $0x90] sm:$0x8] %v4937
        %v4939 = vld [vmem:[#allocation3 + $0xb8] sm:$0x8]
        %v4940 = vsel %vm4926, %v4588, %v4939
        %4941 = vst [vmem:[#allocation3 + $0xb8] sm:$0x8] %v4940
        %v4942 = vld [vmem:[#allocation3 + $0xe0] sm:$0x8]
        %v4943 = vsel %vm4926, %v4607, %v4942
        %4944 = vst [vmem:[#allocation3 + $0xe0] sm:$0x8] %v4943
        %v4945 = vld [vmem:[#allocation3 + $0x108] sm:$0x8]
        %v4946 = vsel %vm4926, %v4626, %v4945
        %4947 = vst [vmem:[#allocation3 + $0x108] sm:$0x8] %v4946
        %v4948 = vld [vmem:[#allocation3 + $0x130] sm:$0x8]
        %v4949 = vsel %vm4926, %v4645, %v4948
        %4950 = vst [vmem:[#allocation3 + $0x130] sm:$0x8] %v4949
        %v4951 = vld [vmem:[#allocation3 + $0x158] sm:$0x8]
        %v4952 = vsel %vm4926, %v4664, %v4951
        %4953 = vst [vmem:[#allocation3 + $0x158] sm:$0x8] %v4952
        %v4954 = vld [vmem:[#allocation3 + $0x180] sm:$0x8]
        %v4955 = vsel %vm4926, %v4683, %v4954
        %4956 = vst [vmem:[#allocation3 + $0x180] sm:$0x8] %v4955
        %v4957 = vld [vmem:[#allocation3 + $0x1a8] sm:$0x8]
        %v4958 = vsel %vm4926, %v4702, %v4957
        %4959 = vst [vmem:[#allocation3 + $0x1a8] sm:$0x8] %v4958
        %v4960 = vld [vmem:[#allocation3 + $0x1d0] sm:$0x8]
        %v4961 = vsel %vm4926, %v4721, %v4960
        %4962 = vst [vmem:[#allocation3 + $0x1d0] sm:$0x8] %v4961
        %v4963 = vld [vmem:[#allocation3 + $0x1f8] sm:$0x8]
        %v4964 = vsel %vm4926, %v4740, %v4963
        %4965 = vst [vmem:[#allocation3 + $0x1f8] sm:$0x8] %v4964
        %v4966 = vld [vmem:[#allocation3 + $0x220] sm:$0x8]
        %v4967 = vsel %vm4926, %v4759, %v4966
        %4968 = vst [vmem:[#allocation3 + $0x220] sm:$0x8] %v4967
        %v4969 = vld [vmem:[#allocation3 + $0x248] sm:$0x8]
        %v4970 = vsel %vm4926, %v4778, %v4969
        %4971 = vst [vmem:[#allocation3 + $0x248] sm:$0x8] %v4970
        %v4972 = vld [vmem:[#allocation3 + $0x270] sm:$0x8]
        %v4973 = vsel %vm4926, %v4797, %v4972
        %4974 = vst [vmem:[#allocation3 + $0x270] sm:$0x8] %v4973
        %v5007 = vrot.slane %v4442, 5
        %v5008 = vrot.slane %v5007, 4
        %v5009 = vrot.slane %v4443, 5
        %v5010 = vsel %vm1363, %v5008, %v5009
        %v5011 = vrot.slane %v5009, 4
        %v5012 = vrot.slane %v4444, 5
        %v5013 = vrot.slane %v5012, 4
        %v5014 = vrot.slane %v4445, 5
        %v5015 = vsel %vm1363, %v5013, %v5014
        %v5016 = vrot.slane %v5014, 4
        %v5017 = vrot.slane %v4446, 5
        %v5018 = vrot.slane %v5017, 4
        %v5019 = vrot.slane %v4447, 5
        %v5020 = vsel %vm1363, %v5018, %v5019
        %v5021 = vrot.slane %v5019, 4
        %v5022 = vrot.slane %v4448, 5
        %v5023 = vrot.slane %v5022, 4
        %v5024 = vrot.slane %v4449, 5
        %v5025 = vsel %vm1363, %v5023, %v5024
        %v5026 = vrot.slane %v5024, 4
        %v5027 = vrot.slane %v4450, 5
        %v5028 = vrot.slane %v5027, 4
        %v5029 = vrot.slane %v4451, 5
        %v5030 = vsel %vm1363, %v5028, %v5029
        %v5031 = vrot.slane %v5029, 4
        %v5032 = vrot.slane %v4452, 5
        %v5033 = vrot.slane %v5032, 4
        %v5034 = vrot.slane %v4453, 5
        %v5035 = vsel %vm1363, %v5033, %v5034
        %v5036 = vrot.slane %v5034, 4
        %v5037 = vrot.slane %v4454, 5
        %v5038 = vrot.slane %v5037, 4
        %v5039 = vrot.slane %v4455, 5
        %v5040 = vsel %vm1363, %v5038, %v5039
        %v5041 = vrot.slane %v5039, 4
        %v5042 = vrot.slane %v4456, 5
        %v5043 = vrot.slane %v5042, 4
        %v5044 = vrot.slane %v4457, 5
        %v5045 = vsel %vm1363, %v5043, %v5044
        %v5046 = vrot.slane %v5044, 4
        %v5047 = vrot.slane %v4458, 5
        %v5048 = vrot.slane %v5047, 4
        %v5049 = vrot.slane %v4459, 5
        %v5050 = vsel %vm1363, %v5048, %v5049
        %v5051 = vrot.slane %v5049, 4
        %v5052 = vrot.slane %v4460, 5
        %v5053 = vrot.slane %v5052, 4
        %v5054 = vrot.slane %v4461, 5
        %v5055 = vsel %vm1363, %v5053, %v5054
        %v5056 = vrot.slane %v5054, 4
        %v5057 = vrot.slane %v4462, 5
        %v5058 = vrot.slane %v5057, 4
        %v5059 = vrot.slane %v4463, 5
        %v5060 = vsel %vm1363, %v5058, %v5059
        %v5061 = vrot.slane %v5059, 4
        %v5062 = vrot.slane %v4464, 5
        %v5063 = vrot.slane %v5062, 4
        %v5064 = vrot.slane %v4465, 5
        %v5065 = vsel %vm1363, %v5063, %v5064
        %v5066 = vrot.slane %v5064, 4
        %v5067 = vrot.slane %v4466, 5
        %v5068 = vrot.slane %v5067, 4
        %v5069 = vrot.slane %v4467, 5
        %v5070 = vsel %vm1363, %v5068, %v5069
        %v5071 = vrot.slane %v5069, 4
        %v5072 = vrot.slane %v4468, 5
        %v5073 = vrot.slane %v5072, 4
        %v5074 = vrot.slane %v4469, 5
        %v5075 = vsel %vm1363, %v5073, %v5074
        %v5076 = vrot.slane %v5074, 4
        %v5077 = vrot.slane %v4470, 5
        %v5078 = vrot.slane %v5077, 4
        %v5079 = vrot.slane %v4471, 5
        %v5080 = vsel %vm1363, %v5078, %v5079
        %v5081 = vrot.slane %v5079, 4
        %v5082 = vrot.slane %v4472, 5
        %v5083 = vrot.slane %v5082, 4
        %v5084 = vrot.slane %v4473, 5
        %v5085 = vsel %vm1363, %v5083, %v5084
        %v5086 = vrot.slane %v5084, 4
        %5119 = vst [vmem:[#allocation3 + $0x8] sm:$0xf] %v5010
        %5120 = vst [vmem:[#allocation3 + $0x1c] sm:$0x7] %v5011
        %5121 = vst [vmem:[#allocation3 + $0x30] sm:$0xf] %v5015
        %5122 = vst [vmem:[#allocation3 + $0x44] sm:$0x7] %v5016
        %5123 = vst [vmem:[#allocation3 + $0x58] sm:$0xf] %v5020
        %5124 = vst [vmem:[#allocation3 + $0x6c] sm:$0x7] %v5021
        %5125 = vst [vmem:[#allocation3 + $0x80] sm:$0xf] %v5025
        %5126 = vst [vmem:[#allocation3 + $0x94] sm:$0x7] %v5026
        %5127 = vst [vmem:[#allocation3 + $0xa8] sm:$0xf] %v5030
        %5128 = vst [vmem:[#allocation3 + $0xbc] sm:$0x7] %v5031
        %5129 = vst [vmem:[#allocation3 + $0xd0] sm:$0xf] %v5035
        %5130 = vst [vmem:[#allocation3 + $0xe4] sm:$0x7] %v5036
        %5131 = vst [vmem:[#allocation3 + $0xf8] sm:$0xf] %v5040
        %5132 = vst [vmem:[#allocation3 + $0x10c] sm:$0x7] %v5041
        %5133 = vst [vmem:[#allocation3 + $0x120] sm:$0xf] %v5045
        %5134 = vst [vmem:[#allocation3 + $0x134] sm:$0x7] %v5046
        %5135 = vst [vmem:[#allocation3 + $0x148] sm:$0xf] %v5050
        %5136 = vst [vmem:[#allocation3 + $0x15c] sm:$0x7] %v5051
        %5137 = vst [vmem:[#allocation3 + $0x170] sm:$0xf] %v5055
        %5138 = vst [vmem:[#allocation3 + $0x184] sm:$0x7] %v5056
        %5139 = vst [vmem:[#allocation3 + $0x198] sm:$0xf] %v5060
        %5140 = vst [vmem:[#allocation3 + $0x1ac] sm:$0x7] %v5061
        %5141 = vst [vmem:[#allocation3 + $0x1c0] sm:$0xf] %v5065
        %5142 = vst [vmem:[#allocation3 + $0x1d4] sm:$0x7] %v5066
        %5143 = vst [vmem:[#allocation3 + $0x1e8] sm:$0xf] %v5070
        %5144 = vst [vmem:[#allocation3 + $0x1fc] sm:$0x7] %v5071
        %5145 = vst [vmem:[#allocation3 + $0x210] sm:$0xf] %v5075
        %5146 = vst [vmem:[#allocation3 + $0x224] sm:$0x7] %v5076
        %5147 = vst [vmem:[#allocation3 + $0x238] sm:$0xf] %v5080
        %5148 = vst [vmem:[#allocation3 + $0x24c] sm:$0x7] %v5081
        %5149 = vst [vmem:[#allocation3 + $0x260] sm:$0xf] %v5085
        %5150 = vst [vmem:[#allocation3 + $0x274] sm:$0x7] %v5086
        %5167 = vst [vmem:[#allocation3 + $0x1c] sm:$0x8] %v5007
        %5168 = vst [vmem:[#allocation3 + $0x44] sm:$0x8] %v5012
        %5169 = vst [vmem:[#allocation3 + $0x6c] sm:$0x8] %v5017
        %5170 = vst [vmem:[#allocation3 + $0x94] sm:$0x8] %v5022
        %5171 = vst [vmem:[#allocation3 + $0xbc] sm:$0x8] %v5027
        %5172 = vst [vmem:[#allocation3 + $0xe4] sm:$0x8] %v5032
        %5173 = vst [vmem:[#allocation3 + $0x10c] sm:$0x8] %v5037
        %5174 = vst [vmem:[#allocation3 + $0x134] sm:$0x8] %v5042
        %5175 = vst [vmem:[#allocation3 + $0x15c] sm:$0x8] %v5047
        %5176 = vst [vmem:[#allocation3 + $0x184] sm:$0x8] %v5052
        %5177 = vst [vmem:[#allocation3 + $0x1ac] sm:$0x8] %v5057
        %5178 = vst [vmem:[#allocation3 + $0x1d4] sm:$0x8] %v5062
        %5179 = vst [vmem:[#allocation3 + $0x1fc] sm:$0x8] %v5067
        %5180 = vst [vmem:[#allocation3 + $0x224] sm:$0x8] %v5072
        %5181 = vst [vmem:[#allocation3 + $0x24c] sm:$0x8] %v5077
        %5182 = vst [vmem:[#allocation3 + $0x274] sm:$0x8] %v5082
        %v5183 = vrot.slane %v4507, 5
        %v5184 = vrot.slane %v4510, 6
        %v5185 = vor.u32 %v5183, %v5184
        %v5186 = vrot.slane %v5185, 4
        %v5187 = vrot.slane %v4520, 5
        %v5188 = vrot.slane %v4516, 6
        %v5189 = vor.u32 %v5187, %v5188
        %v5190 = vsel %vm1727, %v5186, %v5189
        %v5191 = vrot.slane %v5189, 4
        %v5192 = vrot.slane %v4526, 5
        %v5193 = vrot.slane %v4529, 6
        %v5194 = vor.u32 %v5192, %v5193
        %v5195 = vrot.slane %v5194, 4
        %v5196 = vrot.slane %v4539, 5
        %v5197 = vrot.slane %v4535, 6
        %v5198 = vor.u32 %v5196, %v5197
        %v5199 = vsel %vm1727, %v5195, %v5198
        %v5200 = vrot.slane %v5198, 4
        %v5201 = vrot.slane %v4545, 5
        %v5202 = vrot.slane %v4548, 6
        %v5203 = vor.u32 %v5201, %v5202
        %v5204 = vrot.slane %v5203, 4
        %v5205 = vrot.slane %v4558, 5
        %v5206 = vrot.slane %v4554, 6
        %v5207 = vor.u32 %v5205, %v5206
        %v5208 = vsel %vm1727, %v5204, %v5207
        %v5209 = vrot.slane %v5207, 4
        %v5210 = vrot.slane %v4564, 5
        %v5211 = vrot.slane %v4567, 6
        %v5212 = vor.u32 %v5210, %v5211
        %v5213 = vrot.slane %v5212, 4
        %v5214 = vrot.slane %v4577, 5
        %v5215 = vrot.slane %v4573, 6
        %v5216 = vor.u32 %v5214, %v5215
        %v5217 = vsel %vm1727, %v5213, %v5216
        %v5218 = vrot.slane %v5216, 4
        %v5219 = vrot.slane %v4583, 5
        %v5220 = vrot.slane %v4586, 6
        %v5221 = vor.u32 %v5219, %v5220
        %v5222 = vrot.slane %v5221, 4
        %v5223 = vrot.slane %v4596, 5
        %v5224 = vrot.slane %v4592, 6
        %v5225 = vor.u32 %v5223, %v5224
        %v5226 = vsel %vm1727, %v5222, %v5225
        %v5227 = vrot.slane %v5225, 4
        %v5228 = vrot.slane %v4602, 5
        %v5229 = vrot.slane %v4605, 6
        %v5230 = vor.u32 %v5228, %v5229
        %v5231 = vrot.slane %v5230, 4
        %v5232 = vrot.slane %v4615, 5
        %v5233 = vrot.slane %v4611, 6
        %v5234 = vor.u32 %v5232, %v5233
        %v5235 = vsel %vm1727, %v5231, %v5234
        %v5236 = vrot.slane %v5234, 4
        %v5237 = vrot.slane %v4621, 5
        %v5238 = vrot.slane %v4624, 6
        %v5239 = vor.u32 %v5237, %v5238
        %v5240 = vrot.slane %v5239, 4
        %v5241 = vrot.slane %v4634, 5
        %v5242 = vrot.slane %v4630, 6
        %v5243 = vor.u32 %v5241, %v5242
        %v5244 = vsel %vm1727, %v5240, %v5243
        %v5245 = vrot.slane %v5243, 4
        %v5246 = vrot.slane %v4640, 5
        %v5247 = vrot.slane %v4643, 6
        %v5248 = vor.u32 %v5246, %v5247
        %v5249 = vrot.slane %v5248, 4
        %v5250 = vrot.slane %v4653, 5
        %v5251 = vrot.slane %v4649, 6
        %v5252 = vor.u32 %v5250, %v5251
        %v5253 = vsel %vm1727, %v5249, %v5252
        %v5254 = vrot.slane %v5252, 4
        %v5255 = vrot.slane %v4659, 5
        %v5256 = vrot.slane %v4662, 6
        %v5257 = vor.u32 %v5255, %v5256
        %v5258 = vrot.slane %v5257, 4
        %v5259 = vrot.slane %v4672, 5
        %v5260 = vrot.slane %v4668, 6
        %v5261 = vor.u32 %v5259, %v5260
        %v5262 = vsel %vm1727, %v5258, %v5261
        %v5263 = vrot.slane %v5261, 4
        %v5264 = vrot.slane %v4678, 5
        %v5265 = vrot.slane %v4681, 6
        %v5266 = vor.u32 %v5264, %v5265
        %v5267 = vrot.slane %v5266, 4
        %v5268 = vrot.slane %v4691, 5
        %v5269 = vrot.slane %v4687, 6
        %v5270 = vor.u32 %v5268, %v5269
        %v5271 = vsel %vm1727, %v5267, %v5270
        %v5272 = vrot.slane %v5270, 4
        %v5273 = vrot.slane %v4697, 5
        %v5274 = vrot.slane %v4700, 6
        %v5275 = vor.u32 %v5273, %v5274
        %v5276 = vrot.slane %v5275, 4
        %v5277 = vrot.slane %v4710, 5
        %v5278 = vrot.slane %v4706, 6
        %v5279 = vor.u32 %v5277, %v5278
        %v5280 = vsel %vm1727, %v5276, %v5279
        %v5281 = vrot.slane %v5279, 4
        %v5282 = vrot.slane %v4716, 5
        %v5283 = vrot.slane %v4719, 6
        %v5284 = vor.u32 %v5282, %v5283
        %v5285 = vrot.slane %v5284, 4
        %v5286 = vrot.slane %v4729, 5
        %v5287 = vrot.slane %v4725, 6
        %v5288 = vor.u32 %v5286, %v5287
        %v5289 = vsel %vm1727, %v5285, %v5288
        %v5290 = vrot.slane %v5288, 4
        %v5291 = vrot.slane %v4735, 5
        %v5292 = vrot.slane %v4738, 6
        %v5293 = vor.u32 %v5291, %v5292
        %v5294 = vrot.slane %v5293, 4
        %v5295 = vrot.slane %v4748, 5
        %v5296 = vrot.slane %v4744, 6
        %v5297 = vor.u32 %v5295, %v5296
        %v5298 = vsel %vm1727, %v5294, %v5297
        %v5299 = vrot.slane %v5297, 4
        %v5300 = vrot.slane %v4754, 5
        %v5301 = vrot.slane %v4757, 6
        %v5302 = vor.u32 %v5300, %v5301
        %v5303 = vrot.slane %v5302, 4
        %v5304 = vrot.slane %v4767, 5
        %v5305 = vrot.slane %v4763, 6
        %v5306 = vor.u32 %v5304, %v5305
        %v5307 = vsel %vm1727, %v5303, %v5306
        %v5308 = vrot.slane %v5306, 4
        %v5309 = vrot.slane %v4773, 5
        %v5310 = vrot.slane %v4776, 6
        %v5311 = vor.u32 %v5309, %v5310
        %v5312 = vrot.slane %v5311, 4
        %v5313 = vrot.slane %v4786, 5
        %v5314 = vrot.slane %v4782, 6
        %v5315 = vor.u32 %v5313, %v5314
        %v5316 = vsel %vm1727, %v5312, %v5315
        %v5317 = vrot.slane %v5315, 4
        %v5318 = vrot.slane %v4792, 5
        %v5319 = vrot.slane %v4795, 6
        %v5320 = vor.u32 %v5318, %v5319
        %v5321 = vrot.slane %v5320, 4
        %v5322 = vrot.slane %v4805, 5
        %v5323 = vrot.slane %v4801, 6
        %v5324 = vor.u32 %v5322, %v5323
        %v5325 = vsel %vm1727, %v5321, %v5324
        %v5326 = vrot.slane %v5324, 4
        %5359 = vst [vmem:[#allocation3 + $0xc] sm:$0xf] %v5190
        %vm5360 = vmand %vm1361, %vm1725
        %v5361 = vld [vmem:[#allocation3 + $0x20] sm:$0x7]
        %v5362 = vsel %vm5360, %v5191, %v5361
        %5363 = vst [vmem:[#allocation3 + $0x20] sm:$0x7] %v5362
        %5364 = vst [vmem:[#allocation3 + $0x34] sm:$0xf] %v5199
        %v5365 = vld [vmem:[#allocation3 + $0x48] sm:$0x7]
        %v5366 = vsel %vm5360, %v5200, %v5365
        %5367 = vst [vmem:[#allocation3 + $0x48] sm:$0x7] %v5366
        %5368 = vst [vmem:[#allocation3 + $0x5c] sm:$0xf] %v5208
        %v5369 = vld [vmem:[#allocation3 + $0x70] sm:$0x7]
        %v5370 = vsel %vm5360, %v5209, %v5369
        %5371 = vst [vmem:[#allocation3 + $0x70] sm:$0x7] %v5370
        %5372 = vst [vmem:[#allocation3 + $0x84] sm:$0xf] %v5217
        %v5373 = vld [vmem:[#allocation3 + $0x98] sm:$0x7]
        %v5374 = vsel %vm5360, %v5218, %v5373
        %5375 = vst [vmem:[#allocation3 + $0x98] sm:$0x7] %v5374
        %5376 = vst [vmem:[#allocation3 + $0xac] sm:$0xf] %v5226
        %v5377 = vld [vmem:[#allocation3 + $0xc0] sm:$0x7]
        %v5378 = vsel %vm5360, %v5227, %v5377
        %5379 = vst [vmem:[#allocation3 + $0xc0] sm:$0x7] %v5378
        %5380 = vst [vmem:[#allocation3 + $0xd4] sm:$0xf] %v5235
        %v5381 = vld [vmem:[#allocation3 + $0xe8] sm:$0x7]
        %v5382 = vsel %vm5360, %v5236, %v5381
        %5383 = vst [vmem:[#allocation3 + $0xe8] sm:$0x7] %v5382
        %5384 = vst [vmem:[#allocation3 + $0xfc] sm:$0xf] %v5244
        %v5385 = vld [vmem:[#allocation3 + $0x110] sm:$0x7]
        %v5386 = vsel %vm5360, %v5245, %v5385
        %5387 = vst [vmem:[#allocation3 + $0x110] sm:$0x7] %v5386
        %5388 = vst [vmem:[#allocation3 + $0x124] sm:$0xf] %v5253
        %v5389 = vld [vmem:[#allocation3 + $0x138] sm:$0x7]
        %v5390 = vsel %vm5360, %v5254, %v5389
        %5391 = vst [vmem:[#allocation3 + $0x138] sm:$0x7] %v5390
        %5392 = vst [vmem:[#allocation3 + $0x14c] sm:$0xf] %v5262
        %v5393 = vld [vmem:[#allocation3 + $0x160] sm:$0x7]
        %v5394 = vsel %vm5360, %v5263, %v5393
        %5395 = vst [vmem:[#allocation3 + $0x160] sm:$0x7] %v5394
        %5396 = vst [vmem:[#allocation3 + $0x174] sm:$0xf] %v5271
        %v5397 = vld [vmem:[#allocation3 + $0x188] sm:$0x7]
        %v5398 = vsel %vm5360, %v5272, %v5397
        %5399 = vst [vmem:[#allocation3 + $0x188] sm:$0x7] %v5398
        %5400 = vst [vmem:[#allocation3 + $0x19c] sm:$0xf] %v5280
        %v5401 = vld [vmem:[#allocation3 + $0x1b0] sm:$0x7]
        %v5402 = vsel %vm5360, %v5281, %v5401
        %5403 = vst [vmem:[#allocation3 + $0x1b0] sm:$0x7] %v5402
        %5404 = vst [vmem:[#allocation3 + $0x1c4] sm:$0xf] %v5289
        %v5405 = vld [vmem:[#allocation3 + $0x1d8] sm:$0x7]
        %v5406 = vsel %vm5360, %v5290, %v5405
        %5407 = vst [vmem:[#allocation3 + $0x1d8] sm:$0x7] %v5406
        %5408 = vst [vmem:[#allocation3 + $0x1ec] sm:$0xf] %v5298
        %v5409 = vld [vmem:[#allocation3 + $0x200] sm:$0x7]
        %v5410 = vsel %vm5360, %v5299, %v5409
        %5411 = vst [vmem:[#allocation3 + $0x200] sm:$0x7] %v5410
        %5412 = vst [vmem:[#allocation3 + $0x214] sm:$0xf] %v5307
        %v5413 = vld [vmem:[#allocation3 + $0x228] sm:$0x7]
        %v5414 = vsel %vm5360, %v5308, %v5413
        %5415 = vst [vmem:[#allocation3 + $0x228] sm:$0x7] %v5414
        %5416 = vst [vmem:[#allocation3 + $0x23c] sm:$0xf] %v5316
        %v5417 = vld [vmem:[#allocation3 + $0x250] sm:$0x7]
        %v5418 = vsel %vm5360, %v5317, %v5417
        %5419 = vst [vmem:[#allocation3 + $0x250] sm:$0x7] %v5418
        %5420 = vst [vmem:[#allocation3 + $0x264] sm:$0xf] %v5325
        %v5421 = vld [vmem:[#allocation3 + $0x278] sm:$0x7]
        %v5422 = vsel %vm5360, %v5326, %v5421
        %5423 = vst [vmem:[#allocation3 + $0x278] sm:$0x7] %v5422
        %vm5440 = vcmask 1043458
        %vm5441 = vsmask.f32 7946
        %vm5442 = vmand %vm5440, %vm5441
        %v5443 = vld [vmem:[#allocation3 + $0x20] sm:$0xc]
        %v5444 = vsel %vm5442, %v5185, %v5443
        %5445 = vst [vmem:[#allocation3 + $0x20] sm:$0xc] %v5444
        %v5446 = vld [vmem:[#allocation3 + $0x48] sm:$0xc]
        %v5447 = vsel %vm5442, %v5194, %v5446
        %5448 = vst [vmem:[#allocation3 + $0x48] sm:$0xc] %v5447
        %v5449 = vld [vmem:[#allocation3 + $0x70] sm:$0xc]
        %v5450 = vsel %vm5442, %v5203, %v5449
        %5451 = vst [vmem:[#allocation3 + $0x70] sm:$0xc] %v5450
        %v5452 = vld [vmem:[#allocation3 + $0x98] sm:$0xc]
        %v5453 = vsel %vm5442, %v5212, %v5452
        %5454 = vst [vmem:[#allocation3 + $0x98] sm:$0xc] %v5453
        %v5455 = vld [vmem:[#allocation3 + $0xc0] sm:$0xc]
        %v5456 = vsel %vm5442, %v5221, %v5455
        %5457 = vst [vmem:[#allocation3 + $0xc0] sm:$0xc] %v5456
        %v5458 = vld [vmem:[#allocation3 + $0xe8] sm:$0xc]
        %v5459 = vsel %vm5442, %v5230, %v5458
        %5460 = vst [vmem:[#allocation3 + $0xe8] sm:$0xc] %v5459
        %v5461 = vld [vmem:[#allocation3 + $0x110] sm:$0xc]
        %v5462 = vsel %vm5442, %v5239, %v5461
        %5463 = vst [vmem:[#allocation3 + $0x110] sm:$0xc] %v5462
        %v5464 = vld [vmem:[#allocation3 + $0x138] sm:$0xc]
        %v5465 = vsel %vm5442, %v5248, %v5464
        %5466 = vst [vmem:[#allocation3 + $0x138] sm:$0xc] %v5465
        %v5467 = vld [vmem:[#allocation3 + $0x160] sm:$0xc]
        %v5468 = vsel %vm5442, %v5257, %v5467
        %5469 = vst [vmem:[#allocation3 + $0x160] sm:$0xc] %v5468
        %v5470 = vld [vmem:[#allocation3 + $0x188] sm:$0xc]
        %v5471 = vsel %vm5442, %v5266, %v5470
        %5472 = vst [vmem:[#allocation3 + $0x188] sm:$0xc] %v5471
        %v5473 = vld [vmem:[#allocation3 + $0x1b0] sm:$0xc]
        %v5474 = vsel %vm5442, %v5275, %v5473
        %5475 = vst [vmem:[#allocation3 + $0x1b0] sm:$0xc] %v5474
        %v5476 = vld [vmem:[#allocation3 + $0x1d8] sm:$0xc]
        %v5477 = vsel %vm5442, %v5284, %v5476
        %5478 = vst [vmem:[#allocation3 + $0x1d8] sm:$0xc] %v5477
        %v5479 = vld [vmem:[#allocation3 + $0x200] sm:$0xc]
        %v5480 = vsel %vm5442, %v5293, %v5479
        %5481 = vst [vmem:[#allocation3 + $0x200] sm:$0xc] %v5480
        %v5482 = vld [vmem:[#allocation3 + $0x228] sm:$0xc]
        %v5483 = vsel %vm5442, %v5302, %v5482
        %5484 = vst [vmem:[#allocation3 + $0x228] sm:$0xc] %v5483
        %v5485 = vld [vmem:[#allocation3 + $0x250] sm:$0xc]
        %v5486 = vsel %vm5442, %v5311, %v5485
        %5487 = vst [vmem:[#allocation3 + $0x250] sm:$0xc] %v5486
        %v5488 = vld [vmem:[#allocation3 + $0x278] sm:$0xc]
        %v5489 = vsel %vm5442, %v5320, %v5488
        %5490 = vst [vmem:[#allocation3 + $0x278] sm:$0xc] %v5489
        %v5491 = vrot.slane %v4442, 6
        %v5492 = vrot.slane %v5491, 4
        %v5493 = vrot.slane %v4443, 6
        %v5494 = vsel %vm2571, %v5492, %v5493
        %v5495 = vrot.slane %v5493, 4
        %v5496 = vrot.slane %v4444, 6
        %v5497 = vrot.slane %v5496, 4
        %v5498 = vrot.slane %v4445, 6
        %v5499 = vsel %vm2571, %v5497, %v5498
        %v5500 = vrot.slane %v5498, 4
        %v5501 = vrot.slane %v4446, 6
        %v5502 = vrot.slane %v5501, 4
        %v5503 = vrot.slane %v4447, 6
        %v5504 = vsel %vm2571, %v5502, %v5503
        %v5505 = vrot.slane %v5503, 4
        %v5506 = vrot.slane %v4448, 6
        %v5507 = vrot.slane %v5506, 4
        %v5508 = vrot.slane %v4449, 6
        %v5509 = vsel %vm2571, %v5507, %v5508
        %v5510 = vrot.slane %v5508, 4
        %v5511 = vrot.slane %v4450, 6
        %v5512 = vrot.slane %v5511, 4
        %v5513 = vrot.slane %v4451, 6
        %v5514 = vsel %vm2571, %v5512, %v5513
        %v5515 = vrot.slane %v5513, 4
        %v5516 = vrot.slane %v4452, 6
        %v5517 = vrot.slane %v5516, 4
        %v5518 = vrot.slane %v4453, 6
        %v5519 = vsel %vm2571, %v5517, %v5518
        %v5520 = vrot.slane %v5518, 4
        %v5521 = vrot.slane %v4454, 6
        %v5522 = vrot.slane %v5521, 4
        %v5523 = vrot.slane %v4455, 6
        %v5524 = vsel %vm2571, %v5522, %v5523
        %v5525 = vrot.slane %v5523, 4
        %v5526 = vrot.slane %v4456, 6
        %v5527 = vrot.slane %v5526, 4
        %v5528 = vrot.slane %v4457, 6
        %v5529 = vsel %vm2571, %v5527, %v5528
        %v5530 = vrot.slane %v5528, 4
        %v5531 = vrot.slane %v4458, 6
        %v5532 = vrot.slane %v5531, 4
        %v5533 = vrot.slane %v4459, 6
        %v5534 = vsel %vm2571, %v5532, %v5533
        %v5535 = vrot.slane %v5533, 4
        %v5536 = vrot.slane %v4460, 6
        %v5537 = vrot.slane %v5536, 4
        %v5538 = vrot.slane %v4461, 6
        %v5539 = vsel %vm2571, %v5537, %v5538
        %v5540 = vrot.slane %v5538, 4
        %v5541 = vrot.slane %v4462, 6
        %v5542 = vrot.slane %v5541, 4
        %v5543 = vrot.slane %v4463, 6
        %v5544 = vsel %vm2571, %v5542, %v5543
        %v5545 = vrot.slane %v5543, 4
        %v5546 = vrot.slane %v4464, 6
        %v5547 = vrot.slane %v5546, 4
        %v5548 = vrot.slane %v4465, 6
        %v5549 = vsel %vm2571, %v5547, %v5548
        %v5550 = vrot.slane %v5548, 4
        %v5551 = vrot.slane %v4466, 6
        %v5552 = vrot.slane %v5551, 4
        %v5553 = vrot.slane %v4467, 6
        %v5554 = vsel %vm2571, %v5552, %v5553
        %v5555 = vrot.slane %v5553, 4
        %v5556 = vrot.slane %v4468, 6
        %v5557 = vrot.slane %v5556, 4
        %v5558 = vrot.slane %v4469, 6
        %v5559 = vsel %vm2571, %v5557, %v5558
        %v5560 = vrot.slane %v5558, 4
        %v5561 = vrot.slane %v4470, 6
        %v5562 = vrot.slane %v5561, 4
        %v5563 = vrot.slane %v4471, 6
        %v5564 = vsel %vm2571, %v5562, %v5563
        %v5565 = vrot.slane %v5563, 4
        %v5566 = vrot.slane %v4472, 6
        %v5567 = vrot.slane %v5566, 4
        %v5568 = vrot.slane %v4473, 6
        %v5569 = vsel %vm2571, %v5567, %v5568
        %v5570 = vrot.slane %v5568, 4
        %5603 = vst [vmem:[#allocation3 + $0x10] sm:$0xf] %v5494
        %5604 = vst [vmem:[#allocation3 + $0x24] sm:$0x3] %v5495
        %5605 = vst [vmem:[#allocation3 + $0x38] sm:$0xf] %v5499
        %5606 = vst [vmem:[#allocation3 + $0x4c] sm:$0x3] %v5500
        %5607 = vst [vmem:[#allocation3 + $0x60] sm:$0xf] %v5504
        %5608 = vst [vmem:[#allocation3 + $0x74] sm:$0x3] %v5505
        %5609 = vst [vmem:[#allocation3 + $0x88] sm:$0xf] %v5509
        %5610 = vst [vmem:[#allocation3 + $0x9c] sm:$0x3] %v5510
        %5611 = vst [vmem:[#allocation3 + $0xb0] sm:$0xf] %v5514
        %5612 = vst [vmem:[#allocation3 + $0xc4] sm:$0x3] %v5515
        %5613 = vst [vmem:[#allocation3 + $0xd8] sm:$0xf] %v5519
        %5614 = vst [vmem:[#allocation3 + $0xec] sm:$0x3] %v5520
        %5615 = vst [vmem:[#allocation3 + $0x100] sm:$0xf] %v5524
        %5616 = vst [vmem:[#allocation3 + $0x114] sm:$0x3] %v5525
        %5617 = vst [vmem:[#allocation3 + $0x128] sm:$0xf] %v5529
        %5618 = vst [vmem:[#allocation3 + $0x13c] sm:$0x3] %v5530
        %5619 = vst [vmem:[#allocation3 + $0x150] sm:$0xf] %v5534
        %5620 = vst [vmem:[#allocation3 + $0x164] sm:$0x3] %v5535
        %5621 = vst [vmem:[#allocation3 + $0x178] sm:$0xf] %v5539
        %5622 = vst [vmem:[#allocation3 + $0x18c] sm:$0x3] %v5540
        %5623 = vst [vmem:[#allocation3 + $0x1a0] sm:$0xf] %v5544
        %5624 = vst [vmem:[#allocation3 + $0x1b4] sm:$0x3] %v5545
        %5625 = vst [vmem:[#allocation3 + $0x1c8] sm:$0xf] %v5549
        %5626 = vst [vmem:[#allocation3 + $0x1dc] sm:$0x3] %v5550
        %5627 = vst [vmem:[#allocation3 + $0x1f0] sm:$0xf] %v5554
        %5628 = vst [vmem:[#allocation3 + $0x204] sm:$0x3] %v5555
        %5629 = vst [vmem:[#allocation3 + $0x218] sm:$0xf] %v5559
        %5630 = vst [vmem:[#allocation3 + $0x22c] sm:$0x3] %v5560
        %5631 = vst [vmem:[#allocation3 + $0x240] sm:$0xf] %v5564
        %5632 = vst [vmem:[#allocation3 + $0x254] sm:$0x3] %v5565
        %5633 = vst [vmem:[#allocation3 + $0x268] sm:$0xf] %v5569
        %5634 = vst [vmem:[#allocation3 + $0x27c] sm:$0x3] %v5570
        %5651 = vst [vmem:[#allocation3 + $0x24] sm:$0xc] %v5491
        %5652 = vst [vmem:[#allocation3 + $0x4c] sm:$0xc] %v5496
        %5653 = vst [vmem:[#allocation3 + $0x74] sm:$0xc] %v5501
        %5654 = vst [vmem:[#allocation3 + $0x9c] sm:$0xc] %v5506
        %5655 = vst [vmem:[#allocation3 + $0xc4] sm:$0xc] %v5511
        %5656 = vst [vmem:[#allocation3 + $0xec] sm:$0xc] %v5516
        %5657 = vst [vmem:[#allocation3 + $0x114] sm:$0xc] %v5521
        %5658 = vst [vmem:[#allocation3 + $0x13c] sm:$0xc] %v5526
        %5659 = vst [vmem:[#allocation3 + $0x164] sm:$0xc] %v5531
        %5660 = vst [vmem:[#allocation3 + $0x18c] sm:$0xc] %v5536
        %5661 = vst [vmem:[#allocation3 + $0x1b4] sm:$0xc] %v5541
        %5662 = vst [vmem:[#allocation3 + $0x1dc] sm:$0xc] %v5546
        %5663 = vst [vmem:[#allocation3 + $0x204] sm:$0xc] %v5551
        %5664 = vst [vmem:[#allocation3 + $0x22c] sm:$0xc] %v5556
        %5665 = vst [vmem:[#allocation3 + $0x254] sm:$0xc] %v5561
        %5666 = vst [vmem:[#allocation3 + $0x27c] sm:$0xc] %v5566
        %v5667 = vld [vmem:[#allocation3] sm:$0xff]
        %v5668 = vld [vmem:[#allocation3 + $0x8] sm:$0xff]
        %v5669 = vld [vmem:[#allocation3 + $0x10] sm:$0xf]
        %v5670 = vld [vmem:[#allocation3 + $0x14] sm:$0xff]
        %v5671 = vld [vmem:[#allocation3 + $0x1c] sm:$0xff]
        %v5672 = vld [vmem:[#allocation3 + $0x24] sm:$0xf]
        %v5673 = vld [vmem:[#allocation3 + $0x28] sm:$0xff]
        %v5674 = vld [vmem:[#allocation3 + $0x30] sm:$0xff]
        %v5675 = vld [vmem:[#allocation3 + $0x38] sm:$0xf]
        %v5676 = vld [vmem:[#allocation3 + $0x3c] sm:$0xff]
        %v5677 = vld [vmem:[#allocation3 + $0x44] sm:$0xff]
        %v5678 = vld [vmem:[#allocation3 + $0x4c] sm:$0xf]
        %v5679 = vld [vmem:[#allocation3 + $0x50] sm:$0xff]
        %v5680 = vld [vmem:[#allocation3 + $0x58] sm:$0xff]
        %v5681 = vld [vmem:[#allocation3 + $0x60] sm:$0xf]
        %v5682 = vld [vmem:[#allocation3 + $0x64] sm:$0xff]
        %v5683 = vld [vmem:[#allocation3 + $0x6c] sm:$0xff]
        %v5684 = vld [vmem:[#allocation3 + $0x74] sm:$0xf]
        %v5685 = vld [vmem:[#allocation3 + $0x78] sm:$0xff]
        %v5686 = vld [vmem:[#allocation3 + $0x80] sm:$0xff]
        %v5687 = vld [vmem:[#allocation3 + $0x88] sm:$0xf]
        %v5688 = vld [vmem:[#allocation3 + $0x8c] sm:$0xff]
        %v5689 = vld [vmem:[#allocation3 + $0x94] sm:$0xff]
        %v5690 = vld [vmem:[#allocation3 + $0x9c] sm:$0xf]
        %v5691 = vld [vmem:[#allocation3 + $0xa0] sm:$0xff]
        %v5692 = vld [vmem:[#allocation3 + $0xa8] sm:$0xff]
        %v5693 = vld [vmem:[#allocation3 + $0xb0] sm:$0xf]
        %v5694 = vld [vmem:[#allocation3 + $0xb4] sm:$0xff]
        %v5695 = vld [vmem:[#allocation3 + $0xbc] sm:$0xff]
        %v5696 = vld [vmem:[#allocation3 + $0xc4] sm:$0xf]
        %v5697 = vld [vmem:[#allocation3 + $0xc8] sm:$0xff]
        %v5698 = vld [vmem:[#allocation3 + $0xd0] sm:$0xff]
        %v5699 = vld [vmem:[#allocation3 + $0xd8] sm:$0xf]
        %v5700 = vld [vmem:[#allocation3 + $0xdc] sm:$0xff]
        %v5701 = vld [vmem:[#allocation3 + $0xe4] sm:$0xff]
        %v5702 = vld [vmem:[#allocation3 + $0xec] sm:$0xf]
        %v5703 = vld [vmem:[#allocation3 + $0xf0] sm:$0xff]
        %v5704 = vld [vmem:[#allocation3 + $0xf8] sm:$0xff]
        %v5705 = vld [vmem:[#allocation3 + $0x100] sm:$0xf]
        %v5706 = vld [vmem:[#allocation3 + $0x104] sm:$0xff]
        %v5707 = vld [vmem:[#allocation3 + $0x10c] sm:$0xff]
        %v5708 = vld [vmem:[#allocation3 + $0x114] sm:$0xf]
        %v5709 = vld [vmem:[#allocation3 + $0x118] sm:$0xff]
        %v5710 = vld [vmem:[#allocation3 + $0x120] sm:$0xff]
        %v5711 = vld [vmem:[#allocation3 + $0x128] sm:$0xf]
        %v5712 = vld [vmem:[#allocation3 + $0x12c] sm:$0xff]
        %v5713 = vld [vmem:[#allocation3 + $0x134] sm:$0xff]
        %v5714 = vld [vmem:[#allocation3 + $0x13c] sm:$0xf]
        %v5715 = vld [vmem:[#allocation3 + $0x140] sm:$0xff]
        %v5716 = vld [vmem:[#allocation3 + $0x148] sm:$0xff]
        %v5717 = vld [vmem:[#allocation3 + $0x150] sm:$0xf]
        %v5718 = vld [vmem:[#allocation3 + $0x154] sm:$0xff]
        %v5719 = vld [vmem:[#allocation3 + $0x15c] sm:$0xff]
        %v5720 = vld [vmem:[#allocation3 + $0x164] sm:$0xf]
        %v5721 = vld [vmem:[#allocation3 + $0x168] sm:$0xff]
        %v5722 = vld [vmem:[#allocation3 + $0x170] sm:$0xff]
        %v5723 = vld [vmem:[#allocation3 + $0x178] sm:$0xf]
        %v5724 = vld [vmem:[#allocation3 + $0x17c] sm:$0xff]
        %v5725 = vld [vmem:[#allocation3 + $0x184] sm:$0xff]
        %v5726 = vld [vmem:[#allocation3 + $0x18c] sm:$0xf]
        %v5727 = vld [vmem:[#allocation3 + $0x190] sm:$0xff]
        %v5728 = vld [vmem:[#allocation3 + $0x198] sm:$0xff]
        %v5729 = vld [vmem:[#allocation3 + $0x1a0] sm:$0xf]
        %v5730 = vld [vmem:[#allocation3 + $0x1a4] sm:$0xff]
        %v5731 = vld [vmem:[#allocation3 + $0x1ac] sm:$0xff]
        %v5732 = vld [vmem:[#allocation3 + $0x1b4] sm:$0xf]
        %v5733 = vld [vmem:[#allocation3 + $0x1b8] sm:$0xff]
        %v5734 = vld [vmem:[#allocation3 + $0x1c0] sm:$0xff]
        %v5735 = vld [vmem:[#allocation3 + $0x1c8] sm:$0xf]
        %v5736 = vld [vmem:[#allocation3 + $0x1cc] sm:$0xff]
        %v5737 = vld [vmem:[#allocation3 + $0x1d4] sm:$0xff]
        %v5738 = vld [vmem:[#allocation3 + $0x1dc] sm:$0xf]
        %v5739 = vld [vmem:[#allocation4] sm:$0xf]
        %v5740 = vld [vmem:[#allocation4 + $0x4] sm:$0xf]
        %v5741 = vld [vmem:[#allocation4 + $0x8] sm:$0xf]
        %v5742 = vld [vmem:[#allocation4 + $0xc] sm:$0xf]
        %v5743 = vld [vmem:[#allocation4 + $0x10] sm:$0xf]
        %v5744 = vld [vmem:[#allocation4 + $0x14] sm:$0xf]
        %v5745 = vld [vmem:[#allocation4 + $0x18] sm:$0xf]
        %v5746 = vld [vmem:[#allocation4 + $0x1c] sm:$0xf]
        %v5747 = vld [vmem:[#allocation4 + $0x20] sm:$0xf]
        %v5748 = vld [vmem:[#allocation4 + $0x24] sm:$0xf]
        %v5749 = vld [vmem:[#allocation4 + $0x28] sm:$0xf]
        %v5750 = vld [vmem:[#allocation4 + $0x2c] sm:$0xf]
        %v5751 = vld [vmem:[#allocation4 + $0x30] sm:$0xf]
        %v5752 = vld [vmem:[#allocation4 + $0x34] sm:$0xf]
        %v5753 = vld [vmem:[#allocation4 + $0x38] sm:$0xf]
        %v5754 = vld [vmem:[#allocation4 + $0x3c] sm:$0xf]
        %v5755 = vld [vmem:[#allocation4 + $0x40] sm:$0xf]
        %v5756 = vld [vmem:[#allocation4 + $0x44] sm:$0xf]
        %v5757 = vld [vmem:[#allocation4 + $0x48] sm:$0xf]
        %v5758 = vld [vmem:[#allocation4 + $0x4c] sm:$0xf]
        %v5759 = vld [vmem:[#allocation4 + $0x50] sm:$0xf]
        %v5760 = vld [vmem:[#allocation4 + $0x54] sm:$0xf]
        %v5761 = vld [vmem:[#allocation4 + $0x58] sm:$0xf]
        %v5762 = vld [vmem:[#allocation4 + $0x5c] sm:$0xf]
        %v5763 = vld [vmem:[#allocation4 + $0x60] sm:$0xf]
        %v5764 = vld [vmem:[#allocation4 + $0x64] sm:$0xf]
        %v5765 = vld [vmem:[#allocation4 + $0x68] sm:$0xf]
        %v5766 = vld [vmem:[#allocation4 + $0x6c] sm:$0xf]
        %v5767 = vld [vmem:[#allocation4 + $0x70] sm:$0xf]
        %v5768 = vld [vmem:[#allocation4 + $0x74] sm:$0xf]
        %v5769 = vld [vmem:[#allocation4 + $0x78] sm:$0xf]
        %v5770 = vld [vmem:[#allocation4 + $0x7c] sm:$0xf]
        %v5771 = vld [vmem:[#allocation4 + $0x80] sm:$0xf]
        %v5772 = vld [vmem:[#allocation4 + $0x84] sm:$0xf]
        %v5773 = vld [vmem:[#allocation4 + $0x88] sm:$0xf]
        %v5774 = vld [vmem:[#allocation4 + $0x8c] sm:$0xf]
        %v5775 = vld [vmem:[#allocation4 + $0x90] sm:$0xf]
        %v5776 = vld [vmem:[#allocation4 + $0x94] sm:$0xf]
        %v5777 = vld [vmem:[#allocation4 + $0x98] sm:$0xf]
        %v5778 = vld [vmem:[#allocation4 + $0x9c] sm:$0xf]
        %v5779 = vld [vmem:[#allocation4 + $0xa0] sm:$0xf]
        %v5780 = vld [vmem:[#allocation4 + $0xa4] sm:$0xf]
        %v5781 = vld [vmem:[#allocation4 + $0xa8] sm:$0xf]
        %v5782 = vld [vmem:[#allocation4 + $0xac] sm:$0xf]
        %v5783 = vld [vmem:[#allocation4 + $0xb0] sm:$0xf]
        %v5784 = vld [vmem:[#allocation4 + $0xb4] sm:$0xf]
        %v5785 = vld [vmem:[#allocation4 + $0xb8] sm:$0xf]
        %v5786 = vld [vmem:[#allocation4 + $0xbc] sm:$0xf]
        %v5787 = vld [vmem:[#allocation4 + $0xc0] sm:$0xf]
        %v5788 = vld [vmem:[#allocation4 + $0xc4] sm:$0xf]
        %v5789 = vld [vmem:[#allocation4 + $0xc8] sm:$0xf]
        %v5790 = vld [vmem:[#allocation4 + $0xcc] sm:$0xf]
        %v5791 = vld [vmem:[#allocation4 + $0xd0] sm:$0xf]
        %v5792 = vld [vmem:[#allocation4 + $0xd4] sm:$0xf]
        %v5793 = vld [vmem:[#allocation4 + $0xd8] sm:$0xf]
        %v5794 = vld [vmem:[#allocation4 + $0xdc] sm:$0xf]
        %v5795 = vld [vmem:[#allocation4 + $0xe0] sm:$0xf]
        %v5796 = vld [vmem:[#allocation4 + $0xe4] sm:$0xf]
        %v5797 = vld [vmem:[#allocation4 + $0xe8] sm:$0xf]
        %v5798 = vld [vmem:[#allocation4 + $0xec] sm:$0xf]
        %v5799 = vld [vmem:[#allocation4 + $0xf0] sm:$0xf]
        %v5800 = vld [vmem:[#allocation4 + $0xf4] sm:$0xf]
        %v5801 = vld [vmem:[#allocation4 + $0xf8] sm:$0xf]
        %v5802 = vld [vmem:[#allocation4 + $0xfc] sm:$0xf]
        %v5803 = vld [vmem:[#allocation4 + $0x100] sm:$0xf]
        %v5804 = vld [vmem:[#allocation4 + $0x104] sm:$0xf]
        %v5805 = vld [vmem:[#allocation4 + $0x108] sm:$0xf]
        %v5806 = vld [vmem:[#allocation4 + $0x10c] sm:$0xf]
        %v5807 = vld [vmem:[#allocation4 + $0x110] sm:$0xf]
        %v5808 = vld [vmem:[#allocation4 + $0x114] sm:$0xf]
        %v5809 = vld [vmem:[#allocation4 + $0x118] sm:$0xf]
        %v5810 = vld [vmem:[#allocation4 + $0x11c] sm:$0xf]
        %v5811 = vld [vmem:[#allocation4 + $0x120] sm:$0xf]
        %v5812 = vld [vmem:[#allocation4 + $0x124] sm:$0xf]
        %v5813 = vld [vmem:[#allocation4 + $0x128] sm:$0xf]
        %v5814 = vld [vmem:[#allocation4 + $0x12c] sm:$0xf]
        %v5815 = vld [vmem:[#allocation4 + $0x130] sm:$0xf]
        %v5816 = vld [vmem:[#allocation4 + $0x134] sm:$0xf]
        %v5817 = vld [vmem:[#allocation4 + $0x138] sm:$0xf]
        %v5818 = vld [vmem:[#allocation4 + $0x13c] sm:$0xf]
        %s5819 = scalar_lea.vmem [#allocation3], 40
        %v5820 = vld [vmem:[%s5819] sm:$0xff]
        %v5821 = vld [vmem:[%s5819 + $0x8] sm:$0xff]
        %v5822 = vld [vmem:[%s5819 + $0x10] sm:$0xf]
        %v5823 = vld [vmem:[%s5819 + $0x14] sm:$0xff]
        %v5824 = vld [vmem:[%s5819 + $0x1c] sm:$0xff]
        %v5825 = vld [vmem:[%s5819 + $0x24] sm:$0xf]
        %v5826 = vld [vmem:[%s5819 + $0x28] sm:$0xff]
        %v5827 = vld [vmem:[%s5819 + $0x30] sm:$0xff]
        %v5828 = vld [vmem:[%s5819 + $0x38] sm:$0xf]
        %v5829 = vld [vmem:[%s5819 + $0x3c] sm:$0xff]
        %v5830 = vld [vmem:[%s5819 + $0x44] sm:$0xff]
        %v5831 = vld [vmem:[%s5819 + $0x4c] sm:$0xf]
        %v5832 = vld [vmem:[%s5819 + $0x50] sm:$0xff]
        %v5833 = vld [vmem:[%s5819 + $0x58] sm:$0xff]
        %v5834 = vld [vmem:[%s5819 + $0x60] sm:$0xf]
        %v5835 = vld [vmem:[%s5819 + $0x64] sm:$0xff]
        %v5836 = vld [vmem:[%s5819 + $0x6c] sm:$0xff]
        %v5837 = vld [vmem:[%s5819 + $0x74] sm:$0xf]
        %v5838 = vld [vmem:[%s5819 + $0x78] sm:$0xff]
        %v5839 = vld [vmem:[%s5819 + $0x80] sm:$0xff]
        %v5840 = vld [vmem:[%s5819 + $0x88] sm:$0xf]
        %v5841 = vld [vmem:[%s5819 + $0x8c] sm:$0xff]
        %v5842 = vld [vmem:[%s5819 + $0x94] sm:$0xff]
        %v5843 = vld [vmem:[%s5819 + $0x9c] sm:$0xf]
        %v5844 = vld [vmem:[%s5819 + $0xa0] sm:$0xff]
        %v5845 = vld [vmem:[%s5819 + $0xa8] sm:$0xff]
        %v5846 = vld [vmem:[%s5819 + $0xb0] sm:$0xf]
        %v5847 = vld [vmem:[%s5819 + $0xb4] sm:$0xff]
        %v5848 = vld [vmem:[%s5819 + $0xbc] sm:$0xff]
        %v5849 = vld [vmem:[%s5819 + $0xc4] sm:$0xf]
        %v5850 = vld [vmem:[%s5819 + $0xc8] sm:$0xff]
        %v5851 = vld [vmem:[%s5819 + $0xd0] sm:$0xff]
        %v5852 = vld [vmem:[%s5819 + $0xd8] sm:$0xf]
        %v5853 = vld [vmem:[%s5819 + $0xdc] sm:$0xff]
        %v5854 = vld [vmem:[%s5819 + $0xe4] sm:$0xff]
        %v5855 = vld [vmem:[%s5819 + $0xec] sm:$0xf]
        %v5856 = vld [vmem:[%s5819 + $0xf0] sm:$0xff]
        %v5857 = vld [vmem:[%s5819 + $0xf8] sm:$0xff]
        %v5858 = vld [vmem:[%s5819 + $0x100] sm:$0xf]
        %v5859 = vld [vmem:[%s5819 + $0x104] sm:$0xff]
        %v5860 = vld [vmem:[%s5819 + $0x10c] sm:$0xff]
        %v5861 = vld [vmem:[%s5819 + $0x114] sm:$0xf]
        %v5862 = vld [vmem:[%s5819 + $0x118] sm:$0xff]
        %v5863 = vld [vmem:[%s5819 + $0x120] sm:$0xff]
        %v5864 = vld [vmem:[%s5819 + $0x128] sm:$0xf]
        %v5865 = vld [vmem:[%s5819 + $0x12c] sm:$0xff]
        %v5866 = vld [vmem:[%s5819 + $0x134] sm:$0xff]
        %v5867 = vld [vmem:[%s5819 + $0x13c] sm:$0xf]
        %v5868 = vld [vmem:[%s5819 + $0x140] sm:$0xff]
        %v5869 = vld [vmem:[%s5819 + $0x148] sm:$0xff]
        %v5870 = vld [vmem:[%s5819 + $0x150] sm:$0xf]
        %v5871 = vld [vmem:[%s5819 + $0x154] sm:$0xff]
        %v5872 = vld [vmem:[%s5819 + $0x15c] sm:$0xff]
        %v5873 = vld [vmem:[%s5819 + $0x164] sm:$0xf]
        %v5874 = vld [vmem:[%s5819 + $0x168] sm:$0xff]
        %v5875 = vld [vmem:[%s5819 + $0x170] sm:$0xff]
        %v5876 = vld [vmem:[%s5819 + $0x178] sm:$0xf]
        %v5877 = vld [vmem:[%s5819 + $0x17c] sm:$0xff]
        %v5878 = vld [vmem:[%s5819 + $0x184] sm:$0xff]
        %v5879 = vld [vmem:[%s5819 + $0x18c] sm:$0xf]
        %v5880 = vld [vmem:[%s5819 + $0x190] sm:$0xff]
        %v5881 = vld [vmem:[%s5819 + $0x198] sm:$0xff]
        %v5882 = vld [vmem:[%s5819 + $0x1a0] sm:$0xf]
        %v5883 = vld [vmem:[%s5819 + $0x1a4] sm:$0xff]
        %v5884 = vld [vmem:[%s5819 + $0x1ac] sm:$0xff]
        %v5885 = vld [vmem:[%s5819 + $0x1b4] sm:$0xf]
        %v5886 = vld [vmem:[%s5819 + $0x1b8] sm:$0xff]
        %v5887 = vld [vmem:[%s5819 + $0x1c0] sm:$0xff]
        %v5888 = vld [vmem:[%s5819 + $0x1c8] sm:$0xf]
        %v5889 = vld [vmem:[%s5819 + $0x1cc] sm:$0xff]
        %v5890 = vld [vmem:[%s5819 + $0x1d4] sm:$0xff]
        %v5891 = vld [vmem:[%s5819 + $0x1dc] sm:$0xf]
        %v5892 = vld [vmem:[#allocation4 + $0x140] sm:$0xf]
        %v5893 = vld [vmem:[#allocation4 + $0x144] sm:$0xf]
        %v5894 = vld [vmem:[#allocation4 + $0x148] sm:$0xf]
        %v5895 = vld [vmem:[#allocation4 + $0x14c] sm:$0xf]
        %v5896 = vld [vmem:[#allocation4 + $0x150] sm:$0xf]
        %v5897 = vld [vmem:[#allocation4 + $0x154] sm:$0xf]
        %v5898 = vld [vmem:[#allocation4 + $0x158] sm:$0xf]
        %v5899 = vld [vmem:[#allocation4 + $0x15c] sm:$0xf]
        %v5900 = vld [vmem:[#allocation4 + $0x160] sm:$0xf]
        %v5901 = vld [vmem:[#allocation4 + $0x164] sm:$0xf]
        %v5902 = vld [vmem:[#allocation4 + $0x168] sm:$0xf]
        %v5903 = vld [vmem:[#allocation4 + $0x16c] sm:$0xf]
        %v5904 = vld [vmem:[#allocation4 + $0x170] sm:$0xf]
        %v5905 = vld [vmem:[#allocation4 + $0x174] sm:$0xf]
        %v5906 = vld [vmem:[#allocation4 + $0x178] sm:$0xf]
        %v5907 = vld [vmem:[#allocation4 + $0x17c] sm:$0xf]
        %v5908 = vld [vmem:[#allocation4 + $0x180] sm:$0xf]
        %v5909 = vld [vmem:[#allocation4 + $0x184] sm:$0xf]
        %v5910 = vld [vmem:[#allocation4 + $0x188] sm:$0xf]
        %v5911 = vld [vmem:[#allocation4 + $0x18c] sm:$0xf]
        %v5912 = vld [vmem:[#allocation4 + $0x190] sm:$0xf]
        %v5913 = vld [vmem:[#allocation4 + $0x194] sm:$0xf]
        %v5914 = vld [vmem:[#allocation4 + $0x198] sm:$0xf]
        %v5915 = vld [vmem:[#allocation4 + $0x19c] sm:$0xf]
        %v5916 = vld [vmem:[#allocation4 + $0x1a0] sm:$0xf]
        %v5917 = vld [vmem:[#allocation4 + $0x1a4] sm:$0xf]
        %v5918 = vld [vmem:[#allocation4 + $0x1a8] sm:$0xf]
        %v5919 = vld [vmem:[#allocation4 + $0x1ac] sm:$0xf]
        %v5920 = vld [vmem:[#allocation4 + $0x1b0] sm:$0xf]
        %v5921 = vld [vmem:[#allocation4 + $0x1b4] sm:$0xf]
        %v5922 = vld [vmem:[#allocation4 + $0x1b8] sm:$0xf]
        %v5923 = vld [vmem:[#allocation4 + $0x1bc] sm:$0xf]
        %v5924 = vld [vmem:[#allocation4 + $0x1c0] sm:$0xf]
        %v5925 = vld [vmem:[#allocation4 + $0x1c4] sm:$0xf]
        %v5926 = vld [vmem:[#allocation4 + $0x1c8] sm:$0xf]
        %v5927 = vld [vmem:[#allocation4 + $0x1cc] sm:$0xf]
        %v5928 = vld [vmem:[#allocation4 + $0x1d0] sm:$0xf]
        %v5929 = vld [vmem:[#allocation4 + $0x1d4] sm:$0xf]
        %v5930 = vld [vmem:[#allocation4 + $0x1d8] sm:$0xf]
        %v5931 = vld [vmem:[#allocation4 + $0x1dc] sm:$0xf]
        %v5932 = vld [vmem:[#allocation4 + $0x1e0] sm:$0xf]
        %v5933 = vld [vmem:[#allocation4 + $0x1e4] sm:$0xf]
        %v5934 = vld [vmem:[#allocation4 + $0x1e8] sm:$0xf]
        %v5935 = vld [vmem:[#allocation4 + $0x1ec] sm:$0xf]
        %v5936 = vld [vmem:[#allocation4 + $0x1f0] sm:$0xf]
        %v5937 = vld [vmem:[#allocation4 + $0x1f4] sm:$0xf]
        %v5938 = vld [vmem:[#allocation4 + $0x1f8] sm:$0xf]
        %v5939 = vld [vmem:[#allocation4 + $0x1fc] sm:$0xf]
        %v5940 = vld [vmem:[#allocation4 + $0x200] sm:$0xf]
        %v5941 = vld [vmem:[#allocation4 + $0x204] sm:$0xf]
        %v5942 = vld [vmem:[#allocation4 + $0x208] sm:$0xf]
        %v5943 = vld [vmem:[#allocation4 + $0x20c] sm:$0xf]
        %v5944 = vld [vmem:[#allocation4 + $0x210] sm:$0xf]
        %v5945 = vld [vmem:[#allocation4 + $0x214] sm:$0xf]
        %v5946 = vld [vmem:[#allocation4 + $0x218] sm:$0xf]
        %v5947 = vld [vmem:[#allocation4 + $0x21c] sm:$0xf]
        %v5948 = vld [vmem:[#allocation4 + $0x220] sm:$0xf]
        %v5949 = vld [vmem:[#allocation4 + $0x224] sm:$0xf]
        %v5950 = vld [vmem:[#allocation4 + $0x228] sm:$0xf]
        %v5951 = vld [vmem:[#allocation4 + $0x22c] sm:$0xf]
        %v5952 = vld [vmem:[#allocation4 + $0x230] sm:$0xf]
        %v5953 = vld [vmem:[#allocation4 + $0x234] sm:$0xf]
        %v5954 = vld [vmem:[#allocation4 + $0x238] sm:$0xf]
        %v5955 = vld [vmem:[#allocation4 + $0x23c] sm:$0xf]
        %v5956 = vld [vmem:[#allocation4 + $0x240] sm:$0xf]
        %v5957 = vld [vmem:[#allocation4 + $0x244] sm:$0xf]
        %v5958 = vld [vmem:[#allocation4 + $0x248] sm:$0xf]
        %v5959 = vld [vmem:[#allocation4 + $0x24c] sm:$0xf]
        %v5960 = vld [vmem:[#allocation4 + $0x250] sm:$0xf]
        %v5961 = vld [vmem:[#allocation4 + $0x254] sm:$0xf]
        %v5962 = vld [vmem:[#allocation4 + $0x258] sm:$0xf]
        %v5963 = vld [vmem:[#allocation4 + $0x25c] sm:$0xf]
        %v5964 = vld [vmem:[#allocation4 + $0x260] sm:$0xf]
        %v5965 = vld [vmem:[#allocation4 + $0x264] sm:$0xf]
        %v5966 = vld [vmem:[#allocation4 + $0x268] sm:$0xf]
        %v5967 = vld [vmem:[#allocation4 + $0x26c] sm:$0xf]
        %v5968 = vld [vmem:[#allocation4 + $0x270] sm:$0xf]
        %v5969 = vld [vmem:[#allocation4 + $0x274] sm:$0xf]
        %v5970 = vld [vmem:[#allocation4 + $0x278] sm:$0xf]
        %v5971 = vld [vmem:[#allocation4 + $0x27c] sm:$0xf]
        %v6044 = vunpack.c.l.b16 %v5820
        %v6045 = vunpack.c.h.b16 %v5820
        %v6046 = vunpack.c.l.b16 %v5821
        %v6047 = vunpack.c.h.b16 %v5821
        %v6048 = vunpack.c.l.b16 %v5822
        %v6049 = vunpack.c.l.b16 %v5823
        %v6050 = vunpack.c.h.b16 %v5823
        %v6051 = vunpack.c.l.b16 %v5824
        %v6052 = vunpack.c.h.b16 %v5824
        %v6053 = vunpack.c.l.b16 %v5825
        %v6054 = vunpack.c.l.b16 %v5826
        %v6055 = vunpack.c.h.b16 %v5826
        %v6056 = vunpack.c.l.b16 %v5827
        %v6057 = vunpack.c.h.b16 %v5827
        %v6058 = vunpack.c.l.b16 %v5828
        %v6059 = vunpack.c.l.b16 %v5829
        %v6060 = vunpack.c.h.b16 %v5829
        %v6061 = vunpack.c.l.b16 %v5830
        %v6062 = vunpack.c.h.b16 %v5830
        %v6063 = vunpack.c.l.b16 %v5831
        %v6064 = vunpack.c.l.b16 %v5832
        %v6065 = vunpack.c.h.b16 %v5832
        %v6066 = vunpack.c.l.b16 %v5833
        %v6067 = vunpack.c.h.b16 %v5833
        %v6068 = vunpack.c.l.b16 %v5834
        %v6069 = vunpack.c.l.b16 %v5835
        %v6070 = vunpack.c.h.b16 %v5835
        %v6071 = vunpack.c.l.b16 %v5836
        %v6072 = vunpack.c.h.b16 %v5836
        %v6073 = vunpack.c.l.b16 %v5837
        %v6074 = vunpack.c.l.b16 %v5838
        %v6075 = vunpack.c.h.b16 %v5838
        %v6076 = vunpack.c.l.b16 %v5839
        %v6077 = vunpack.c.h.b16 %v5839
        %v6078 = vunpack.c.l.b16 %v5840
        %v6079 = vunpack.c.l.b16 %v5841
        %v6080 = vunpack.c.h.b16 %v5841
        %v6081 = vunpack.c.l.b16 %v5842
        %v6082 = vunpack.c.h.b16 %v5842
        %v6083 = vunpack.c.l.b16 %v5843
        %v6084 = vunpack.c.l.b16 %v5844
        %v6085 = vunpack.c.h.b16 %v5844
        %v6086 = vunpack.c.l.b16 %v5845
        %v6087 = vunpack.c.h.b16 %v5845
        %v6088 = vunpack.c.l.b16 %v5846
        %v6089 = vunpack.c.l.b16 %v5847
        %v6090 = vunpack.c.h.b16 %v5847
        %v6091 = vunpack.c.l.b16 %v5848
        %v6092 = vunpack.c.h.b16 %v5848
        %v6093 = vunpack.c.l.b16 %v5849
        %v6094 = vunpack.c.l.b16 %v5850
        %v6095 = vunpack.c.h.b16 %v5850
        %v6096 = vunpack.c.l.b16 %v5851
        %v6097 = vunpack.c.h.b16 %v5851
        %v6098 = vunpack.c.l.b16 %v5852
        %v6099 = vunpack.c.l.b16 %v5853
        %v6100 = vunpack.c.h.b16 %v5853
        %v6101 = vunpack.c.l.b16 %v5854
        %v6102 = vunpack.c.h.b16 %v5854
        %v6103 = vunpack.c.l.b16 %v5855
        %v6104 = vunpack.c.l.b16 %v5856
        %v6105 = vunpack.c.h.b16 %v5856
        %v6106 = vunpack.c.l.b16 %v5857
        %v6107 = vunpack.c.h.b16 %v5857
        %v6108 = vunpack.c.l.b16 %v5858
        %v6109 = vunpack.c.l.b16 %v5859
        %v6110 = vunpack.c.h.b16 %v5859
        %v6111 = vunpack.c.l.b16 %v5860
        %v6112 = vunpack.c.h.b16 %v5860
        %v6113 = vunpack.c.l.b16 %v5861
        %v6114 = vunpack.c.l.b16 %v5862
        %v6115 = vunpack.c.h.b16 %v5862
        %v6116 = vunpack.c.l.b16 %v5863
        %v6117 = vunpack.c.h.b16 %v5863
        %v6118 = vunpack.c.l.b16 %v5864
        %v6119 = vunpack.c.l.b16 %v5865
        %v6120 = vunpack.c.h.b16 %v5865
        %v6121 = vunpack.c.l.b16 %v5866
        %v6122 = vunpack.c.h.b16 %v5866
        %v6123 = vunpack.c.l.b16 %v5867
        %v6124 = vunpack.c.l.b16 %v5868
        %v6125 = vunpack.c.h.b16 %v5868
        %v6126 = vunpack.c.l.b16 %v5869
        %v6127 = vunpack.c.h.b16 %v5869
        %v6128 = vunpack.c.l.b16 %v5870
        %v6129 = vunpack.c.l.b16 %v5871
        %v6130 = vunpack.c.h.b16 %v5871
        %v6131 = vunpack.c.l.b16 %v5872
        %v6132 = vunpack.c.h.b16 %v5872
        %v6133 = vunpack.c.l.b16 %v5873
        %v6134 = vunpack.c.l.b16 %v5874
        %v6135 = vunpack.c.h.b16 %v5874
        %v6136 = vunpack.c.l.b16 %v5875
        %v6137 = vunpack.c.h.b16 %v5875
        %v6138 = vunpack.c.l.b16 %v5876
        %v6139 = vunpack.c.l.b16 %v5877
        %v6140 = vunpack.c.h.b16 %v5877
        %v6141 = vunpack.c.l.b16 %v5878
        %v6142 = vunpack.c.h.b16 %v5878
        %v6143 = vunpack.c.l.b16 %v5879
        %v6144 = vunpack.c.l.b16 %v5880
        %v6145 = vunpack.c.h.b16 %v5880
        %v6146 = vunpack.c.l.b16 %v5881
        %v6147 = vunpack.c.h.b16 %v5881
        %v6148 = vunpack.c.l.b16 %v5882
        %v6149 = vunpack.c.l.b16 %v5883
        %v6150 = vunpack.c.h.b16 %v5883
        %v6151 = vunpack.c.l.b16 %v5884
        %v6152 = vunpack.c.h.b16 %v5884
        %v6153 = vunpack.c.l.b16 %v5885
        %v6154 = vunpack.c.l.b16 %v5886
        %v6155 = vunpack.c.h.b16 %v5886
        %v6156 = vunpack.c.l.b16 %v5887
        %v6157 = vunpack.c.h.b16 %v5887
        %v6158 = vunpack.c.l.b16 %v5888
        %v6159 = vunpack.c.l.b16 %v5889
        %v6160 = vunpack.c.h.b16 %v5889
        %v6161 = vunpack.c.l.b16 %v5890
        %v6162 = vunpack.c.h.b16 %v5890
        %v6163 = vunpack.c.l.b16 %v5891
        %v6164 = vpack.c.b16 %v6049, %v6044
        %v6165 = vpack.c.b16 %v6050, %v6045
        %v6166 = vpack.c.b16 %v6051, %v6046
        %v6167 = vpack.c.b16 %v6052, %v6047
        %v6168 = vpack.c.b16 %v6053, %v6048
        %v6169 = vpack.c.b16 %v6059, %v6054
        %v6170 = vpack.c.b16 %v6060, %v6055
        %v6171 = vpack.c.b16 %v6061, %v6056
        %v6172 = vpack.c.b16 %v6062, %v6057
        %v6173 = vpack.c.b16 %v6063, %v6058
        %v6174 = vpack.c.b16 %v6069, %v6064
        %v6175 = vpack.c.b16 %v6070, %v6065
        %v6176 = vpack.c.b16 %v6071, %v6066
        %v6177 = vpack.c.b16 %v6072, %v6067
        %v6178 = vpack.c.b16 %v6073, %v6068
        %v6179 = vpack.c.b16 %v6079, %v6074
        %v6180 = vpack.c.b16 %v6080, %v6075
        %v6181 = vpack.c.b16 %v6081, %v6076
        %v6182 = vpack.c.b16 %v6082, %v6077
        %v6183 = vpack.c.b16 %v6083, %v6078
        %v6184 = vpack.c.b16 %v6089, %v6084
        %v6185 = vpack.c.b16 %v6090, %v6085
        %v6186 = vpack.c.b16 %v6091, %v6086
        %v6187 = vpack.c.b16 %v6092, %v6087
        %v6188 = vpack.c.b16 %v6093, %v6088
        %v6189 = vpack.c.b16 %v6099, %v6094
        %v6190 = vpack.c.b16 %v6100, %v6095
        %v6191 = vpack.c.b16 %v6101, %v6096
        %v6192 = vpack.c.b16 %v6102, %v6097
        %v6193 = vpack.c.b16 %v6103, %v6098
        %v6194 = vpack.c.b16 %v6109, %v6104
        %v6195 = vpack.c.b16 %v6110, %v6105
        %v6196 = vpack.c.b16 %v6111, %v6106
        %v6197 = vpack.c.b16 %v6112, %v6107
        %v6198 = vpack.c.b16 %v6113, %v6108
        %v6199 = vpack.c.b16 %v6119, %v6114
        %v6200 = vpack.c.b16 %v6120, %v6115
        %v6201 = vpack.c.b16 %v6121, %v6116
        %v6202 = vpack.c.b16 %v6122, %v6117
        %v6203 = vpack.c.b16 %v6123, %v6118
        %v6204 = vpack.c.b16 %v6129, %v6124
        %v6205 = vpack.c.b16 %v6130, %v6125
        %v6206 = vpack.c.b16 %v6131, %v6126
        %v6207 = vpack.c.b16 %v6132, %v6127
        %v6208 = vpack.c.b16 %v6133, %v6128
        %v6209 = vpack.c.b16 %v6139, %v6134
        %v6210 = vpack.c.b16 %v6140, %v6135
        %v6211 = vpack.c.b16 %v6141, %v6136
        %v6212 = vpack.c.b16 %v6142, %v6137
        %v6213 = vpack.c.b16 %v6143, %v6138
        %v6214 = vpack.c.b16 %v6149, %v6144
        %v6215 = vpack.c.b16 %v6150, %v6145
        %v6216 = vpack.c.b16 %v6151, %v6146
        %v6217 = vpack.c.b16 %v6152, %v6147
        %v6218 = vpack.c.b16 %v6153, %v6148
        %v6219 = vpack.c.b16 %v6159, %v6154
        %v6220 = vpack.c.b16 %v6160, %v6155
        %v6221 = vpack.c.b16 %v6161, %v6156
        %v6222 = vpack.c.b16 %v6162, %v6157
        %v6223 = vpack.c.b16 %v6163, %v6158
        %v6364 = vunpack.c.l.b16 %v5892
        %v6365 = vunpack.c.l.b16 %v5893
        %v6366 = vunpack.c.l.b16 %v5894
        %v6367 = vunpack.c.l.b16 %v5895
        %v6368 = vunpack.c.l.b16 %v5896
        %v6369 = vunpack.c.l.b16 %v5897
        %v6370 = vunpack.c.l.b16 %v5898
        %v6371 = vunpack.c.l.b16 %v5899
        %v6372 = vunpack.c.l.b16 %v5900
        %v6373 = vunpack.c.l.b16 %v5901
        %v6374 = vunpack.c.l.b16 %v5902
        %v6375 = vunpack.c.l.b16 %v5903
        %v6376 = vunpack.c.l.b16 %v5904
        %v6377 = vunpack.c.l.b16 %v5905
        %v6378 = vunpack.c.l.b16 %v5906
        %v6379 = vunpack.c.l.b16 %v5907
        %v6380 = vunpack.c.l.b16 %v5908
        %v6381 = vunpack.c.l.b16 %v5909
        %v6382 = vunpack.c.l.b16 %v5910
        %v6383 = vunpack.c.l.b16 %v5911
        %v6384 = vunpack.c.l.b16 %v5912
        %v6385 = vunpack.c.l.b16 %v5913
        %v6386 = vunpack.c.l.b16 %v5914
        %v6387 = vunpack.c.l.b16 %v5915
        %v6388 = vunpack.c.l.b16 %v5916
        %v6389 = vunpack.c.l.b16 %v5917
        %v6390 = vunpack.c.l.b16 %v5918
        %v6391 = vunpack.c.l.b16 %v5919
        %v6392 = vunpack.c.l.b16 %v5920
        %v6393 = vunpack.c.l.b16 %v5921
        %v6394 = vunpack.c.l.b16 %v5922
        %v6395 = vunpack.c.l.b16 %v5923
        %v6396 = vunpack.c.l.b16 %v5924
        %v6397 = vunpack.c.l.b16 %v5925
        %v6398 = vunpack.c.l.b16 %v5926
        %v6399 = vunpack.c.l.b16 %v5927
        %v6400 = vunpack.c.l.b16 %v5928
        %v6401 = vunpack.c.l.b16 %v5929
        %v6402 = vunpack.c.l.b16 %v5930
        %v6403 = vunpack.c.l.b16 %v5931
        %v6404 = vunpack.c.l.b16 %v5932
        %v6405 = vunpack.c.l.b16 %v5933
        %v6406 = vunpack.c.l.b16 %v5934
        %v6407 = vunpack.c.l.b16 %v5935
        %v6408 = vunpack.c.l.b16 %v5936
        %v6409 = vunpack.c.l.b16 %v5937
        %v6410 = vunpack.c.l.b16 %v5938
        %v6411 = vunpack.c.l.b16 %v5939
        %v6412 = vunpack.c.l.b16 %v5940
        %v6413 = vunpack.c.l.b16 %v5941
        %v6414 = vunpack.c.l.b16 %v5942
        %v6415 = vunpack.c.l.b16 %v5943
        %v6416 = vunpack.c.l.b16 %v5944
        %v6417 = vunpack.c.l.b16 %v5945
        %v6418 = vunpack.c.l.b16 %v5946
        %v6419 = vunpack.c.l.b16 %v5947
        %v6420 = vunpack.c.l.b16 %v5948
        %v6421 = vunpack.c.l.b16 %v5949
        %v6422 = vunpack.c.l.b16 %v5950
        %v6423 = vunpack.c.l.b16 %v5951
        %v6424 = vunpack.c.l.b16 %v5952
        %v6425 = vunpack.c.l.b16 %v5953
        %v6426 = vunpack.c.l.b16 %v5954
        %v6427 = vunpack.c.l.b16 %v5955
        %v6428 = vunpack.c.l.b16 %v5956
        %v6429 = vunpack.c.l.b16 %v5957
        %v6430 = vunpack.c.l.b16 %v5958
        %v6431 = vunpack.c.l.b16 %v5959
        %v6432 = vunpack.c.l.b16 %v5960
        %v6433 = vunpack.c.l.b16 %v5961
        %v6434 = vunpack.c.l.b16 %v5962
        %v6435 = vunpack.c.l.b16 %v5963
        %v6436 = vunpack.c.l.b16 %v5964
        %v6437 = vunpack.c.l.b16 %v5965
        %v6438 = vunpack.c.l.b16 %v5966
        %v6439 = vunpack.c.l.b16 %v5967
        %v6440 = vunpack.c.l.b16 %v5968
        %v6441 = vunpack.c.l.b16 %v5969
        %v6442 = vunpack.c.l.b16 %v5970
        %v6443 = vunpack.c.l.b16 %v5971
        %v6444 = vpack.c.b16 %v6365, %v6364
        %v6445 = vpack.c.b16 %v6367, %v6366
        %v6446 = vpack.c.b16 %v6369, %v6368
        %v6447 = vpack.c.b16 %v6371, %v6370
        %v6448 = vpack.c.b16 %v6373, %v6372
        %v6449 = vpack.c.b16 %v6375, %v6374
        %v6450 = vpack.c.b16 %v6377, %v6376
        %v6451 = vpack.c.b16 %v6379, %v6378
        %v6452 = vpack.c.b16 %v6381, %v6380
        %v6453 = vpack.c.b16 %v6383, %v6382
        %v6454 = vpack.c.b16 %v6385, %v6384
        %v6455 = vpack.c.b16 %v6387, %v6386
        %v6456 = vpack.c.b16 %v6389, %v6388
        %v6457 = vpack.c.b16 %v6391, %v6390
        %v6458 = vpack.c.b16 %v6393, %v6392
        %v6459 = vpack.c.b16 %v6395, %v6394
        %v6460 = vpack.c.b16 %v6397, %v6396
        %v6461 = vpack.c.b16 %v6399, %v6398
        %v6462 = vpack.c.b16 %v6401, %v6400
        %v6463 = vpack.c.b16 %v6403, %v6402
        %v6464 = vpack.c.b16 %v6405, %v6404
        %v6465 = vpack.c.b16 %v6407, %v6406
        %v6466 = vpack.c.b16 %v6409, %v6408
        %v6467 = vpack.c.b16 %v6411, %v6410
        %v6468 = vpack.c.b16 %v6413, %v6412
        %v6469 = vpack.c.b16 %v6415, %v6414
        %v6470 = vpack.c.b16 %v6417, %v6416
        %v6471 = vpack.c.b16 %v6419, %v6418
        %v6472 = vpack.c.b16 %v6421, %v6420
        %v6473 = vpack.c.b16 %v6423, %v6422
        %v6474 = vpack.c.b16 %v6425, %v6424
        %v6475 = vpack.c.b16 %v6427, %v6426
        %v6476 = vpack.c.b16 %v6429, %v6428
        %v6477 = vpack.c.b16 %v6431, %v6430
        %v6478 = vpack.c.b16 %v6433, %v6432
        %v6479 = vpack.c.b16 %v6435, %v6434
        %v6480 = vpack.c.b16 %v6437, %v6436
        %v6481 = vpack.c.b16 %v6439, %v6438
        %v6482 = vpack.c.b16 %v6441, %v6440
        %v6483 = vpack.c.b16 %v6443, %v6442
        %6524 = vmatpush.bf16.msra.mxu0 %v6451
        %6525 = vmatpush.bf16.msra.mxu0 %v6450
        %6526 = vmatpush.bf16.msra.mxu0 %v6449
        %6527 = vmatpush.bf16.msra.mxu0 %v6448
        %6528 = vmatpush.bf16.msra.mxu0 %v6447
        %6529 = vmatpush.bf16.msra.mxu0 %v6446
        %6530 = vmatpush.bf16.msra.mxu0 %v6445
        %6531 = vmatpush.bf16.msra.mxu0 %v6444
        %6532 = vmatmul.bf16.gmra.mxu0 %v6164
        %v6533 = vpop.f32.mrf.mxu0
        %v6534 = vadd.f32 0.0, %v6533
        %v6535 = vpop.f32.mrf.mxu0
        %v6536 = vadd.f32 0.0, %v6535
        %6537 = vmatmul.bf16.gmra.mxu0 %v6169
        %v6538 = vpop.f32.mrf.mxu0
        %v6539 = vadd.f32 0.0, %v6538
        %v6540 = vpop.f32.mrf.mxu0
        %v6541 = vadd.f32 0.0, %v6540
        %6542 = vmatmul.bf16.gmra.mxu0 %v6174
        %v6543 = vpop.f32.mrf.mxu0
        %v6544 = vadd.f32 0.0, %v6543
        %v6545 = vpop.f32.mrf.mxu0
        %v6546 = vadd.f32 0.0, %v6545
        %6547 = vmatmul.bf16.gmra.mxu0 %v6179
        %v6548 = vpop.f32.mrf.mxu0
        %v6549 = vadd.f32 0.0, %v6548
        %v6550 = vpop.f32.mrf.mxu0
        %v6551 = vadd.f32 0.0, %v6550
        %6552 = vmatmul.bf16.gmra.mxu0 %v6184
        %v6553 = vpop.f32.mrf.mxu0
        %v6554 = vadd.f32 0.0, %v6553
        %v6555 = vpop.f32.mrf.mxu0
        %v6556 = vadd.f32 0.0, %v6555
        %6557 = vmatmul.bf16.gmra.mxu0 %v6189
        %v6558 = vpop.f32.mrf.mxu0
        %v6559 = vadd.f32 0.0, %v6558
        %v6560 = vpop.f32.mrf.mxu0
        %v6561 = vadd.f32 0.0, %v6560
        %6562 = vmatmul.bf16.gmra.mxu0 %v6194
        %v6563 = vpop.f32.mrf.mxu0
        %v6564 = vadd.f32 0.0, %v6563
        %v6565 = vpop.f32.mrf.mxu0
        %v6566 = vadd.f32 0.0, %v6565
        %6567 = vmatmul.bf16.gmra.mxu0 %v6199
        %v6568 = vpop.f32.mrf.mxu0
        %v6569 = vadd.f32 0.0, %v6568
        %v6570 = vpop.f32.mrf.mxu0
        %v6571 = vadd.f32 0.0, %v6570
        %6572 = vmatmul.bf16.gmra.mxu0 %v6204
        %v6573 = vpop.f32.mrf.mxu0
        %v6574 = vadd.f32 0.0, %v6573
        %v6575 = vpop.f32.mrf.mxu0
        %v6576 = vadd.f32 0.0, %v6575
        %6577 = vmatmul.bf16.gmra.mxu0 %v6209
        %v6578 = vpop.f32.mrf.mxu0
        %v6579 = vadd.f32 0.0, %v6578
        %v6580 = vpop.f32.mrf.mxu0
        %v6581 = vadd.f32 0.0, %v6580
        %6582 = vmatmul.bf16.gmra.mxu0 %v6214
        %v6583 = vpop.f32.mrf.mxu0
        %v6584 = vpop.f32.mrf.mxu0
        %6585 = vmatmul.bf16.gmra.mxu0 %v6219
        %v6586 = vpop.f32.mrf.mxu0
        %v6587 = vpop.f32.mrf.mxu0
        %6588 = vdwg.mxu0
        %6589 = vmatpush.bf16.msra.mxu0 %v6459
        %6590 = vmatpush.bf16.msra.mxu0 %v6458
        %6591 = vmatpush.bf16.msra.mxu0 %v6457
        %6592 = vmatpush.bf16.msra.mxu0 %v6456
        %6593 = vmatpush.bf16.msra.mxu0 %v6455
        %6594 = vmatpush.bf16.msra.mxu0 %v6454
        %6595 = vmatpush.bf16.msra.mxu0 %v6453
        %6596 = vmatpush.bf16.msra.mxu0 %v6452
        %6597 = vmatmul.bf16.gmra.mxu0 %v6165
        %v6598 = vpop.f32.mrf.mxu0
        %v6599 = vadd.f32 %v6534, %v6598
        %v6600 = vpop.f32.mrf.mxu0
        %v6601 = vadd.f32 %v6536, %v6600
        %6602 = vmatmul.bf16.gmra.mxu0 %v6170
        %v6603 = vpop.f32.mrf.mxu0
        %v6604 = vadd.f32 %v6539, %v6603
        %v6605 = vpop.f32.mrf.mxu0
        %v6606 = vadd.f32 %v6541, %v6605
        %6607 = vmatmul.bf16.gmra.mxu0 %v6175
        %v6608 = vpop.f32.mrf.mxu0
        %v6609 = vadd.f32 %v6544, %v6608
        %v6610 = vpop.f32.mrf.mxu0
        %v6611 = vadd.f32 %v6546, %v6610
        %6612 = vmatmul.bf16.gmra.mxu0 %v6180
        %v6613 = vpop.f32.mrf.mxu0
        %v6614 = vadd.f32 %v6549, %v6613
        %v6615 = vpop.f32.mrf.mxu0
        %v6616 = vadd.f32 %v6551, %v6615
        %6617 = vmatmul.bf16.gmra.mxu0 %v6185
        %v6618 = vpop.f32.mrf.mxu0
        %v6619 = vadd.f32 %v6554, %v6618
        %v6620 = vpop.f32.mrf.mxu0
        %v6621 = vadd.f32 %v6556, %v6620
        %6622 = vmatmul.bf16.gmra.mxu0 %v6190
        %v6623 = vpop.f32.mrf.mxu0
        %v6624 = vadd.f32 %v6559, %v6623
        %v6625 = vpop.f32.mrf.mxu0
        %v6626 = vadd.f32 %v6561, %v6625
        %6627 = vmatmul.bf16.gmra.mxu0 %v6195
        %v6628 = vpop.f32.mrf.mxu0
        %v6629 = vadd.f32 %v6564, %v6628
        %v6630 = vpop.f32.mrf.mxu0
        %v6631 = vadd.f32 %v6566, %v6630
        %6632 = vmatmul.bf16.gmra.mxu0 %v6200
        %v6633 = vpop.f32.mrf.mxu0
        %v6634 = vadd.f32 %v6569, %v6633
        %v6635 = vpop.f32.mrf.mxu0
        %v6636 = vadd.f32 %v6571, %v6635
        %6637 = vmatmul.bf16.gmra.mxu0 %v6205
        %v6638 = vpop.f32.mrf.mxu0
        %v6639 = vadd.f32 %v6574, %v6638
        %v6640 = vpop.f32.mrf.mxu0
        %v6641 = vadd.f32 %v6576, %v6640
        %6642 = vmatmul.bf16.gmra.mxu0 %v6210
        %v6643 = vpop.f32.mrf.mxu0
        %v6644 = vadd.f32 %v6579, %v6643
        %v6645 = vpop.f32.mrf.mxu0
        %v6646 = vadd.f32 %v6581, %v6645
        %6647 = vmatmul.bf16.gmra.mxu0 %v6215
        %v6648 = vpop.f32.mrf.mxu0
        %v6649 = vpop.f32.mrf.mxu0
        %6650 = vmatmul.bf16.gmra.mxu0 %v6220
        %v6651 = vpop.f32.mrf.mxu0
        %v6652 = vpop.f32.mrf.mxu0
        %6653 = vdwg.mxu0
        %6654 = vmatpush.bf16.msra.mxu0 %v6467
        %6655 = vmatpush.bf16.msra.mxu0 %v6466
        %6656 = vmatpush.bf16.msra.mxu0 %v6465
        %6657 = vmatpush.bf16.msra.mxu0 %v6464
        %6658 = vmatpush.bf16.msra.mxu0 %v6463
        %6659 = vmatpush.bf16.msra.mxu0 %v6462
        %6660 = vmatpush.bf16.msra.mxu0 %v6461
        %6661 = vmatpush.bf16.msra.mxu0 %v6460
        %6662 = vmatmul.bf16.gmra.mxu0 %v6166
        %v6663 = vpop.f32.mrf.mxu0
        %v6664 = vadd.f32 %v6599, %v6663
        %v6665 = vpop.f32.mrf.mxu0
        %v6666 = vadd.f32 %v6601, %v6665
        %6667 = vmatmul.bf16.gmra.mxu0 %v6171
        %v6668 = vpop.f32.mrf.mxu0
        %v6669 = vadd.f32 %v6604, %v6668
        %v6670 = vpop.f32.mrf.mxu0
        %v6671 = vadd.f32 %v6606, %v6670
        %6672 = vmatmul.bf16.gmra.mxu0 %v6176
        %v6673 = vpop.f32.mrf.mxu0
        %v6674 = vadd.f32 %v6609, %v6673
        %v6675 = vpop.f32.mrf.mxu0
        %v6676 = vadd.f32 %v6611, %v6675
        %6677 = vmatmul.bf16.gmra.mxu0 %v6181
        %v6678 = vpop.f32.mrf.mxu0
        %v6679 = vadd.f32 %v6614, %v6678
        %v6680 = vpop.f32.mrf.mxu0
        %v6681 = vadd.f32 %v6616, %v6680
        %6682 = vmatmul.bf16.gmra.mxu0 %v6186
        %v6683 = vpop.f32.mrf.mxu0
        %v6684 = vadd.f32 %v6619, %v6683
        %v6685 = vpop.f32.mrf.mxu0
        %v6686 = vadd.f32 %v6621, %v6685
        %6687 = vmatmul.bf16.gmra.mxu0 %v6191
        %v6688 = vpop.f32.mrf.mxu0
        %v6689 = vadd.f32 %v6624, %v6688
        %v6690 = vpop.f32.mrf.mxu0
        %v6691 = vadd.f32 %v6626, %v6690
        %6692 = vmatmul.bf16.gmra.mxu0 %v6196
        %v6693 = vpop.f32.mrf.mxu0
        %v6694 = vadd.f32 %v6629, %v6693
        %v6695 = vpop.f32.mrf.mxu0
        %v6696 = vadd.f32 %v6631, %v6695
        %6697 = vmatmul.bf16.gmra.mxu0 %v6201
        %v6698 = vpop.f32.mrf.mxu0
        %v6699 = vadd.f32 %v6634, %v6698
        %v6700 = vpop.f32.mrf.mxu0
        %v6701 = vadd.f32 %v6636, %v6700
        %6702 = vmatmul.bf16.gmra.mxu0 %v6206
        %v6703 = vpop.f32.mrf.mxu0
        %v6704 = vadd.f32 %v6639, %v6703
        %v6705 = vpop.f32.mrf.mxu0
        %v6706 = vadd.f32 %v6641, %v6705
        %6707 = vmatmul.bf16.gmra.mxu0 %v6211
        %v6708 = vpop.f32.mrf.mxu0
        %v6709 = vadd.f32 %v6644, %v6708
        %v6710 = vpop.f32.mrf.mxu0
        %v6711 = vadd.f32 %v6646, %v6710
        %6712 = vmatmul.bf16.gmra.mxu0 %v6216
        %v6713 = vpop.f32.mrf.mxu0
        %v6714 = vpop.f32.mrf.mxu0
        %6715 = vmatmul.bf16.gmra.mxu0 %v6221
        %v6716 = vpop.f32.mrf.mxu0
        %v6717 = vpop.f32.mrf.mxu0
        %6718 = vdwg.mxu0
        %6719 = vmatpush.bf16.msra.mxu0 %v6475
        %6720 = vmatpush.bf16.msra.mxu0 %v6474
        %6721 = vmatpush.bf16.msra.mxu0 %v6473
        %6722 = vmatpush.bf16.msra.mxu0 %v6472
        %6723 = vmatpush.bf16.msra.mxu0 %v6471
        %6724 = vmatpush.bf16.msra.mxu0 %v6470
        %6725 = vmatpush.bf16.msra.mxu0 %v6469
        %6726 = vmatpush.bf16.msra.mxu0 %v6468
        %6727 = vmatmul.bf16.gmra.mxu0 %v6167
        %v6728 = vpop.f32.mrf.mxu0
        %v6729 = vadd.f32 %v6664, %v6728
        %v6730 = vpop.f32.mrf.mxu0
        %v6731 = vadd.f32 %v6666, %v6730
        %6732 = vmatmul.bf16.gmra.mxu0 %v6172
        %v6733 = vpop.f32.mrf.mxu0
        %v6734 = vadd.f32 %v6669, %v6733
        %v6735 = vpop.f32.mrf.mxu0
        %v6736 = vadd.f32 %v6671, %v6735
        %6737 = vmatmul.bf16.gmra.mxu0 %v6177
        %v6738 = vpop.f32.mrf.mxu0
        %v6739 = vadd.f32 %v6674, %v6738
        %v6740 = vpop.f32.mrf.mxu0
        %v6741 = vadd.f32 %v6676, %v6740
        %6742 = vmatmul.bf16.gmra.mxu0 %v6182
        %v6743 = vpop.f32.mrf.mxu0
        %v6744 = vadd.f32 %v6679, %v6743
        %v6745 = vpop.f32.mrf.mxu0
        %v6746 = vadd.f32 %v6681, %v6745
        %6747 = vmatmul.bf16.gmra.mxu0 %v6187
        %v6748 = vpop.f32.mrf.mxu0
        %v6749 = vadd.f32 %v6684, %v6748
        %v6750 = vpop.f32.mrf.mxu0
        %v6751 = vadd.f32 %v6686, %v6750
        %6752 = vmatmul.bf16.gmra.mxu0 %v6192
        %v6753 = vpop.f32.mrf.mxu0
        %v6754 = vadd.f32 %v6689, %v6753
        %v6755 = vpop.f32.mrf.mxu0
        %v6756 = vadd.f32 %v6691, %v6755
        %6757 = vmatmul.bf16.gmra.mxu0 %v6197
        %v6758 = vpop.f32.mrf.mxu0
        %v6759 = vadd.f32 %v6694, %v6758
        %v6760 = vpop.f32.mrf.mxu0
        %v6761 = vadd.f32 %v6696, %v6760
        %6762 = vmatmul.bf16.gmra.mxu0 %v6202
        %v6763 = vpop.f32.mrf.mxu0
        %v6764 = vadd.f32 %v6699, %v6763
        %v6765 = vpop.f32.mrf.mxu0
        %v6766 = vadd.f32 %v6701, %v6765
        %6767 = vmatmul.bf16.gmra.mxu0 %v6207
        %v6768 = vpop.f32.mrf.mxu0
        %v6769 = vadd.f32 %v6704, %v6768
        %v6770 = vpop.f32.mrf.mxu0
        %v6771 = vadd.f32 %v6706, %v6770
        %6772 = vmatmul.bf16.gmra.mxu0 %v6212
        %v6773 = vpop.f32.mrf.mxu0
        %v6774 = vadd.f32 %v6709, %v6773
        %v6775 = vpop.f32.mrf.mxu0
        %v6776 = vadd.f32 %v6711, %v6775
        %6777 = vmatmul.bf16.gmra.mxu0 %v6217
        %v6778 = vpop.f32.mrf.mxu0
        %v6779 = vpop.f32.mrf.mxu0
        %6780 = vmatmul.bf16.gmra.mxu0 %v6222
        %v6781 = vpop.f32.mrf.mxu0
        %v6782 = vpop.f32.mrf.mxu0
        %6783 = vdwg.mxu0
        %6784 = vmatpush.bf16.msra.mxu0 %v6483
        %6785 = vmatpush.bf16.msra.mxu0 %v6482
        %6786 = vmatpush.bf16.msra.mxu0 %v6481
        %6787 = vmatpush.bf16.msra.mxu0 %v6480
        %6788 = vmatpush.bf16.msra.mxu0 %v6479
        %6789 = vmatpush.bf16.msra.mxu0 %v6478
        %6790 = vmatpush.bf16.msra.mxu0 %v6477
        %6791 = vmatpush.bf16.msra.mxu0 %v6476
        %6792 = vmatmul.bf16.gmra.mxu0 %v6168
        %v6793 = vpop.f32.mrf.mxu0
        %v6794 = vadd.f32 %v6729, %v6793
        %v6795 = vpop.f32.mrf.mxu0
        %v6796 = vadd.f32 %v6731, %v6795
        %6797 = vmatmul.bf16.gmra.mxu0 %v6173
        %v6798 = vpop.f32.mrf.mxu0
        %v6799 = vadd.f32 %v6734, %v6798
        %v6800 = vpop.f32.mrf.mxu0
        %v6801 = vadd.f32 %v6736, %v6800
        %6802 = vmatmul.bf16.gmra.mxu0 %v6178
        %v6803 = vpop.f32.mrf.mxu0
        %v6804 = vadd.f32 %v6739, %v6803
        %v6805 = vpop.f32.mrf.mxu0
        %v6806 = vadd.f32 %v6741, %v6805
        %6807 = vmatmul.bf16.gmra.mxu0 %v6183
        %v6808 = vpop.f32.mrf.mxu0
        %v6809 = vadd.f32 %v6744, %v6808
        %v6810 = vpop.f32.mrf.mxu0
        %v6811 = vadd.f32 %v6746, %v6810
        %6812 = vmatmul.bf16.gmra.mxu0 %v6188
        %v6813 = vpop.f32.mrf.mxu0
        %v6814 = vadd.f32 %v6749, %v6813
        %v6815 = vpop.f32.mrf.mxu0
        %v6816 = vadd.f32 %v6751, %v6815
        %6817 = vmatmul.bf16.gmra.mxu0 %v6193
        %v6818 = vpop.f32.mrf.mxu0
        %v6819 = vadd.f32 %v6754, %v6818
        %v6820 = vpop.f32.mrf.mxu0
        %v6821 = vadd.f32 %v6756, %v6820
        %6822 = vmatmul.bf16.gmra.mxu0 %v6198
        %v6823 = vpop.f32.mrf.mxu0
        %v6824 = vadd.f32 %v6759, %v6823
        %v6825 = vpop.f32.mrf.mxu0
        %v6826 = vadd.f32 %v6761, %v6825
        %6827 = vmatmul.bf16.gmra.mxu0 %v6203
        %v6828 = vpop.f32.mrf.mxu0
        %v6829 = vadd.f32 %v6764, %v6828
        %v6830 = vpop.f32.mrf.mxu0
        %v6831 = vadd.f32 %v6766, %v6830
        %6832 = vmatmul.bf16.gmra.mxu0 %v6208
        %v6833 = vpop.f32.mrf.mxu0
        %v6834 = vadd.f32 %v6769, %v6833
        %v6835 = vpop.f32.mrf.mxu0
        %v6836 = vadd.f32 %v6771, %v6835
        %6837 = vmatmul.bf16.gmra.mxu0 %v6213
        %v6838 = vpop.f32.mrf.mxu0
        %v6839 = vadd.f32 %v6774, %v6838
        %v6840 = vpop.f32.mrf.mxu0
        %v6841 = vadd.f32 %v6776, %v6840
        %6842 = vmatmul.bf16.gmra.mxu0 %v6218
        %v6843 = vpop.f32.mrf.mxu0
        %v6844 = vpop.f32.mrf.mxu0
        %6845 = vmatmul.bf16.gmra.mxu0 %v6223
        %v6846 = vpop.f32.mrf.mxu0
        %v6847 = vpop.f32.mrf.mxu0
        %6848 = vdwg.mxu0
        %v6921 = vunpack.c.l.b16 %v5667
        %v6922 = vunpack.c.h.b16 %v5667
        %v6923 = vunpack.c.l.b16 %v5668
        %v6924 = vunpack.c.h.b16 %v5668
        %v6925 = vunpack.c.l.b16 %v5669
        %v6926 = vunpack.c.l.b16 %v5670
        %v6927 = vunpack.c.h.b16 %v5670
        %v6928 = vunpack.c.l.b16 %v5671
        %v6929 = vunpack.c.h.b16 %v5671
        %v6930 = vunpack.c.l.b16 %v5672
        %v6931 = vunpack.c.l.b16 %v5673
        %v6932 = vunpack.c.h.b16 %v5673
        %v6933 = vunpack.c.l.b16 %v5674
        %v6934 = vunpack.c.h.b16 %v5674
        %v6935 = vunpack.c.l.b16 %v5675
        %v6936 = vunpack.c.l.b16 %v5676
        %v6937 = vunpack.c.h.b16 %v5676
        %v6938 = vunpack.c.l.b16 %v5677
        %v6939 = vunpack.c.h.b16 %v5677
        %v6940 = vunpack.c.l.b16 %v5678
        %v6941 = vunpack.c.l.b16 %v5679
        %v6942 = vunpack.c.h.b16 %v5679
        %v6943 = vunpack.c.l.b16 %v5680
        %v6944 = vunpack.c.h.b16 %v5680
        %v6945 = vunpack.c.l.b16 %v5681
        %v6946 = vunpack.c.l.b16 %v5682
        %v6947 = vunpack.c.h.b16 %v5682
        %v6948 = vunpack.c.l.b16 %v5683
        %v6949 = vunpack.c.h.b16 %v5683
        %v6950 = vunpack.c.l.b16 %v5684
        %v6951 = vunpack.c.l.b16 %v5685
        %v6952 = vunpack.c.h.b16 %v5685
        %v6953 = vunpack.c.l.b16 %v5686
        %v6954 = vunpack.c.h.b16 %v5686
        %v6955 = vunpack.c.l.b16 %v5687
        %v6956 = vunpack.c.l.b16 %v5688
        %v6957 = vunpack.c.h.b16 %v5688
        %v6958 = vunpack.c.l.b16 %v5689
        %v6959 = vunpack.c.h.b16 %v5689
        %v6960 = vunpack.c.l.b16 %v5690
        %v6961 = vunpack.c.l.b16 %v5691
        %v6962 = vunpack.c.h.b16 %v5691
        %v6963 = vunpack.c.l.b16 %v5692
        %v6964 = vunpack.c.h.b16 %v5692
        %v6965 = vunpack.c.l.b16 %v5693
        %v6966 = vunpack.c.l.b16 %v5694
        %v6967 = vunpack.c.h.b16 %v5694
        %v6968 = vunpack.c.l.b16 %v5695
        %v6969 = vunpack.c.h.b16 %v5695
        %v6970 = vunpack.c.l.b16 %v5696
        %v6971 = vunpack.c.l.b16 %v5697
        %v6972 = vunpack.c.h.b16 %v5697
        %v6973 = vunpack.c.l.b16 %v5698
        %v6974 = vunpack.c.h.b16 %v5698
        %v6975 = vunpack.c.l.b16 %v5699
        %v6976 = vunpack.c.l.b16 %v5700
        %v6977 = vunpack.c.h.b16 %v5700
        %v6978 = vunpack.c.l.b16 %v5701
        %v6979 = vunpack.c.h.b16 %v5701
        %v6980 = vunpack.c.l.b16 %v5702
        %v6981 = vunpack.c.l.b16 %v5703
        %v6982 = vunpack.c.h.b16 %v5703
        %v6983 = vunpack.c.l.b16 %v5704
        %v6984 = vunpack.c.h.b16 %v5704
        %v6985 = vunpack.c.l.b16 %v5705
        %v6986 = vunpack.c.l.b16 %v5706
        %v6987 = vunpack.c.h.b16 %v5706
        %v6988 = vunpack.c.l.b16 %v5707
        %v6989 = vunpack.c.h.b16 %v5707
        %v6990 = vunpack.c.l.b16 %v5708
        %v6991 = vunpack.c.l.b16 %v5709
        %v6992 = vunpack.c.h.b16 %v5709
        %v6993 = vunpack.c.l.b16 %v5710
        %v6994 = vunpack.c.h.b16 %v5710
        %v6995 = vunpack.c.l.b16 %v5711
        %v6996 = vunpack.c.l.b16 %v5712
        %v6997 = vunpack.c.h.b16 %v5712
        %v6998 = vunpack.c.l.b16 %v5713
        %v6999 = vunpack.c.h.b16 %v5713
        %v7000 = vunpack.c.l.b16 %v5714
        %v7001 = vunpack.c.l.b16 %v5715
        %v7002 = vunpack.c.h.b16 %v5715
        %v7003 = vunpack.c.l.b16 %v5716
        %v7004 = vunpack.c.h.b16 %v5716
        %v7005 = vunpack.c.l.b16 %v5717
        %v7006 = vunpack.c.l.b16 %v5718
        %v7007 = vunpack.c.h.b16 %v5718
        %v7008 = vunpack.c.l.b16 %v5719
        %v7009 = vunpack.c.h.b16 %v5719
        %v7010 = vunpack.c.l.b16 %v5720
        %v7011 = vunpack.c.l.b16 %v5721
        %v7012 = vunpack.c.h.b16 %v5721
        %v7013 = vunpack.c.l.b16 %v5722
        %v7014 = vunpack.c.h.b16 %v5722
        %v7015 = vunpack.c.l.b16 %v5723
        %v7016 = vunpack.c.l.b16 %v5724
        %v7017 = vunpack.c.h.b16 %v5724
        %v7018 = vunpack.c.l.b16 %v5725
        %v7019 = vunpack.c.h.b16 %v5725
        %v7020 = vunpack.c.l.b16 %v5726
        %v7021 = vunpack.c.l.b16 %v5727
        %v7022 = vunpack.c.h.b16 %v5727
        %v7023 = vunpack.c.l.b16 %v5728
        %v7024 = vunpack.c.h.b16 %v5728
        %v7025 = vunpack.c.l.b16 %v5729
        %v7026 = vunpack.c.l.b16 %v5730
        %v7027 = vunpack.c.h.b16 %v5730
        %v7028 = vunpack.c.l.b16 %v5731
        %v7029 = vunpack.c.h.b16 %v5731
        %v7030 = vunpack.c.l.b16 %v5732
        %v7031 = vunpack.c.l.b16 %v5733
        %v7032 = vunpack.c.h.b16 %v5733
        %v7033 = vunpack.c.l.b16 %v5734
        %v7034 = vunpack.c.h.b16 %v5734
        %v7035 = vunpack.c.l.b16 %v5735
        %v7036 = vunpack.c.l.b16 %v5736
        %v7037 = vunpack.c.h.b16 %v5736
        %v7038 = vunpack.c.l.b16 %v5737
        %v7039 = vunpack.c.h.b16 %v5737
        %v7040 = vunpack.c.l.b16 %v5738
        %v7041 = vpack.c.b16 %v6926, %v6921
        %v7042 = vpack.c.b16 %v6927, %v6922
        %v7043 = vpack.c.b16 %v6928, %v6923
        %v7044 = vpack.c.b16 %v6929, %v6924
        %v7045 = vpack.c.b16 %v6930, %v6925
        %v7046 = vpack.c.b16 %v6936, %v6931
        %v7047 = vpack.c.b16 %v6937, %v6932
        %v7048 = vpack.c.b16 %v6938, %v6933
        %v7049 = vpack.c.b16 %v6939, %v6934
        %v7050 = vpack.c.b16 %v6940, %v6935
        %v7051 = vpack.c.b16 %v6946, %v6941
        %v7052 = vpack.c.b16 %v6947, %v6942
        %v7053 = vpack.c.b16 %v6948, %v6943
        %v7054 = vpack.c.b16 %v6949, %v6944
        %v7055 = vpack.c.b16 %v6950, %v6945
        %v7056 = vpack.c.b16 %v6956, %v6951
        %v7057 = vpack.c.b16 %v6957, %v6952
        %v7058 = vpack.c.b16 %v6958, %v6953
        %v7059 = vpack.c.b16 %v6959, %v6954
        %v7060 = vpack.c.b16 %v6960, %v6955
        %v7061 = vpack.c.b16 %v6966, %v6961
        %v7062 = vpack.c.b16 %v6967, %v6962
        %v7063 = vpack.c.b16 %v6968, %v6963
        %v7064 = vpack.c.b16 %v6969, %v6964
        %v7065 = vpack.c.b16 %v6970, %v6965
        %v7066 = vpack.c.b16 %v6976, %v6971
        %v7067 = vpack.c.b16 %v6977, %v6972
        %v7068 = vpack.c.b16 %v6978, %v6973
        %v7069 = vpack.c.b16 %v6979, %v6974
        %v7070 = vpack.c.b16 %v6980, %v6975
        %v7071 = vpack.c.b16 %v6986, %v6981
        %v7072 = vpack.c.b16 %v6987, %v6982
        %v7073 = vpack.c.b16 %v6988, %v6983
        %v7074 = vpack.c.b16 %v6989, %v6984
        %v7075 = vpack.c.b16 %v6990, %v6985
        %v7076 = vpack.c.b16 %v6996, %v6991
        %v7077 = vpack.c.b16 %v6997, %v6992
        %v7078 = vpack.c.b16 %v6998, %v6993
        %v7079 = vpack.c.b16 %v6999, %v6994
        %v7080 = vpack.c.b16 %v7000, %v6995
        %v7081 = vpack.c.b16 %v7006, %v7001
        %v7082 = vpack.c.b16 %v7007, %v7002
        %v7083 = vpack.c.b16 %v7008, %v7003
        %v7084 = vpack.c.b16 %v7009, %v7004
        %v7085 = vpack.c.b16 %v7010, %v7005
        %v7086 = vpack.c.b16 %v7016, %v7011
        %v7087 = vpack.c.b16 %v7017, %v7012
        %v7088 = vpack.c.b16 %v7018, %v7013
        %v7089 = vpack.c.b16 %v7019, %v7014
        %v7090 = vpack.c.b16 %v7020, %v7015
        %v7091 = vpack.c.b16 %v7026, %v7021
        %v7092 = vpack.c.b16 %v7027, %v7022
        %v7093 = vpack.c.b16 %v7028, %v7023
        %v7094 = vpack.c.b16 %v7029, %v7024
        %v7095 = vpack.c.b16 %v7030, %v7025
        %v7096 = vpack.c.b16 %v7036, %v7031
        %v7097 = vpack.c.b16 %v7037, %v7032
        %v7098 = vpack.c.b16 %v7038, %v7033
        %v7099 = vpack.c.b16 %v7039, %v7034
        %v7100 = vpack.c.b16 %v7040, %v7035
        %v7241 = vunpack.c.l.b16 %v5739
        %v7242 = vunpack.c.l.b16 %v5740
        %v7243 = vunpack.c.l.b16 %v5741
        %v7244 = vunpack.c.l.b16 %v5742
        %v7245 = vunpack.c.l.b16 %v5743
        %v7246 = vunpack.c.l.b16 %v5744
        %v7247 = vunpack.c.l.b16 %v5745
        %v7248 = vunpack.c.l.b16 %v5746
        %v7249 = vunpack.c.l.b16 %v5747
        %v7250 = vunpack.c.l.b16 %v5748
        %v7251 = vunpack.c.l.b16 %v5749
        %v7252 = vunpack.c.l.b16 %v5750
        %v7253 = vunpack.c.l.b16 %v5751
        %v7254 = vunpack.c.l.b16 %v5752
        %v7255 = vunpack.c.l.b16 %v5753
        %v7256 = vunpack.c.l.b16 %v5754
        %v7257 = vunpack.c.l.b16 %v5755
        %v7258 = vunpack.c.l.b16 %v5756
        %v7259 = vunpack.c.l.b16 %v5757
        %v7260 = vunpack.c.l.b16 %v5758
        %v7261 = vunpack.c.l.b16 %v5759
        %v7262 = vunpack.c.l.b16 %v5760
        %v7263 = vunpack.c.l.b16 %v5761
        %v7264 = vunpack.c.l.b16 %v5762
        %v7265 = vunpack.c.l.b16 %v5763
        %v7266 = vunpack.c.l.b16 %v5764
        %v7267 = vunpack.c.l.b16 %v5765
        %v7268 = vunpack.c.l.b16 %v5766
        %v7269 = vunpack.c.l.b16 %v5767
        %v7270 = vunpack.c.l.b16 %v5768
        %v7271 = vunpack.c.l.b16 %v5769
        %v7272 = vunpack.c.l.b16 %v5770
        %v7273 = vunpack.c.l.b16 %v5771
        %v7274 = vunpack.c.l.b16 %v5772
        %v7275 = vunpack.c.l.b16 %v5773
        %v7276 = vunpack.c.l.b16 %v5774
        %v7277 = vunpack.c.l.b16 %v5775
        %v7278 = vunpack.c.l.b16 %v5776
        %v7279 = vunpack.c.l.b16 %v5777
        %v7280 = vunpack.c.l.b16 %v5778
        %v7281 = vunpack.c.l.b16 %v5779
        %v7282 = vunpack.c.l.b16 %v5780
        %v7283 = vunpack.c.l.b16 %v5781
        %v7284 = vunpack.c.l.b16 %v5782
        %v7285 = vunpack.c.l.b16 %v5783
        %v7286 = vunpack.c.l.b16 %v5784
        %v7287 = vunpack.c.l.b16 %v5785
        %v7288 = vunpack.c.l.b16 %v5786
        %v7289 = vunpack.c.l.b16 %v5787
        %v7290 = vunpack.c.l.b16 %v5788
        %v7291 = vunpack.c.l.b16 %v5789
        %v7292 = vunpack.c.l.b16 %v5790
        %v7293 = vunpack.c.l.b16 %v5791
        %v7294 = vunpack.c.l.b16 %v5792
        %v7295 = vunpack.c.l.b16 %v5793
        %v7296 = vunpack.c.l.b16 %v5794
        %v7297 = vunpack.c.l.b16 %v5795
        %v7298 = vunpack.c.l.b16 %v5796
        %v7299 = vunpack.c.l.b16 %v5797
        %v7300 = vunpack.c.l.b16 %v5798
        %v7301 = vunpack.c.l.b16 %v5799
        %v7302 = vunpack.c.l.b16 %v5800
        %v7303 = vunpack.c.l.b16 %v5801
        %v7304 = vunpack.c.l.b16 %v5802
        %v7305 = vunpack.c.l.b16 %v5803
        %v7306 = vunpack.c.l.b16 %v5804
        %v7307 = vunpack.c.l.b16 %v5805
        %v7308 = vunpack.c.l.b16 %v5806
        %v7309 = vunpack.c.l.b16 %v5807
        %v7310 = vunpack.c.l.b16 %v5808
        %v7311 = vunpack.c.l.b16 %v5809
        %v7312 = vunpack.c.l.b16 %v5810
        %v7313 = vunpack.c.l.b16 %v5811
        %v7314 = vunpack.c.l.b16 %v5812
        %v7315 = vunpack.c.l.b16 %v5813
        %v7316 = vunpack.c.l.b16 %v5814
        %v7317 = vunpack.c.l.b16 %v5815
        %v7318 = vunpack.c.l.b16 %v5816
        %v7319 = vunpack.c.l.b16 %v5817
        %v7320 = vunpack.c.l.b16 %v5818
        %v7321 = vpack.c.b16 %v7242, %v7241
        %v7322 = vpack.c.b16 %v7244, %v7243
        %v7323 = vpack.c.b16 %v7246, %v7245
        %v7324 = vpack.c.b16 %v7248, %v7247
        %v7325 = vpack.c.b16 %v7250, %v7249
        %v7326 = vpack.c.b16 %v7252, %v7251
        %v7327 = vpack.c.b16 %v7254, %v7253
        %v7328 = vpack.c.b16 %v7256, %v7255
        %v7329 = vpack.c.b16 %v7258, %v7257
        %v7330 = vpack.c.b16 %v7260, %v7259
        %v7331 = vpack.c.b16 %v7262, %v7261
        %v7332 = vpack.c.b16 %v7264, %v7263
        %v7333 = vpack.c.b16 %v7266, %v7265
        %v7334 = vpack.c.b16 %v7268, %v7267
        %v7335 = vpack.c.b16 %v7270, %v7269
        %v7336 = vpack.c.b16 %v7272, %v7271
        %v7337 = vpack.c.b16 %v7274, %v7273
        %v7338 = vpack.c.b16 %v7276, %v7275
        %v7339 = vpack.c.b16 %v7278, %v7277
        %v7340 = vpack.c.b16 %v7280, %v7279
        %v7341 = vpack.c.b16 %v7282, %v7281
        %v7342 = vpack.c.b16 %v7284, %v7283
        %v7343 = vpack.c.b16 %v7286, %v7285
        %v7344 = vpack.c.b16 %v7288, %v7287
        %v7345 = vpack.c.b16 %v7290, %v7289
        %v7346 = vpack.c.b16 %v7292, %v7291
        %v7347 = vpack.c.b16 %v7294, %v7293
        %v7348 = vpack.c.b16 %v7296, %v7295
        %v7349 = vpack.c.b16 %v7298, %v7297
        %v7350 = vpack.c.b16 %v7300, %v7299
        %v7351 = vpack.c.b16 %v7302, %v7301
        %v7352 = vpack.c.b16 %v7304, %v7303
        %v7353 = vpack.c.b16 %v7306, %v7305
        %v7354 = vpack.c.b16 %v7308, %v7307
        %v7355 = vpack.c.b16 %v7310, %v7309
        %v7356 = vpack.c.b16 %v7312, %v7311
        %v7357 = vpack.c.b16 %v7314, %v7313
        %v7358 = vpack.c.b16 %v7316, %v7315
        %v7359 = vpack.c.b16 %v7318, %v7317
        %v7360 = vpack.c.b16 %v7320, %v7319
        %7401 = vmatpush.bf16.msra.mxu0 %v7328
        %7402 = vmatpush.bf16.msra.mxu0 %v7327
        %7403 = vmatpush.bf16.msra.mxu0 %v7326
        %7404 = vmatpush.bf16.msra.mxu0 %v7325
        %7405 = vmatpush.bf16.msra.mxu0 %v7324
        %7406 = vmatpush.bf16.msra.mxu0 %v7323
        %7407 = vmatpush.bf16.msra.mxu0 %v7322
        %7408 = vmatpush.bf16.msra.mxu0 %v7321
        %7409 = vmatmul.bf16.gmra.mxu0 %v7041
        %v7410 = vpop.f32.mrf.mxu0
        %v7411 = vadd.f32 %v6794, %v7410
        %v7412 = vpop.f32.mrf.mxu0
        %v7413 = vadd.f32 %v6796, %v7412
        %7414 = vmatmul.bf16.gmra.mxu0 %v7046
        %v7415 = vpop.f32.mrf.mxu0
        %v7416 = vadd.f32 %v6799, %v7415
        %v7417 = vpop.f32.mrf.mxu0
        %v7418 = vadd.f32 %v6801, %v7417
        %7419 = vmatmul.bf16.gmra.mxu0 %v7051
        %v7420 = vpop.f32.mrf.mxu0
        %v7421 = vadd.f32 %v6804, %v7420
        %v7422 = vpop.f32.mrf.mxu0
        %v7423 = vadd.f32 %v6806, %v7422
        %7424 = vmatmul.bf16.gmra.mxu0 %v7056
        %v7425 = vpop.f32.mrf.mxu0
        %v7426 = vadd.f32 %v6809, %v7425
        %v7427 = vpop.f32.mrf.mxu0
        %v7428 = vadd.f32 %v6811, %v7427
        %7429 = vmatmul.bf16.gmra.mxu0 %v7061
        %v7430 = vpop.f32.mrf.mxu0
        %v7431 = vadd.f32 %v6814, %v7430
        %v7432 = vpop.f32.mrf.mxu0
        %v7433 = vadd.f32 %v6816, %v7432
        %7434 = vmatmul.bf16.gmra.mxu0 %v7066
        %v7435 = vpop.f32.mrf.mxu0
        %v7436 = vadd.f32 %v6819, %v7435
        %v7437 = vpop.f32.mrf.mxu0
        %v7438 = vadd.f32 %v6821, %v7437
        %7439 = vmatmul.bf16.gmra.mxu0 %v7071
        %v7440 = vpop.f32.mrf.mxu0
        %v7441 = vadd.f32 %v6824, %v7440
        %v7442 = vpop.f32.mrf.mxu0
        %v7443 = vadd.f32 %v6826, %v7442
        %7444 = vmatmul.bf16.gmra.mxu0 %v7076
        %v7445 = vpop.f32.mrf.mxu0
        %v7446 = vadd.f32 %v6829, %v7445
        %v7447 = vpop.f32.mrf.mxu0
        %v7448 = vadd.f32 %v6831, %v7447
        %7449 = vmatmul.bf16.gmra.mxu0 %v7081
        %v7450 = vpop.f32.mrf.mxu0
        %v7451 = vadd.f32 %v6834, %v7450
        %v7452 = vpop.f32.mrf.mxu0
        %v7453 = vadd.f32 %v6836, %v7452
        %7454 = vmatmul.bf16.gmra.mxu0 %v7086
        %v7455 = vpop.f32.mrf.mxu0
        %v7456 = vadd.f32 %v6839, %v7455
        %v7457 = vpop.f32.mrf.mxu0
        %v7458 = vadd.f32 %v6841, %v7457
        %7459 = vmatmul.bf16.gmra.mxu0 %v7091
        %v7460 = vpop.f32.mrf.mxu0
        %v7461 = vpop.f32.mrf.mxu0
        %7462 = vmatmul.bf16.gmra.mxu0 %v7096
        %v7463 = vpop.f32.mrf.mxu0
        %v7464 = vpop.f32.mrf.mxu0
        %7465 = vdwg.mxu0
        %7466 = vmatpush.bf16.msra.mxu0 %v7336
        %7467 = vmatpush.bf16.msra.mxu0 %v7335
        %7468 = vmatpush.bf16.msra.mxu0 %v7334
        %7469 = vmatpush.bf16.msra.mxu0 %v7333
        %7470 = vmatpush.bf16.msra.mxu0 %v7332
        %7471 = vmatpush.bf16.msra.mxu0 %v7331
        %7472 = vmatpush.bf16.msra.mxu0 %v7330
        %7473 = vmatpush.bf16.msra.mxu0 %v7329
        %7474 = vmatmul.bf16.gmra.mxu0 %v7042
        %v7475 = vpop.f32.mrf.mxu0
        %v7476 = vadd.f32 %v7411, %v7475
        %v7477 = vpop.f32.mrf.mxu0
        %v7478 = vadd.f32 %v7413, %v7477
        %7479 = vmatmul.bf16.gmra.mxu0 %v7047
        %v7480 = vpop.f32.mrf.mxu0
        %v7481 = vadd.f32 %v7416, %v7480
        %v7482 = vpop.f32.mrf.mxu0
        %v7483 = vadd.f32 %v7418, %v7482
        %7484 = vmatmul.bf16.gmra.mxu0 %v7052
        %v7485 = vpop.f32.mrf.mxu0
        %v7486 = vadd.f32 %v7421, %v7485
        %v7487 = vpop.f32.mrf.mxu0
        %v7488 = vadd.f32 %v7423, %v7487
        %7489 = vmatmul.bf16.gmra.mxu0 %v7057
        %v7490 = vpop.f32.mrf.mxu0
        %v7491 = vadd.f32 %v7426, %v7490
        %v7492 = vpop.f32.mrf.mxu0
        %v7493 = vadd.f32 %v7428, %v7492
        %7494 = vmatmul.bf16.gmra.mxu0 %v7062
        %v7495 = vpop.f32.mrf.mxu0
        %v7496 = vadd.f32 %v7431, %v7495
        %v7497 = vpop.f32.mrf.mxu0
        %v7498 = vadd.f32 %v7433, %v7497
        %7499 = vmatmul.bf16.gmra.mxu0 %v7067
        %v7500 = vpop.f32.mrf.mxu0
        %v7501 = vadd.f32 %v7436, %v7500
        %v7502 = vpop.f32.mrf.mxu0
        %v7503 = vadd.f32 %v7438, %v7502
        %7504 = vmatmul.bf16.gmra.mxu0 %v7072
        %v7505 = vpop.f32.mrf.mxu0
        %v7506 = vadd.f32 %v7441, %v7505
        %v7507 = vpop.f32.mrf.mxu0
        %v7508 = vadd.f32 %v7443, %v7507
        %7509 = vmatmul.bf16.gmra.mxu0 %v7077
        %v7510 = vpop.f32.mrf.mxu0
        %v7511 = vadd.f32 %v7446, %v7510
        %v7512 = vpop.f32.mrf.mxu0
        %v7513 = vadd.f32 %v7448, %v7512
        %7514 = vmatmul.bf16.gmra.mxu0 %v7082
        %v7515 = vpop.f32.mrf.mxu0
        %v7516 = vadd.f32 %v7451, %v7515
        %v7517 = vpop.f32.mrf.mxu0
        %v7518 = vadd.f32 %v7453, %v7517
        %7519 = vmatmul.bf16.gmra.mxu0 %v7087
        %v7520 = vpop.f32.mrf.mxu0
        %v7521 = vadd.f32 %v7456, %v7520
        %v7522 = vpop.f32.mrf.mxu0
        %v7523 = vadd.f32 %v7458, %v7522
        %7524 = vmatmul.bf16.gmra.mxu0 %v7092
        %v7525 = vpop.f32.mrf.mxu0
        %v7526 = vpop.f32.mrf.mxu0
        %7527 = vmatmul.bf16.gmra.mxu0 %v7097
        %v7528 = vpop.f32.mrf.mxu0
        %v7529 = vpop.f32.mrf.mxu0
        %7530 = vdwg.mxu0
        %7531 = vmatpush.bf16.msra.mxu0 %v7344
        %7532 = vmatpush.bf16.msra.mxu0 %v7343
        %7533 = vmatpush.bf16.msra.mxu0 %v7342
        %7534 = vmatpush.bf16.msra.mxu0 %v7341
        %7535 = vmatpush.bf16.msra.mxu0 %v7340
        %7536 = vmatpush.bf16.msra.mxu0 %v7339
        %7537 = vmatpush.bf16.msra.mxu0 %v7338
        %7538 = vmatpush.bf16.msra.mxu0 %v7337
        %7539 = vmatmul.bf16.gmra.mxu0 %v7043
        %v7540 = vpop.f32.mrf.mxu0
        %v7541 = vadd.f32 %v7476, %v7540
        %v7542 = vpop.f32.mrf.mxu0
        %v7543 = vadd.f32 %v7478, %v7542
        %7544 = vmatmul.bf16.gmra.mxu0 %v7048
        %v7545 = vpop.f32.mrf.mxu0
        %v7546 = vadd.f32 %v7481, %v7545
        %v7547 = vpop.f32.mrf.mxu0
        %v7548 = vadd.f32 %v7483, %v7547
        %7549 = vmatmul.bf16.gmra.mxu0 %v7053
        %v7550 = vpop.f32.mrf.mxu0
        %v7551 = vadd.f32 %v7486, %v7550
        %v7552 = vpop.f32.mrf.mxu0
        %v7553 = vadd.f32 %v7488, %v7552
        %7554 = vmatmul.bf16.gmra.mxu0 %v7058
        %v7555 = vpop.f32.mrf.mxu0
        %v7556 = vadd.f32 %v7491, %v7555
        %v7557 = vpop.f32.mrf.mxu0
        %v7558 = vadd.f32 %v7493, %v7557
        %7559 = vmatmul.bf16.gmra.mxu0 %v7063
        %v7560 = vpop.f32.mrf.mxu0
        %v7561 = vadd.f32 %v7496, %v7560
        %v7562 = vpop.f32.mrf.mxu0
        %v7563 = vadd.f32 %v7498, %v7562
        %7564 = vmatmul.bf16.gmra.mxu0 %v7068
        %v7565 = vpop.f32.mrf.mxu0
        %v7566 = vadd.f32 %v7501, %v7565
        %v7567 = vpop.f32.mrf.mxu0
        %v7568 = vadd.f32 %v7503, %v7567
        %7569 = vmatmul.bf16.gmra.mxu0 %v7073
        %v7570 = vpop.f32.mrf.mxu0
        %v7571 = vadd.f32 %v7506, %v7570
        %v7572 = vpop.f32.mrf.mxu0
        %v7573 = vadd.f32 %v7508, %v7572
        %7574 = vmatmul.bf16.gmra.mxu0 %v7078
        %v7575 = vpop.f32.mrf.mxu0
        %v7576 = vadd.f32 %v7511, %v7575
        %v7577 = vpop.f32.mrf.mxu0
        %v7578 = vadd.f32 %v7513, %v7577
        %7579 = vmatmul.bf16.gmra.mxu0 %v7083
        %v7580 = vpop.f32.mrf.mxu0
        %v7581 = vadd.f32 %v7516, %v7580
        %v7582 = vpop.f32.mrf.mxu0
        %v7583 = vadd.f32 %v7518, %v7582
        %7584 = vmatmul.bf16.gmra.mxu0 %v7088
        %v7585 = vpop.f32.mrf.mxu0
        %v7586 = vadd.f32 %v7521, %v7585
        %v7587 = vpop.f32.mrf.mxu0
        %v7588 = vadd.f32 %v7523, %v7587
        %7589 = vmatmul.bf16.gmra.mxu0 %v7093
        %v7590 = vpop.f32.mrf.mxu0
        %v7591 = vpop.f32.mrf.mxu0
        %7592 = vmatmul.bf16.gmra.mxu0 %v7098
        %v7593 = vpop.f32.mrf.mxu0
        %v7594 = vpop.f32.mrf.mxu0
        %7595 = vdwg.mxu0
        %7596 = vmatpush.bf16.msra.mxu0 %v7352
        %7597 = vmatpush.bf16.msra.mxu0 %v7351
        %7598 = vmatpush.bf16.msra.mxu0 %v7350
        %7599 = vmatpush.bf16.msra.mxu0 %v7349
        %7600 = vmatpush.bf16.msra.mxu0 %v7348
        %7601 = vmatpush.bf16.msra.mxu0 %v7347
        %7602 = vmatpush.bf16.msra.mxu0 %v7346
        %7603 = vmatpush.bf16.msra.mxu0 %v7345
        %7604 = vmatmul.bf16.gmra.mxu0 %v7044
        %v7605 = vpop.f32.mrf.mxu0
        %v7606 = vadd.f32 %v7541, %v7605
        %v7607 = vpop.f32.mrf.mxu0
        %v7608 = vadd.f32 %v7543, %v7607
        %7609 = vmatmul.bf16.gmra.mxu0 %v7049
        %v7610 = vpop.f32.mrf.mxu0
        %v7611 = vadd.f32 %v7546, %v7610
        %v7612 = vpop.f32.mrf.mxu0
        %v7613 = vadd.f32 %v7548, %v7612
        %7614 = vmatmul.bf16.gmra.mxu0 %v7054
        %v7615 = vpop.f32.mrf.mxu0
        %v7616 = vadd.f32 %v7551, %v7615
        %v7617 = vpop.f32.mrf.mxu0
        %v7618 = vadd.f32 %v7553, %v7617
        %7619 = vmatmul.bf16.gmra.mxu0 %v7059
        %v7620 = vpop.f32.mrf.mxu0
        %v7621 = vadd.f32 %v7556, %v7620
        %v7622 = vpop.f32.mrf.mxu0
        %v7623 = vadd.f32 %v7558, %v7622
        %7624 = vmatmul.bf16.gmra.mxu0 %v7064
        %v7625 = vpop.f32.mrf.mxu0
        %v7626 = vadd.f32 %v7561, %v7625
        %v7627 = vpop.f32.mrf.mxu0
        %v7628 = vadd.f32 %v7563, %v7627
        %7629 = vmatmul.bf16.gmra.mxu0 %v7069
        %v7630 = vpop.f32.mrf.mxu0
        %v7631 = vadd.f32 %v7566, %v7630
        %v7632 = vpop.f32.mrf.mxu0
        %v7633 = vadd.f32 %v7568, %v7632
        %7634 = vmatmul.bf16.gmra.mxu0 %v7074
        %v7635 = vpop.f32.mrf.mxu0
        %v7636 = vadd.f32 %v7571, %v7635
        %v7637 = vpop.f32.mrf.mxu0
        %v7638 = vadd.f32 %v7573, %v7637
        %7639 = vmatmul.bf16.gmra.mxu0 %v7079
        %v7640 = vpop.f32.mrf.mxu0
        %v7641 = vadd.f32 %v7576, %v7640
        %v7642 = vpop.f32.mrf.mxu0
        %v7643 = vadd.f32 %v7578, %v7642
        %7644 = vmatmul.bf16.gmra.mxu0 %v7084
        %v7645 = vpop.f32.mrf.mxu0
        %v7646 = vadd.f32 %v7581, %v7645
        %v7647 = vpop.f32.mrf.mxu0
        %v7648 = vadd.f32 %v7583, %v7647
        %7649 = vmatmul.bf16.gmra.mxu0 %v7089
        %v7650 = vpop.f32.mrf.mxu0
        %v7651 = vadd.f32 %v7586, %v7650
        %v7652 = vpop.f32.mrf.mxu0
        %v7653 = vadd.f32 %v7588, %v7652
        %7654 = vmatmul.bf16.gmra.mxu0 %v7094
        %v7655 = vpop.f32.mrf.mxu0
        %v7656 = vpop.f32.mrf.mxu0
        %7657 = vmatmul.bf16.gmra.mxu0 %v7099
        %v7658 = vpop.f32.mrf.mxu0
        %v7659 = vpop.f32.mrf.mxu0
        %7660 = vdwg.mxu0
        %7661 = vmatpush.bf16.msra.mxu0 %v7360
        %7662 = vmatpush.bf16.msra.mxu0 %v7359
        %7663 = vmatpush.bf16.msra.mxu0 %v7358
        %7664 = vmatpush.bf16.msra.mxu0 %v7357
        %7665 = vmatpush.bf16.msra.mxu0 %v7356
        %7666 = vmatpush.bf16.msra.mxu0 %v7355
        %7667 = vmatpush.bf16.msra.mxu0 %v7354
        %7668 = vmatpush.bf16.msra.mxu0 %v7353
        %7669 = vmatmul.bf16.gmra.mxu0 %v7045
        %v7670 = vpop.f32.mrf.mxu0
        %v7671 = vadd.f32 %v7606, %v7670
        %v7672 = vpop.f32.mrf.mxu0
        %v7673 = vadd.f32 %v7608, %v7672
        %7674 = vmatmul.bf16.gmra.mxu0 %v7050
        %v7675 = vpop.f32.mrf.mxu0
        %v7676 = vadd.f32 %v7611, %v7675
        %v7677 = vpop.f32.mrf.mxu0
        %v7678 = vadd.f32 %v7613, %v7677
        %7679 = vmatmul.bf16.gmra.mxu0 %v7055
        %v7680 = vpop.f32.mrf.mxu0
        %v7681 = vadd.f32 %v7616, %v7680
        %v7682 = vpop.f32.mrf.mxu0
        %v7683 = vadd.f32 %v7618, %v7682
        %7684 = vmatmul.bf16.gmra.mxu0 %v7060
        %v7685 = vpop.f32.mrf.mxu0
        %v7686 = vadd.f32 %v7621, %v7685
        %v7687 = vpop.f32.mrf.mxu0
        %v7688 = vadd.f32 %v7623, %v7687
        %7689 = vmatmul.bf16.gmra.mxu0 %v7065
        %v7690 = vpop.f32.mrf.mxu0
        %v7691 = vadd.f32 %v7626, %v7690
        %v7692 = vpop.f32.mrf.mxu0
        %v7693 = vadd.f32 %v7628, %v7692
        %7694 = vmatmul.bf16.gmra.mxu0 %v7070
        %v7695 = vpop.f32.mrf.mxu0
        %v7696 = vadd.f32 %v7631, %v7695
        %v7697 = vpop.f32.mrf.mxu0
        %v7698 = vadd.f32 %v7633, %v7697
        %7699 = vmatmul.bf16.gmra.mxu0 %v7075
        %v7700 = vpop.f32.mrf.mxu0
        %v7701 = vadd.f32 %v7636, %v7700
        %v7702 = vpop.f32.mrf.mxu0
        %v7703 = vadd.f32 %v7638, %v7702
        %7704 = vmatmul.bf16.gmra.mxu0 %v7080
        %v7705 = vpop.f32.mrf.mxu0
        %v7706 = vadd.f32 %v7641, %v7705
        %v7707 = vpop.f32.mrf.mxu0
        %v7708 = vadd.f32 %v7643, %v7707
        %7709 = vmatmul.bf16.gmra.mxu0 %v7085
        %v7710 = vpop.f32.mrf.mxu0
        %v7711 = vadd.f32 %v7646, %v7710
        %v7712 = vpop.f32.mrf.mxu0
        %v7713 = vadd.f32 %v7648, %v7712
        %7714 = vmatmul.bf16.gmra.mxu0 %v7090
        %v7715 = vpop.f32.mrf.mxu0
        %v7716 = vadd.f32 %v7651, %v7715
        %v7717 = vpop.f32.mrf.mxu0
        %v7718 = vadd.f32 %v7653, %v7717
        %7719 = vmatmul.bf16.gmra.mxu0 %v7095
        %v7720 = vpop.f32.mrf.mxu0
        %v7721 = vpop.f32.mrf.mxu0
        %7722 = vmatmul.bf16.gmra.mxu0 %v7100
        %v7723 = vpop.f32.mrf.mxu0
        %v7724 = vpop.f32.mrf.mxu0
        %7725 = vdwg.mxu0
        %s7726 = scalar_lea.vmem [#allocation3], 80
        %v7727 = vld [vmem:[%s7726] sm:$0xff]
        %v7728 = vld [vmem:[%s7726 + $0x8] sm:$0xff]
        %v7729 = vld [vmem:[%s7726 + $0x10] sm:$0xf]
        %v7730 = vld [vmem:[%s7726 + $0x14] sm:$0xff]
        %v7731 = vld [vmem:[%s7726 + $0x1c] sm:$0xff]
        %v7732 = vld [vmem:[%s7726 + $0x24] sm:$0xf]
        %v7733 = vld [vmem:[%s7726 + $0x28] sm:$0xff]
        %v7734 = vld [vmem:[%s7726 + $0x30] sm:$0xff]
        %v7735 = vld [vmem:[%s7726 + $0x38] sm:$0xf]
        %v7736 = vld [vmem:[%s7726 + $0x3c] sm:$0xff]
        %v7737 = vld [vmem:[%s7726 + $0x44] sm:$0xff]
        %v7738 = vld [vmem:[%s7726 + $0x4c] sm:$0xf]
        %v7739 = vld [vmem:[%s7726 + $0x50] sm:$0xff]
        %v7740 = vld [vmem:[%s7726 + $0x58] sm:$0xff]
        %v7741 = vld [vmem:[%s7726 + $0x60] sm:$0xf]
        %v7742 = vld [vmem:[%s7726 + $0x64] sm:$0xff]
        %v7743 = vld [vmem:[%s7726 + $0x6c] sm:$0xff]
        %v7744 = vld [vmem:[%s7726 + $0x74] sm:$0xf]
        %v7745 = vld [vmem:[%s7726 + $0x78] sm:$0xff]
        %v7746 = vld [vmem:[%s7726 + $0x80] sm:$0xff]
        %v7747 = vld [vmem:[%s7726 + $0x88] sm:$0xf]
        %v7748 = vld [vmem:[%s7726 + $0x8c] sm:$0xff]
        %v7749 = vld [vmem:[%s7726 + $0x94] sm:$0xff]
        %v7750 = vld [vmem:[%s7726 + $0x9c] sm:$0xf]
        %v7751 = vld [vmem:[%s7726 + $0xa0] sm:$0xff]
        %v7752 = vld [vmem:[%s7726 + $0xa8] sm:$0xff]
        %v7753 = vld [vmem:[%s7726 + $0xb0] sm:$0xf]
        %v7754 = vld [vmem:[%s7726 + $0xb4] sm:$0xff]
        %v7755 = vld [vmem:[%s7726 + $0xbc] sm:$0xff]
        %v7756 = vld [vmem:[%s7726 + $0xc4] sm:$0xf]
        %v7757 = vld [vmem:[%s7726 + $0xc8] sm:$0xff]
        %v7758 = vld [vmem:[%s7726 + $0xd0] sm:$0xff]
        %v7759 = vld [vmem:[%s7726 + $0xd8] sm:$0xf]
        %v7760 = vld [vmem:[%s7726 + $0xdc] sm:$0xff]
        %v7761 = vld [vmem:[%s7726 + $0xe4] sm:$0xff]
        %v7762 = vld [vmem:[%s7726 + $0xec] sm:$0xf]
        %v7763 = vld [vmem:[%s7726 + $0xf0] sm:$0xff]
        %v7764 = vld [vmem:[%s7726 + $0xf8] sm:$0xff]
        %v7765 = vld [vmem:[%s7726 + $0x100] sm:$0xf]
        %v7766 = vld [vmem:[%s7726 + $0x104] sm:$0xff]
        %v7767 = vld [vmem:[%s7726 + $0x10c] sm:$0xff]
        %v7768 = vld [vmem:[%s7726 + $0x114] sm:$0xf]
        %v7769 = vld [vmem:[%s7726 + $0x118] sm:$0xff]
        %v7770 = vld [vmem:[%s7726 + $0x120] sm:$0xff]
        %v7771 = vld [vmem:[%s7726 + $0x128] sm:$0xf]
        %v7772 = vld [vmem:[%s7726 + $0x12c] sm:$0xff]
        %v7773 = vld [vmem:[%s7726 + $0x134] sm:$0xff]
        %v7774 = vld [vmem:[%s7726 + $0x13c] sm:$0xf]
        %v7775 = vld [vmem:[%s7726 + $0x140] sm:$0xff]
        %v7776 = vld [vmem:[%s7726 + $0x148] sm:$0xff]
        %v7777 = vld [vmem:[%s7726 + $0x150] sm:$0xf]
        %v7778 = vld [vmem:[%s7726 + $0x154] sm:$0xff]
        %v7779 = vld [vmem:[%s7726 + $0x15c] sm:$0xff]
        %v7780 = vld [vmem:[%s7726 + $0x164] sm:$0xf]
        %v7781 = vld [vmem:[%s7726 + $0x168] sm:$0xff]
        %v7782 = vld [vmem:[%s7726 + $0x170] sm:$0xff]
        %v7783 = vld [vmem:[%s7726 + $0x178] sm:$0xf]
        %v7784 = vld [vmem:[%s7726 + $0x17c] sm:$0xff]
        %v7785 = vld [vmem:[%s7726 + $0x184] sm:$0xff]
        %v7786 = vld [vmem:[%s7726 + $0x18c] sm:$0xf]
        %v7787 = vld [vmem:[%s7726 + $0x190] sm:$0xff]
        %v7788 = vld [vmem:[%s7726 + $0x198] sm:$0xff]
        %v7789 = vld [vmem:[%s7726 + $0x1a0] sm:$0xf]
        %v7790 = vld [vmem:[%s7726 + $0x1a4] sm:$0xff]
        %v7791 = vld [vmem:[%s7726 + $0x1ac] sm:$0xff]
        %v7792 = vld [vmem:[%s7726 + $0x1b4] sm:$0xf]
        %v7793 = vld [vmem:[%s7726 + $0x1b8] sm:$0xff]
        %v7794 = vld [vmem:[%s7726 + $0x1c0] sm:$0xff]
        %v7795 = vld [vmem:[%s7726 + $0x1c8] sm:$0xf]
        %v7796 = vld [vmem:[%s7726 + $0x1cc] sm:$0xff]
        %v7797 = vld [vmem:[%s7726 + $0x1d4] sm:$0xff]
        %v7798 = vld [vmem:[%s7726 + $0x1dc] sm:$0xf]
        %v7799 = vld [vmem:[#allocation4 + $0x280] sm:$0xf]
        %v7800 = vld [vmem:[#allocation4 + $0x284] sm:$0xf]
        %v7801 = vld [vmem:[#allocation4 + $0x288] sm:$0xf]
        %v7802 = vld [vmem:[#allocation4 + $0x28c] sm:$0xf]
        %v7803 = vld [vmem:[#allocation4 + $0x290] sm:$0xf]
        %v7804 = vld [vmem:[#allocation4 + $0x294] sm:$0xf]
        %v7805 = vld [vmem:[#allocation4 + $0x298] sm:$0xf]
        %v7806 = vld [vmem:[#allocation4 + $0x29c] sm:$0xf]
        %v7807 = vld [vmem:[#allocation4 + $0x2a0] sm:$0xf]
        %v7808 = vld [vmem:[#allocation4 + $0x2a4] sm:$0xf]
        %v7809 = vld [vmem:[#allocation4 + $0x2a8] sm:$0xf]
        %v7810 = vld [vmem:[#allocation4 + $0x2ac] sm:$0xf]
        %v7811 = vld [vmem:[#allocation4 + $0x2b0] sm:$0xf]
        %v7812 = vld [vmem:[#allocation4 + $0x2b4] sm:$0xf]
        %v7813 = vld [vmem:[#allocation4 + $0x2b8] sm:$0xf]
        %v7814 = vld [vmem:[#allocation4 + $0x2bc] sm:$0xf]
        %v7815 = vld [vmem:[#allocation4 + $0x2c0] sm:$0xf]
        %v7816 = vld [vmem:[#allocation4 + $0x2c4] sm:$0xf]
        %v7817 = vld [vmem:[#allocation4 + $0x2c8] sm:$0xf]
        %v7818 = vld [vmem:[#allocation4 + $0x2cc] sm:$0xf]
        %v7819 = vld [vmem:[#allocation4 + $0x2d0] sm:$0xf]
        %v7820 = vld [vmem:[#allocation4 + $0x2d4] sm:$0xf]
        %v7821 = vld [vmem:[#allocation4 + $0x2d8] sm:$0xf]
        %v7822 = vld [vmem:[#allocation4 + $0x2dc] sm:$0xf]
        %v7823 = vld [vmem:[#allocation4 + $0x2e0] sm:$0xf]
        %v7824 = vld [vmem:[#allocation4 + $0x2e4] sm:$0xf]
        %v7825 = vld [vmem:[#allocation4 + $0x2e8] sm:$0xf]
        %v7826 = vld [vmem:[#allocation4 + $0x2ec] sm:$0xf]
        %v7827 = vld [vmem:[#allocation4 + $0x2f0] sm:$0xf]
        %v7828 = vld [vmem:[#allocation4 + $0x2f4] sm:$0xf]
        %v7829 = vld [vmem:[#allocation4 + $0x2f8] sm:$0xf]
        %v7830 = vld [vmem:[#allocation4 + $0x2fc] sm:$0xf]
        %v7831 = vld [vmem:[#allocation4 + $0x300] sm:$0xf]
        %v7832 = vld [vmem:[#allocation4 + $0x304] sm:$0xf]
        %v7833 = vld [vmem:[#allocation4 + $0x308] sm:$0xf]
        %v7834 = vld [vmem:[#allocation4 + $0x30c] sm:$0xf]
        %v7835 = vld [vmem:[#allocation4 + $0x310] sm:$0xf]
        %v7836 = vld [vmem:[#allocation4 + $0x314] sm:$0xf]
        %v7837 = vld [vmem:[#allocation4 + $0x318] sm:$0xf]
        %v7838 = vld [vmem:[#allocation4 + $0x31c] sm:$0xf]
        %v7839 = vld [vmem:[#allocation4 + $0x320] sm:$0xf]
        %v7840 = vld [vmem:[#allocation4 + $0x324] sm:$0xf]
        %v7841 = vld [vmem:[#allocation4 + $0x328] sm:$0xf]
        %v7842 = vld [vmem:[#allocation4 + $0x32c] sm:$0xf]
        %v7843 = vld [vmem:[#allocation4 + $0x330] sm:$0xf]
        %v7844 = vld [vmem:[#allocation4 + $0x334] sm:$0xf]
        %v7845 = vld [vmem:[#allocation4 + $0x338] sm:$0xf]
        %v7846 = vld [vmem:[#allocation4 + $0x33c] sm:$0xf]
        %v7847 = vld [vmem:[#allocation4 + $0x340] sm:$0xf]
        %v7848 = vld [vmem:[#allocation4 + $0x344] sm:$0xf]
        %v7849 = vld [vmem:[#allocation4 + $0x348] sm:$0xf]
        %v7850 = vld [vmem:[#allocation4 + $0x34c] sm:$0xf]
        %v7851 = vld [vmem:[#allocation4 + $0x350] sm:$0xf]
        %v7852 = vld [vmem:[#allocation4 + $0x354] sm:$0xf]
        %v7853 = vld [vmem:[#allocation4 + $0x358] sm:$0xf]
        %v7854 = vld [vmem:[#allocation4 + $0x35c] sm:$0xf]
        %v7855 = vld [vmem:[#allocation4 + $0x360] sm:$0xf]
        %v7856 = vld [vmem:[#allocation4 + $0x364] sm:$0xf]
        %v7857 = vld [vmem:[#allocation4 + $0x368] sm:$0xf]
        %v7858 = vld [vmem:[#allocation4 + $0x36c] sm:$0xf]
        %v7859 = vld [vmem:[#allocation4 + $0x370] sm:$0xf]
        %v7860 = vld [vmem:[#allocation4 + $0x374] sm:$0xf]
        %v7861 = vld [vmem:[#allocation4 + $0x378] sm:$0xf]
        %v7862 = vld [vmem:[#allocation4 + $0x37c] sm:$0xf]
        %v7863 = vld [vmem:[#allocation4 + $0x380] sm:$0xf]
        %v7864 = vld [vmem:[#allocation4 + $0x384] sm:$0xf]
        %v7865 = vld [vmem:[#allocation4 + $0x388] sm:$0xf]
        %v7866 = vld [vmem:[#allocation4 + $0x38c] sm:$0xf]
        %v7867 = vld [vmem:[#allocation4 + $0x390] sm:$0xf]
        %v7868 = vld [vmem:[#allocation4 + $0x394] sm:$0xf]
        %v7869 = vld [vmem:[#allocation4 + $0x398] sm:$0xf]
        %v7870 = vld [vmem:[#allocation4 + $0x39c] sm:$0xf]
        %v7871 = vld [vmem:[#allocation4 + $0x3a0] sm:$0xf]
        %v7872 = vld [vmem:[#allocation4 + $0x3a4] sm:$0xf]
        %v7873 = vld [vmem:[#allocation4 + $0x3a8] sm:$0xf]
        %v7874 = vld [vmem:[#allocation4 + $0x3ac] sm:$0xf]
        %v7875 = vld [vmem:[#allocation4 + $0x3b0] sm:$0xf]
        %v7876 = vld [vmem:[#allocation4 + $0x3b4] sm:$0xf]
        %v7877 = vld [vmem:[#allocation4 + $0x3b8] sm:$0xf]
        %v7878 = vld [vmem:[#allocation4 + $0x3bc] sm:$0xf]
        %v7951 = vunpack.c.l.b16 %v7727
        %v7952 = vunpack.c.h.b16 %v7727
        %v7953 = vunpack.c.l.b16 %v7728
        %v7954 = vunpack.c.h.b16 %v7728
        %v7955 = vunpack.c.l.b16 %v7729
        %v7956 = vunpack.c.l.b16 %v7730
        %v7957 = vunpack.c.h.b16 %v7730
        %v7958 = vunpack.c.l.b16 %v7731
        %v7959 = vunpack.c.h.b16 %v7731
        %v7960 = vunpack.c.l.b16 %v7732
        %v7961 = vunpack.c.l.b16 %v7733
        %v7962 = vunpack.c.h.b16 %v7733
        %v7963 = vunpack.c.l.b16 %v7734
        %v7964 = vunpack.c.h.b16 %v7734
        %v7965 = vunpack.c.l.b16 %v7735
        %v7966 = vunpack.c.l.b16 %v7736
        %v7967 = vunpack.c.h.b16 %v7736
        %v7968 = vunpack.c.l.b16 %v7737
        %v7969 = vunpack.c.h.b16 %v7737
        %v7970 = vunpack.c.l.b16 %v7738
        %v7971 = vunpack.c.l.b16 %v7739
        %v7972 = vunpack.c.h.b16 %v7739
        %v7973 = vunpack.c.l.b16 %v7740
        %v7974 = vunpack.c.h.b16 %v7740
        %v7975 = vunpack.c.l.b16 %v7741
        %v7976 = vunpack.c.l.b16 %v7742
        %v7977 = vunpack.c.h.b16 %v7742
        %v7978 = vunpack.c.l.b16 %v7743
        %v7979 = vunpack.c.h.b16 %v7743
        %v7980 = vunpack.c.l.b16 %v7744
        %v7981 = vunpack.c.l.b16 %v7745
        %v7982 = vunpack.c.h.b16 %v7745
        %v7983 = vunpack.c.l.b16 %v7746
        %v7984 = vunpack.c.h.b16 %v7746
        %v7985 = vunpack.c.l.b16 %v7747
        %v7986 = vunpack.c.l.b16 %v7748
        %v7987 = vunpack.c.h.b16 %v7748
        %v7988 = vunpack.c.l.b16 %v7749
        %v7989 = vunpack.c.h.b16 %v7749
        %v7990 = vunpack.c.l.b16 %v7750
        %v7991 = vunpack.c.l.b16 %v7751
        %v7992 = vunpack.c.h.b16 %v7751
        %v7993 = vunpack.c.l.b16 %v7752
        %v7994 = vunpack.c.h.b16 %v7752
        %v7995 = vunpack.c.l.b16 %v7753
        %v7996 = vunpack.c.l.b16 %v7754
        %v7997 = vunpack.c.h.b16 %v7754
        %v7998 = vunpack.c.l.b16 %v7755
        %v7999 = vunpack.c.h.b16 %v7755
        %v8000 = vunpack.c.l.b16 %v7756
        %v8001 = vunpack.c.l.b16 %v7757
        %v8002 = vunpack.c.h.b16 %v7757
        %v8003 = vunpack.c.l.b16 %v7758
        %v8004 = vunpack.c.h.b16 %v7758
        %v8005 = vunpack.c.l.b16 %v7759
        %v8006 = vunpack.c.l.b16 %v7760
        %v8007 = vunpack.c.h.b16 %v7760
        %v8008 = vunpack.c.l.b16 %v7761
        %v8009 = vunpack.c.h.b16 %v7761
        %v8010 = vunpack.c.l.b16 %v7762
        %v8011 = vunpack.c.l.b16 %v7763
        %v8012 = vunpack.c.h.b16 %v7763
        %v8013 = vunpack.c.l.b16 %v7764
        %v8014 = vunpack.c.h.b16 %v7764
        %v8015 = vunpack.c.l.b16 %v7765
        %v8016 = vunpack.c.l.b16 %v7766
        %v8017 = vunpack.c.h.b16 %v7766
        %v8018 = vunpack.c.l.b16 %v7767
        %v8019 = vunpack.c.h.b16 %v7767
        %v8020 = vunpack.c.l.b16 %v7768
        %v8021 = vunpack.c.l.b16 %v7769
        %v8022 = vunpack.c.h.b16 %v7769
        %v8023 = vunpack.c.l.b16 %v7770
        %v8024 = vunpack.c.h.b16 %v7770
        %v8025 = vunpack.c.l.b16 %v7771
        %v8026 = vunpack.c.l.b16 %v7772
        %v8027 = vunpack.c.h.b16 %v7772
        %v8028 = vunpack.c.l.b16 %v7773
        %v8029 = vunpack.c.h.b16 %v7773
        %v8030 = vunpack.c.l.b16 %v7774
        %v8031 = vunpack.c.l.b16 %v7775
        %v8032 = vunpack.c.h.b16 %v7775
        %v8033 = vunpack.c.l.b16 %v7776
        %v8034 = vunpack.c.h.b16 %v7776
        %v8035 = vunpack.c.l.b16 %v7777
        %v8036 = vunpack.c.l.b16 %v7778
        %v8037 = vunpack.c.h.b16 %v7778
        %v8038 = vunpack.c.l.b16 %v7779
        %v8039 = vunpack.c.h.b16 %v7779
        %v8040 = vunpack.c.l.b16 %v7780
        %v8041 = vunpack.c.l.b16 %v7781
        %v8042 = vunpack.c.h.b16 %v7781
        %v8043 = vunpack.c.l.b16 %v7782
        %v8044 = vunpack.c.h.b16 %v7782
        %v8045 = vunpack.c.l.b16 %v7783
        %v8046 = vunpack.c.l.b16 %v7784
        %v8047 = vunpack.c.h.b16 %v7784
        %v8048 = vunpack.c.l.b16 %v7785
        %v8049 = vunpack.c.h.b16 %v7785
        %v8050 = vunpack.c.l.b16 %v7786
        %v8051 = vunpack.c.l.b16 %v7787
        %v8052 = vunpack.c.h.b16 %v7787
        %v8053 = vunpack.c.l.b16 %v7788
        %v8054 = vunpack.c.h.b16 %v7788
        %v8055 = vunpack.c.l.b16 %v7789
        %v8056 = vunpack.c.l.b16 %v7790
        %v8057 = vunpack.c.h.b16 %v7790
        %v8058 = vunpack.c.l.b16 %v7791
        %v8059 = vunpack.c.h.b16 %v7791
        %v8060 = vunpack.c.l.b16 %v7792
        %v8061 = vunpack.c.l.b16 %v7793
        %v8062 = vunpack.c.h.b16 %v7793
        %v8063 = vunpack.c.l.b16 %v7794
        %v8064 = vunpack.c.h.b16 %v7794
        %v8065 = vunpack.c.l.b16 %v7795
        %v8066 = vunpack.c.l.b16 %v7796
        %v8067 = vunpack.c.h.b16 %v7796
        %v8068 = vunpack.c.l.b16 %v7797
        %v8069 = vunpack.c.h.b16 %v7797
        %v8070 = vunpack.c.l.b16 %v7798
        %v8071 = vpack.c.b16 %v7956, %v7951
        %v8072 = vpack.c.b16 %v7957, %v7952
        %v8073 = vpack.c.b16 %v7958, %v7953
        %v8074 = vpack.c.b16 %v7959, %v7954
        %v8075 = vpack.c.b16 %v7960, %v7955
        %v8076 = vpack.c.b16 %v7966, %v7961
        %v8077 = vpack.c.b16 %v7967, %v7962
        %v8078 = vpack.c.b16 %v7968, %v7963
        %v8079 = vpack.c.b16 %v7969, %v7964
        %v8080 = vpack.c.b16 %v7970, %v7965
        %v8081 = vpack.c.b16 %v7976, %v7971
        %v8082 = vpack.c.b16 %v7977, %v7972
        %v8083 = vpack.c.b16 %v7978, %v7973
        %v8084 = vpack.c.b16 %v7979, %v7974
        %v8085 = vpack.c.b16 %v7980, %v7975
        %v8086 = vpack.c.b16 %v7986, %v7981
        %v8087 = vpack.c.b16 %v7987, %v7982
        %v8088 = vpack.c.b16 %v7988, %v7983
        %v8089 = vpack.c.b16 %v7989, %v7984
        %v8090 = vpack.c.b16 %v7990, %v7985
        %v8091 = vpack.c.b16 %v7996, %v7991
        %v8092 = vpack.c.b16 %v7997, %v7992
        %v8093 = vpack.c.b16 %v7998, %v7993
        %v8094 = vpack.c.b16 %v7999, %v7994
        %v8095 = vpack.c.b16 %v8000, %v7995
        %v8096 = vpack.c.b16 %v8006, %v8001
        %v8097 = vpack.c.b16 %v8007, %v8002
        %v8098 = vpack.c.b16 %v8008, %v8003
        %v8099 = vpack.c.b16 %v8009, %v8004
        %v8100 = vpack.c.b16 %v8010, %v8005
        %v8101 = vpack.c.b16 %v8016, %v8011
        %v8102 = vpack.c.b16 %v8017, %v8012
        %v8103 = vpack.c.b16 %v8018, %v8013
        %v8104 = vpack.c.b16 %v8019, %v8014
        %v8105 = vpack.c.b16 %v8020, %v8015
        %v8106 = vpack.c.b16 %v8026, %v8021
        %v8107 = vpack.c.b16 %v8027, %v8022
        %v8108 = vpack.c.b16 %v8028, %v8023
        %v8109 = vpack.c.b16 %v8029, %v8024
        %v8110 = vpack.c.b16 %v8030, %v8025
        %v8111 = vpack.c.b16 %v8036, %v8031
        %v8112 = vpack.c.b16 %v8037, %v8032
        %v8113 = vpack.c.b16 %v8038, %v8033
        %v8114 = vpack.c.b16 %v8039, %v8034
        %v8115 = vpack.c.b16 %v8040, %v8035
        %v8116 = vpack.c.b16 %v8046, %v8041
        %v8117 = vpack.c.b16 %v8047, %v8042
        %v8118 = vpack.c.b16 %v8048, %v8043
        %v8119 = vpack.c.b16 %v8049, %v8044
        %v8120 = vpack.c.b16 %v8050, %v8045
        %v8121 = vpack.c.b16 %v8056, %v8051
        %v8122 = vpack.c.b16 %v8057, %v8052
        %v8123 = vpack.c.b16 %v8058, %v8053
        %v8124 = vpack.c.b16 %v8059, %v8054
        %v8125 = vpack.c.b16 %v8060, %v8055
        %v8126 = vpack.c.b16 %v8066, %v8061
        %v8127 = vpack.c.b16 %v8067, %v8062
        %v8128 = vpack.c.b16 %v8068, %v8063
        %v8129 = vpack.c.b16 %v8069, %v8064
        %v8130 = vpack.c.b16 %v8070, %v8065
        %v8271 = vunpack.c.l.b16 %v7799
        %v8272 = vunpack.c.l.b16 %v7800
        %v8273 = vunpack.c.l.b16 %v7801
        %v8274 = vunpack.c.l.b16 %v7802
        %v8275 = vunpack.c.l.b16 %v7803
        %v8276 = vunpack.c.l.b16 %v7804
        %v8277 = vunpack.c.l.b16 %v7805
        %v8278 = vunpack.c.l.b16 %v7806
        %v8279 = vunpack.c.l.b16 %v7807
        %v8280 = vunpack.c.l.b16 %v7808
        %v8281 = vunpack.c.l.b16 %v7809
        %v8282 = vunpack.c.l.b16 %v7810
        %v8283 = vunpack.c.l.b16 %v7811
        %v8284 = vunpack.c.l.b16 %v7812
        %v8285 = vunpack.c.l.b16 %v7813
        %v8286 = vunpack.c.l.b16 %v7814
        %v8287 = vunpack.c.l.b16 %v7815
        %v8288 = vunpack.c.l.b16 %v7816
        %v8289 = vunpack.c.l.b16 %v7817
        %v8290 = vunpack.c.l.b16 %v7818
        %v8291 = vunpack.c.l.b16 %v7819
        %v8292 = vunpack.c.l.b16 %v7820
        %v8293 = vunpack.c.l.b16 %v7821
        %v8294 = vunpack.c.l.b16 %v7822
        %v8295 = vunpack.c.l.b16 %v7823
        %v8296 = vunpack.c.l.b16 %v7824
        %v8297 = vunpack.c.l.b16 %v7825
        %v8298 = vunpack.c.l.b16 %v7826
        %v8299 = vunpack.c.l.b16 %v7827
        %v8300 = vunpack.c.l.b16 %v7828
        %v8301 = vunpack.c.l.b16 %v7829
        %v8302 = vunpack.c.l.b16 %v7830
        %v8303 = vunpack.c.l.b16 %v7831
        %v8304 = vunpack.c.l.b16 %v7832
        %v8305 = vunpack.c.l.b16 %v7833
        %v8306 = vunpack.c.l.b16 %v7834
        %v8307 = vunpack.c.l.b16 %v7835
        %v8308 = vunpack.c.l.b16 %v7836
        %v8309 = vunpack.c.l.b16 %v7837
        %v8310 = vunpack.c.l.b16 %v7838
        %v8311 = vunpack.c.l.b16 %v7839
        %v8312 = vunpack.c.l.b16 %v7840
        %v8313 = vunpack.c.l.b16 %v7841
        %v8314 = vunpack.c.l.b16 %v7842
        %v8315 = vunpack.c.l.b16 %v7843
        %v8316 = vunpack.c.l.b16 %v7844
        %v8317 = vunpack.c.l.b16 %v7845
        %v8318 = vunpack.c.l.b16 %v7846
        %v8319 = vunpack.c.l.b16 %v7847
        %v8320 = vunpack.c.l.b16 %v7848
        %v8321 = vunpack.c.l.b16 %v7849
        %v8322 = vunpack.c.l.b16 %v7850
        %v8323 = vunpack.c.l.b16 %v7851
        %v8324 = vunpack.c.l.b16 %v7852
        %v8325 = vunpack.c.l.b16 %v7853
        %v8326 = vunpack.c.l.b16 %v7854
        %v8327 = vunpack.c.l.b16 %v7855
        %v8328 = vunpack.c.l.b16 %v7856
        %v8329 = vunpack.c.l.b16 %v7857
        %v8330 = vunpack.c.l.b16 %v7858
        %v8331 = vunpack.c.l.b16 %v7859
        %v8332 = vunpack.c.l.b16 %v7860
        %v8333 = vunpack.c.l.b16 %v7861
        %v8334 = vunpack.c.l.b16 %v7862
        %v8335 = vunpack.c.l.b16 %v7863
        %v8336 = vunpack.c.l.b16 %v7864
        %v8337 = vunpack.c.l.b16 %v7865
        %v8338 = vunpack.c.l.b16 %v7866
        %v8339 = vunpack.c.l.b16 %v7867
        %v8340 = vunpack.c.l.b16 %v7868
        %v8341 = vunpack.c.l.b16 %v7869
        %v8342 = vunpack.c.l.b16 %v7870
        %v8343 = vunpack.c.l.b16 %v7871
        %v8344 = vunpack.c.l.b16 %v7872
        %v8345 = vunpack.c.l.b16 %v7873
        %v8346 = vunpack.c.l.b16 %v7874
        %v8347 = vunpack.c.l.b16 %v7875
        %v8348 = vunpack.c.l.b16 %v7876
        %v8349 = vunpack.c.l.b16 %v7877
        %v8350 = vunpack.c.l.b16 %v7878
        %v8351 = vpack.c.b16 %v8272, %v8271
        %v8352 = vpack.c.b16 %v8274, %v8273
        %v8353 = vpack.c.b16 %v8276, %v8275
        %v8354 = vpack.c.b16 %v8278, %v8277
        %v8355 = vpack.c.b16 %v8280, %v8279
        %v8356 = vpack.c.b16 %v8282, %v8281
        %v8357 = vpack.c.b16 %v8284, %v8283
        %v8358 = vpack.c.b16 %v8286, %v8285
        %v8359 = vpack.c.b16 %v8288, %v8287
        %v8360 = vpack.c.b16 %v8290, %v8289
        %v8361 = vpack.c.b16 %v8292, %v8291
        %v8362 = vpack.c.b16 %v8294, %v8293
        %v8363 = vpack.c.b16 %v8296, %v8295
        %v8364 = vpack.c.b16 %v8298, %v8297
        %v8365 = vpack.c.b16 %v8300, %v8299
        %v8366 = vpack.c.b16 %v8302, %v8301
        %v8367 = vpack.c.b16 %v8304, %v8303
        %v8368 = vpack.c.b16 %v8306, %v8305
        %v8369 = vpack.c.b16 %v8308, %v8307
        %v8370 = vpack.c.b16 %v8310, %v8309
        %v8371 = vpack.c.b16 %v8312, %v8311
        %v8372 = vpack.c.b16 %v8314, %v8313
        %v8373 = vpack.c.b16 %v8316, %v8315
        %v8374 = vpack.c.b16 %v8318, %v8317
        %v8375 = vpack.c.b16 %v8320, %v8319
        %v8376 = vpack.c.b16 %v8322, %v8321
        %v8377 = vpack.c.b16 %v8324, %v8323
        %v8378 = vpack.c.b16 %v8326, %v8325
        %v8379 = vpack.c.b16 %v8328, %v8327
        %v8380 = vpack.c.b16 %v8330, %v8329
        %v8381 = vpack.c.b16 %v8332, %v8331
        %v8382 = vpack.c.b16 %v8334, %v8333
        %v8383 = vpack.c.b16 %v8336, %v8335
        %v8384 = vpack.c.b16 %v8338, %v8337
        %v8385 = vpack.c.b16 %v8340, %v8339
        %v8386 = vpack.c.b16 %v8342, %v8341
        %v8387 = vpack.c.b16 %v8344, %v8343
        %v8388 = vpack.c.b16 %v8346, %v8345
        %v8389 = vpack.c.b16 %v8348, %v8347
        %v8390 = vpack.c.b16 %v8350, %v8349
        %8431 = vmatpush.bf16.msra.mxu0 %v8358
        %8432 = vmatpush.bf16.msra.mxu0 %v8357
        %8433 = vmatpush.bf16.msra.mxu0 %v8356
        %8434 = vmatpush.bf16.msra.mxu0 %v8355
        %8435 = vmatpush.bf16.msra.mxu0 %v8354
        %8436 = vmatpush.bf16.msra.mxu0 %v8353
        %8437 = vmatpush.bf16.msra.mxu0 %v8352
        %8438 = vmatpush.bf16.msra.mxu0 %v8351
        %8439 = vmatmul.bf16.gmra.mxu0 %v8071
        %v8440 = vpop.f32.mrf.mxu0
        %v8441 = vadd.f32 0.0, %v8440
        %v8442 = vpop.f32.mrf.mxu0
        %v8443 = vadd.f32 0.0, %v8442
        %8444 = vmatmul.bf16.gmra.mxu0 %v8076
        %v8445 = vpop.f32.mrf.mxu0
        %v8446 = vadd.f32 0.0, %v8445
        %v8447 = vpop.f32.mrf.mxu0
        %v8448 = vadd.f32 0.0, %v8447
        %8449 = vmatmul.bf16.gmra.mxu0 %v8081
        %v8450 = vpop.f32.mrf.mxu0
        %v8451 = vadd.f32 0.0, %v8450
        %v8452 = vpop.f32.mrf.mxu0
        %v8453 = vadd.f32 0.0, %v8452
        %8454 = vmatmul.bf16.gmra.mxu0 %v8086
        %v8455 = vpop.f32.mrf.mxu0
        %v8456 = vadd.f32 0.0, %v8455
        %v8457 = vpop.f32.mrf.mxu0
        %v8458 = vadd.f32 0.0, %v8457
        %8459 = vmatmul.bf16.gmra.mxu0 %v8091
        %v8460 = vpop.f32.mrf.mxu0
        %v8461 = vadd.f32 0.0, %v8460
        %v8462 = vpop.f32.mrf.mxu0
        %v8463 = vadd.f32 0.0, %v8462
        %8464 = vmatmul.bf16.gmra.mxu0 %v8096
        %v8465 = vpop.f32.mrf.mxu0
        %v8466 = vadd.f32 0.0, %v8465
        %v8467 = vpop.f32.mrf.mxu0
        %v8468 = vadd.f32 0.0, %v8467
        %8469 = vmatmul.bf16.gmra.mxu0 %v8101
        %v8470 = vpop.f32.mrf.mxu0
        %v8471 = vadd.f32 0.0, %v8470
        %v8472 = vpop.f32.mrf.mxu0
        %v8473 = vadd.f32 0.0, %v8472
        %8474 = vmatmul.bf16.gmra.mxu0 %v8106
        %v8475 = vpop.f32.mrf.mxu0
        %v8476 = vadd.f32 0.0, %v8475
        %v8477 = vpop.f32.mrf.mxu0
        %v8478 = vadd.f32 0.0, %v8477
        %8479 = vmatmul.bf16.gmra.mxu0 %v8111
        %v8480 = vpop.f32.mrf.mxu0
        %v8481 = vadd.f32 0.0, %v8480
        %v8482 = vpop.f32.mrf.mxu0
        %v8483 = vadd.f32 0.0, %v8482
        %8484 = vmatmul.bf16.gmra.mxu0 %v8116
        %v8485 = vpop.f32.mrf.mxu0
        %v8486 = vadd.f32 0.0, %v8485
        %v8487 = vpop.f32.mrf.mxu0
        %v8488 = vadd.f32 0.0, %v8487
        %8489 = vmatmul.bf16.gmra.mxu0 %v8121
        %v8490 = vpop.f32.mrf.mxu0
        %v8491 = vpop.f32.mrf.mxu0
        %8492 = vmatmul.bf16.gmra.mxu0 %v8126
        %v8493 = vpop.f32.mrf.mxu0
        %v8494 = vpop.f32.mrf.mxu0
        %8495 = vdwg.mxu0
        %8496 = vmatpush.bf16.msra.mxu0 %v8366
        %8497 = vmatpush.bf16.msra.mxu0 %v8365
        %8498 = vmatpush.bf16.msra.mxu0 %v8364
        %8499 = vmatpush.bf16.msra.mxu0 %v8363
        %8500 = vmatpush.bf16.msra.mxu0 %v8362
        %8501 = vmatpush.bf16.msra.mxu0 %v8361
        %8502 = vmatpush.bf16.msra.mxu0 %v8360
        %8503 = vmatpush.bf16.msra.mxu0 %v8359
        %8504 = vmatmul.bf16.gmra.mxu0 %v8072
        %v8505 = vpop.f32.mrf.mxu0
        %v8506 = vadd.f32 %v8441, %v8505
        %v8507 = vpop.f32.mrf.mxu0
        %v8508 = vadd.f32 %v8443, %v8507
        %8509 = vmatmul.bf16.gmra.mxu0 %v8077
        %v8510 = vpop.f32.mrf.mxu0
        %v8511 = vadd.f32 %v8446, %v8510
        %v8512 = vpop.f32.mrf.mxu0
        %v8513 = vadd.f32 %v8448, %v8512
        %8514 = vmatmul.bf16.gmra.mxu0 %v8082
        %v8515 = vpop.f32.mrf.mxu0
        %v8516 = vadd.f32 %v8451, %v8515
        %v8517 = vpop.f32.mrf.mxu0
        %v8518 = vadd.f32 %v8453, %v8517
        %8519 = vmatmul.bf16.gmra.mxu0 %v8087
        %v8520 = vpop.f32.mrf.mxu0
        %v8521 = vadd.f32 %v8456, %v8520
        %v8522 = vpop.f32.mrf.mxu0
        %v8523 = vadd.f32 %v8458, %v8522
        %8524 = vmatmul.bf16.gmra.mxu0 %v8092
        %v8525 = vpop.f32.mrf.mxu0
        %v8526 = vadd.f32 %v8461, %v8525
        %v8527 = vpop.f32.mrf.mxu0
        %v8528 = vadd.f32 %v8463, %v8527
        %8529 = vmatmul.bf16.gmra.mxu0 %v8097
        %v8530 = vpop.f32.mrf.mxu0
        %v8531 = vadd.f32 %v8466, %v8530
        %v8532 = vpop.f32.mrf.mxu0
        %v8533 = vadd.f32 %v8468, %v8532
        %8534 = vmatmul.bf16.gmra.mxu0 %v8102
        %v8535 = vpop.f32.mrf.mxu0
        %v8536 = vadd.f32 %v8471, %v8535
        %v8537 = vpop.f32.mrf.mxu0
        %v8538 = vadd.f32 %v8473, %v8537
        %8539 = vmatmul.bf16.gmra.mxu0 %v8107
        %v8540 = vpop.f32.mrf.mxu0
        %v8541 = vadd.f32 %v8476, %v8540
        %v8542 = vpop.f32.mrf.mxu0
        %v8543 = vadd.f32 %v8478, %v8542
        %8544 = vmatmul.bf16.gmra.mxu0 %v8112
        %v8545 = vpop.f32.mrf.mxu0
        %v8546 = vadd.f32 %v8481, %v8545
        %v8547 = vpop.f32.mrf.mxu0
        %v8548 = vadd.f32 %v8483, %v8547
        %8549 = vmatmul.bf16.gmra.mxu0 %v8117
        %v8550 = vpop.f32.mrf.mxu0
        %v8551 = vadd.f32 %v8486, %v8550
        %v8552 = vpop.f32.mrf.mxu0
        %v8553 = vadd.f32 %v8488, %v8552
        %8554 = vmatmul.bf16.gmra.mxu0 %v8122
        %v8555 = vpop.f32.mrf.mxu0
        %v8556 = vpop.f32.mrf.mxu0
        %8557 = vmatmul.bf16.gmra.mxu0 %v8127
        %v8558 = vpop.f32.mrf.mxu0
        %v8559 = vpop.f32.mrf.mxu0
        %8560 = vdwg.mxu0
        %8561 = vmatpush.bf16.msra.mxu0 %v8374
        %8562 = vmatpush.bf16.msra.mxu0 %v8373
        %8563 = vmatpush.bf16.msra.mxu0 %v8372
        %8564 = vmatpush.bf16.msra.mxu0 %v8371
        %8565 = vmatpush.bf16.msra.mxu0 %v8370
        %8566 = vmatpush.bf16.msra.mxu0 %v8369
        %8567 = vmatpush.bf16.msra.mxu0 %v8368
        %8568 = vmatpush.bf16.msra.mxu0 %v8367
        %8569 = vmatmul.bf16.gmra.mxu0 %v8073
        %v8570 = vpop.f32.mrf.mxu0
        %v8571 = vadd.f32 %v8506, %v8570
        %v8572 = vpop.f32.mrf.mxu0
        %v8573 = vadd.f32 %v8508, %v8572
        %8574 = vmatmul.bf16.gmra.mxu0 %v8078
        %v8575 = vpop.f32.mrf.mxu0
        %v8576 = vadd.f32 %v8511, %v8575
        %v8577 = vpop.f32.mrf.mxu0
        %v8578 = vadd.f32 %v8513, %v8577
        %8579 = vmatmul.bf16.gmra.mxu0 %v8083
        %v8580 = vpop.f32.mrf.mxu0
        %v8581 = vadd.f32 %v8516, %v8580
        %v8582 = vpop.f32.mrf.mxu0
        %v8583 = vadd.f32 %v8518, %v8582
        %8584 = vmatmul.bf16.gmra.mxu0 %v8088
        %v8585 = vpop.f32.mrf.mxu0
        %v8586 = vadd.f32 %v8521, %v8585
        %v8587 = vpop.f32.mrf.mxu0
        %v8588 = vadd.f32 %v8523, %v8587
        %8589 = vmatmul.bf16.gmra.mxu0 %v8093
        %v8590 = vpop.f32.mrf.mxu0
        %v8591 = vadd.f32 %v8526, %v8590
        %v8592 = vpop.f32.mrf.mxu0
        %v8593 = vadd.f32 %v8528, %v8592
        %8594 = vmatmul.bf16.gmra.mxu0 %v8098
        %v8595 = vpop.f32.mrf.mxu0
        %v8596 = vadd.f32 %v8531, %v8595
        %v8597 = vpop.f32.mrf.mxu0
        %v8598 = vadd.f32 %v8533, %v8597
        %8599 = vmatmul.bf16.gmra.mxu0 %v8103
        %v8600 = vpop.f32.mrf.mxu0
        %v8601 = vadd.f32 %v8536, %v8600
        %v8602 = vpop.f32.mrf.mxu0
        %v8603 = vadd.f32 %v8538, %v8602
        %8604 = vmatmul.bf16.gmra.mxu0 %v8108
        %v8605 = vpop.f32.mrf.mxu0
        %v8606 = vadd.f32 %v8541, %v8605
        %v8607 = vpop.f32.mrf.mxu0
        %v8608 = vadd.f32 %v8543, %v8607
        %8609 = vmatmul.bf16.gmra.mxu0 %v8113
        %v8610 = vpop.f32.mrf.mxu0
        %v8611 = vadd.f32 %v8546, %v8610
        %v8612 = vpop.f32.mrf.mxu0
        %v8613 = vadd.f32 %v8548, %v8612
        %8614 = vmatmul.bf16.gmra.mxu0 %v8118
        %v8615 = vpop.f32.mrf.mxu0
        %v8616 = vadd.f32 %v8551, %v8615
        %v8617 = vpop.f32.mrf.mxu0
        %v8618 = vadd.f32 %v8553, %v8617
        %8619 = vmatmul.bf16.gmra.mxu0 %v8123
        %v8620 = vpop.f32.mrf.mxu0
        %v8621 = vpop.f32.mrf.mxu0
        %8622 = vmatmul.bf16.gmra.mxu0 %v8128
        %v8623 = vpop.f32.mrf.mxu0
        %v8624 = vpop.f32.mrf.mxu0
        %8625 = vdwg.mxu0
        %8626 = vmatpush.bf16.msra.mxu0 %v8382
        %8627 = vmatpush.bf16.msra.mxu0 %v8381
        %8628 = vmatpush.bf16.msra.mxu0 %v8380
        %8629 = vmatpush.bf16.msra.mxu0 %v8379
        %8630 = vmatpush.bf16.msra.mxu0 %v8378
        %8631 = vmatpush.bf16.msra.mxu0 %v8377
        %8632 = vmatpush.bf16.msra.mxu0 %v8376
        %8633 = vmatpush.bf16.msra.mxu0 %v8375
        %8634 = vmatmul.bf16.gmra.mxu0 %v8074
        %v8635 = vpop.f32.mrf.mxu0
        %v8636 = vadd.f32 %v8571, %v8635
        %v8637 = vpop.f32.mrf.mxu0
        %v8638 = vadd.f32 %v8573, %v8637
        %8639 = vmatmul.bf16.gmra.mxu0 %v8079
        %v8640 = vpop.f32.mrf.mxu0
        %v8641 = vadd.f32 %v8576, %v8640
        %v8642 = vpop.f32.mrf.mxu0
        %v8643 = vadd.f32 %v8578, %v8642
        %8644 = vmatmul.bf16.gmra.mxu0 %v8084
        %v8645 = vpop.f32.mrf.mxu0
        %v8646 = vadd.f32 %v8581, %v8645
        %v8647 = vpop.f32.mrf.mxu0
        %v8648 = vadd.f32 %v8583, %v8647
        %8649 = vmatmul.bf16.gmra.mxu0 %v8089
        %v8650 = vpop.f32.mrf.mxu0
        %v8651 = vadd.f32 %v8586, %v8650
        %v8652 = vpop.f32.mrf.mxu0
        %v8653 = vadd.f32 %v8588, %v8652
        %8654 = vmatmul.bf16.gmra.mxu0 %v8094
        %v8655 = vpop.f32.mrf.mxu0
        %v8656 = vadd.f32 %v8591, %v8655
        %v8657 = vpop.f32.mrf.mxu0
        %v8658 = vadd.f32 %v8593, %v8657
        %8659 = vmatmul.bf16.gmra.mxu0 %v8099
        %v8660 = vpop.f32.mrf.mxu0
        %v8661 = vadd.f32 %v8596, %v8660
        %v8662 = vpop.f32.mrf.mxu0
        %v8663 = vadd.f32 %v8598, %v8662
        %8664 = vmatmul.bf16.gmra.mxu0 %v8104
        %v8665 = vpop.f32.mrf.mxu0
        %v8666 = vadd.f32 %v8601, %v8665
        %v8667 = vpop.f32.mrf.mxu0
        %v8668 = vadd.f32 %v8603, %v8667
        %8669 = vmatmul.bf16.gmra.mxu0 %v8109
        %v8670 = vpop.f32.mrf.mxu0
        %v8671 = vadd.f32 %v8606, %v8670
        %v8672 = vpop.f32.mrf.mxu0
        %v8673 = vadd.f32 %v8608, %v8672
        %8674 = vmatmul.bf16.gmra.mxu0 %v8114
        %v8675 = vpop.f32.mrf.mxu0
        %v8676 = vadd.f32 %v8611, %v8675
        %v8677 = vpop.f32.mrf.mxu0
        %v8678 = vadd.f32 %v8613, %v8677
        %8679 = vmatmul.bf16.gmra.mxu0 %v8119
        %v8680 = vpop.f32.mrf.mxu0
        %v8681 = vadd.f32 %v8616, %v8680
        %v8682 = vpop.f32.mrf.mxu0
        %v8683 = vadd.f32 %v8618, %v8682
        %8684 = vmatmul.bf16.gmra.mxu0 %v8124
        %v8685 = vpop.f32.mrf.mxu0
        %v8686 = vpop.f32.mrf.mxu0
        %8687 = vmatmul.bf16.gmra.mxu0 %v8129
        %v8688 = vpop.f32.mrf.mxu0
        %v8689 = vpop.f32.mrf.mxu0
        %8690 = vdwg.mxu0
        %8691 = vmatpush.bf16.msra.mxu0 %v8390
        %8692 = vmatpush.bf16.msra.mxu0 %v8389
        %8693 = vmatpush.bf16.msra.mxu0 %v8388
        %8694 = vmatpush.bf16.msra.mxu0 %v8387
        %8695 = vmatpush.bf16.msra.mxu0 %v8386
        %8696 = vmatpush.bf16.msra.mxu0 %v8385
        %8697 = vmatpush.bf16.msra.mxu0 %v8384
        %8698 = vmatpush.bf16.msra.mxu0 %v8383
        %8699 = vmatmul.bf16.gmra.mxu0 %v8075
        %v8700 = vpop.f32.mrf.mxu0
        %v8701 = vadd.f32 %v8636, %v8700
        %v8702 = vpop.f32.mrf.mxu0
        %v8703 = vadd.f32 %v8638, %v8702
        %8704 = vmatmul.bf16.gmra.mxu0 %v8080
        %v8705 = vpop.f32.mrf.mxu0
        %v8706 = vadd.f32 %v8641, %v8705
        %v8707 = vpop.f32.mrf.mxu0
        %v8708 = vadd.f32 %v8643, %v8707
        %8709 = vmatmul.bf16.gmra.mxu0 %v8085
        %v8710 = vpop.f32.mrf.mxu0
        %v8711 = vadd.f32 %v8646, %v8710
        %v8712 = vpop.f32.mrf.mxu0
        %v8713 = vadd.f32 %v8648, %v8712
        %8714 = vmatmul.bf16.gmra.mxu0 %v8090
        %v8715 = vpop.f32.mrf.mxu0
        %v8716 = vadd.f32 %v8651, %v8715
        %v8717 = vpop.f32.mrf.mxu0
        %v8718 = vadd.f32 %v8653, %v8717
        %8719 = vmatmul.bf16.gmra.mxu0 %v8095
        %v8720 = vpop.f32.mrf.mxu0
        %v8721 = vadd.f32 %v8656, %v8720
        %v8722 = vpop.f32.mrf.mxu0
        %v8723 = vadd.f32 %v8658, %v8722
        %8724 = vmatmul.bf16.gmra.mxu0 %v8100
        %v8725 = vpop.f32.mrf.mxu0
        %v8726 = vadd.f32 %v8661, %v8725
        %v8727 = vpop.f32.mrf.mxu0
        %v8728 = vadd.f32 %v8663, %v8727
        %8729 = vmatmul.bf16.gmra.mxu0 %v8105
        %v8730 = vpop.f32.mrf.mxu0
        %v8731 = vadd.f32 %v8666, %v8730
        %v8732 = vpop.f32.mrf.mxu0
        %v8733 = vadd.f32 %v8668, %v8732
        %8734 = vmatmul.bf16.gmra.mxu0 %v8110
        %v8735 = vpop.f32.mrf.mxu0
        %v8736 = vadd.f32 %v8671, %v8735
        %v8737 = vpop.f32.mrf.mxu0
        %v8738 = vadd.f32 %v8673, %v8737
        %8739 = vmatmul.bf16.gmra.mxu0 %v8115
        %v8740 = vpop.f32.mrf.mxu0
        %v8741 = vadd.f32 %v8676, %v8740
        %v8742 = vpop.f32.mrf.mxu0
        %v8743 = vadd.f32 %v8678, %v8742
        %8744 = vmatmul.bf16.gmra.mxu0 %v8120
        %v8745 = vpop.f32.mrf.mxu0
        %v8746 = vadd.f32 %v8681, %v8745
        %v8747 = vpop.f32.mrf.mxu0
        %v8748 = vadd.f32 %v8683, %v8747
        %8749 = vmatmul.bf16.gmra.mxu0 %v8125
        %v8750 = vpop.f32.mrf.mxu0
        %v8751 = vpop.f32.mrf.mxu0
        %8752 = vmatmul.bf16.gmra.mxu0 %v8130
        %v8753 = vpop.f32.mrf.mxu0
        %v8754 = vpop.f32.mrf.mxu0
        %8755 = vdwg.mxu0
        %v8756 = vadd.f32 %v7671, %v8701
        %v8757 = vadd.f32 %v7673, %v8703
        %v8758 = vadd.f32 %v7676, %v8706
        %v8759 = vadd.f32 %v7678, %v8708
        %v8760 = vadd.f32 %v7681, %v8711
        %v8761 = vadd.f32 %v7683, %v8713
        %v8762 = vadd.f32 %v7686, %v8716
        %v8763 = vadd.f32 %v7688, %v8718
        %v8764 = vadd.f32 %v7691, %v8721
        %v8765 = vadd.f32 %v7693, %v8723
        %v8766 = vadd.f32 %v7696, %v8726
        %v8767 = vadd.f32 %v7698, %v8728
        %v8768 = vadd.f32 %v7701, %v8731
        %v8769 = vadd.f32 %v7703, %v8733
        %v8770 = vadd.f32 %v7706, %v8736
        %v8771 = vadd.f32 %v7708, %v8738
        %v8772 = vadd.f32 %v7711, %v8741
        %v8773 = vadd.f32 %v7713, %v8743
        %v8774 = vadd.f32 %v7716, %v8746
        %v8775 = vadd.f32 %v7718, %v8748
        %s8776 = scalar_lea.vmem [#allocation3], 120
        %v8777 = vld [vmem:[%s8776] sm:$0xff]
        %v8778 = vld [vmem:[%s8776 + $0x8] sm:$0xff]
        %v8779 = vld [vmem:[%s8776 + $0x10] sm:$0xf]
        %v8780 = vld [vmem:[%s8776 + $0x14] sm:$0xff]
        %v8781 = vld [vmem:[%s8776 + $0x1c] sm:$0xff]
        %v8782 = vld [vmem:[%s8776 + $0x24] sm:$0xf]
        %v8783 = vld [vmem:[%s8776 + $0x28] sm:$0xff]
        %v8784 = vld [vmem:[%s8776 + $0x30] sm:$0xff]
        %v8785 = vld [vmem:[%s8776 + $0x38] sm:$0xf]
        %v8786 = vld [vmem:[%s8776 + $0x3c] sm:$0xff]
        %v8787 = vld [vmem:[%s8776 + $0x44] sm:$0xff]
        %v8788 = vld [vmem:[%s8776 + $0x4c] sm:$0xf]
        %v8789 = vld [vmem:[%s8776 + $0x50] sm:$0xff]
        %v8790 = vld [vmem:[%s8776 + $0x58] sm:$0xff]
        %v8791 = vld [vmem:[%s8776 + $0x60] sm:$0xf]
        %v8792 = vld [vmem:[%s8776 + $0x64] sm:$0xff]
        %v8793 = vld [vmem:[%s8776 + $0x6c] sm:$0xff]
        %v8794 = vld [vmem:[%s8776 + $0x74] sm:$0xf]
        %v8795 = vld [vmem:[%s8776 + $0x78] sm:$0xff]
        %v8796 = vld [vmem:[%s8776 + $0x80] sm:$0xff]
        %v8797 = vld [vmem:[%s8776 + $0x88] sm:$0xf]
        %v8798 = vld [vmem:[%s8776 + $0x8c] sm:$0xff]
        %v8799 = vld [vmem:[%s8776 + $0x94] sm:$0xff]
        %v8800 = vld [vmem:[%s8776 + $0x9c] sm:$0xf]
        %v8801 = vld [vmem:[%s8776 + $0xa0] sm:$0xff]
        %v8802 = vld [vmem:[%s8776 + $0xa8] sm:$0xff]
        %v8803 = vld [vmem:[%s8776 + $0xb0] sm:$0xf]
        %v8804 = vld [vmem:[%s8776 + $0xb4] sm:$0xff]
        %v8805 = vld [vmem:[%s8776 + $0xbc] sm:$0xff]
        %v8806 = vld [vmem:[%s8776 + $0xc4] sm:$0xf]
        %v8807 = vld [vmem:[%s8776 + $0xc8] sm:$0xff]
        %v8808 = vld [vmem:[%s8776 + $0xd0] sm:$0xff]
        %v8809 = vld [vmem:[%s8776 + $0xd8] sm:$0xf]
        %v8810 = vld [vmem:[%s8776 + $0xdc] sm:$0xff]
        %v8811 = vld [vmem:[%s8776 + $0xe4] sm:$0xff]
        %v8812 = vld [vmem:[%s8776 + $0xec] sm:$0xf]
        %v8813 = vld [vmem:[%s8776 + $0xf0] sm:$0xff]
        %v8814 = vld [vmem:[%s8776 + $0xf8] sm:$0xff]
        %v8815 = vld [vmem:[%s8776 + $0x100] sm:$0xf]
        %v8816 = vld [vmem:[%s8776 + $0x104] sm:$0xff]
        %v8817 = vld [vmem:[%s8776 + $0x10c] sm:$0xff]
        %v8818 = vld [vmem:[%s8776 + $0x114] sm:$0xf]
        %v8819 = vld [vmem:[%s8776 + $0x118] sm:$0xff]
        %v8820 = vld [vmem:[%s8776 + $0x120] sm:$0xff]
        %v8821 = vld [vmem:[%s8776 + $0x128] sm:$0xf]
        %v8822 = vld [vmem:[%s8776 + $0x12c] sm:$0xff]
        %v8823 = vld [vmem:[%s8776 + $0x134] sm:$0xff]
        %v8824 = vld [vmem:[%s8776 + $0x13c] sm:$0xf]
        %v8825 = vld [vmem:[%s8776 + $0x140] sm:$0xff]
        %v8826 = vld [vmem:[%s8776 + $0x148] sm:$0xff]
        %v8827 = vld [vmem:[%s8776 + $0x150] sm:$0xf]
        %v8828 = vld [vmem:[%s8776 + $0x154] sm:$0xff]
        %v8829 = vld [vmem:[%s8776 + $0x15c] sm:$0xff]
        %v8830 = vld [vmem:[%s8776 + $0x164] sm:$0xf]
        %v8831 = vld [vmem:[%s8776 + $0x168] sm:$0xff]
        %v8832 = vld [vmem:[%s8776 + $0x170] sm:$0xff]
        %v8833 = vld [vmem:[%s8776 + $0x178] sm:$0xf]
        %v8834 = vld [vmem:[%s8776 + $0x17c] sm:$0xff]
        %v8835 = vld [vmem:[%s8776 + $0x184] sm:$0xff]
        %v8836 = vld [vmem:[%s8776 + $0x18c] sm:$0xf]
        %v8837 = vld [vmem:[%s8776 + $0x190] sm:$0xff]
        %v8838 = vld [vmem:[%s8776 + $0x198] sm:$0xff]
        %v8839 = vld [vmem:[%s8776 + $0x1a0] sm:$0xf]
        %v8840 = vld [vmem:[%s8776 + $0x1a4] sm:$0xff]
        %v8841 = vld [vmem:[%s8776 + $0x1ac] sm:$0xff]
        %v8842 = vld [vmem:[%s8776 + $0x1b4] sm:$0xf]
        %v8843 = vld [vmem:[%s8776 + $0x1b8] sm:$0xff]
        %v8844 = vld [vmem:[%s8776 + $0x1c0] sm:$0xff]
        %v8845 = vld [vmem:[%s8776 + $0x1c8] sm:$0xf]
        %v8846 = vld [vmem:[%s8776 + $0x1cc] sm:$0xff]
        %v8847 = vld [vmem:[%s8776 + $0x1d4] sm:$0xff]
        %v8848 = vld [vmem:[%s8776 + $0x1dc] sm:$0xf]
        %v8849 = vld [vmem:[#allocation4 + $0x3c0] sm:$0xf]
        %v8850 = vld [vmem:[#allocation4 + $0x3c4] sm:$0xf]
        %v8851 = vld [vmem:[#allocation4 + $0x3c8] sm:$0xf]
        %v8852 = vld [vmem:[#allocation4 + $0x3cc] sm:$0xf]
        %v8853 = vld [vmem:[#allocation4 + $0x3d0] sm:$0xf]
        %v8854 = vld [vmem:[#allocation4 + $0x3d4] sm:$0xf]
        %v8855 = vld [vmem:[#allocation4 + $0x3d8] sm:$0xf]
        %v8856 = vld [vmem:[#allocation4 + $0x3dc] sm:$0xf]
        %v8857 = vld [vmem:[#allocation4 + $0x3e0] sm:$0xf]
        %v8858 = vld [vmem:[#allocation4 + $0x3e4] sm:$0xf]
        %v8859 = vld [vmem:[#allocation4 + $0x3e8] sm:$0xf]
        %v8860 = vld [vmem:[#allocation4 + $0x3ec] sm:$0xf]
        %v8861 = vld [vmem:[#allocation4 + $0x3f0] sm:$0xf]
        %v8862 = vld [vmem:[#allocation4 + $0x3f4] sm:$0xf]
        %v8863 = vld [vmem:[#allocation4 + $0x3f8] sm:$0xf]
        %v8864 = vld [vmem:[#allocation4 + $0x3fc] sm:$0xf]
        %v8865 = vld [vmem:[#allocation4 + $0x400] sm:$0xf]
        %v8866 = vld [vmem:[#allocation4 + $0x404] sm:$0xf]
        %v8867 = vld [vmem:[#allocation4 + $0x408] sm:$0xf]
        %v8868 = vld [vmem:[#allocation4 + $0x40c] sm:$0xf]
        %v8869 = vld [vmem:[#allocation4 + $0x410] sm:$0xf]
        %v8870 = vld [vmem:[#allocation4 + $0x414] sm:$0xf]
        %v8871 = vld [vmem:[#allocation4 + $0x418] sm:$0xf]
        %v8872 = vld [vmem:[#allocation4 + $0x41c] sm:$0xf]
        %v8873 = vld [vmem:[#allocation4 + $0x420] sm:$0xf]
        %v8874 = vld [vmem:[#allocation4 + $0x424] sm:$0xf]
        %v8875 = vld [vmem:[#allocation4 + $0x428] sm:$0xf]
        %v8876 = vld [vmem:[#allocation4 + $0x42c] sm:$0xf]
        %v8877 = vld [vmem:[#allocation4 + $0x430] sm:$0xf]
        %v8878 = vld [vmem:[#allocation4 + $0x434] sm:$0xf]
        %v8879 = vld [vmem:[#allocation4 + $0x438] sm:$0xf]
        %v8880 = vld [vmem:[#allocation4 + $0x43c] sm:$0xf]
        %v8881 = vld [vmem:[#allocation4 + $0x440] sm:$0xf]
        %v8882 = vld [vmem:[#allocation4 + $0x444] sm:$0xf]
        %v8883 = vld [vmem:[#allocation4 + $0x448] sm:$0xf]
        %v8884 = vld [vmem:[#allocation4 + $0x44c] sm:$0xf]
        %v8885 = vld [vmem:[#allocation4 + $0x450] sm:$0xf]
        %v8886 = vld [vmem:[#allocation4 + $0x454] sm:$0xf]
        %v8887 = vld [vmem:[#allocation4 + $0x458] sm:$0xf]
        %v8888 = vld [vmem:[#allocation4 + $0x45c] sm:$0xf]
        %v8889 = vld [vmem:[#allocation4 + $0x460] sm:$0xf]
        %v8890 = vld [vmem:[#allocation4 + $0x464] sm:$0xf]
        %v8891 = vld [vmem:[#allocation4 + $0x468] sm:$0xf]
        %v8892 = vld [vmem:[#allocation4 + $0x46c] sm:$0xf]
        %v8893 = vld [vmem:[#allocation4 + $0x470] sm:$0xf]
        %v8894 = vld [vmem:[#allocation4 + $0x474] sm:$0xf]
        %v8895 = vld [vmem:[#allocation4 + $0x478] sm:$0xf]
        %v8896 = vld [vmem:[#allocation4 + $0x47c] sm:$0xf]
        %v8897 = vld [vmem:[#allocation4 + $0x480] sm:$0xf]
        %v8898 = vld [vmem:[#allocation4 + $0x484] sm:$0xf]
        %v8899 = vld [vmem:[#allocation4 + $0x488] sm:$0xf]
        %v8900 = vld [vmem:[#allocation4 + $0x48c] sm:$0xf]
        %v8901 = vld [vmem:[#allocation4 + $0x490] sm:$0xf]
        %v8902 = vld [vmem:[#allocation4 + $0x494] sm:$0xf]
        %v8903 = vld [vmem:[#allocation4 + $0x498] sm:$0xf]
        %v8904 = vld [vmem:[#allocation4 + $0x49c] sm:$0xf]
        %v8905 = vld [vmem:[#allocation4 + $0x4a0] sm:$0xf]
        %v8906 = vld [vmem:[#allocation4 + $0x4a4] sm:$0xf]
        %v8907 = vld [vmem:[#allocation4 + $0x4a8] sm:$0xf]
        %v8908 = vld [vmem:[#allocation4 + $0x4ac] sm:$0xf]
        %v8909 = vld [vmem:[#allocation4 + $0x4b0] sm:$0xf]
        %v8910 = vld [vmem:[#allocation4 + $0x4b4] sm:$0xf]
        %v8911 = vld [vmem:[#allocation4 + $0x4b8] sm:$0xf]
        %v8912 = vld [vmem:[#allocation4 + $0x4bc] sm:$0xf]
        %v8913 = vld [vmem:[#allocation4 + $0x4c0] sm:$0xf]
        %v8914 = vld [vmem:[#allocation4 + $0x4c4] sm:$0xf]
        %v8915 = vld [vmem:[#allocation4 + $0x4c8] sm:$0xf]
        %v8916 = vld [vmem:[#allocation4 + $0x4cc] sm:$0xf]
        %v8917 = vld [vmem:[#allocation4 + $0x4d0] sm:$0xf]
        %v8918 = vld [vmem:[#allocation4 + $0x4d4] sm:$0xf]
        %v8919 = vld [vmem:[#allocation4 + $0x4d8] sm:$0xf]
        %v8920 = vld [vmem:[#allocation4 + $0x4dc] sm:$0xf]
        %v8921 = vld [vmem:[#allocation4 + $0x4e0] sm:$0xf]
        %v8922 = vld [vmem:[#allocation4 + $0x4e4] sm:$0xf]
        %v8923 = vld [vmem:[#allocation4 + $0x4e8] sm:$0xf]
        %v8924 = vld [vmem:[#allocation4 + $0x4ec] sm:$0xf]
        %v8925 = vld [vmem:[#allocation4 + $0x4f0] sm:$0xf]
        %v8926 = vld [vmem:[#allocation4 + $0x4f4] sm:$0xf]
        %v8927 = vld [vmem:[#allocation4 + $0x4f8] sm:$0xf]
        %v8928 = vld [vmem:[#allocation4 + $0x4fc] sm:$0xf]
        %v9001 = vunpack.c.l.b16 %v8777
        %v9002 = vunpack.c.h.b16 %v8777
        %v9003 = vunpack.c.l.b16 %v8778
        %v9004 = vunpack.c.h.b16 %v8778
        %v9005 = vunpack.c.l.b16 %v8779
        %v9006 = vunpack.c.l.b16 %v8780
        %v9007 = vunpack.c.h.b16 %v8780
        %v9008 = vunpack.c.l.b16 %v8781
        %v9009 = vunpack.c.h.b16 %v8781
        %v9010 = vunpack.c.l.b16 %v8782
        %v9011 = vunpack.c.l.b16 %v8783
        %v9012 = vunpack.c.h.b16 %v8783
        %v9013 = vunpack.c.l.b16 %v8784
        %v9014 = vunpack.c.h.b16 %v8784
        %v9015 = vunpack.c.l.b16 %v8785
        %v9016 = vunpack.c.l.b16 %v8786
        %v9017 = vunpack.c.h.b16 %v8786
        %v9018 = vunpack.c.l.b16 %v8787
        %v9019 = vunpack.c.h.b16 %v8787
        %v9020 = vunpack.c.l.b16 %v8788
        %v9021 = vunpack.c.l.b16 %v8789
        %v9022 = vunpack.c.h.b16 %v8789
        %v9023 = vunpack.c.l.b16 %v8790
        %v9024 = vunpack.c.h.b16 %v8790
        %v9025 = vunpack.c.l.b16 %v8791
        %v9026 = vunpack.c.l.b16 %v8792
        %v9027 = vunpack.c.h.b16 %v8792
        %v9028 = vunpack.c.l.b16 %v8793
        %v9029 = vunpack.c.h.b16 %v8793
        %v9030 = vunpack.c.l.b16 %v8794
        %v9031 = vunpack.c.l.b16 %v8795
        %v9032 = vunpack.c.h.b16 %v8795
        %v9033 = vunpack.c.l.b16 %v8796
        %v9034 = vunpack.c.h.b16 %v8796
        %v9035 = vunpack.c.l.b16 %v8797
        %v9036 = vunpack.c.l.b16 %v8798
        %v9037 = vunpack.c.h.b16 %v8798
        %v9038 = vunpack.c.l.b16 %v8799
        %v9039 = vunpack.c.h.b16 %v8799
        %v9040 = vunpack.c.l.b16 %v8800
        %v9041 = vunpack.c.l.b16 %v8801
        %v9042 = vunpack.c.h.b16 %v8801
        %v9043 = vunpack.c.l.b16 %v8802
        %v9044 = vunpack.c.h.b16 %v8802
        %v9045 = vunpack.c.l.b16 %v8803
        %v9046 = vunpack.c.l.b16 %v8804
        %v9047 = vunpack.c.h.b16 %v8804
        %v9048 = vunpack.c.l.b16 %v8805
        %v9049 = vunpack.c.h.b16 %v8805
        %v9050 = vunpack.c.l.b16 %v8806
        %v9051 = vunpack.c.l.b16 %v8807
        %v9052 = vunpack.c.h.b16 %v8807
        %v9053 = vunpack.c.l.b16 %v8808
        %v9054 = vunpack.c.h.b16 %v8808
        %v9055 = vunpack.c.l.b16 %v8809
        %v9056 = vunpack.c.l.b16 %v8810
        %v9057 = vunpack.c.h.b16 %v8810
        %v9058 = vunpack.c.l.b16 %v8811
        %v9059 = vunpack.c.h.b16 %v8811
        %v9060 = vunpack.c.l.b16 %v8812
        %v9061 = vunpack.c.l.b16 %v8813
        %v9062 = vunpack.c.h.b16 %v8813
        %v9063 = vunpack.c.l.b16 %v8814
        %v9064 = vunpack.c.h.b16 %v8814
        %v9065 = vunpack.c.l.b16 %v8815
        %v9066 = vunpack.c.l.b16 %v8816
        %v9067 = vunpack.c.h.b16 %v8816
        %v9068 = vunpack.c.l.b16 %v8817
        %v9069 = vunpack.c.h.b16 %v8817
        %v9070 = vunpack.c.l.b16 %v8818
        %v9071 = vunpack.c.l.b16 %v8819
        %v9072 = vunpack.c.h.b16 %v8819
        %v9073 = vunpack.c.l.b16 %v8820
        %v9074 = vunpack.c.h.b16 %v8820
        %v9075 = vunpack.c.l.b16 %v8821
        %v9076 = vunpack.c.l.b16 %v8822
        %v9077 = vunpack.c.h.b16 %v8822
        %v9078 = vunpack.c.l.b16 %v8823
        %v9079 = vunpack.c.h.b16 %v8823
        %v9080 = vunpack.c.l.b16 %v8824
        %v9081 = vunpack.c.l.b16 %v8825
        %v9082 = vunpack.c.h.b16 %v8825
        %v9083 = vunpack.c.l.b16 %v8826
        %v9084 = vunpack.c.h.b16 %v8826
        %v9085 = vunpack.c.l.b16 %v8827
        %v9086 = vunpack.c.l.b16 %v8828
        %v9087 = vunpack.c.h.b16 %v8828
        %v9088 = vunpack.c.l.b16 %v8829
        %v9089 = vunpack.c.h.b16 %v8829
        %v9090 = vunpack.c.l.b16 %v8830
        %v9091 = vunpack.c.l.b16 %v8831
        %v9092 = vunpack.c.h.b16 %v8831
        %v9093 = vunpack.c.l.b16 %v8832
        %v9094 = vunpack.c.h.b16 %v8832
        %v9095 = vunpack.c.l.b16 %v8833
        %v9096 = vunpack.c.l.b16 %v8834
        %v9097 = vunpack.c.h.b16 %v8834
        %v9098 = vunpack.c.l.b16 %v8835
        %v9099 = vunpack.c.h.b16 %v8835
        %v9100 = vunpack.c.l.b16 %v8836
        %v9101 = vunpack.c.l.b16 %v8837
        %v9102 = vunpack.c.h.b16 %v8837
        %v9103 = vunpack.c.l.b16 %v8838
        %v9104 = vunpack.c.h.b16 %v8838
        %v9105 = vunpack.c.l.b16 %v8839
        %v9106 = vunpack.c.l.b16 %v8840
        %v9107 = vunpack.c.h.b16 %v8840
        %v9108 = vunpack.c.l.b16 %v8841
        %v9109 = vunpack.c.h.b16 %v8841
        %v9110 = vunpack.c.l.b16 %v8842
        %v9111 = vunpack.c.l.b16 %v8843
        %v9112 = vunpack.c.h.b16 %v8843
        %v9113 = vunpack.c.l.b16 %v8844
        %v9114 = vunpack.c.h.b16 %v8844
        %v9115 = vunpack.c.l.b16 %v8845
        %v9116 = vunpack.c.l.b16 %v8846
        %v9117 = vunpack.c.h.b16 %v8846
        %v9118 = vunpack.c.l.b16 %v8847
        %v9119 = vunpack.c.h.b16 %v8847
        %v9120 = vunpack.c.l.b16 %v8848
        %v9121 = vpack.c.b16 %v9006, %v9001
        %v9122 = vpack.c.b16 %v9007, %v9002
        %v9123 = vpack.c.b16 %v9008, %v9003
        %v9124 = vpack.c.b16 %v9009, %v9004
        %v9125 = vpack.c.b16 %v9010, %v9005
        %v9126 = vpack.c.b16 %v9016, %v9011
        %v9127 = vpack.c.b16 %v9017, %v9012
        %v9128 = vpack.c.b16 %v9018, %v9013
        %v9129 = vpack.c.b16 %v9019, %v9014
        %v9130 = vpack.c.b16 %v9020, %v9015
        %v9131 = vpack.c.b16 %v9026, %v9021
        %v9132 = vpack.c.b16 %v9027, %v9022
        %v9133 = vpack.c.b16 %v9028, %v9023
        %v9134 = vpack.c.b16 %v9029, %v9024
        %v9135 = vpack.c.b16 %v9030, %v9025
        %v9136 = vpack.c.b16 %v9036, %v9031
        %v9137 = vpack.c.b16 %v9037, %v9032
        %v9138 = vpack.c.b16 %v9038, %v9033
        %v9139 = vpack.c.b16 %v9039, %v9034
        %v9140 = vpack.c.b16 %v9040, %v9035
        %v9141 = vpack.c.b16 %v9046, %v9041
        %v9142 = vpack.c.b16 %v9047, %v9042
        %v9143 = vpack.c.b16 %v9048, %v9043
        %v9144 = vpack.c.b16 %v9049, %v9044
        %v9145 = vpack.c.b16 %v9050, %v9045
        %v9146 = vpack.c.b16 %v9056, %v9051
        %v9147 = vpack.c.b16 %v9057, %v9052
        %v9148 = vpack.c.b16 %v9058, %v9053
        %v9149 = vpack.c.b16 %v9059, %v9054
        %v9150 = vpack.c.b16 %v9060, %v9055
        %v9151 = vpack.c.b16 %v9066, %v9061
        %v9152 = vpack.c.b16 %v9067, %v9062
        %v9153 = vpack.c.b16 %v9068, %v9063
        %v9154 = vpack.c.b16 %v9069, %v9064
        %v9155 = vpack.c.b16 %v9070, %v9065
        %v9156 = vpack.c.b16 %v9076, %v9071
        %v9157 = vpack.c.b16 %v9077, %v9072
        %v9158 = vpack.c.b16 %v9078, %v9073
        %v9159 = vpack.c.b16 %v9079, %v9074
        %v9160 = vpack.c.b16 %v9080, %v9075
        %v9161 = vpack.c.b16 %v9086, %v9081
        %v9162 = vpack.c.b16 %v9087, %v9082
        %v9163 = vpack.c.b16 %v9088, %v9083
        %v9164 = vpack.c.b16 %v9089, %v9084
        %v9165 = vpack.c.b16 %v9090, %v9085
        %v9166 = vpack.c.b16 %v9096, %v9091
        %v9167 = vpack.c.b16 %v9097, %v9092
        %v9168 = vpack.c.b16 %v9098, %v9093
        %v9169 = vpack.c.b16 %v9099, %v9094
        %v9170 = vpack.c.b16 %v9100, %v9095
        %v9171 = vpack.c.b16 %v9106, %v9101
        %v9172 = vpack.c.b16 %v9107, %v9102
        %v9173 = vpack.c.b16 %v9108, %v9103
        %v9174 = vpack.c.b16 %v9109, %v9104
        %v9175 = vpack.c.b16 %v9110, %v9105
        %v9176 = vpack.c.b16 %v9116, %v9111
        %v9177 = vpack.c.b16 %v9117, %v9112
        %v9178 = vpack.c.b16 %v9118, %v9113
        %v9179 = vpack.c.b16 %v9119, %v9114
        %v9180 = vpack.c.b16 %v9120, %v9115
        %v9321 = vunpack.c.l.b16 %v8849
        %v9322 = vunpack.c.l.b16 %v8850
        %v9323 = vunpack.c.l.b16 %v8851
        %v9324 = vunpack.c.l.b16 %v8852
        %v9325 = vunpack.c.l.b16 %v8853
        %v9326 = vunpack.c.l.b16 %v8854
        %v9327 = vunpack.c.l.b16 %v8855
        %v9328 = vunpack.c.l.b16 %v8856
        %v9329 = vunpack.c.l.b16 %v8857
        %v9330 = vunpack.c.l.b16 %v8858
        %v9331 = vunpack.c.l.b16 %v8859
        %v9332 = vunpack.c.l.b16 %v8860
        %v9333 = vunpack.c.l.b16 %v8861
        %v9334 = vunpack.c.l.b16 %v8862
        %v9335 = vunpack.c.l.b16 %v8863
        %v9336 = vunpack.c.l.b16 %v8864
        %v9337 = vunpack.c.l.b16 %v8865
        %v9338 = vunpack.c.l.b16 %v8866
        %v9339 = vunpack.c.l.b16 %v8867
        %v9340 = vunpack.c.l.b16 %v8868
        %v9341 = vunpack.c.l.b16 %v8869
        %v9342 = vunpack.c.l.b16 %v8870
        %v9343 = vunpack.c.l.b16 %v8871
        %v9344 = vunpack.c.l.b16 %v8872
        %v9345 = vunpack.c.l.b16 %v8873
        %v9346 = vunpack.c.l.b16 %v8874
        %v9347 = vunpack.c.l.b16 %v8875
        %v9348 = vunpack.c.l.b16 %v8876
        %v9349 = vunpack.c.l.b16 %v8877
        %v9350 = vunpack.c.l.b16 %v8878
        %v9351 = vunpack.c.l.b16 %v8879
        %v9352 = vunpack.c.l.b16 %v8880
        %v9353 = vunpack.c.l.b16 %v8881
        %v9354 = vunpack.c.l.b16 %v8882
        %v9355 = vunpack.c.l.b16 %v8883
        %v9356 = vunpack.c.l.b16 %v8884
        %v9357 = vunpack.c.l.b16 %v8885
        %v9358 = vunpack.c.l.b16 %v8886
        %v9359 = vunpack.c.l.b16 %v8887
        %v9360 = vunpack.c.l.b16 %v8888
        %v9361 = vunpack.c.l.b16 %v8889
        %v9362 = vunpack.c.l.b16 %v8890
        %v9363 = vunpack.c.l.b16 %v8891
        %v9364 = vunpack.c.l.b16 %v8892
        %v9365 = vunpack.c.l.b16 %v8893
        %v9366 = vunpack.c.l.b16 %v8894
        %v9367 = vunpack.c.l.b16 %v8895
        %v9368 = vunpack.c.l.b16 %v8896
        %v9369 = vunpack.c.l.b16 %v8897
        %v9370 = vunpack.c.l.b16 %v8898
        %v9371 = vunpack.c.l.b16 %v8899
        %v9372 = vunpack.c.l.b16 %v8900
        %v9373 = vunpack.c.l.b16 %v8901
        %v9374 = vunpack.c.l.b16 %v8902
        %v9375 = vunpack.c.l.b16 %v8903
        %v9376 = vunpack.c.l.b16 %v8904
        %v9377 = vunpack.c.l.b16 %v8905
        %v9378 = vunpack.c.l.b16 %v8906
        %v9379 = vunpack.c.l.b16 %v8907
        %v9380 = vunpack.c.l.b16 %v8908
        %v9381 = vunpack.c.l.b16 %v8909
        %v9382 = vunpack.c.l.b16 %v8910
        %v9383 = vunpack.c.l.b16 %v8911
        %v9384 = vunpack.c.l.b16 %v8912
        %v9385 = vunpack.c.l.b16 %v8913
        %v9386 = vunpack.c.l.b16 %v8914
        %v9387 = vunpack.c.l.b16 %v8915
        %v9388 = vunpack.c.l.b16 %v8916
        %v9389 = vunpack.c.l.b16 %v8917
        %v9390 = vunpack.c.l.b16 %v8918
        %v9391 = vunpack.c.l.b16 %v8919
        %v9392 = vunpack.c.l.b16 %v8920
        %v9393 = vunpack.c.l.b16 %v8921
        %v9394 = vunpack.c.l.b16 %v8922
        %v9395 = vunpack.c.l.b16 %v8923
        %v9396 = vunpack.c.l.b16 %v8924
        %v9397 = vunpack.c.l.b16 %v8925
        %v9398 = vunpack.c.l.b16 %v8926
        %v9399 = vunpack.c.l.b16 %v8927
        %v9400 = vunpack.c.l.b16 %v8928
        %v9401 = vpack.c.b16 %v9322, %v9321
        %v9402 = vpack.c.b16 %v9324, %v9323
        %v9403 = vpack.c.b16 %v9326, %v9325
        %v9404 = vpack.c.b16 %v9328, %v9327
        %v9405 = vpack.c.b16 %v9330, %v9329
        %v9406 = vpack.c.b16 %v9332, %v9331
        %v9407 = vpack.c.b16 %v9334, %v9333
        %v9408 = vpack.c.b16 %v9336, %v9335
        %v9409 = vpack.c.b16 %v9338, %v9337
        %v9410 = vpack.c.b16 %v9340, %v9339
        %v9411 = vpack.c.b16 %v9342, %v9341
        %v9412 = vpack.c.b16 %v9344, %v9343
        %v9413 = vpack.c.b16 %v9346, %v9345
        %v9414 = vpack.c.b16 %v9348, %v9347
        %v9415 = vpack.c.b16 %v9350, %v9349
        %v9416 = vpack.c.b16 %v9352, %v9351
        %v9417 = vpack.c.b16 %v9354, %v9353
        %v9418 = vpack.c.b16 %v9356, %v9355
        %v9419 = vpack.c.b16 %v9358, %v9357
        %v9420 = vpack.c.b16 %v9360, %v9359
        %v9421 = vpack.c.b16 %v9362, %v9361
        %v9422 = vpack.c.b16 %v9364, %v9363
        %v9423 = vpack.c.b16 %v9366, %v9365
        %v9424 = vpack.c.b16 %v9368, %v9367
        %v9425 = vpack.c.b16 %v9370, %v9369
        %v9426 = vpack.c.b16 %v9372, %v9371
        %v9427 = vpack.c.b16 %v9374, %v9373
        %v9428 = vpack.c.b16 %v9376, %v9375
        %v9429 = vpack.c.b16 %v9378, %v9377
        %v9430 = vpack.c.b16 %v9380, %v9379
        %v9431 = vpack.c.b16 %v9382, %v9381
        %v9432 = vpack.c.b16 %v9384, %v9383
        %v9433 = vpack.c.b16 %v9386, %v9385
        %v9434 = vpack.c.b16 %v9388, %v9387
        %v9435 = vpack.c.b16 %v9390, %v9389
        %v9436 = vpack.c.b16 %v9392, %v9391
        %v9437 = vpack.c.b16 %v9394, %v9393
        %v9438 = vpack.c.b16 %v9396, %v9395
        %v9439 = vpack.c.b16 %v9398, %v9397
        %v9440 = vpack.c.b16 %v9400, %v9399
        %9481 = vmatpush.bf16.msra.mxu0 %v9408
        %9482 = vmatpush.bf16.msra.mxu0 %v9407
        %9483 = vmatpush.bf16.msra.mxu0 %v9406
        %9484 = vmatpush.bf16.msra.mxu0 %v9405
        %9485 = vmatpush.bf16.msra.mxu0 %v9404
        %9486 = vmatpush.bf16.msra.mxu0 %v9403
        %9487 = vmatpush.bf16.msra.mxu0 %v9402
        %9488 = vmatpush.bf16.msra.mxu0 %v9401
        %9489 = vmatmul.bf16.gmra.mxu0 %v9121
        %v9490 = vpop.f32.mrf.mxu0
        %v9491 = vadd.f32 0.0, %v9490
        %v9492 = vpop.f32.mrf.mxu0
        %v9493 = vadd.f32 0.0, %v9492
        %9494 = vmatmul.bf16.gmra.mxu0 %v9126
        %v9495 = vpop.f32.mrf.mxu0
        %v9496 = vadd.f32 0.0, %v9495
        %v9497 = vpop.f32.mrf.mxu0
        %v9498 = vadd.f32 0.0, %v9497
        %9499 = vmatmul.bf16.gmra.mxu0 %v9131
        %v9500 = vpop.f32.mrf.mxu0
        %v9501 = vadd.f32 0.0, %v9500
        %v9502 = vpop.f32.mrf.mxu0
        %v9503 = vadd.f32 0.0, %v9502
        %9504 = vmatmul.bf16.gmra.mxu0 %v9136
        %v9505 = vpop.f32.mrf.mxu0
        %v9506 = vadd.f32 0.0, %v9505
        %v9507 = vpop.f32.mrf.mxu0
        %v9508 = vadd.f32 0.0, %v9507
        %9509 = vmatmul.bf16.gmra.mxu0 %v9141
        %v9510 = vpop.f32.mrf.mxu0
        %v9511 = vadd.f32 0.0, %v9510
        %v9512 = vpop.f32.mrf.mxu0
        %v9513 = vadd.f32 0.0, %v9512
        %9514 = vmatmul.bf16.gmra.mxu0 %v9146
        %v9515 = vpop.f32.mrf.mxu0
        %v9516 = vadd.f32 0.0, %v9515
        %v9517 = vpop.f32.mrf.mxu0
        %v9518 = vadd.f32 0.0, %v9517
        %9519 = vmatmul.bf16.gmra.mxu0 %v9151
        %v9520 = vpop.f32.mrf.mxu0
        %v9521 = vadd.f32 0.0, %v9520
        %v9522 = vpop.f32.mrf.mxu0
        %v9523 = vadd.f32 0.0, %v9522
        %9524 = vmatmul.bf16.gmra.mxu0 %v9156
        %v9525 = vpop.f32.mrf.mxu0
        %v9526 = vadd.f32 0.0, %v9525
        %v9527 = vpop.f32.mrf.mxu0
        %v9528 = vadd.f32 0.0, %v9527
        %9529 = vmatmul.bf16.gmra.mxu0 %v9161
        %v9530 = vpop.f32.mrf.mxu0
        %v9531 = vadd.f32 0.0, %v9530
        %v9532 = vpop.f32.mrf.mxu0
        %v9533 = vadd.f32 0.0, %v9532
        %9534 = vmatmul.bf16.gmra.mxu0 %v9166
        %v9535 = vpop.f32.mrf.mxu0
        %v9536 = vadd.f32 0.0, %v9535
        %v9537 = vpop.f32.mrf.mxu0
        %v9538 = vadd.f32 0.0, %v9537
        %9539 = vmatmul.bf16.gmra.mxu0 %v9171
        %v9540 = vpop.f32.mrf.mxu0
        %v9541 = vpop.f32.mrf.mxu0
        %9542 = vmatmul.bf16.gmra.mxu0 %v9176
        %v9543 = vpop.f32.mrf.mxu0
        %v9544 = vpop.f32.mrf.mxu0
        %9545 = vdwg.mxu0
        %9546 = vmatpush.bf16.msra.mxu0 %v9416
        %9547 = vmatpush.bf16.msra.mxu0 %v9415
        %9548 = vmatpush.bf16.msra.mxu0 %v9414
        %9549 = vmatpush.bf16.msra.mxu0 %v9413
        %9550 = vmatpush.bf16.msra.mxu0 %v9412
        %9551 = vmatpush.bf16.msra.mxu0 %v9411
        %9552 = vmatpush.bf16.msra.mxu0 %v9410
        %9553 = vmatpush.bf16.msra.mxu0 %v9409
        %9554 = vmatmul.bf16.gmra.mxu0 %v9122
        %v9555 = vpop.f32.mrf.mxu0
        %v9556 = vadd.f32 %v9491, %v9555
        %v9557 = vpop.f32.mrf.mxu0
        %v9558 = vadd.f32 %v9493, %v9557
        %9559 = vmatmul.bf16.gmra.mxu0 %v9127
        %v9560 = vpop.f32.mrf.mxu0
        %v9561 = vadd.f32 %v9496, %v9560
        %v9562 = vpop.f32.mrf.mxu0
        %v9563 = vadd.f32 %v9498, %v9562
        %9564 = vmatmul.bf16.gmra.mxu0 %v9132
        %v9565 = vpop.f32.mrf.mxu0
        %v9566 = vadd.f32 %v9501, %v9565
        %v9567 = vpop.f32.mrf.mxu0
        %v9568 = vadd.f32 %v9503, %v9567
        %9569 = vmatmul.bf16.gmra.mxu0 %v9137
        %v9570 = vpop.f32.mrf.mxu0
        %v9571 = vadd.f32 %v9506, %v9570
        %v9572 = vpop.f32.mrf.mxu0
        %v9573 = vadd.f32 %v9508, %v9572
        %9574 = vmatmul.bf16.gmra.mxu0 %v9142
        %v9575 = vpop.f32.mrf.mxu0
        %v9576 = vadd.f32 %v9511, %v9575
        %v9577 = vpop.f32.mrf.mxu0
        %v9578 = vadd.f32 %v9513, %v9577
        %9579 = vmatmul.bf16.gmra.mxu0 %v9147
        %v9580 = vpop.f32.mrf.mxu0
        %v9581 = vadd.f32 %v9516, %v9580
        %v9582 = vpop.f32.mrf.mxu0
        %v9583 = vadd.f32 %v9518, %v9582
        %9584 = vmatmul.bf16.gmra.mxu0 %v9152
        %v9585 = vpop.f32.mrf.mxu0
        %v9586 = vadd.f32 %v9521, %v9585
        %v9587 = vpop.f32.mrf.mxu0
        %v9588 = vadd.f32 %v9523, %v9587
        %9589 = vmatmul.bf16.gmra.mxu0 %v9157
        %v9590 = vpop.f32.mrf.mxu0
        %v9591 = vadd.f32 %v9526, %v9590
        %v9592 = vpop.f32.mrf.mxu0
        %v9593 = vadd.f32 %v9528, %v9592
        %9594 = vmatmul.bf16.gmra.mxu0 %v9162
        %v9595 = vpop.f32.mrf.mxu0
        %v9596 = vadd.f32 %v9531, %v9595
        %v9597 = vpop.f32.mrf.mxu0
        %v9598 = vadd.f32 %v9533, %v9597
        %9599 = vmatmul.bf16.gmra.mxu0 %v9167
        %v9600 = vpop.f32.mrf.mxu0
        %v9601 = vadd.f32 %v9536, %v9600
        %v9602 = vpop.f32.mrf.mxu0
        %v9603 = vadd.f32 %v9538, %v9602
        %9604 = vmatmul.bf16.gmra.mxu0 %v9172
        %v9605 = vpop.f32.mrf.mxu0
        %v9606 = vpop.f32.mrf.mxu0
        %9607 = vmatmul.bf16.gmra.mxu0 %v9177
        %v9608 = vpop.f32.mrf.mxu0
        %v9609 = vpop.f32.mrf.mxu0
        %9610 = vdwg.mxu0
        %9611 = vmatpush.bf16.msra.mxu0 %v9424
        %9612 = vmatpush.bf16.msra.mxu0 %v9423
        %9613 = vmatpush.bf16.msra.mxu0 %v9422
        %9614 = vmatpush.bf16.msra.mxu0 %v9421
        %9615 = vmatpush.bf16.msra.mxu0 %v9420
        %9616 = vmatpush.bf16.msra.mxu0 %v9419
        %9617 = vmatpush.bf16.msra.mxu0 %v9418
        %9618 = vmatpush.bf16.msra.mxu0 %v9417
        %9619 = vmatmul.bf16.gmra.mxu0 %v9123
        %v9620 = vpop.f32.mrf.mxu0
        %v9621 = vadd.f32 %v9556, %v9620
        %v9622 = vpop.f32.mrf.mxu0
        %v9623 = vadd.f32 %v9558, %v9622
        %9624 = vmatmul.bf16.gmra.mxu0 %v9128
        %v9625 = vpop.f32.mrf.mxu0
        %v9626 = vadd.f32 %v9561, %v9625
        %v9627 = vpop.f32.mrf.mxu0
        %v9628 = vadd.f32 %v9563, %v9627
        %9629 = vmatmul.bf16.gmra.mxu0 %v9133
        %v9630 = vpop.f32.mrf.mxu0
        %v9631 = vadd.f32 %v9566, %v9630
        %v9632 = vpop.f32.mrf.mxu0
        %v9633 = vadd.f32 %v9568, %v9632
        %9634 = vmatmul.bf16.gmra.mxu0 %v9138
        %v9635 = vpop.f32.mrf.mxu0
        %v9636 = vadd.f32 %v9571, %v9635
        %v9637 = vpop.f32.mrf.mxu0
        %v9638 = vadd.f32 %v9573, %v9637
        %9639 = vmatmul.bf16.gmra.mxu0 %v9143
        %v9640 = vpop.f32.mrf.mxu0
        %v9641 = vadd.f32 %v9576, %v9640
        %v9642 = vpop.f32.mrf.mxu0
        %v9643 = vadd.f32 %v9578, %v9642
        %9644 = vmatmul.bf16.gmra.mxu0 %v9148
        %v9645 = vpop.f32.mrf.mxu0
        %v9646 = vadd.f32 %v9581, %v9645
        %v9647 = vpop.f32.mrf.mxu0
        %v9648 = vadd.f32 %v9583, %v9647
        %9649 = vmatmul.bf16.gmra.mxu0 %v9153
        %v9650 = vpop.f32.mrf.mxu0
        %v9651 = vadd.f32 %v9586, %v9650
        %v9652 = vpop.f32.mrf.mxu0
        %v9653 = vadd.f32 %v9588, %v9652
        %9654 = vmatmul.bf16.gmra.mxu0 %v9158
        %v9655 = vpop.f32.mrf.mxu0
        %v9656 = vadd.f32 %v9591, %v9655
        %v9657 = vpop.f32.mrf.mxu0
        %v9658 = vadd.f32 %v9593, %v9657
        %9659 = vmatmul.bf16.gmra.mxu0 %v9163
        %v9660 = vpop.f32.mrf.mxu0
        %v9661 = vadd.f32 %v9596, %v9660
        %v9662 = vpop.f32.mrf.mxu0
        %v9663 = vadd.f32 %v9598, %v9662
        %9664 = vmatmul.bf16.gmra.mxu0 %v9168
        %v9665 = vpop.f32.mrf.mxu0
        %v9666 = vadd.f32 %v9601, %v9665
        %v9667 = vpop.f32.mrf.mxu0
        %v9668 = vadd.f32 %v9603, %v9667
        %9669 = vmatmul.bf16.gmra.mxu0 %v9173
        %v9670 = vpop.f32.mrf.mxu0
        %v9671 = vpop.f32.mrf.mxu0
        %9672 = vmatmul.bf16.gmra.mxu0 %v9178
        %v9673 = vpop.f32.mrf.mxu0
        %v9674 = vpop.f32.mrf.mxu0
        %9675 = vdwg.mxu0
        %9676 = vmatpush.bf16.msra.mxu0 %v9432
        %9677 = vmatpush.bf16.msra.mxu0 %v9431
        %9678 = vmatpush.bf16.msra.mxu0 %v9430
        %9679 = vmatpush.bf16.msra.mxu0 %v9429
        %9680 = vmatpush.bf16.msra.mxu0 %v9428
        %9681 = vmatpush.bf16.msra.mxu0 %v9427
        %9682 = vmatpush.bf16.msra.mxu0 %v9426
        %9683 = vmatpush.bf16.msra.mxu0 %v9425
        %9684 = vmatmul.bf16.gmra.mxu0 %v9124
        %v9685 = vpop.f32.mrf.mxu0
        %v9686 = vadd.f32 %v9621, %v9685
        %v9687 = vpop.f32.mrf.mxu0
        %v9688 = vadd.f32 %v9623, %v9687
        %9689 = vmatmul.bf16.gmra.mxu0 %v9129
        %v9690 = vpop.f32.mrf.mxu0
        %v9691 = vadd.f32 %v9626, %v9690
        %v9692 = vpop.f32.mrf.mxu0
        %v9693 = vadd.f32 %v9628, %v9692
        %9694 = vmatmul.bf16.gmra.mxu0 %v9134
        %v9695 = vpop.f32.mrf.mxu0
        %v9696 = vadd.f32 %v9631, %v9695
        %v9697 = vpop.f32.mrf.mxu0
        %v9698 = vadd.f32 %v9633, %v9697
        %9699 = vmatmul.bf16.gmra.mxu0 %v9139
        %v9700 = vpop.f32.mrf.mxu0
        %v9701 = vadd.f32 %v9636, %v9700
        %v9702 = vpop.f32.mrf.mxu0
        %v9703 = vadd.f32 %v9638, %v9702
        %9704 = vmatmul.bf16.gmra.mxu0 %v9144
        %v9705 = vpop.f32.mrf.mxu0
        %v9706 = vadd.f32 %v9641, %v9705
        %v9707 = vpop.f32.mrf.mxu0
        %v9708 = vadd.f32 %v9643, %v9707
        %9709 = vmatmul.bf16.gmra.mxu0 %v9149
        %v9710 = vpop.f32.mrf.mxu0
        %v9711 = vadd.f32 %v9646, %v9710
        %v9712 = vpop.f32.mrf.mxu0
        %v9713 = vadd.f32 %v9648, %v9712
        %9714 = vmatmul.bf16.gmra.mxu0 %v9154
        %v9715 = vpop.f32.mrf.mxu0
        %v9716 = vadd.f32 %v9651, %v9715
        %v9717 = vpop.f32.mrf.mxu0
        %v9718 = vadd.f32 %v9653, %v9717
        %9719 = vmatmul.bf16.gmra.mxu0 %v9159
        %v9720 = vpop.f32.mrf.mxu0
        %v9721 = vadd.f32 %v9656, %v9720
        %v9722 = vpop.f32.mrf.mxu0
        %v9723 = vadd.f32 %v9658, %v9722
        %9724 = vmatmul.bf16.gmra.mxu0 %v9164
        %v9725 = vpop.f32.mrf.mxu0
        %v9726 = vadd.f32 %v9661, %v9725
        %v9727 = vpop.f32.mrf.mxu0
        %v9728 = vadd.f32 %v9663, %v9727
        %9729 = vmatmul.bf16.gmra.mxu0 %v9169
        %v9730 = vpop.f32.mrf.mxu0
        %v9731 = vadd.f32 %v9666, %v9730
        %v9732 = vpop.f32.mrf.mxu0
        %v9733 = vadd.f32 %v9668, %v9732
        %9734 = vmatmul.bf16.gmra.mxu0 %v9174
        %v9735 = vpop.f32.mrf.mxu0
        %v9736 = vpop.f32.mrf.mxu0
        %9737 = vmatmul.bf16.gmra.mxu0 %v9179
        %v9738 = vpop.f32.mrf.mxu0
        %v9739 = vpop.f32.mrf.mxu0
        %9740 = vdwg.mxu0
        %9741 = vmatpush.bf16.msra.mxu0 %v9440
        %9742 = vmatpush.bf16.msra.mxu0 %v9439
        %9743 = vmatpush.bf16.msra.mxu0 %v9438
        %9744 = vmatpush.bf16.msra.mxu0 %v9437
        %9745 = vmatpush.bf16.msra.mxu0 %v9436
        %9746 = vmatpush.bf16.msra.mxu0 %v9435
        %9747 = vmatpush.bf16.msra.mxu0 %v9434
        %9748 = vmatpush.bf16.msra.mxu0 %v9433
        %9749 = vmatmul.bf16.gmra.mxu0 %v9125
        %v9750 = vpop.f32.mrf.mxu0
        %v9751 = vadd.f32 %v9686, %v9750
        %v9752 = vpop.f32.mrf.mxu0
        %v9753 = vadd.f32 %v9688, %v9752
        %9754 = vmatmul.bf16.gmra.mxu0 %v9130
        %v9755 = vpop.f32.mrf.mxu0
        %v9756 = vadd.f32 %v9691, %v9755
        %v9757 = vpop.f32.mrf.mxu0
        %v9758 = vadd.f32 %v9693, %v9757
        %9759 = vmatmul.bf16.gmra.mxu0 %v9135
        %v9760 = vpop.f32.mrf.mxu0
        %v9761 = vadd.f32 %v9696, %v9760
        %v9762 = vpop.f32.mrf.mxu0
        %v9763 = vadd.f32 %v9698, %v9762
        %9764 = vmatmul.bf16.gmra.mxu0 %v9140
        %v9765 = vpop.f32.mrf.mxu0
        %v9766 = vadd.f32 %v9701, %v9765
        %v9767 = vpop.f32.mrf.mxu0
        %v9768 = vadd.f32 %v9703, %v9767
        %9769 = vmatmul.bf16.gmra.mxu0 %v9145
        %v9770 = vpop.f32.mrf.mxu0
        %v9771 = vadd.f32 %v9706, %v9770
        %v9772 = vpop.f32.mrf.mxu0
        %v9773 = vadd.f32 %v9708, %v9772
        %9774 = vmatmul.bf16.gmra.mxu0 %v9150
        %v9775 = vpop.f32.mrf.mxu0
        %v9776 = vadd.f32 %v9711, %v9775
        %v9777 = vpop.f32.mrf.mxu0
        %v9778 = vadd.f32 %v9713, %v9777
        %9779 = vmatmul.bf16.gmra.mxu0 %v9155
        %v9780 = vpop.f32.mrf.mxu0
        %v9781 = vadd.f32 %v9716, %v9780
        %v9782 = vpop.f32.mrf.mxu0
        %v9783 = vadd.f32 %v9718, %v9782
        %9784 = vmatmul.bf16.gmra.mxu0 %v9160
        %v9785 = vpop.f32.mrf.mxu0
        %v9786 = vadd.f32 %v9721, %v9785
        %v9787 = vpop.f32.mrf.mxu0
        %v9788 = vadd.f32 %v9723, %v9787
        %9789 = vmatmul.bf16.gmra.mxu0 %v9165
        %v9790 = vpop.f32.mrf.mxu0
        %v9791 = vadd.f32 %v9726, %v9790
        %v9792 = vpop.f32.mrf.mxu0
        %v9793 = vadd.f32 %v9728, %v9792
        %9794 = vmatmul.bf16.gmra.mxu0 %v9170
        %v9795 = vpop.f32.mrf.mxu0
        %v9796 = vadd.f32 %v9731, %v9795
        %v9797 = vpop.f32.mrf.mxu0
        %v9798 = vadd.f32 %v9733, %v9797
        %9799 = vmatmul.bf16.gmra.mxu0 %v9175
        %v9800 = vpop.f32.mrf.mxu0
        %v9801 = vpop.f32.mrf.mxu0
        %9802 = vmatmul.bf16.gmra.mxu0 %v9180
        %v9803 = vpop.f32.mrf.mxu0
        %v9804 = vpop.f32.mrf.mxu0
        %9805 = vdwg.mxu0
        %v9806 = vadd.f32 %v8756, %v9751
        %v9807 = vadd.f32 %v8757, %v9753
        %v9808 = vadd.f32 %v8758, %v9756
        %v9809 = vadd.f32 %v8759, %v9758
        %v9810 = vadd.f32 %v8760, %v9761
        %v9811 = vadd.f32 %v8761, %v9763
        %v9812 = vadd.f32 %v8762, %v9766
        %v9813 = vadd.f32 %v8763, %v9768
        %v9814 = vadd.f32 %v8764, %v9771
        %v9815 = vadd.f32 %v8765, %v9773
        %v9816 = vadd.f32 %v8766, %v9776
        %v9817 = vadd.f32 %v8767, %v9778
        %v9818 = vadd.f32 %v8768, %v9781
        %v9819 = vadd.f32 %v8769, %v9783
        %v9820 = vadd.f32 %v8770, %v9786
        %v9821 = vadd.f32 %v8771, %v9788
        %v9822 = vadd.f32 %v8772, %v9791
        %v9823 = vadd.f32 %v8773, %v9793
        %v9824 = vadd.f32 %v8774, %v9796
        %v9825 = vadd.f32 %v8775, %v9798
        %s9826 = scalar_lea.vmem [#allocation3], 160
        %v9827 = vld [vmem:[%s9826] sm:$0xff]
        %v9828 = vld [vmem:[%s9826 + $0x8] sm:$0xff]
        %v9829 = vld [vmem:[%s9826 + $0x10] sm:$0xf]
        %v9830 = vld [vmem:[%s9826 + $0x14] sm:$0xff]
        %v9831 = vld [vmem:[%s9826 + $0x1c] sm:$0xff]
        %v9832 = vld [vmem:[%s9826 + $0x24] sm:$0xf]
        %v9833 = vld [vmem:[%s9826 + $0x28] sm:$0xff]
        %v9834 = vld [vmem:[%s9826 + $0x30] sm:$0xff]
        %v9835 = vld [vmem:[%s9826 + $0x38] sm:$0xf]
        %v9836 = vld [vmem:[%s9826 + $0x3c] sm:$0xff]
        %v9837 = vld [vmem:[%s9826 + $0x44] sm:$0xff]
        %v9838 = vld [vmem:[%s9826 + $0x4c] sm:$0xf]
        %v9839 = vld [vmem:[%s9826 + $0x50] sm:$0xff]
        %v9840 = vld [vmem:[%s9826 + $0x58] sm:$0xff]
        %v9841 = vld [vmem:[%s9826 + $0x60] sm:$0xf]
        %v9842 = vld [vmem:[%s9826 + $0x64] sm:$0xff]
        %v9843 = vld [vmem:[%s9826 + $0x6c] sm:$0xff]
        %v9844 = vld [vmem:[%s9826 + $0x74] sm:$0xf]
        %v9845 = vld [vmem:[%s9826 + $0x78] sm:$0xff]
        %v9846 = vld [vmem:[%s9826 + $0x80] sm:$0xff]
        %v9847 = vld [vmem:[%s9826 + $0x88] sm:$0xf]
        %v9848 = vld [vmem:[%s9826 + $0x8c] sm:$0xff]
        %v9849 = vld [vmem:[%s9826 + $0x94] sm:$0xff]
        %v9850 = vld [vmem:[%s9826 + $0x9c] sm:$0xf]
        %v9851 = vld [vmem:[%s9826 + $0xa0] sm:$0xff]
        %v9852 = vld [vmem:[%s9826 + $0xa8] sm:$0xff]
        %v9853 = vld [vmem:[%s9826 + $0xb0] sm:$0xf]
        %v9854 = vld [vmem:[%s9826 + $0xb4] sm:$0xff]
        %v9855 = vld [vmem:[%s9826 + $0xbc] sm:$0xff]
        %v9856 = vld [vmem:[%s9826 + $0xc4] sm:$0xf]
        %v9857 = vld [vmem:[%s9826 + $0xc8] sm:$0xff]
        %v9858 = vld [vmem:[%s9826 + $0xd0] sm:$0xff]
        %v9859 = vld [vmem:[%s9826 + $0xd8] sm:$0xf]
        %v9860 = vld [vmem:[%s9826 + $0xdc] sm:$0xff]
        %v9861 = vld [vmem:[%s9826 + $0xe4] sm:$0xff]
        %v9862 = vld [vmem:[%s9826 + $0xec] sm:$0xf]
        %v9863 = vld [vmem:[%s9826 + $0xf0] sm:$0xff]
        %v9864 = vld [vmem:[%s9826 + $0xf8] sm:$0xff]
        %v9865 = vld [vmem:[%s9826 + $0x100] sm:$0xf]
        %v9866 = vld [vmem:[%s9826 + $0x104] sm:$0xff]
        %v9867 = vld [vmem:[%s9826 + $0x10c] sm:$0xff]
        %v9868 = vld [vmem:[%s9826 + $0x114] sm:$0xf]
        %v9869 = vld [vmem:[%s9826 + $0x118] sm:$0xff]
        %v9870 = vld [vmem:[%s9826 + $0x120] sm:$0xff]
        %v9871 = vld [vmem:[%s9826 + $0x128] sm:$0xf]
        %v9872 = vld [vmem:[%s9826 + $0x12c] sm:$0xff]
        %v9873 = vld [vmem:[%s9826 + $0x134] sm:$0xff]
        %v9874 = vld [vmem:[%s9826 + $0x13c] sm:$0xf]
        %v9875 = vld [vmem:[%s9826 + $0x140] sm:$0xff]
        %v9876 = vld [vmem:[%s9826 + $0x148] sm:$0xff]
        %v9877 = vld [vmem:[%s9826 + $0x150] sm:$0xf]
        %v9878 = vld [vmem:[%s9826 + $0x154] sm:$0xff]
        %v9879 = vld [vmem:[%s9826 + $0x15c] sm:$0xff]
        %v9880 = vld [vmem:[%s9826 + $0x164] sm:$0xf]
        %v9881 = vld [vmem:[%s9826 + $0x168] sm:$0xff]
        %v9882 = vld [vmem:[%s9826 + $0x170] sm:$0xff]
        %v9883 = vld [vmem:[%s9826 + $0x178] sm:$0xf]
        %v9884 = vld [vmem:[%s9826 + $0x17c] sm:$0xff]
        %v9885 = vld [vmem:[%s9826 + $0x184] sm:$0xff]
        %v9886 = vld [vmem:[%s9826 + $0x18c] sm:$0xf]
        %v9887 = vld [vmem:[%s9826 + $0x190] sm:$0xff]
        %v9888 = vld [vmem:[%s9826 + $0x198] sm:$0xff]
        %v9889 = vld [vmem:[%s9826 + $0x1a0] sm:$0xf]
        %v9890 = vld [vmem:[%s9826 + $0x1a4] sm:$0xff]
        %v9891 = vld [vmem:[%s9826 + $0x1ac] sm:$0xff]
        %v9892 = vld [vmem:[%s9826 + $0x1b4] sm:$0xf]
        %v9893 = vld [vmem:[%s9826 + $0x1b8] sm:$0xff]
        %v9894 = vld [vmem:[%s9826 + $0x1c0] sm:$0xff]
        %v9895 = vld [vmem:[%s9826 + $0x1c8] sm:$0xf]
        %v9896 = vld [vmem:[%s9826 + $0x1cc] sm:$0xff]
        %v9897 = vld [vmem:[%s9826 + $0x1d4] sm:$0xff]
        %v9898 = vld [vmem:[%s9826 + $0x1dc] sm:$0xf]
        %v9899 = vld [vmem:[#allocation4 + $0x500] sm:$0xf]
        %v9900 = vld [vmem:[#allocation4 + $0x504] sm:$0xf]
        %v9901 = vld [vmem:[#allocation4 + $0x508] sm:$0xf]
        %v9902 = vld [vmem:[#allocation4 + $0x50c] sm:$0xf]
        %v9903 = vld [vmem:[#allocation4 + $0x510] sm:$0xf]
        %v9904 = vld [vmem:[#allocation4 + $0x514] sm:$0xf]
        %v9905 = vld [vmem:[#allocation4 + $0x518] sm:$0xf]
        %v9906 = vld [vmem:[#allocation4 + $0x51c] sm:$0xf]
        %v9907 = vld [vmem:[#allocation4 + $0x520] sm:$0xf]
        %v9908 = vld [vmem:[#allocation4 + $0x524] sm:$0xf]
        %v9909 = vld [vmem:[#allocation4 + $0x528] sm:$0xf]
        %v9910 = vld [vmem:[#allocation4 + $0x52c] sm:$0xf]
        %v9911 = vld [vmem:[#allocation4 + $0x530] sm:$0xf]
        %v9912 = vld [vmem:[#allocation4 + $0x534] sm:$0xf]
        %v9913 = vld [vmem:[#allocation4 + $0x538] sm:$0xf]
        %v9914 = vld [vmem:[#allocation4 + $0x53c] sm:$0xf]
        %v9915 = vld [vmem:[#allocation4 + $0x540] sm:$0xf]
        %v9916 = vld [vmem:[#allocation4 + $0x544] sm:$0xf]
        %v9917 = vld [vmem:[#allocation4 + $0x548] sm:$0xf]
        %v9918 = vld [vmem:[#allocation4 + $0x54c] sm:$0xf]
        %v9919 = vld [vmem:[#allocation4 + $0x550] sm:$0xf]
        %v9920 = vld [vmem:[#allocation4 + $0x554] sm:$0xf]
        %v9921 = vld [vmem:[#allocation4 + $0x558] sm:$0xf]
        %v9922 = vld [vmem:[#allocation4 + $0x55c] sm:$0xf]
        %v9923 = vld [vmem:[#allocation4 + $0x560] sm:$0xf]
        %v9924 = vld [vmem:[#allocation4 + $0x564] sm:$0xf]
        %v9925 = vld [vmem:[#allocation4 + $0x568] sm:$0xf]
        %v9926 = vld [vmem:[#allocation4 + $0x56c] sm:$0xf]
        %v9927 = vld [vmem:[#allocation4 + $0x570] sm:$0xf]
        %v9928 = vld [vmem:[#allocation4 + $0x574] sm:$0xf]
        %v9929 = vld [vmem:[#allocation4 + $0x578] sm:$0xf]
        %v9930 = vld [vmem:[#allocation4 + $0x57c] sm:$0xf]
        %v9931 = vld [vmem:[#allocation4 + $0x580] sm:$0xf]
        %v9932 = vld [vmem:[#allocation4 + $0x584] sm:$0xf]
        %v9933 = vld [vmem:[#allocation4 + $0x588] sm:$0xf]
        %v9934 = vld [vmem:[#allocation4 + $0x58c] sm:$0xf]
        %v9935 = vld [vmem:[#allocation4 + $0x590] sm:$0xf]
        %v9936 = vld [vmem:[#allocation4 + $0x594] sm:$0xf]
        %v9937 = vld [vmem:[#allocation4 + $0x598] sm:$0xf]
        %v9938 = vld [vmem:[#allocation4 + $0x59c] sm:$0xf]
        %v9939 = vld [vmem:[#allocation4 + $0x5a0] sm:$0xf]
        %v9940 = vld [vmem:[#allocation4 + $0x5a4] sm:$0xf]
        %v9941 = vld [vmem:[#allocation4 + $0x5a8] sm:$0xf]
        %v9942 = vld [vmem:[#allocation4 + $0x5ac] sm:$0xf]
        %v9943 = vld [vmem:[#allocation4 + $0x5b0] sm:$0xf]
        %v9944 = vld [vmem:[#allocation4 + $0x5b4] sm:$0xf]
        %v9945 = vld [vmem:[#allocation4 + $0x5b8] sm:$0xf]
        %v9946 = vld [vmem:[#allocation4 + $0x5bc] sm:$0xf]
        %v9947 = vld [vmem:[#allocation4 + $0x5c0] sm:$0xf]
        %v9948 = vld [vmem:[#allocation4 + $0x5c4] sm:$0xf]
        %v9949 = vld [vmem:[#allocation4 + $0x5c8] sm:$0xf]
        %v9950 = vld [vmem:[#allocation4 + $0x5cc] sm:$0xf]
        %v9951 = vld [vmem:[#allocation4 + $0x5d0] sm:$0xf]
        %v9952 = vld [vmem:[#allocation4 + $0x5d4] sm:$0xf]
        %v9953 = vld [vmem:[#allocation4 + $0x5d8] sm:$0xf]
        %v9954 = vld [vmem:[#allocation4 + $0x5dc] sm:$0xf]
        %v9955 = vld [vmem:[#allocation4 + $0x5e0] sm:$0xf]
        %v9956 = vld [vmem:[#allocation4 + $0x5e4] sm:$0xf]
        %v9957 = vld [vmem:[#allocation4 + $0x5e8] sm:$0xf]
        %v9958 = vld [vmem:[#allocation4 + $0x5ec] sm:$0xf]
        %v9959 = vld [vmem:[#allocation4 + $0x5f0] sm:$0xf]
        %v9960 = vld [vmem:[#allocation4 + $0x5f4] sm:$0xf]
        %v9961 = vld [vmem:[#allocation4 + $0x5f8] sm:$0xf]
        %v9962 = vld [vmem:[#allocation4 + $0x5fc] sm:$0xf]
        %v9963 = vld [vmem:[#allocation4 + $0x600] sm:$0xf]
        %v9964 = vld [vmem:[#allocation4 + $0x604] sm:$0xf]
        %v9965 = vld [vmem:[#allocation4 + $0x608] sm:$0xf]
        %v9966 = vld [vmem:[#allocation4 + $0x60c] sm:$0xf]
        %v9967 = vld [vmem:[#allocation4 + $0x610] sm:$0xf]
        %v9968 = vld [vmem:[#allocation4 + $0x614] sm:$0xf]
        %v9969 = vld [vmem:[#allocation4 + $0x618] sm:$0xf]
        %v9970 = vld [vmem:[#allocation4 + $0x61c] sm:$0xf]
        %v9971 = vld [vmem:[#allocation4 + $0x620] sm:$0xf]
        %v9972 = vld [vmem:[#allocation4 + $0x624] sm:$0xf]
        %v9973 = vld [vmem:[#allocation4 + $0x628] sm:$0xf]
        %v9974 = vld [vmem:[#allocation4 + $0x62c] sm:$0xf]
        %v9975 = vld [vmem:[#allocation4 + $0x630] sm:$0xf]
        %v9976 = vld [vmem:[#allocation4 + $0x634] sm:$0xf]
        %v9977 = vld [vmem:[#allocation4 + $0x638] sm:$0xf]
        %v9978 = vld [vmem:[#allocation4 + $0x63c] sm:$0xf]
        %v10051 = vunpack.c.l.b16 %v9827
        %v10052 = vunpack.c.h.b16 %v9827
        %v10053 = vunpack.c.l.b16 %v9828
        %v10054 = vunpack.c.h.b16 %v9828
        %v10055 = vunpack.c.l.b16 %v9829
        %v10056 = vunpack.c.l.b16 %v9830
        %v10057 = vunpack.c.h.b16 %v9830
        %v10058 = vunpack.c.l.b16 %v9831
        %v10059 = vunpack.c.h.b16 %v9831
        %v10060 = vunpack.c.l.b16 %v9832
        %v10061 = vunpack.c.l.b16 %v9833
        %v10062 = vunpack.c.h.b16 %v9833
        %v10063 = vunpack.c.l.b16 %v9834
        %v10064 = vunpack.c.h.b16 %v9834
        %v10065 = vunpack.c.l.b16 %v9835
        %v10066 = vunpack.c.l.b16 %v9836
        %v10067 = vunpack.c.h.b16 %v9836
        %v10068 = vunpack.c.l.b16 %v9837
        %v10069 = vunpack.c.h.b16 %v9837
        %v10070 = vunpack.c.l.b16 %v9838
        %v10071 = vunpack.c.l.b16 %v9839
        %v10072 = vunpack.c.h.b16 %v9839
        %v10073 = vunpack.c.l.b16 %v9840
        %v10074 = vunpack.c.h.b16 %v9840
        %v10075 = vunpack.c.l.b16 %v9841
        %v10076 = vunpack.c.l.b16 %v9842
        %v10077 = vunpack.c.h.b16 %v9842
        %v10078 = vunpack.c.l.b16 %v9843
        %v10079 = vunpack.c.h.b16 %v9843
        %v10080 = vunpack.c.l.b16 %v9844
        %v10081 = vunpack.c.l.b16 %v9845
        %v10082 = vunpack.c.h.b16 %v9845
        %v10083 = vunpack.c.l.b16 %v9846
        %v10084 = vunpack.c.h.b16 %v9846
        %v10085 = vunpack.c.l.b16 %v9847
        %v10086 = vunpack.c.l.b16 %v9848
        %v10087 = vunpack.c.h.b16 %v9848
        %v10088 = vunpack.c.l.b16 %v9849
        %v10089 = vunpack.c.h.b16 %v9849
        %v10090 = vunpack.c.l.b16 %v9850
        %v10091 = vunpack.c.l.b16 %v9851
        %v10092 = vunpack.c.h.b16 %v9851
        %v10093 = vunpack.c.l.b16 %v9852
        %v10094 = vunpack.c.h.b16 %v9852
        %v10095 = vunpack.c.l.b16 %v9853
        %v10096 = vunpack.c.l.b16 %v9854
        %v10097 = vunpack.c.h.b16 %v9854
        %v10098 = vunpack.c.l.b16 %v9855
        %v10099 = vunpack.c.h.b16 %v9855
        %v10100 = vunpack.c.l.b16 %v9856
        %v10101 = vunpack.c.l.b16 %v9857
        %v10102 = vunpack.c.h.b16 %v9857
        %v10103 = vunpack.c.l.b16 %v9858
        %v10104 = vunpack.c.h.b16 %v9858
        %v10105 = vunpack.c.l.b16 %v9859
        %v10106 = vunpack.c.l.b16 %v9860
        %v10107 = vunpack.c.h.b16 %v9860
        %v10108 = vunpack.c.l.b16 %v9861
        %v10109 = vunpack.c.h.b16 %v9861
        %v10110 = vunpack.c.l.b16 %v9862
        %v10111 = vunpack.c.l.b16 %v9863
        %v10112 = vunpack.c.h.b16 %v9863
        %v10113 = vunpack.c.l.b16 %v9864
        %v10114 = vunpack.c.h.b16 %v9864
        %v10115 = vunpack.c.l.b16 %v9865
        %v10116 = vunpack.c.l.b16 %v9866
        %v10117 = vunpack.c.h.b16 %v9866
        %v10118 = vunpack.c.l.b16 %v9867
        %v10119 = vunpack.c.h.b16 %v9867
        %v10120 = vunpack.c.l.b16 %v9868
        %v10121 = vunpack.c.l.b16 %v9869
        %v10122 = vunpack.c.h.b16 %v9869
        %v10123 = vunpack.c.l.b16 %v9870
        %v10124 = vunpack.c.h.b16 %v9870
        %v10125 = vunpack.c.l.b16 %v9871
        %v10126 = vunpack.c.l.b16 %v9872
        %v10127 = vunpack.c.h.b16 %v9872
        %v10128 = vunpack.c.l.b16 %v9873
        %v10129 = vunpack.c.h.b16 %v9873
        %v10130 = vunpack.c.l.b16 %v9874
        %v10131 = vunpack.c.l.b16 %v9875
        %v10132 = vunpack.c.h.b16 %v9875
        %v10133 = vunpack.c.l.b16 %v9876
        %v10134 = vunpack.c.h.b16 %v9876
        %v10135 = vunpack.c.l.b16 %v9877
        %v10136 = vunpack.c.l.b16 %v9878
        %v10137 = vunpack.c.h.b16 %v9878
        %v10138 = vunpack.c.l.b16 %v9879
        %v10139 = vunpack.c.h.b16 %v9879
        %v10140 = vunpack.c.l.b16 %v9880
        %v10141 = vunpack.c.l.b16 %v9881
        %v10142 = vunpack.c.h.b16 %v9881
        %v10143 = vunpack.c.l.b16 %v9882
        %v10144 = vunpack.c.h.b16 %v9882
        %v10145 = vunpack.c.l.b16 %v9883
        %v10146 = vunpack.c.l.b16 %v9884
        %v10147 = vunpack.c.h.b16 %v9884
        %v10148 = vunpack.c.l.b16 %v9885
        %v10149 = vunpack.c.h.b16 %v9885
        %v10150 = vunpack.c.l.b16 %v9886
        %v10151 = vunpack.c.l.b16 %v9887
        %v10152 = vunpack.c.h.b16 %v9887
        %v10153 = vunpack.c.l.b16 %v9888
        %v10154 = vunpack.c.h.b16 %v9888
        %v10155 = vunpack.c.l.b16 %v9889
        %v10156 = vunpack.c.l.b16 %v9890
        %v10157 = vunpack.c.h.b16 %v9890
        %v10158 = vunpack.c.l.b16 %v9891
        %v10159 = vunpack.c.h.b16 %v9891
        %v10160 = vunpack.c.l.b16 %v9892
        %v10161 = vunpack.c.l.b16 %v9893
        %v10162 = vunpack.c.h.b16 %v9893
        %v10163 = vunpack.c.l.b16 %v9894
        %v10164 = vunpack.c.h.b16 %v9894
        %v10165 = vunpack.c.l.b16 %v9895
        %v10166 = vunpack.c.l.b16 %v9896
        %v10167 = vunpack.c.h.b16 %v9896
        %v10168 = vunpack.c.l.b16 %v9897
        %v10169 = vunpack.c.h.b16 %v9897
        %v10170 = vunpack.c.l.b16 %v9898
        %v10171 = vpack.c.b16 %v10056, %v10051
        %v10172 = vpack.c.b16 %v10057, %v10052
        %v10173 = vpack.c.b16 %v10058, %v10053
        %v10174 = vpack.c.b16 %v10059, %v10054
        %v10175 = vpack.c.b16 %v10060, %v10055
        %v10176 = vpack.c.b16 %v10066, %v10061
        %v10177 = vpack.c.b16 %v10067, %v10062
        %v10178 = vpack.c.b16 %v10068, %v10063
        %v10179 = vpack.c.b16 %v10069, %v10064
        %v10180 = vpack.c.b16 %v10070, %v10065
        %v10181 = vpack.c.b16 %v10076, %v10071
        %v10182 = vpack.c.b16 %v10077, %v10072
        %v10183 = vpack.c.b16 %v10078, %v10073
        %v10184 = vpack.c.b16 %v10079, %v10074
        %v10185 = vpack.c.b16 %v10080, %v10075
        %v10186 = vpack.c.b16 %v10086, %v10081
        %v10187 = vpack.c.b16 %v10087, %v10082
        %v10188 = vpack.c.b16 %v10088, %v10083
        %v10189 = vpack.c.b16 %v10089, %v10084
        %v10190 = vpack.c.b16 %v10090, %v10085
        %v10191 = vpack.c.b16 %v10096, %v10091
        %v10192 = vpack.c.b16 %v10097, %v10092
        %v10193 = vpack.c.b16 %v10098, %v10093
        %v10194 = vpack.c.b16 %v10099, %v10094
        %v10195 = vpack.c.b16 %v10100, %v10095
        %v10196 = vpack.c.b16 %v10106, %v10101
        %v10197 = vpack.c.b16 %v10107, %v10102
        %v10198 = vpack.c.b16 %v10108, %v10103
        %v10199 = vpack.c.b16 %v10109, %v10104
        %v10200 = vpack.c.b16 %v10110, %v10105
        %v10201 = vpack.c.b16 %v10116, %v10111
        %v10202 = vpack.c.b16 %v10117, %v10112
        %v10203 = vpack.c.b16 %v10118, %v10113
        %v10204 = vpack.c.b16 %v10119, %v10114
        %v10205 = vpack.c.b16 %v10120, %v10115
        %v10206 = vpack.c.b16 %v10126, %v10121
        %v10207 = vpack.c.b16 %v10127, %v10122
        %v10208 = vpack.c.b16 %v10128, %v10123
        %v10209 = vpack.c.b16 %v10129, %v10124
        %v10210 = vpack.c.b16 %v10130, %v10125
        %v10211 = vpack.c.b16 %v10136, %v10131
        %v10212 = vpack.c.b16 %v10137, %v10132
        %v10213 = vpack.c.b16 %v10138, %v10133
        %v10214 = vpack.c.b16 %v10139, %v10134
        %v10215 = vpack.c.b16 %v10140, %v10135
        %v10216 = vpack.c.b16 %v10146, %v10141
        %v10217 = vpack.c.b16 %v10147, %v10142
        %v10218 = vpack.c.b16 %v10148, %v10143
        %v10219 = vpack.c.b16 %v10149, %v10144
        %v10220 = vpack.c.b16 %v10150, %v10145
        %v10221 = vpack.c.b16 %v10156, %v10151
        %v10222 = vpack.c.b16 %v10157, %v10152
        %v10223 = vpack.c.b16 %v10158, %v10153
        %v10224 = vpack.c.b16 %v10159, %v10154
        %v10225 = vpack.c.b16 %v10160, %v10155
        %v10226 = vpack.c.b16 %v10166, %v10161
        %v10227 = vpack.c.b16 %v10167, %v10162
        %v10228 = vpack.c.b16 %v10168, %v10163
        %v10229 = vpack.c.b16 %v10169, %v10164
        %v10230 = vpack.c.b16 %v10170, %v10165
        %v10371 = vunpack.c.l.b16 %v9899
        %v10372 = vunpack.c.l.b16 %v9900
        %v10373 = vunpack.c.l.b16 %v9901
        %v10374 = vunpack.c.l.b16 %v9902
        %v10375 = vunpack.c.l.b16 %v9903
        %v10376 = vunpack.c.l.b16 %v9904
        %v10377 = vunpack.c.l.b16 %v9905
        %v10378 = vunpack.c.l.b16 %v9906
        %v10379 = vunpack.c.l.b16 %v9907
        %v10380 = vunpack.c.l.b16 %v9908
        %v10381 = vunpack.c.l.b16 %v9909
        %v10382 = vunpack.c.l.b16 %v9910
        %v10383 = vunpack.c.l.b16 %v9911
        %v10384 = vunpack.c.l.b16 %v9912
        %v10385 = vunpack.c.l.b16 %v9913
        %v10386 = vunpack.c.l.b16 %v9914
        %v10387 = vunpack.c.l.b16 %v9915
        %v10388 = vunpack.c.l.b16 %v9916
        %v10389 = vunpack.c.l.b16 %v9917
        %v10390 = vunpack.c.l.b16 %v9918
        %v10391 = vunpack.c.l.b16 %v9919
        %v10392 = vunpack.c.l.b16 %v9920
        %v10393 = vunpack.c.l.b16 %v9921
        %v10394 = vunpack.c.l.b16 %v9922
        %v10395 = vunpack.c.l.b16 %v9923
        %v10396 = vunpack.c.l.b16 %v9924
        %v10397 = vunpack.c.l.b16 %v9925
        %v10398 = vunpack.c.l.b16 %v9926
        %v10399 = vunpack.c.l.b16 %v9927
        %v10400 = vunpack.c.l.b16 %v9928
        %v10401 = vunpack.c.l.b16 %v9929
        %v10402 = vunpack.c.l.b16 %v9930
        %v10403 = vunpack.c.l.b16 %v9931
        %v10404 = vunpack.c.l.b16 %v9932
        %v10405 = vunpack.c.l.b16 %v9933
        %v10406 = vunpack.c.l.b16 %v9934
        %v10407 = vunpack.c.l.b16 %v9935
        %v10408 = vunpack.c.l.b16 %v9936
        %v10409 = vunpack.c.l.b16 %v9937
        %v10410 = vunpack.c.l.b16 %v9938
        %v10411 = vunpack.c.l.b16 %v9939
        %v10412 = vunpack.c.l.b16 %v9940
        %v10413 = vunpack.c.l.b16 %v9941
        %v10414 = vunpack.c.l.b16 %v9942
        %v10415 = vunpack.c.l.b16 %v9943
        %v10416 = vunpack.c.l.b16 %v9944
        %v10417 = vunpack.c.l.b16 %v9945
        %v10418 = vunpack.c.l.b16 %v9946
        %v10419 = vunpack.c.l.b16 %v9947
        %v10420 = vunpack.c.l.b16 %v9948
        %v10421 = vunpack.c.l.b16 %v9949
        %v10422 = vunpack.c.l.b16 %v9950
        %v10423 = vunpack.c.l.b16 %v9951
        %v10424 = vunpack.c.l.b16 %v9952
        %v10425 = vunpack.c.l.b16 %v9953
        %v10426 = vunpack.c.l.b16 %v9954
        %v10427 = vunpack.c.l.b16 %v9955
        %v10428 = vunpack.c.l.b16 %v9956
        %v10429 = vunpack.c.l.b16 %v9957
        %v10430 = vunpack.c.l.b16 %v9958
        %v10431 = vunpack.c.l.b16 %v9959
        %v10432 = vunpack.c.l.b16 %v9960
        %v10433 = vunpack.c.l.b16 %v9961
        %v10434 = vunpack.c.l.b16 %v9962
        %v10435 = vunpack.c.l.b16 %v9963
        %v10436 = vunpack.c.l.b16 %v9964
        %v10437 = vunpack.c.l.b16 %v9965
        %v10438 = vunpack.c.l.b16 %v9966
        %v10439 = vunpack.c.l.b16 %v9967
        %v10440 = vunpack.c.l.b16 %v9968
        %v10441 = vunpack.c.l.b16 %v9969
        %v10442 = vunpack.c.l.b16 %v9970
        %v10443 = vunpack.c.l.b16 %v9971
        %v10444 = vunpack.c.l.b16 %v9972
        %v10445 = vunpack.c.l.b16 %v9973
        %v10446 = vunpack.c.l.b16 %v9974
        %v10447 = vunpack.c.l.b16 %v9975
        %v10448 = vunpack.c.l.b16 %v9976
        %v10449 = vunpack.c.l.b16 %v9977
        %v10450 = vunpack.c.l.b16 %v9978
        %v10451 = vpack.c.b16 %v10372, %v10371
        %v10452 = vpack.c.b16 %v10374, %v10373
        %v10453 = vpack.c.b16 %v10376, %v10375
        %v10454 = vpack.c.b16 %v10378, %v10377
        %v10455 = vpack.c.b16 %v10380, %v10379
        %v10456 = vpack.c.b16 %v10382, %v10381
        %v10457 = vpack.c.b16 %v10384, %v10383
        %v10458 = vpack.c.b16 %v10386, %v10385
        %v10459 = vpack.c.b16 %v10388, %v10387
        %v10460 = vpack.c.b16 %v10390, %v10389
        %v10461 = vpack.c.b16 %v10392, %v10391
        %v10462 = vpack.c.b16 %v10394, %v10393
        %v10463 = vpack.c.b16 %v10396, %v10395
        %v10464 = vpack.c.b16 %v10398, %v10397
        %v10465 = vpack.c.b16 %v10400, %v10399
        %v10466 = vpack.c.b16 %v10402, %v10401
        %v10467 = vpack.c.b16 %v10404, %v10403
        %v10468 = vpack.c.b16 %v10406, %v10405
        %v10469 = vpack.c.b16 %v10408, %v10407
        %v10470 = vpack.c.b16 %v10410, %v10409
        %v10471 = vpack.c.b16 %v10412, %v10411
        %v10472 = vpack.c.b16 %v10414, %v10413
        %v10473 = vpack.c.b16 %v10416, %v10415
        %v10474 = vpack.c.b16 %v10418, %v10417
        %v10475 = vpack.c.b16 %v10420, %v10419
        %v10476 = vpack.c.b16 %v10422, %v10421
        %v10477 = vpack.c.b16 %v10424, %v10423
        %v10478 = vpack.c.b16 %v10426, %v10425
        %v10479 = vpack.c.b16 %v10428, %v10427
        %v10480 = vpack.c.b16 %v10430, %v10429
        %v10481 = vpack.c.b16 %v10432, %v10431
        %v10482 = vpack.c.b16 %v10434, %v10433
        %v10483 = vpack.c.b16 %v10436, %v10435
        %v10484 = vpack.c.b16 %v10438, %v10437
        %v10485 = vpack.c.b16 %v10440, %v10439
        %v10486 = vpack.c.b16 %v10442, %v10441
        %v10487 = vpack.c.b16 %v10444, %v10443
        %v10488 = vpack.c.b16 %v10446, %v10445
        %v10489 = vpack.c.b16 %v10448, %v10447
        %v10490 = vpack.c.b16 %v10450, %v10449
        %10531 = vmatpush.bf16.msra.mxu0 %v10458
        %10532 = vmatpush.bf16.msra.mxu0 %v10457
        %10533 = vmatpush.bf16.msra.mxu0 %v10456
        %10534 = vmatpush.bf16.msra.mxu0 %v10455
        %10535 = vmatpush.bf16.msra.mxu0 %v10454
        %10536 = vmatpush.bf16.msra.mxu0 %v10453
        %10537 = vmatpush.bf16.msra.mxu0 %v10452
        %10538 = vmatpush.bf16.msra.mxu0 %v10451
        %10539 = vmatmul.bf16.gmra.mxu0 %v10171
        %v10540 = vpop.f32.mrf.mxu0
        %v10541 = vadd.f32 0.0, %v10540
        %v10542 = vpop.f32.mrf.mxu0
        %v10543 = vadd.f32 0.0, %v10542
        %10544 = vmatmul.bf16.gmra.mxu0 %v10176
        %v10545 = vpop.f32.mrf.mxu0
        %v10546 = vadd.f32 0.0, %v10545
        %v10547 = vpop.f32.mrf.mxu0
        %v10548 = vadd.f32 0.0, %v10547
        %10549 = vmatmul.bf16.gmra.mxu0 %v10181
        %v10550 = vpop.f32.mrf.mxu0
        %v10551 = vadd.f32 0.0, %v10550
        %v10552 = vpop.f32.mrf.mxu0
        %v10553 = vadd.f32 0.0, %v10552
        %10554 = vmatmul.bf16.gmra.mxu0 %v10186
        %v10555 = vpop.f32.mrf.mxu0
        %v10556 = vadd.f32 0.0, %v10555
        %v10557 = vpop.f32.mrf.mxu0
        %v10558 = vadd.f32 0.0, %v10557
        %10559 = vmatmul.bf16.gmra.mxu0 %v10191
        %v10560 = vpop.f32.mrf.mxu0
        %v10561 = vadd.f32 0.0, %v10560
        %v10562 = vpop.f32.mrf.mxu0
        %v10563 = vadd.f32 0.0, %v10562
        %10564 = vmatmul.bf16.gmra.mxu0 %v10196
        %v10565 = vpop.f32.mrf.mxu0
        %v10566 = vadd.f32 0.0, %v10565
        %v10567 = vpop.f32.mrf.mxu0
        %v10568 = vadd.f32 0.0, %v10567
        %10569 = vmatmul.bf16.gmra.mxu0 %v10201
        %v10570 = vpop.f32.mrf.mxu0
        %v10571 = vadd.f32 0.0, %v10570
        %v10572 = vpop.f32.mrf.mxu0
        %v10573 = vadd.f32 0.0, %v10572
        %10574 = vmatmul.bf16.gmra.mxu0 %v10206
        %v10575 = vpop.f32.mrf.mxu0
        %v10576 = vadd.f32 0.0, %v10575
        %v10577 = vpop.f32.mrf.mxu0
        %v10578 = vadd.f32 0.0, %v10577
        %10579 = vmatmul.bf16.gmra.mxu0 %v10211
        %v10580 = vpop.f32.mrf.mxu0
        %v10581 = vadd.f32 0.0, %v10580
        %v10582 = vpop.f32.mrf.mxu0
        %v10583 = vadd.f32 0.0, %v10582
        %10584 = vmatmul.bf16.gmra.mxu0 %v10216
        %v10585 = vpop.f32.mrf.mxu0
        %v10586 = vadd.f32 0.0, %v10585
        %v10587 = vpop.f32.mrf.mxu0
        %v10588 = vadd.f32 0.0, %v10587
        %10589 = vmatmul.bf16.gmra.mxu0 %v10221
        %v10590 = vpop.f32.mrf.mxu0
        %v10591 = vpop.f32.mrf.mxu0
        %10592 = vmatmul.bf16.gmra.mxu0 %v10226
        %v10593 = vpop.f32.mrf.mxu0
        %v10594 = vpop.f32.mrf.mxu0
        %10595 = vdwg.mxu0
        %10596 = vmatpush.bf16.msra.mxu0 %v10466
        %10597 = vmatpush.bf16.msra.mxu0 %v10465
        %10598 = vmatpush.bf16.msra.mxu0 %v10464
        %10599 = vmatpush.bf16.msra.mxu0 %v10463
        %10600 = vmatpush.bf16.msra.mxu0 %v10462
        %10601 = vmatpush.bf16.msra.mxu0 %v10461
        %10602 = vmatpush.bf16.msra.mxu0 %v10460
        %10603 = vmatpush.bf16.msra.mxu0 %v10459
        %10604 = vmatmul.bf16.gmra.mxu0 %v10172
        %v10605 = vpop.f32.mrf.mxu0
        %v10606 = vadd.f32 %v10541, %v10605
        %v10607 = vpop.f32.mrf.mxu0
        %v10608 = vadd.f32 %v10543, %v10607
        %10609 = vmatmul.bf16.gmra.mxu0 %v10177
        %v10610 = vpop.f32.mrf.mxu0
        %v10611 = vadd.f32 %v10546, %v10610
        %v10612 = vpop.f32.mrf.mxu0
        %v10613 = vadd.f32 %v10548, %v10612
        %10614 = vmatmul.bf16.gmra.mxu0 %v10182
        %v10615 = vpop.f32.mrf.mxu0
        %v10616 = vadd.f32 %v10551, %v10615
        %v10617 = vpop.f32.mrf.mxu0
        %v10618 = vadd.f32 %v10553, %v10617
        %10619 = vmatmul.bf16.gmra.mxu0 %v10187
        %v10620 = vpop.f32.mrf.mxu0
        %v10621 = vadd.f32 %v10556, %v10620
        %v10622 = vpop.f32.mrf.mxu0
        %v10623 = vadd.f32 %v10558, %v10622
        %10624 = vmatmul.bf16.gmra.mxu0 %v10192
        %v10625 = vpop.f32.mrf.mxu0
        %v10626 = vadd.f32 %v10561, %v10625
        %v10627 = vpop.f32.mrf.mxu0
        %v10628 = vadd.f32 %v10563, %v10627
        %10629 = vmatmul.bf16.gmra.mxu0 %v10197
        %v10630 = vpop.f32.mrf.mxu0
        %v10631 = vadd.f32 %v10566, %v10630
        %v10632 = vpop.f32.mrf.mxu0
        %v10633 = vadd.f32 %v10568, %v10632
        %10634 = vmatmul.bf16.gmra.mxu0 %v10202
        %v10635 = vpop.f32.mrf.mxu0
        %v10636 = vadd.f32 %v10571, %v10635
        %v10637 = vpop.f32.mrf.mxu0
        %v10638 = vadd.f32 %v10573, %v10637
        %10639 = vmatmul.bf16.gmra.mxu0 %v10207
        %v10640 = vpop.f32.mrf.mxu0
        %v10641 = vadd.f32 %v10576, %v10640
        %v10642 = vpop.f32.mrf.mxu0
        %v10643 = vadd.f32 %v10578, %v10642
        %10644 = vmatmul.bf16.gmra.mxu0 %v10212
        %v10645 = vpop.f32.mrf.mxu0
        %v10646 = vadd.f32 %v10581, %v10645
        %v10647 = vpop.f32.mrf.mxu0
        %v10648 = vadd.f32 %v10583, %v10647
        %10649 = vmatmul.bf16.gmra.mxu0 %v10217
        %v10650 = vpop.f32.mrf.mxu0
        %v10651 = vadd.f32 %v10586, %v10650
        %v10652 = vpop.f32.mrf.mxu0
        %v10653 = vadd.f32 %v10588, %v10652
        %10654 = vmatmul.bf16.gmra.mxu0 %v10222
        %v10655 = vpop.f32.mrf.mxu0
        %v10656 = vpop.f32.mrf.mxu0
        %10657 = vmatmul.bf16.gmra.mxu0 %v10227
        %v10658 = vpop.f32.mrf.mxu0
        %v10659 = vpop.f32.mrf.mxu0
        %10660 = vdwg.mxu0
        %10661 = vmatpush.bf16.msra.mxu0 %v10474
        %10662 = vmatpush.bf16.msra.mxu0 %v10473
        %10663 = vmatpush.bf16.msra.mxu0 %v10472
        %10664 = vmatpush.bf16.msra.mxu0 %v10471
        %10665 = vmatpush.bf16.msra.mxu0 %v10470
        %10666 = vmatpush.bf16.msra.mxu0 %v10469
        %10667 = vmatpush.bf16.msra.mxu0 %v10468
        %10668 = vmatpush.bf16.msra.mxu0 %v10467
        %10669 = vmatmul.bf16.gmra.mxu0 %v10173
        %v10670 = vpop.f32.mrf.mxu0
        %v10671 = vadd.f32 %v10606, %v10670
        %v10672 = vpop.f32.mrf.mxu0
        %v10673 = vadd.f32 %v10608, %v10672
        %10674 = vmatmul.bf16.gmra.mxu0 %v10178
        %v10675 = vpop.f32.mrf.mxu0
        %v10676 = vadd.f32 %v10611, %v10675
        %v10677 = vpop.f32.mrf.mxu0
        %v10678 = vadd.f32 %v10613, %v10677
        %10679 = vmatmul.bf16.gmra.mxu0 %v10183
        %v10680 = vpop.f32.mrf.mxu0
        %v10681 = vadd.f32 %v10616, %v10680
        %v10682 = vpop.f32.mrf.mxu0
        %v10683 = vadd.f32 %v10618, %v10682
        %10684 = vmatmul.bf16.gmra.mxu0 %v10188
        %v10685 = vpop.f32.mrf.mxu0
        %v10686 = vadd.f32 %v10621, %v10685
        %v10687 = vpop.f32.mrf.mxu0
        %v10688 = vadd.f32 %v10623, %v10687
        %10689 = vmatmul.bf16.gmra.mxu0 %v10193
        %v10690 = vpop.f32.mrf.mxu0
        %v10691 = vadd.f32 %v10626, %v10690
        %v10692 = vpop.f32.mrf.mxu0
        %v10693 = vadd.f32 %v10628, %v10692
        %10694 = vmatmul.bf16.gmra.mxu0 %v10198
        %v10695 = vpop.f32.mrf.mxu0
        %v10696 = vadd.f32 %v10631, %v10695
        %v10697 = vpop.f32.mrf.mxu0
        %v10698 = vadd.f32 %v10633, %v10697
        %10699 = vmatmul.bf16.gmra.mxu0 %v10203
        %v10700 = vpop.f32.mrf.mxu0
        %v10701 = vadd.f32 %v10636, %v10700
        %v10702 = vpop.f32.mrf.mxu0
        %v10703 = vadd.f32 %v10638, %v10702
        %10704 = vmatmul.bf16.gmra.mxu0 %v10208
        %v10705 = vpop.f32.mrf.mxu0
        %v10706 = vadd.f32 %v10641, %v10705
        %v10707 = vpop.f32.mrf.mxu0
        %v10708 = vadd.f32 %v10643, %v10707
        %10709 = vmatmul.bf16.gmra.mxu0 %v10213
        %v10710 = vpop.f32.mrf.mxu0
        %v10711 = vadd.f32 %v10646, %v10710
        %v10712 = vpop.f32.mrf.mxu0
        %v10713 = vadd.f32 %v10648, %v10712
        %10714 = vmatmul.bf16.gmra.mxu0 %v10218
        %v10715 = vpop.f32.mrf.mxu0
        %v10716 = vadd.f32 %v10651, %v10715
        %v10717 = vpop.f32.mrf.mxu0
        %v10718 = vadd.f32 %v10653, %v10717
        %10719 = vmatmul.bf16.gmra.mxu0 %v10223
        %v10720 = vpop.f32.mrf.mxu0
        %v10721 = vpop.f32.mrf.mxu0
        %10722 = vmatmul.bf16.gmra.mxu0 %v10228
        %v10723 = vpop.f32.mrf.mxu0
        %v10724 = vpop.f32.mrf.mxu0
        %10725 = vdwg.mxu0
        %10726 = vmatpush.bf16.msra.mxu0 %v10482
        %10727 = vmatpush.bf16.msra.mxu0 %v10481
        %10728 = vmatpush.bf16.msra.mxu0 %v10480
        %10729 = vmatpush.bf16.msra.mxu0 %v10479
        %10730 = vmatpush.bf16.msra.mxu0 %v10478
        %10731 = vmatpush.bf16.msra.mxu0 %v10477
        %10732 = vmatpush.bf16.msra.mxu0 %v10476
        %10733 = vmatpush.bf16.msra.mxu0 %v10475
        %10734 = vmatmul.bf16.gmra.mxu0 %v10174
        %v10735 = vpop.f32.mrf.mxu0
        %v10736 = vadd.f32 %v10671, %v10735
        %v10737 = vpop.f32.mrf.mxu0
        %v10738 = vadd.f32 %v10673, %v10737
        %10739 = vmatmul.bf16.gmra.mxu0 %v10179
        %v10740 = vpop.f32.mrf.mxu0
        %v10741 = vadd.f32 %v10676, %v10740
        %v10742 = vpop.f32.mrf.mxu0
        %v10743 = vadd.f32 %v10678, %v10742
        %10744 = vmatmul.bf16.gmra.mxu0 %v10184
        %v10745 = vpop.f32.mrf.mxu0
        %v10746 = vadd.f32 %v10681, %v10745
        %v10747 = vpop.f32.mrf.mxu0
        %v10748 = vadd.f32 %v10683, %v10747
        %10749 = vmatmul.bf16.gmra.mxu0 %v10189
        %v10750 = vpop.f32.mrf.mxu0
        %v10751 = vadd.f32 %v10686, %v10750
        %v10752 = vpop.f32.mrf.mxu0
        %v10753 = vadd.f32 %v10688, %v10752
        %10754 = vmatmul.bf16.gmra.mxu0 %v10194
        %v10755 = vpop.f32.mrf.mxu0
        %v10756 = vadd.f32 %v10691, %v10755
        %v10757 = vpop.f32.mrf.mxu0
        %v10758 = vadd.f32 %v10693, %v10757
        %10759 = vmatmul.bf16.gmra.mxu0 %v10199
        %v10760 = vpop.f32.mrf.mxu0
        %v10761 = vadd.f32 %v10696, %v10760
        %v10762 = vpop.f32.mrf.mxu0
        %v10763 = vadd.f32 %v10698, %v10762
        %10764 = vmatmul.bf16.gmra.mxu0 %v10204
        %v10765 = vpop.f32.mrf.mxu0
        %v10766 = vadd.f32 %v10701, %v10765
        %v10767 = vpop.f32.mrf.mxu0
        %v10768 = vadd.f32 %v10703, %v10767
        %10769 = vmatmul.bf16.gmra.mxu0 %v10209
        %v10770 = vpop.f32.mrf.mxu0
        %v10771 = vadd.f32 %v10706, %v10770
        %v10772 = vpop.f32.mrf.mxu0
        %v10773 = vadd.f32 %v10708, %v10772
        %10774 = vmatmul.bf16.gmra.mxu0 %v10214
        %v10775 = vpop.f32.mrf.mxu0
        %v10776 = vadd.f32 %v10711, %v10775
        %v10777 = vpop.f32.mrf.mxu0
        %v10778 = vadd.f32 %v10713, %v10777
        %10779 = vmatmul.bf16.gmra.mxu0 %v10219
        %v10780 = vpop.f32.mrf.mxu0
        %v10781 = vadd.f32 %v10716, %v10780
        %v10782 = vpop.f32.mrf.mxu0
        %v10783 = vadd.f32 %v10718, %v10782
        %10784 = vmatmul.bf16.gmra.mxu0 %v10224
        %v10785 = vpop.f32.mrf.mxu0
        %v10786 = vpop.f32.mrf.mxu0
        %10787 = vmatmul.bf16.gmra.mxu0 %v10229
        %v10788 = vpop.f32.mrf.mxu0
        %v10789 = vpop.f32.mrf.mxu0
        %10790 = vdwg.mxu0
        %10791 = vmatpush.bf16.msra.mxu0 %v10490
        %10792 = vmatpush.bf16.msra.mxu0 %v10489
        %10793 = vmatpush.bf16.msra.mxu0 %v10488
        %10794 = vmatpush.bf16.msra.mxu0 %v10487
        %10795 = vmatpush.bf16.msra.mxu0 %v10486
        %10796 = vmatpush.bf16.msra.mxu0 %v10485
        %10797 = vmatpush.bf16.msra.mxu0 %v10484
        %10798 = vmatpush.bf16.msra.mxu0 %v10483
        %10799 = vmatmul.bf16.gmra.mxu0 %v10175
        %v10800 = vpop.f32.mrf.mxu0
        %v10801 = vadd.f32 %v10736, %v10800
        %v10802 = vpop.f32.mrf.mxu0
        %v10803 = vadd.f32 %v10738, %v10802
        %10804 = vmatmul.bf16.gmra.mxu0 %v10180
        %v10805 = vpop.f32.mrf.mxu0
        %v10806 = vadd.f32 %v10741, %v10805
        %v10807 = vpop.f32.mrf.mxu0
        %v10808 = vadd.f32 %v10743, %v10807
        %10809 = vmatmul.bf16.gmra.mxu0 %v10185
        %v10810 = vpop.f32.mrf.mxu0
        %v10811 = vadd.f32 %v10746, %v10810
        %v10812 = vpop.f32.mrf.mxu0
        %v10813 = vadd.f32 %v10748, %v10812
        %10814 = vmatmul.bf16.gmra.mxu0 %v10190
        %v10815 = vpop.f32.mrf.mxu0
        %v10816 = vadd.f32 %v10751, %v10815
        %v10817 = vpop.f32.mrf.mxu0
        %v10818 = vadd.f32 %v10753, %v10817
        %10819 = vmatmul.bf16.gmra.mxu0 %v10195
        %v10820 = vpop.f32.mrf.mxu0
        %v10821 = vadd.f32 %v10756, %v10820
        %v10822 = vpop.f32.mrf.mxu0
        %v10823 = vadd.f32 %v10758, %v10822
        %10824 = vmatmul.bf16.gmra.mxu0 %v10200
        %v10825 = vpop.f32.mrf.mxu0
        %v10826 = vadd.f32 %v10761, %v10825
        %v10827 = vpop.f32.mrf.mxu0
        %v10828 = vadd.f32 %v10763, %v10827
        %10829 = vmatmul.bf16.gmra.mxu0 %v10205
        %v10830 = vpop.f32.mrf.mxu0
        %v10831 = vadd.f32 %v10766, %v10830
        %v10832 = vpop.f32.mrf.mxu0
        %v10833 = vadd.f32 %v10768, %v10832
        %10834 = vmatmul.bf16.gmra.mxu0 %v10210
        %v10835 = vpop.f32.mrf.mxu0
        %v10836 = vadd.f32 %v10771, %v10835
        %v10837 = vpop.f32.mrf.mxu0
        %v10838 = vadd.f32 %v10773, %v10837
        %10839 = vmatmul.bf16.gmra.mxu0 %v10215
        %v10840 = vpop.f32.mrf.mxu0
        %v10841 = vadd.f32 %v10776, %v10840
        %v10842 = vpop.f32.mrf.mxu0
        %v10843 = vadd.f32 %v10778, %v10842
        %10844 = vmatmul.bf16.gmra.mxu0 %v10220
        %v10845 = vpop.f32.mrf.mxu0
        %v10846 = vadd.f32 %v10781, %v10845
        %v10847 = vpop.f32.mrf.mxu0
        %v10848 = vadd.f32 %v10783, %v10847
        %10849 = vmatmul.bf16.gmra.mxu0 %v10225
        %v10850 = vpop.f32.mrf.mxu0
        %v10851 = vpop.f32.mrf.mxu0
        %10852 = vmatmul.bf16.gmra.mxu0 %v10230
        %v10853 = vpop.f32.mrf.mxu0
        %v10854 = vpop.f32.mrf.mxu0
        %10855 = vdwg.mxu0
        %v10856 = vadd.f32 %v9806, %v10801
        %v10857 = vadd.f32 %v9807, %v10803
        %v10858 = vadd.f32 %v9808, %v10806
        %v10859 = vadd.f32 %v9809, %v10808
        %v10860 = vadd.f32 %v9810, %v10811
        %v10861 = vadd.f32 %v9811, %v10813
        %v10862 = vadd.f32 %v9812, %v10816
        %v10863 = vadd.f32 %v9813, %v10818
        %v10864 = vadd.f32 %v9814, %v10821
        %v10865 = vadd.f32 %v9815, %v10823
        %v10866 = vadd.f32 %v9816, %v10826
        %v10867 = vadd.f32 %v9817, %v10828
        %v10868 = vadd.f32 %v9818, %v10831
        %v10869 = vadd.f32 %v9819, %v10833
        %v10870 = vadd.f32 %v9820, %v10836
        %v10871 = vadd.f32 %v9821, %v10838
        %v10872 = vadd.f32 %v9822, %v10841
        %v10873 = vadd.f32 %v9823, %v10843
        %v10874 = vadd.f32 %v9824, %v10846
        %v10875 = vadd.f32 %v9825, %v10848
        %v10876 = vld [vmem:[%s6] sm:$0x1]
        %v10878 = vperm.slane %v10876, 0
        %v10880 = vadd.f32 %v10856, %v10878
        %v10881 = vadd.f32 %v10857, %v10878
        %v10882 = vadd.f32 %v10858, %v10878
        %v10883 = vadd.f32 %v10859, %v10878
        %v10884 = vadd.f32 %v10860, %v10878
        %v10885 = vadd.f32 %v10861, %v10878
        %v10886 = vadd.f32 %v10862, %v10878
        %v10887 = vadd.f32 %v10863, %v10878
        %v10888 = vadd.f32 %v10864, %v10878
        %v10889 = vadd.f32 %v10865, %v10878
        %v10890 = vadd.f32 %v10866, %v10878
        %v10891 = vadd.f32 %v10867, %v10878
        %v10892 = vadd.f32 %v10868, %v10878
        %v10893 = vadd.f32 %v10869, %v10878
        %v10894 = vadd.f32 %v10870, %v10878
        %v10895 = vadd.f32 %v10871, %v10878
        %v10896 = vadd.f32 %v10872, %v10878
        %v10897 = vadd.f32 %v10873, %v10878
        %v10898 = vadd.f32 %v10874, %v10878
        %v10899 = vadd.f32 %v10875, %v10878
        %v10900 = vmax.f32 %v10880, 0.0
        %v10901 = vmax.f32 %v10881, 0.0
        %v10902 = vmax.f32 %v10882, 0.0
        %v10903 = vmax.f32 %v10883, 0.0
        %v10904 = vmax.f32 %v10884, 0.0
        %v10905 = vmax.f32 %v10885, 0.0
        %v10906 = vmax.f32 %v10886, 0.0
        %v10907 = vmax.f32 %v10887, 0.0
        %v10908 = vmax.f32 %v10888, 0.0
        %v10909 = vmax.f32 %v10889, 0.0
        %v10910 = vmax.f32 %v10890, 0.0
        %v10911 = vmax.f32 %v10891, 0.0
        %v10912 = vmax.f32 %v10892, 0.0
        %v10913 = vmax.f32 %v10893, 0.0
        %v10914 = vmax.f32 %v10894, 0.0
        %v10915 = vmax.f32 %v10895, 0.0
        %v10916 = vmax.f32 %v10896, 0.0
        %v10917 = vmax.f32 %v10897, 0.0
        %v10918 = vmax.f32 %v10898, 0.0
        %v10919 = vmax.f32 %v10899, 0.0
        %v10920 = vld [vmem:[%s7] sm:$0x1]
        %v10922 = vperm.slane %v10920, 0
        %v10924 = vmul.f32 %v10900, %v10922
        %v10925 = vmul.f32 %v10901, %v10922
        %v10926 = vmul.f32 %v10902, %v10922
        %v10927 = vmul.f32 %v10903, %v10922
        %v10928 = vmul.f32 %v10904, %v10922
        %v10929 = vmul.f32 %v10905, %v10922
        %v10930 = vmul.f32 %v10906, %v10922
        %v10931 = vmul.f32 %v10907, %v10922
        %v10932 = vmul.f32 %v10908, %v10922
        %v10933 = vmul.f32 %v10909, %v10922
        %v10934 = vmul.f32 %v10910, %v10922
        %v10935 = vmul.f32 %v10911, %v10922
        %v10936 = vmul.f32 %v10912, %v10922
        %v10937 = vmul.f32 %v10913, %v10922
        %v10938 = vmul.f32 %v10914, %v10922
        %v10939 = vmul.f32 %v10915, %v10922
        %v10940 = vmul.f32 %v10916, %v10922
        %v10941 = vmul.f32 %v10917, %v10922
        %v10942 = vmul.f32 %v10918, %v10922
        %v10943 = vmul.f32 %v10919, %v10922
        %v10944 = vld [vmem:[%s8] sm:$0x1]
        %v10946 = vperm.slane %v10944, 0
        %v10948 = vadd.f32 %v10924, %v10946
        %v10949 = vadd.f32 %v10925, %v10946
        %v10950 = vadd.f32 %v10926, %v10946
        %v10951 = vadd.f32 %v10927, %v10946
        %v10952 = vadd.f32 %v10928, %v10946
        %v10953 = vadd.f32 %v10929, %v10946
        %v10954 = vadd.f32 %v10930, %v10946
        %v10955 = vadd.f32 %v10931, %v10946
        %v10956 = vadd.f32 %v10932, %v10946
        %v10957 = vadd.f32 %v10933, %v10946
        %v10958 = vadd.f32 %v10934, %v10946
        %v10959 = vadd.f32 %v10935, %v10946
        %v10960 = vadd.f32 %v10936, %v10946
        %v10961 = vadd.f32 %v10937, %v10946
        %v10962 = vadd.f32 %v10938, %v10946
        %v10963 = vadd.f32 %v10939, %v10946
        %v10964 = vadd.f32 %v10940, %v10946
        %v10965 = vadd.f32 %v10941, %v10946
        %v10966 = vadd.f32 %v10942, %v10946
        %v10967 = vadd.f32 %v10943, %v10946
        %v10968 = vld [vmem:[%s10] sm:$0x1]
        %vm10969 = vcmask 1044480
        %v10970 = vsel %vm10969, %v10948, 0.0
        %v10971 = vsel %vm10969, %v10950, 0.0
        %v10972 = vadd.f32 %v10970, %v10971
        %v10973 = vsel %vm10969, %v10952, 0.0
        %v10974 = vadd.f32 %v10972, %v10973
        %v10975 = vsel %vm10969, %v10954, 0.0
        %v10976 = vadd.f32 %v10974, %v10975
        %v10977 = vsel %vm10969, %v10956, 0.0
        %v10978 = vadd.f32 %v10976, %v10977
        %v10979 = vsel %vm10969, %v10978, 0.0
        %v10980 = vrot.slane %v10979, 4
        %v10981 = vadd.f32 %v10979, %v10980
        %v10982 = vrot.slane %v10981, 2
        %v10983 = vadd.f32 %v10981, %v10982
        %v10984 = vrot.slane %v10983, 1
        %v10985 = vadd.f32 %v10983, %v10984
        %v10986 = vmul.f32 %v10985, 0.04
        %v10987 = vpack.c.bf16 %v10986, %v10986
        %v10988 = vld [vmem:[%s9] sm:$0xf]
        %v10989 = vld [vmem:[%s9 + $0x4] sm:$0xf]
        %v10990 = vld [vmem:[%s9 + $0x8] sm:$0xf]
        %v10991 = vld [vmem:[%s9 + $0xc] sm:$0xf]
        %v10992 = vld [vmem:[%s9 + $0x10] sm:$0xf]
        %v10993 = vld [vmem:[%s9 + $0x14] sm:$0xf]
        %v10994 = vld [vmem:[%s9 + $0x18] sm:$0xf]
        %v10995 = vld [vmem:[%s9 + $0x1c] sm:$0xf]
        %v10996 = vld [vmem:[%s9 + $0x20] sm:$0xf]
        %v10997 = vld [vmem:[%s9 + $0x24] sm:$0xf]
        %v10998 = vld [vmem:[%s9 + $0x28] sm:$0xf]
        %v10999 = vld [vmem:[%s9 + $0x2c] sm:$0xf]
        %v11000 = vld [vmem:[%s9 + $0x30] sm:$0xf]
        %v11001 = vld [vmem:[%s9 + $0x34] sm:$0xf]
        %v11002 = vld [vmem:[%s9 + $0x38] sm:$0xf]
        %v11003 = vld [vmem:[%s9 + $0x3c] sm:$0xf]
        %v11020 = vunpack.c.l.b16 %v10988
        %v11021 = vunpack.c.l.b16 %v10989
        %v11022 = vunpack.c.l.b16 %v10990
        %v11023 = vunpack.c.l.b16 %v10991
        %v11024 = vunpack.c.l.b16 %v10992
        %v11025 = vunpack.c.l.b16 %v10993
        %v11026 = vunpack.c.l.b16 %v10994
        %v11027 = vunpack.c.l.b16 %v10995
        %v11028 = vunpack.c.l.b16 %v10996
        %v11029 = vunpack.c.l.b16 %v10997
        %v11030 = vunpack.c.l.b16 %v10998
        %v11031 = vunpack.c.l.b16 %v10999
        %v11032 = vunpack.c.l.b16 %v11000
        %v11033 = vunpack.c.l.b16 %v11001
        %v11034 = vunpack.c.l.b16 %v11002
        %v11035 = vunpack.c.l.b16 %v11003
        %v11036 = vpack.c.b16 %v11021, %v11020
        %v11037 = vpack.c.b16 %v11023, %v11022
        %v11038 = vpack.c.b16 %v11025, %v11024
        %v11039 = vpack.c.b16 %v11027, %v11026
        %v11040 = vpack.c.b16 %v11029, %v11028
        %v11041 = vpack.c.b16 %v11031, %v11030
        %v11042 = vpack.c.b16 %v11033, %v11032
        %v11043 = vpack.c.b16 %v11035, %v11034
        %11052 = vmatpush.bf16.msra.mxu0 %v11043
        %11053 = vmatpush.bf16.msra.mxu0 %v11042
        %11054 = vmatpush.bf16.msra.mxu0 %v11041
        %11055 = vmatpush.bf16.msra.mxu0 %v11040
        %11056 = vmatpush.bf16.msra.mxu0 %v11039
        %11057 = vmatpush.bf16.msra.mxu0 %v11038
        %11058 = vmatpush.bf16.msra.mxu0 %v11037
        %11059 = vmatpush.bf16.msra.mxu0 %v11036
        %11060 = vmatmul.bf16.gmra.mxu0 %v10987
        %v11061 = vpop.f32.mrf.mxu0
        %v11062 = vadd.f32 0.0, %v11061
        %v11063 = vpop.f32.mrf.mxu0
        %11064 = vdwg.mxu0
        %v11065 = vadd.f32 %v10968, %v11062
        %vm11066 = vcmask 1047557
        %v11067 = vsel %vm11066, %v10948, 0.0
        %v11068 = vsel %vm11066, %v10950, 0.0
        %v11069 = vadd.f32 %v11067, %v11068
        %v11070 = vsel %vm11066, %v10952, 0.0
        %v11071 = vadd.f32 %v11069, %v11070
        %v11072 = vsel %vm11066, %v10954, 0.0
        %v11073 = vadd.f32 %v11071, %v11072
        %v11074 = vsel %vm11066, %v10956, 0.0
        %v11075 = vadd.f32 %v11073, %v11074
        %v11076 = vsel %vm3086, %v10949, 0.0
        %v11077 = vsel %vm3086, %v10951, 0.0
        %v11078 = vadd.f32 %v11076, %v11077
        %v11079 = vsel %vm3086, %v10953, 0.0
        %v11080 = vadd.f32 %v11078, %v11079
        %v11081 = vsel %vm3086, %v10955, 0.0
        %v11082 = vadd.f32 %v11080, %v11081
        %v11083 = vsel %vm3086, %v10957, 0.0
        %v11084 = vadd.f32 %v11082, %v11083
        %vm11087 = vcmask 1042432
        %v11088 = vrot.slane %v11075, 5
        %v11089 = vrot.slane %v11084, 5
        %v11090 = vsel %vm11087, %v11088, %v11089
        %v11092 = vsel %vm10969, %v11090, 0.0
        %v11093 = vrot.slane %v11092, 4
        %v11094 = vadd.f32 %v11092, %v11093
        %v11095 = vrot.slane %v11094, 2
        %v11096 = vadd.f32 %v11094, %v11095
        %v11097 = vrot.slane %v11096, 1
        %v11098 = vadd.f32 %v11096, %v11097
        %v11099 = vmul.f32 %v11098, 0.04
        %v11100 = vpack.c.bf16 %v11099, %v11099
        %v11101 = vld [vmem:[%s9 + $0x40] sm:$0xf]
        %v11102 = vld [vmem:[%s9 + $0x44] sm:$0xf]
        %v11103 = vld [vmem:[%s9 + $0x48] sm:$0xf]
        %v11104 = vld [vmem:[%s9 + $0x4c] sm:$0xf]
        %v11105 = vld [vmem:[%s9 + $0x50] sm:$0xf]
        %v11106 = vld [vmem:[%s9 + $0x54] sm:$0xf]
        %v11107 = vld [vmem:[%s9 + $0x58] sm:$0xf]
        %v11108 = vld [vmem:[%s9 + $0x5c] sm:$0xf]
        %v11109 = vld [vmem:[%s9 + $0x60] sm:$0xf]
        %v11110 = vld [vmem:[%s9 + $0x64] sm:$0xf]
        %v11111 = vld [vmem:[%s9 + $0x68] sm:$0xf]
        %v11112 = vld [vmem:[%s9 + $0x6c] sm:$0xf]
        %v11113 = vld [vmem:[%s9 + $0x70] sm:$0xf]
        %v11114 = vld [vmem:[%s9 + $0x74] sm:$0xf]
        %v11115 = vld [vmem:[%s9 + $0x78] sm:$0xf]
        %v11116 = vld [vmem:[%s9 + $0x7c] sm:$0xf]
        %v11133 = vunpack.c.l.b16 %v11101
        %v11134 = vunpack.c.l.b16 %v11102
        %v11135 = vunpack.c.l.b16 %v11103
        %v11136 = vunpack.c.l.b16 %v11104
        %v11137 = vunpack.c.l.b16 %v11105
        %v11138 = vunpack.c.l.b16 %v11106
        %v11139 = vunpack.c.l.b16 %v11107
        %v11140 = vunpack.c.l.b16 %v11108
        %v11141 = vunpack.c.l.b16 %v11109
        %v11142 = vunpack.c.l.b16 %v11110
        %v11143 = vunpack.c.l.b16 %v11111
        %v11144 = vunpack.c.l.b16 %v11112
        %v11145 = vunpack.c.l.b16 %v11113
        %v11146 = vunpack.c.l.b16 %v11114
        %v11147 = vunpack.c.l.b16 %v11115
        %v11148 = vunpack.c.l.b16 %v11116
        %v11149 = vpack.c.b16 %v11134, %v11133
        %v11150 = vpack.c.b16 %v11136, %v11135
        %v11151 = vpack.c.b16 %v11138, %v11137
        %v11152 = vpack.c.b16 %v11140, %v11139
        %v11153 = vpack.c.b16 %v11142, %v11141
        %v11154 = vpack.c.b16 %v11144, %v11143
        %v11155 = vpack.c.b16 %v11146, %v11145
        %v11156 = vpack.c.b16 %v11148, %v11147
        %11165 = vmatpush.bf16.msra.mxu0 %v11156
        %11166 = vmatpush.bf16.msra.mxu0 %v11155
        %11167 = vmatpush.bf16.msra.mxu0 %v11154
        %11168 = vmatpush.bf16.msra.mxu0 %v11153
        %11169 = vmatpush.bf16.msra.mxu0 %v11152
        %11170 = vmatpush.bf16.msra.mxu0 %v11151
        %11171 = vmatpush.bf16.msra.mxu0 %v11150
        %11172 = vmatpush.bf16.msra.mxu0 %v11149
        %11173 = vmatmul.bf16.gmra.mxu0 %v11100
        %v11174 = vpop.f32.mrf.mxu0
        %v11175 = vadd.f32 0.0, %v11174
        %v11176 = vpop.f32.mrf.mxu0
        %11177 = vdwg.mxu0
        %v11178 = vadd.f32 %v11065, %v11175
        %v11179 = vsel %vm10969, %v10958, 0.0
        %v11180 = vsel %vm10969, %v10960, 0.0
        %v11181 = vadd.f32 %v11179, %v11180
        %v11182 = vsel %vm10969, %v10962, 0.0
        %v11183 = vadd.f32 %v11181, %v11182
        %v11184 = vsel %vm10969, %v10964, 0.0
        %v11185 = vadd.f32 %v11183, %v11184
        %v11186 = vsel %vm10969, %v10966, 0.0
        %v11187 = vadd.f32 %v11185, %v11186
        %v11188 = vsel %vm10969, %v11187, 0.0
        %v11189 = vrot.slane %v11188, 4
        %v11190 = vadd.f32 %v11188, %v11189
        %v11191 = vrot.slane %v11190, 2
        %v11192 = vadd.f32 %v11190, %v11191
        %v11193 = vrot.slane %v11192, 1
        %v11194 = vadd.f32 %v11192, %v11193
        %v11195 = vmul.f32 %v11194, 0.04
        %v11196 = vpack.c.bf16 %v11195, %v11195
        %v11197 = vld [vmem:[%s9 + $0x80] sm:$0xf]
        %v11198 = vld [vmem:[%s9 + $0x84] sm:$0xf]
        %v11199 = vld [vmem:[%s9 + $0x88] sm:$0xf]
        %v11200 = vld [vmem:[%s9 + $0x8c] sm:$0xf]
        %v11201 = vld [vmem:[%s9 + $0x90] sm:$0xf]
        %v11202 = vld [vmem:[%s9 + $0x94] sm:$0xf]
        %v11203 = vld [vmem:[%s9 + $0x98] sm:$0xf]
        %v11204 = vld [vmem:[%s9 + $0x9c] sm:$0xf]
        %v11205 = vld [vmem:[%s9 + $0xa0] sm:$0xf]
        %v11206 = vld [vmem:[%s9 + $0xa4] sm:$0xf]
        %v11207 = vld [vmem:[%s9 + $0xa8] sm:$0xf]
        %v11208 = vld [vmem:[%s9 + $0xac] sm:$0xf]
        %v11209 = vld [vmem:[%s9 + $0xb0] sm:$0xf]
        %v11210 = vld [vmem:[%s9 + $0xb4] sm:$0xf]
        %v11211 = vld [vmem:[%s9 + $0xb8] sm:$0xf]
        %v11212 = vld [vmem:[%s9 + $0xbc] sm:$0xf]
        %v11229 = vunpack.c.l.b16 %v11197
        %v11230 = vunpack.c.l.b16 %v11198
        %v11231 = vunpack.c.l.b16 %v11199
        %v11232 = vunpack.c.l.b16 %v11200
        %v11233 = vunpack.c.l.b16 %v11201
        %v11234 = vunpack.c.l.b16 %v11202
        %v11235 = vunpack.c.l.b16 %v11203
        %v11236 = vunpack.c.l.b16 %v11204
        %v11237 = vunpack.c.l.b16 %v11205
        %v11238 = vunpack.c.l.b16 %v11206
        %v11239 = vunpack.c.l.b16 %v11207
        %v11240 = vunpack.c.l.b16 %v11208
        %v11241 = vunpack.c.l.b16 %v11209
        %v11242 = vunpack.c.l.b16 %v11210
        %v11243 = vunpack.c.l.b16 %v11211
        %v11244 = vunpack.c.l.b16 %v11212
        %v11245 = vpack.c.b16 %v11230, %v11229
        %v11246 = vpack.c.b16 %v11232, %v11231
        %v11247 = vpack.c.b16 %v11234, %v11233
        %v11248 = vpack.c.b16 %v11236, %v11235
        %v11249 = vpack.c.b16 %v11238, %v11237
        %v11250 = vpack.c.b16 %v11240, %v11239
        %v11251 = vpack.c.b16 %v11242, %v11241
        %v11252 = vpack.c.b16 %v11244, %v11243
        %11261 = vmatpush.bf16.msra.mxu0 %v11252
        %11262 = vmatpush.bf16.msra.mxu0 %v11251
        %11263 = vmatpush.bf16.msra.mxu0 %v11250
        %11264 = vmatpush.bf16.msra.mxu0 %v11249
        %11265 = vmatpush.bf16.msra.mxu0 %v11248
        %11266 = vmatpush.bf16.msra.mxu0 %v11247
        %11267 = vmatpush.bf16.msra.mxu0 %v11246
        %11268 = vmatpush.bf16.msra.mxu0 %v11245
        %11269 = vmatmul.bf16.gmra.mxu0 %v11196
        %v11270 = vpop.f32.mrf.mxu0
        %v11271 = vadd.f32 0.0, %v11270
        %v11272 = vpop.f32.mrf.mxu0
        %11273 = vdwg.mxu0
        %v11274 = vadd.f32 %v11178, %v11271
        %v11275 = vsel %vm11066, %v10958, 0.0
        %v11276 = vsel %vm11066, %v10960, 0.0
        %v11277 = vadd.f32 %v11275, %v11276
        %v11278 = vsel %vm11066, %v10962, 0.0
        %v11279 = vadd.f32 %v11277, %v11278
        %v11280 = vsel %vm11066, %v10964, 0.0
        %v11281 = vadd.f32 %v11279, %v11280
        %v11282 = vsel %vm11066, %v10966, 0.0
        %v11283 = vadd.f32 %v11281, %v11282
        %v11284 = vsel %vm3086, %v10959, 0.0
        %v11285 = vsel %vm3086, %v10961, 0.0
        %v11286 = vadd.f32 %v11284, %v11285
        %v11287 = vsel %vm3086, %v10963, 0.0
        %v11288 = vadd.f32 %v11286, %v11287
        %v11289 = vsel %vm3086, %v10965, 0.0
        %v11290 = vadd.f32 %v11288, %v11289
        %v11291 = vsel %vm3086, %v10967, 0.0
        %v11292 = vadd.f32 %v11290, %v11291
        %v11295 = vrot.slane %v11283, 5
        %v11296 = vrot.slane %v11292, 5
        %v11297 = vsel %vm11087, %v11295, %v11296
        %v11299 = vsel %vm10969, %v11297, 0.0
        %v11300 = vrot.slane %v11299, 4
        %v11301 = vadd.f32 %v11299, %v11300
        %v11302 = vrot.slane %v11301, 2
        %v11303 = vadd.f32 %v11301, %v11302
        %v11304 = vrot.slane %v11303, 1
        %v11305 = vadd.f32 %v11303, %v11304
        %v11306 = vmul.f32 %v11305, 0.04
        %v11307 = vpack.c.bf16 %v11306, %v11306
        %v11308 = vld [vmem:[%s9 + $0xc0] sm:$0xf]
        %v11309 = vld [vmem:[%s9 + $0xc4] sm:$0xf]
        %v11310 = vld [vmem:[%s9 + $0xc8] sm:$0xf]
        %v11311 = vld [vmem:[%s9 + $0xcc] sm:$0xf]
        %v11312 = vld [vmem:[%s9 + $0xd0] sm:$0xf]
        %v11313 = vld [vmem:[%s9 + $0xd4] sm:$0xf]
        %v11314 = vld [vmem:[%s9 + $0xd8] sm:$0xf]
        %v11315 = vld [vmem:[%s9 + $0xdc] sm:$0xf]
        %v11316 = vld [vmem:[%s9 + $0xe0] sm:$0xf]
        %v11317 = vld [vmem:[%s9 + $0xe4] sm:$0xf]
        %v11318 = vld [vmem:[%s9 + $0xe8] sm:$0xf]
        %v11319 = vld [vmem:[%s9 + $0xec] sm:$0xf]
        %v11320 = vld [vmem:[%s9 + $0xf0] sm:$0xf]
        %v11321 = vld [vmem:[%s9 + $0xf4] sm:$0xf]
        %v11322 = vld [vmem:[%s9 + $0xf8] sm:$0xf]
        %v11323 = vld [vmem:[%s9 + $0xfc] sm:$0xf]
        %v11340 = vunpack.c.l.b16 %v11308
        %v11341 = vunpack.c.l.b16 %v11309
        %v11342 = vunpack.c.l.b16 %v11310
        %v11343 = vunpack.c.l.b16 %v11311
        %v11344 = vunpack.c.l.b16 %v11312
        %v11345 = vunpack.c.l.b16 %v11313
        %v11346 = vunpack.c.l.b16 %v11314
        %v11347 = vunpack.c.l.b16 %v11315
        %v11348 = vunpack.c.l.b16 %v11316
        %v11349 = vunpack.c.l.b16 %v11317
        %v11350 = vunpack.c.l.b16 %v11318
        %v11351 = vunpack.c.l.b16 %v11319
        %v11352 = vunpack.c.l.b16 %v11320
        %v11353 = vunpack.c.l.b16 %v11321
        %v11354 = vunpack.c.l.b16 %v11322
        %v11355 = vunpack.c.l.b16 %v11323
        %v11356 = vpack.c.b16 %v11341, %v11340
        %v11357 = vpack.c.b16 %v11343, %v11342
        %v11358 = vpack.c.b16 %v11345, %v11344
        %v11359 = vpack.c.b16 %v11347, %v11346
        %v11360 = vpack.c.b16 %v11349, %v11348
        %v11361 = vpack.c.b16 %v11351, %v11350
        %v11362 = vpack.c.b16 %v11353, %v11352
        %v11363 = vpack.c.b16 %v11355, %v11354
        %11372 = vmatpush.bf16.msra.mxu0 %v11363
        %11373 = vmatpush.bf16.msra.mxu0 %v11362
        %11374 = vmatpush.bf16.msra.mxu0 %v11361
        %11375 = vmatpush.bf16.msra.mxu0 %v11360
        %11376 = vmatpush.bf16.msra.mxu0 %v11359
        %11377 = vmatpush.bf16.msra.mxu0 %v11358
        %11378 = vmatpush.bf16.msra.mxu0 %v11357
        %11379 = vmatpush.bf16.msra.mxu0 %v11356
        %11380 = vmatmul.bf16.gmra.mxu0 %v11307
        %v11381 = vpop.f32.mrf.mxu0
        %v11382 = vadd.f32 0.0, %v11381
        %v11383 = vpop.f32.mrf.mxu0
        %11384 = vdwg.mxu0
        %v11385 = vadd.f32 %v11274, %v11382
        %v11386 = vpack.c.bf16 %v11385, %v11385
        %v11387 = vld [vmem:[%s11] sm:$0xf]
        %v11388 = vld [vmem:[%s11 + $0x4] sm:$0xf]
        %v11389 = vld [vmem:[%s11 + $0x8] sm:$0xf]
        %v11390 = vld [vmem:[%s11 + $0xc] sm:$0xf]
        %v11391 = vld [vmem:[%s11 + $0x10] sm:$0xf]
        %v11392 = vld [vmem:[%s11 + $0x14] sm:$0xf]
        %v11393 = vld [vmem:[%s11 + $0x18] sm:$0xf]
        %v11394 = vld [vmem:[%s11 + $0x1c] sm:$0xf]
        %v11395 = vld [vmem:[%s11 + $0x20] sm:$0xf]
        %v11396 = vld [vmem:[%s11 + $0x24] sm:$0xf]
        %v11397 = vld [vmem:[%s11 + $0x28] sm:$0xf]
        %v11398 = vld [vmem:[%s11 + $0x2c] sm:$0xf]
        %v11399 = vld [vmem:[%s11 + $0x30] sm:$0xf]
        %v11400 = vld [vmem:[%s11 + $0x34] sm:$0xf]
        %v11401 = vld [vmem:[%s11 + $0x38] sm:$0xf]
        %v11402 = vld [vmem:[%s11 + $0x3c] sm:$0xf]
        %v11403 = vld [vmem:[%s12] sm:$0x1]
        %v11420 = vunpack.c.l.b16 %v11387
        %v11421 = vunpack.c.l.b16 %v11388
        %v11422 = vunpack.c.l.b16 %v11389
        %v11423 = vunpack.c.l.b16 %v11390
        %v11424 = vunpack.c.l.b16 %v11391
        %v11425 = vunpack.c.l.b16 %v11392
        %v11426 = vunpack.c.l.b16 %v11393
        %v11427 = vunpack.c.l.b16 %v11394
        %v11428 = vunpack.c.l.b16 %v11395
        %v11429 = vunpack.c.l.b16 %v11396
        %v11430 = vunpack.c.l.b16 %v11397
        %v11431 = vunpack.c.l.b16 %v11398
        %v11432 = vunpack.c.l.b16 %v11399
        %v11433 = vunpack.c.l.b16 %v11400
        %v11434 = vunpack.c.l.b16 %v11401
        %v11435 = vunpack.c.l.b16 %v11402
        %v11436 = vpack.c.b16 %v11421, %v11420
        %v11437 = vpack.c.b16 %v11423, %v11422
        %v11438 = vpack.c.b16 %v11425, %v11424
        %v11439 = vpack.c.b16 %v11427, %v11426
        %v11440 = vpack.c.b16 %v11429, %v11428
        %v11441 = vpack.c.b16 %v11431, %v11430
        %v11442 = vpack.c.b16 %v11433, %v11432
        %v11443 = vpack.c.b16 %v11435, %v11434
        %11452 = vmatpush.bf16.msra.mxu0 %v11443
        %11453 = vmatpush.bf16.msra.mxu0 %v11442
        %11454 = vmatpush.bf16.msra.mxu0 %v11441
        %11455 = vmatpush.bf16.msra.mxu0 %v11440
        %11456 = vmatpush.bf16.msra.mxu0 %v11439
        %11457 = vmatpush.bf16.msra.mxu0 %v11438
        %11458 = vmatpush.bf16.msra.mxu0 %v11437
        %11459 = vmatpush.bf16.msra.mxu0 %v11436
        %11460 = vmatmul.bf16.gmra.mxu0 %v11386
        %v11461 = vpop.f32.mrf.mxu0
        %v11462 = vadd.f32 %v11403, %v11461
        %v11463 = vpop.f32.mrf.mxu0
        %11464 = vdwg.mxu0
        %vm11465 = vcmask 73728
        %v11466 = vsel %vm11465, %v11462, -inf
        %11467 = vmax.xlane.f32.xlu0 %v11466
        %v11468 = vpop.xlane.xlu0 %11467
        %v11469 = vsub.f32 %v11462, %v11468
        %v11470 = vmul.f32 %v11469, 1.442695
        %v11471 = vpow.pop %v11470
        %v11472 = vsel %vm11465, %v11471, 0.0
        %11473 = vadd.xlane.f32.xlu0 %v11472
        %v11474 = vpop.xlane.xlu0 %11473
        %v11475 = vrcp.pop %v11474
        %v11476 = vmul.f32 %v11474, %v11475
        %v11477 = vsub.f32 1.0, %v11476
        %v11478 = vmul.f32 %v11475, %v11477
        %v11479 = vadd.f32 %v11475, %v11478
        %vm11480 = vweird.f32 %v11474
        %vm11481 = vweird.f32 %v11475
        %vm11482 = vmor %vm11480, %vm11481
        %v11483 = vsel %vm11482, %v11475, %v11479
        %v11484 = vand.u32 2147483647, %v11474
        %vm11485 = vcmp.eq.f32.partialorder %v11484, 8.507059e+37
        %v11486 = vand.u32 %v11474, 2147483648
        %v11487 = vor.u32 1.1754944e-38, %v11486
        %v11488 = vsel %vm11485, %v11487, %v11483
        %v11489 = vmul.f32 %v11471, %v11488
        %11490 = vst.msk [vmem:[%s449] sm:$0x1] %vm11465, %v11489
        %s11491 = sand.u32 %s314, 1
        %s11492 = scalar_lea.sflag [#allocation6], %s11491
        %s11493 = sand.u32 %s314, 1
        %s11494 = scalar_lea.vmem [#allocation7], %s11493
        // Predicated region
        $region77: #{shallow2d_forward.1} parent=71 // pred_check
          %p11495 = pneg %p324
        $region78: #{shallow2d_forward.1} parent=71 // pred_check_branch
          %11497 = sbr.rel (%p11495) target = $region80
        $region79: #{shallow2d_forward.1} parent=71 // pred_region
          %11499 = vsyncadd %s11492, 0
          %s11500 = scalar_lea.hbm %s13, %s28
          %s11502 = sshll.u32 %s11494, 4
          %s11503 = int_to_ptr.vmem [resolvable:$true] %s11502
          %s11504 = sshll.u32 %s11500, 4
          %s11505 = int_to_ptr.hbm [resolvable:$true] %s11504
          %11507 = dma.vmem_to_hbm [thread:$0]  %s11503, 16, %s11505, %s11492
        $region80: #{shallow2d_forward.1} parent=71 // pred_fallthru
          _
      $region72: #{shallow2d_forward.1} parent=5 // pred_fallthru
        _
      %p11508 = scmp.le.s32.totalorder 2, %s23
      // Predicated region
      $region81: #{shallow2d_forward.1} parent=5 // pred_check
        %p11509 = pneg %p11508
      $region82: #{shallow2d_forward.1} parent=5 // pred_check_branch
        %11511 = sbr.rel (%p11509) target = $region84
      $region83: #{shallow2d_forward.1} parent=5 // pred_region
        %s11512 = ssub.s32 %s23, 2
        // Predicated region
        $region85: #{shallow2d_forward.1} parent=83 // pred_check
          %p11513 = pneg %p330
        $region86: #{shallow2d_forward.1} parent=83 // pred_check_branch
          %11515 = sbr.rel (%p11513) target = $region88
        $region87: #{shallow2d_forward.1} parent=83 // pred_region
          %s11516 = sand.u32 %s315, 1
          %s11517 = scalar_lea.sflag [#allocation6], %s11516
          %s11518 = sand.u32 %s315, 1
          %s11519 = scalar_lea.vmem [#allocation7], %s11518
          %11521 = dma.done %s11517, 16
        $region88: #{shallow2d_forward.1} parent=83 // pred_fallthru
          _
      $region84: #{shallow2d_forward.1} parent=5 // pred_fallthru
        _
    $region6: #{shallow2d_forward.1} parent=1 // loop_footer
      %s27 = sadd.s32 1, %s23
    $region7: #{shallow2d_forward.1} parent=1 // loop_footer_branch
      %22 = sbr.rel target = $region3
    $region8: #{shallow2d_forward.1} parent=1 // loop_exit
      _
    %11522 = vsyncpa [#allocation5], 1
    %s11523 = scalar_lea.sflag [#allocation5], 1
    %11524 = vsyncpa %s11523, 1
    %11525 = vsyncpa [#allocation6], 1
    %s11526 = scalar_lea.sflag [#allocation6], 1
    %11527 = vsyncpa %s11526, 1

</llo_original>
